<compile_context>
chip_gen: v5e
topology: v5e:2x2
jax: 0.10.0
libtpu: 0.0.40
codegen_flags: <defaults>
</compile_context>

<pallas_src>
import functools

import jax
import jax.numpy as jnp
from jax.experimental import pallas as pl
from jax.experimental.pallas import tpu as pltpu

C_IN = 1024
C_HID = 1024
C_OUT_PAD = 128    # true out-channels = 1, padded to a full lane width


def _round_up(x, m):
    return (x + m - 1) // m * m


def _cdiv(a, b):
    return (a + b - 1) // b


@functools.lru_cache(maxsize=None)
def _tile_config():
    """Generation-conditional (v5e/v6e vs v7x) row-tile / VMEM-limit choice."""
    try:
        vmem_bytes = pltpu.get_tpu_info().vmem_capacity_bytes
    except Exception:
        vmem_bytes = 64 << 20
    if vmem_bytes >= (100 << 20):
        # v5e / v6e: 128 MiB physical VMEM -> big tile, high scoped limit.
        return 2048, 96 << 20
    # v7x: 64 MiB physical VMEM -> cap at 1024 rows, modest scoped limit.
    return 1024, 52 << 20


def _leaky_relu(x, slope=0.01):
    # Identical to where(x > 0, x, slope*x) for slope in (0, 1), one fewer op.
    return jnp.maximum(x, slope * x)


def disc_xz_kernel(x_ref, w1_ref, b1_ref, w2_ref, b2_ref, w3_ref, b3_ref, o_ref):
    # x_ref: (tile_m, 1024) bf16 — rows = pixels, lanes = channels.
    # Weights are bf16; all three dots take bf16 inputs with f32 accumulation
    # (full-rate MXU path).  Bias add / activation math stays in f32.
    x = x_ref[...]

    # Conv1 (1x1) + LeakyReLU(0.01)
    h1 = jnp.dot(x, w1_ref[...], preferred_element_type=jnp.float32) + b1_ref[...]
    a1 = _leaky_relu(h1).astype(jnp.bfloat16)

    # Conv2 (1x1) + LeakyReLU(0.01)
    h2 = jnp.dot(a1, w2_ref[...], preferred_element_type=jnp.float32) + b2_ref[...]
    a2 = _leaky_relu(h2).astype(jnp.bfloat16)

    # Conv3 (1x1, 1024 -> 1 padded to 128) + Sigmoid
    h3 = jnp.dot(a2, w3_ref[...], preferred_element_type=jnp.float32) + b3_ref[...]
    # sigmoid = 1 / (1 + exp(-h3)); exp and approx reciprocal land on the EUP.
    o_ref[...] = pl.reciprocal(1.0 + jnp.exp(-h3), approx=True).astype(jnp.bfloat16)


@jax.jit
def discriminator_xz_forward(xz, params):
    """xz: (N, 1024, H, W) float32  ->  (N, 1, H, W) float32."""
    w1, b1, w2, b2, w3, b3 = params
    N, C, H, W = xz.shape
    assert C == C_IN

    tile_m_max, vmem_limit = _tile_config()

    # NCHW -> NHWC -> (N*H*W, C), cast to bf16 in the same pass (the transpose
    # already touches every element for H,W > 1; for H=W=1 it is a reshape).
    rows = jnp.transpose(xz, (0, 2, 3, 1)).reshape(N * H * W, C)
    rows = rows.astype(jnp.bfloat16)

    # Ragged-friendly tile: n_tiles chosen first, then the smallest 16-aligned
    # tile that covers M, so last-tile padding is a handful of rows, not up to
    # tile_m - 8 rows of dead matmul work.
    M = rows.shape[0]
    n_tiles = _cdiv(M, tile_m_max)
    tile_m = _round_up(_cdiv(M, n_tiles), 16)
    M_pad = n_tiles * tile_m
    rows = jnp.pad(rows, ((0, M_pad - M), (0, 0)))

    # bf16 weights: halves weight DMA / VMEM and feeds the bf16 MXU path.
    w1b = w1.astype(jnp.bfloat16)
    w2b = w2.astype(jnp.bfloat16)
    # Pad the 1-channel head to 128 lanes (zeros -> sigmoid(0)=0.5, sliced off).
    w3b = jnp.pad(w3, ((0, 0), (0, C_OUT_PAD - w3.shape[1]))).astype(jnp.bfloat16)
    b3p = jnp.pad(b3, ((0, 0), (0, C_OUT_PAD - b3.shape[1])))

    grid = (M_pad // tile_m,)

    # Constant-index weight/bias blocks: fetched once, single-buffered.
    resident = pl.Buffered(1)

    out = pl.pallas_call(
        disc_xz_kernel,
        out_shape=jax.ShapeDtypeStruct((M_pad, C_OUT_PAD), jnp.bfloat16),
        grid=grid,
        in_specs=[
            # Row tile marches with the grid (default double-buffering).
            pl.BlockSpec((tile_m, C_IN), lambda i: (i, 0)),
            # Weights/biases: whole-array blocks, constant index_map, single
            # buffer -> resident in VMEM across all grid steps.
            pl.BlockSpec((C_IN, C_HID), lambda i: (0, 0), pipeline_mode=resident),
            pl.BlockSpec((1, C_HID), lambda i: (0, 0), pipeline_mode=resident),
            pl.BlockSpec((C_HID, C_HID), lambda i: (0, 0), pipeline_mode=resident),
            pl.BlockSpec((1, C_HID), lambda i: (0, 0), pipeline_mode=resident),
            pl.BlockSpec((C_HID, C_OUT_PAD), lambda i: (0, 0), pipeline_mode=resident),
            pl.BlockSpec((1, C_OUT_PAD), lambda i: (0, 0), pipeline_mode=resident),
        ],
        out_specs=pl.BlockSpec((tile_m, C_OUT_PAD), lambda i: (i, 0)),
        compiler_params=pltpu.CompilerParams(
            # Row tiles are independent -> megacore sharding on v7x;
            # no-op on single-TC v5e/v6e.
            dimension_semantics=("parallel",),
            vmem_limit_bytes=vmem_limit,
        ),
    )(rows, w1b, b1, w2b, b2, w3b, b3p)

    # Slice real rows and the single real output channel, back to f32 NCHW.
    y = out[:M, 0:1].astype(jnp.float32)   # (N*H*W, 1)
    y = y.reshape(N, H, W, 1)
    return jnp.transpose(y, (0, 3, 1, 2))  # (N, 1, H, W)


def init_params(key):
    """Deterministic synthetic parameters (shapes match the PyTorch module).

    Conv2d(1024,1024,1,1) weight is (out,in,1,1); we store the equivalent
    (in,out) matrix used by the per-pixel matmul."""
    k1, k2, k3, k4, k5, k6 = jax.random.split(key, 6)
    scale1 = 1.0 / jnp.sqrt(C_IN)
    w1 = jax.random.uniform(k1, (C_IN, C_HID), jnp.float32, -scale1, scale1)
    b1 = jax.random.uniform(k2, (1, C_HID), jnp.float32, -scale1, scale1)
    w2 = jax.random.uniform(k3, (C_HID, C_HID), jnp.float32, -scale1, scale1)
    b2 = jax.random.uniform(k4, (1, C_HID), jnp.float32, -scale1, scale1)
    w3 = jax.random.uniform(k5, (C_HID, 1), jnp.float32, -scale1, scale1)
    b3 = jax.random.uniform(k6, (1, 1), jnp.float32, -scale1, scale1)
    return (w1, b1, w2, b2, w3, b3)


def reference_forward(xz, params):
    """Pure-JAX f32 reference of the module math (for a sanity check)."""
    w1, b1, w2, b2, w3, b3 = params
    N, C, H, W = xz.shape
    r = jnp.transpose(xz, (0, 2, 3, 1)).reshape(-1, C)
    h = jnp.maximum(r @ w1 + b1, 0.01 * (r @ w1 + b1))
    h = jnp.maximum(h @ w2 + b2, 0.01 * (h @ w2 + b2))
    y = jax.nn.sigmoid(h @ w3 + b3)
    return jnp.transpose(y.reshape(N, H, W, 1), (0, 3, 1, 2))


if __name__ == "__main__":
    key = jax.random.PRNGKey(0)
    kp, kx1, kx2, kx3 = jax.random.split(key, 4)
    params = init_params(kp)

    # bf16 matmul inputs + bf16 output store + approx reciprocal vs. the f32
    # reference: sigmoid output agrees well within 2e-2 absolute.
    TOL = 2e-2

    # Realistic ALI D_xz case: 1x1 spatial feature maps, batch=2.
    x_small = jax.random.normal(kx1, (2, C_IN, 1, 1), dtype=jnp.float32)
    y_small = jax.block_until_ready(discriminator_xz_forward(x_small, params))
    assert y_small.shape == (2, 1, 1, 1), y_small.shape
    ref_small = jax.block_until_ready(reference_forward(x_small, params))
    assert jnp.allclose(y_small, ref_small, atol=TOL), float(
        jnp.max(jnp.abs(y_small - ref_small)))

    # Spatial case (M=800): single ragged-sized tile, no padded matmul work.
    x_med = jax.random.normal(kx2, (2, C_IN, 20, 20), dtype=jnp.float32)
    y_med = jax.block_until_ready(discriminator_xz_forward(x_med, params))
    assert y_med.shape == (2, 1, 20, 20), y_med.shape
    ref_med = jax.block_until_ready(reference_forward(x_med, params))
    assert jnp.allclose(y_med, ref_med, atol=TOL), float(
        jnp.max(jnp.abs(y_med - ref_med)))

    # Larger case (M=2304): exercises the multi-tile row grid on any chip.
    x_big = jax.random.normal(kx3, (1, C_IN, 48, 48), dtype=jnp.float32)
    y_big = jax.block_until_ready(discriminator_xz_forward(x_big, params))
    assert y_big.shape == (1, 1, 48, 48), y_big.shape
    ref_big = jax.block_until_ready(reference_forward(x_big, params))
    assert jnp.allclose(y_big, ref_big, atol=TOL), float(
        jnp.max(jnp.abs(y_big - ref_big)))

    print("KERNEL_OK")
</pallas_src>

<mosaic_0001>
module attributes {stable_mosaic.version = 11 : i64} {
  func.func @disc_xz_kernel(%arg0: i32, %arg1: memref<16x1024xbf16, #tpu.memory_space<vmem>>, %arg2: memref<1024x1024xbf16, #tpu.memory_space<vmem>>, %arg3: memref<1x1024xf32, #tpu.memory_space<vmem>>, %arg4: memref<1024x1024xbf16, #tpu.memory_space<vmem>>, %arg5: memref<1x1024xf32, #tpu.memory_space<vmem>>, %arg6: memref<1024x128xbf16, #tpu.memory_space<vmem>>, %arg7: memref<1x128xf32, #tpu.memory_space<vmem>>, %arg8: memref<16x128xbf16, #tpu.memory_space<vmem>>) attributes {dimension_semantics = [#tpu.dimension_semantics<parallel>], iteration_bounds = array<i64: 1>, scalar_prefetch = 0 : i64, scratch_operands = 0 : i64, tpu.core_type = #tpu.core_type<tc>, window_params = [{transform_indices = @transform_0, window_bounds = array<i64: 16, 1024>}, {pipeline_mode = #tpu.pipeline_mode<synchronous>, transform_indices = @transform_1, window_bounds = array<i64: 1024, 1024>}, {pipeline_mode = #tpu.pipeline_mode<synchronous>, transform_indices = @transform_2, window_bounds = array<i64: 1, 1024>}, {pipeline_mode = #tpu.pipeline_mode<synchronous>, transform_indices = @transform_3, window_bounds = array<i64: 1024, 1024>}, {pipeline_mode = #tpu.pipeline_mode<synchronous>, transform_indices = @transform_4, window_bounds = array<i64: 1, 1024>}, {pipeline_mode = #tpu.pipeline_mode<synchronous>, transform_indices = @transform_5, window_bounds = array<i64: 1024, 128>}, {pipeline_mode = #tpu.pipeline_mode<synchronous>, transform_indices = @transform_6, window_bounds = array<i64: 1, 128>}, {transform_indices = @transform_7, window_bounds = array<i64: 16, 128>}]} {
    %c0 = arith.constant 0 : index
    %c0_0 = arith.constant 0 : index
    %0 = vector.load %arg1[%c0, %c0_0] : memref<16x1024xbf16, #tpu.memory_space<vmem>>, vector<16x1024xbf16>
    %c0_1 = arith.constant 0 : index
    %c0_2 = arith.constant 0 : index
    %1 = vector.load %arg2[%c0_1, %c0_2] : memref<1024x1024xbf16, #tpu.memory_space<vmem>>, vector<1024x1024xbf16>
    %cst = arith.constant dense<0.000000e+00> : vector<16x1024xf32>
    %2 = tpu.matmul %0, %1, %cst {dimension_numbers = #tpu.dot_dimension_numbers<[1], [0], [0], [1], [0, 0, 1, 1], [], []>} : vector<16x1024xbf16>, vector<1024x1024xbf16>, vector<16x1024xf32> -> vector<16x1024xf32>
    %c0_3 = arith.constant 0 : index
    %c0_4 = arith.constant 0 : index
    %3 = vector.load %arg3[%c0_3, %c0_4] : memref<1x1024xf32, #tpu.memory_space<vmem>>, vector<1x1024xf32>
    %4 = vector.broadcast %3 : vector<1x1024xf32> to vector<16x1024xf32>
    %5 = arith.addf %2, %4 : vector<16x1024xf32>
    %cst_5 = arith.constant 0.00999999977 : f32
    %6 = vector.broadcast %cst_5 : f32 to vector<16x1024xf32>
    %7 = arith.mulf %6, %5 : vector<16x1024xf32>
    %8 = arith.maximumf %5, %7 : vector<16x1024xf32>
    %9 = arith.truncf %8 : vector<16x1024xf32> to vector<16x1024xbf16>
    %c0_6 = arith.constant 0 : index
    %c0_7 = arith.constant 0 : index
    %10 = vector.load %arg4[%c0_6, %c0_7] : memref<1024x1024xbf16, #tpu.memory_space<vmem>>, vector<1024x1024xbf16>
    %cst_8 = arith.constant dense<0.000000e+00> : vector<16x1024xf32>
    %11 = tpu.matmul %9, %10, %cst_8 {dimension_numbers = #tpu.dot_dimension_numbers<[1], [0], [0], [1], [0, 0, 1, 1], [], []>} : vector<16x1024xbf16>, vector<1024x1024xbf16>, vector<16x1024xf32> -> vector<16x1024xf32>
    %c0_9 = arith.constant 0 : index
    %c0_10 = arith.constant 0 : index
    %12 = vector.load %arg5[%c0_9, %c0_10] : memref<1x1024xf32, #tpu.memory_space<vmem>>, vector<1x1024xf32>
    %13 = vector.broadcast %12 : vector<1x1024xf32> to vector<16x1024xf32>
    %14 = arith.addf %11, %13 : vector<16x1024xf32>
    %cst_11 = arith.constant 0.00999999977 : f32
    %15 = vector.broadcast %cst_11 : f32 to vector<16x1024xf32>
    %16 = arith.mulf %15, %14 : vector<16x1024xf32>
    %17 = arith.maximumf %14, %16 : vector<16x1024xf32>
    %18 = arith.truncf %17 : vector<16x1024xf32> to vector<16x1024xbf16>
    %c0_12 = arith.constant 0 : index
    %c0_13 = arith.constant 0 : index
    %19 = vector.load %arg6[%c0_12, %c0_13] : memref<1024x128xbf16, #tpu.memory_space<vmem>>, vector<1024x128xbf16>
    %cst_14 = arith.constant dense<0.000000e+00> : vector<16x128xf32>
    %20 = tpu.matmul %18, %19, %cst_14 {dimension_numbers = #tpu.dot_dimension_numbers<[1], [0], [0], [1], [0, 0, 1, 1], [], []>} : vector<16x1024xbf16>, vector<1024x128xbf16>, vector<16x128xf32> -> vector<16x128xf32>
    %c0_15 = arith.constant 0 : index
    %c0_16 = arith.constant 0 : index
    %21 = vector.load %arg7[%c0_15, %c0_16] : memref<1x128xf32, #tpu.memory_space<vmem>>, vector<1x128xf32>
    %22 = vector.broadcast %21 : vector<1x128xf32> to vector<16x128xf32>
    %23 = arith.addf %20, %22 : vector<16x128xf32>
    %cst_17 = arith.constant 0.000000e+00 : f32
    %24 = vector.broadcast %cst_17 : f32 to vector<16x128xf32>
    %25 = arith.subf %24, %23 : vector<16x128xf32>
    %26 = math.exp %25 : vector<16x128xf32>
    %cst_18 = arith.constant 1.000000e+00 : f32
    %27 = vector.broadcast %cst_18 : f32 to vector<16x128xf32>
    %28 = arith.addf %27, %26 : vector<16x128xf32>
    %29 = tpu.reciprocal %28 {approx = true} : vector<16x128xf32> -> vector<16x128xf32>
    %30 = arith.truncf %29 : vector<16x128xf32> to vector<16x128xbf16>
    %c0_19 = arith.constant 0 : index
    %c0_20 = arith.constant 0 : index
    %31 = vector.load %arg8[%c0_19, %c0_20] : memref<16x128xbf16, #tpu.memory_space<vmem>>, vector<16x128xbf16>
    tpu.vector_store %arg8[%c0_19, %c0_20], %30 {strides = array<i32>} : memref<16x128xbf16, #tpu.memory_space<vmem>>, vector<16x128xbf16>,
    return
  }
  func.func @transform_0(%arg0: i32) -> (i32, i32) {
    %c0_i32 = arith.constant 0 : i32
    %c0_i32_0 = arith.constant 0 : i32
    return %arg0, %c0_i32 : i32, i32
  }
  func.func @transform_1(%arg0: i32) -> (i32, i32) {
    %c0_i32 = arith.constant 0 : i32
    %c0_i32_0 = arith.constant 0 : i32
    %c0_i32_1 = arith.constant 0 : i32
    return %c0_i32, %c0_i32_0 : i32, i32
  }
  func.func @transform_2(%arg0: i32) -> (i32, i32) {
    %c0_i32 = arith.constant 0 : i32
    %c0_i32_0 = arith.constant 0 : i32
    %c0_i32_1 = arith.constant 0 : i32
    return %c0_i32, %c0_i32_0 : i32, i32
  }
  func.func @transform_3(%arg0: i32) -> (i32, i32) {
    %c0_i32 = arith.constant 0 : i32
    %c0_i32_0 = arith.constant 0 : i32
    %c0_i32_1 = arith.constant 0 : i32
    return %c0_i32, %c0_i32_0 : i32, i32
  }
  func.func @transform_4(%arg0: i32) -> (i32, i32) {
    %c0_i32 = arith.constant 0 : i32
    %c0_i32_0 = arith.constant 0 : i32
    %c0_i32_1 = arith.constant 0 : i32
    return %c0_i32, %c0_i32_0 : i32, i32
  }
  func.func @transform_5(%arg0: i32) -> (i32, i32) {
    %c0_i32 = arith.constant 0 : i32
    %c0_i32_0 = arith.constant 0 : i32
    %c0_i32_1 = arith.constant 0 : i32
    return %c0_i32, %c0_i32_0 : i32, i32
  }
  func.func @transform_6(%arg0: i32) -> (i32, i32) {
    %c0_i32 = arith.constant 0 : i32
    %c0_i32_0 = arith.constant 0 : i32
    %c0_i32_1 = arith.constant 0 : i32
    return %c0_i32, %c0_i32_0 : i32, i32
  }
  func.func @transform_7(%arg0: i32) -> (i32, i32) {
    %c0_i32 = arith.constant 0 : i32
    %c0_i32_0 = arith.constant 0 : i32
    return %arg0, %c0_i32 : i32, i32
  }
}

</mosaic_0001>

<llo_original>
// kernel: discriminator_xz_forward.1
$region0: #{discriminator_xz_forward.1}
  #allocation0 [shape = 'u32[]', space=smem, size = 0x4, offset = 0x4, fixed_abs, tag = 'smem constant byte address 0x4 - core index']
  #allocation1 [shape = 'u32[72,128]{1,0:T(1,128)}', space=vmem, size = 0x9000, scoped, tag = 'internal scratch']
  %s0 = inlined_call_operand.vmem [shape: bf16[16,1024], index: 0, kind: input, shape index: {}]
  %s1 = inlined_call_operand.vmem [shape: bf16[1024,1024], index: 1, kind: input, shape index: {}]
  %s2 = inlined_call_operand.vmem [shape: f32[1,1024], index: 2, kind: input, shape index: {}]
  %s3 = inlined_call_operand.vmem [shape: bf16[1024,1024], index: 3, kind: input, shape index: {}]
  %s4 = inlined_call_operand.vmem [shape: f32[1,1024], index: 4, kind: input, shape index: {}]
  %s5 = inlined_call_operand.vmem [shape: bf16[1024,128], index: 5, kind: input, shape index: {}]
  %s6 = inlined_call_operand.vmem [shape: f32[1,128], index: 6, kind: input, shape index: {}]
  %s7 = inlined_call_operand.vmem [shape: bf16[16,128], index: 7, kind: output, shape index: {}]
  %s8 = sld [smem:[#allocation0]]
  $region38: #{discriminator_xz_forward.1} parent=0
    _
  %s10 = ssub.s32 1, %s8
  %s11 = scalar_select 0, %s10, %s8
  // Predicated region
  $region2: #{discriminator_xz_forward.1} parent=0 // pred_check
    _
  $region3: #{discriminator_xz_forward.1} parent=0 // pred_check_branch
    %13 = sbr.rel (0) target = $region5
  $region4: #{discriminator_xz_forward.1} parent=0 // pred_region
    _
  $region5: #{discriminator_xz_forward.1} parent=0 // pred_fallthru
    _
  // Predicated region
  $region6: #{discriminator_xz_forward.1} parent=0 // pred_check
    _
  $region7: #{discriminator_xz_forward.1} parent=0 // pred_check_branch
    %15 = sbr.rel (0) target = $region9
  $region8: #{discriminator_xz_forward.1} parent=0 // pred_region
    _
  $region9: #{discriminator_xz_forward.1} parent=0 // pred_fallthru
    _
  // Predicated region
  $region10: #{discriminator_xz_forward.1} parent=0 // pred_check
    _
  $region11: #{discriminator_xz_forward.1} parent=0 // pred_check_branch
    %17 = sbr.rel (0) target = $region13
  $region12: #{discriminator_xz_forward.1} parent=0 // pred_region
    _
  $region13: #{discriminator_xz_forward.1} parent=0 // pred_fallthru
    _
  // Predicated region
  $region14: #{discriminator_xz_forward.1} parent=0 // pred_check
    _
  $region15: #{discriminator_xz_forward.1} parent=0 // pred_check_branch
    %19 = sbr.rel (0) target = $region17
  $region16: #{discriminator_xz_forward.1} parent=0 // pred_region
    _
  $region17: #{discriminator_xz_forward.1} parent=0 // pred_fallthru
    _
  // Predicated region
  $region18: #{discriminator_xz_forward.1} parent=0 // pred_check
    _
  $region19: #{discriminator_xz_forward.1} parent=0 // pred_check_branch
    %21 = sbr.rel (0) target = $region21
  $region20: #{discriminator_xz_forward.1} parent=0 // pred_region
    _
  $region21: #{discriminator_xz_forward.1} parent=0 // pred_fallthru
    _
  // Predicated region
  $region22: #{discriminator_xz_forward.1} parent=0 // pred_check
    _
  $region23: #{discriminator_xz_forward.1} parent=0 // pred_check_branch
    %23 = sbr.rel (0) target = $region25
  $region24: #{discriminator_xz_forward.1} parent=0 // pred_region
    _
  $region25: #{discriminator_xz_forward.1} parent=0 // pred_fallthru
    _
  // Predicated region
  $region26: #{discriminator_xz_forward.1} parent=0 // pred_check
    _
  $region27: #{discriminator_xz_forward.1} parent=0 // pred_check_branch
    %25 = sbr.rel (0) target = $region29
  $region28: #{discriminator_xz_forward.1} parent=0 // pred_region
    _
  $region29: #{discriminator_xz_forward.1} parent=0 // pred_fallthru
    _
  %v26 = vld [vmem:[%s0] sm:$0xff]
  %v27 = vld [vmem:[%s0 + $0x8] sm:$0xff]
  %v28 = vld [vmem:[%s0 + $0x10] sm:$0xff]
  %v29 = vld [vmem:[%s0 + $0x18] sm:$0xff]
  %v30 = vld [vmem:[%s0 + $0x20] sm:$0xff]
  %v31 = vld [vmem:[%s0 + $0x28] sm:$0xff]
  %v32 = vld [vmem:[%s0 + $0x30] sm:$0xff]
  %v33 = vld [vmem:[%s0 + $0x38] sm:$0xff]
  %v34 = vld [vmem:[%s1] sm:$0xff]
  %v35 = vld [vmem:[%s1 + $0x8] sm:$0xff]
  %v36 = vld [vmem:[%s1 + $0x10] sm:$0xff]
  %v37 = vld [vmem:[%s1 + $0x18] sm:$0xff]
  %v38 = vld [vmem:[%s1 + $0x20] sm:$0xff]
  %v39 = vld [vmem:[%s1 + $0x28] sm:$0xff]
  %v40 = vld [vmem:[%s1 + $0x30] sm:$0xff]
  %v41 = vld [vmem:[%s1 + $0x38] sm:$0xff]
  %v42 = vld [vmem:[%s1 + $0x40] sm:$0xff]
  %v43 = vld [vmem:[%s1 + $0x48] sm:$0xff]
  %v44 = vld [vmem:[%s1 + $0x50] sm:$0xff]
  %v45 = vld [vmem:[%s1 + $0x58] sm:$0xff]
  %v46 = vld [vmem:[%s1 + $0x60] sm:$0xff]
  %v47 = vld [vmem:[%s1 + $0x68] sm:$0xff]
  %v48 = vld [vmem:[%s1 + $0x70] sm:$0xff]
  %v49 = vld [vmem:[%s1 + $0x78] sm:$0xff]
  %v50 = vld [vmem:[%s1 + $0x80] sm:$0xff]
  %v51 = vld [vmem:[%s1 + $0x88] sm:$0xff]
  %v52 = vld [vmem:[%s1 + $0x90] sm:$0xff]
  %v53 = vld [vmem:[%s1 + $0x98] sm:$0xff]
  %v54 = vld [vmem:[%s1 + $0xa0] sm:$0xff]
  %v55 = vld [vmem:[%s1 + $0xa8] sm:$0xff]
  %v56 = vld [vmem:[%s1 + $0xb0] sm:$0xff]
  %v57 = vld [vmem:[%s1 + $0xb8] sm:$0xff]
  %v58 = vld [vmem:[%s1 + $0xc0] sm:$0xff]
  %v59 = vld [vmem:[%s1 + $0xc8] sm:$0xff]
  %v60 = vld [vmem:[%s1 + $0xd0] sm:$0xff]
  %v61 = vld [vmem:[%s1 + $0xd8] sm:$0xff]
  %v62 = vld [vmem:[%s1 + $0xe0] sm:$0xff]
  %v63 = vld [vmem:[%s1 + $0xe8] sm:$0xff]
  %v64 = vld [vmem:[%s1 + $0xf0] sm:$0xff]
  %v65 = vld [vmem:[%s1 + $0xf8] sm:$0xff]
  %v66 = vld [vmem:[%s1 + $0x100] sm:$0xff]
  %v67 = vld [vmem:[%s1 + $0x108] sm:$0xff]
  %v68 = vld [vmem:[%s1 + $0x110] sm:$0xff]
  %v69 = vld [vmem:[%s1 + $0x118] sm:$0xff]
  %v70 = vld [vmem:[%s1 + $0x120] sm:$0xff]
  %v71 = vld [vmem:[%s1 + $0x128] sm:$0xff]
  %v72 = vld [vmem:[%s1 + $0x130] sm:$0xff]
  %v73 = vld [vmem:[%s1 + $0x138] sm:$0xff]
  %v74 = vld [vmem:[%s1 + $0x140] sm:$0xff]
  %v75 = vld [vmem:[%s1 + $0x148] sm:$0xff]
  %v76 = vld [vmem:[%s1 + $0x150] sm:$0xff]
  %v77 = vld [vmem:[%s1 + $0x158] sm:$0xff]
  %v78 = vld [vmem:[%s1 + $0x160] sm:$0xff]
  %v79 = vld [vmem:[%s1 + $0x168] sm:$0xff]
  %v80 = vld [vmem:[%s1 + $0x170] sm:$0xff]
  %v81 = vld [vmem:[%s1 + $0x178] sm:$0xff]
  %v82 = vld [vmem:[%s1 + $0x180] sm:$0xff]
  %v83 = vld [vmem:[%s1 + $0x188] sm:$0xff]
  %v84 = vld [vmem:[%s1 + $0x190] sm:$0xff]
  %v85 = vld [vmem:[%s1 + $0x198] sm:$0xff]
  %v86 = vld [vmem:[%s1 + $0x1a0] sm:$0xff]
  %v87 = vld [vmem:[%s1 + $0x1a8] sm:$0xff]
  %v88 = vld [vmem:[%s1 + $0x1b0] sm:$0xff]
  %v89 = vld [vmem:[%s1 + $0x1b8] sm:$0xff]
  %v90 = vld [vmem:[%s1 + $0x1c0] sm:$0xff]
  %v91 = vld [vmem:[%s1 + $0x1c8] sm:$0xff]
  %v92 = vld [vmem:[%s1 + $0x1d0] sm:$0xff]
  %v93 = vld [vmem:[%s1 + $0x1d8] sm:$0xff]
  %v94 = vld [vmem:[%s1 + $0x1e0] sm:$0xff]
  %v95 = vld [vmem:[%s1 + $0x1e8] sm:$0xff]
  %v96 = vld [vmem:[%s1 + $0x1f0] sm:$0xff]
  %v97 = vld [vmem:[%s1 + $0x1f8] sm:$0xff]
  %v98 = vld [vmem:[%s1 + $0x200] sm:$0xff]
  %v99 = vld [vmem:[%s1 + $0x208] sm:$0xff]
  %v100 = vld [vmem:[%s1 + $0x210] sm:$0xff]
  %v101 = vld [vmem:[%s1 + $0x218] sm:$0xff]
  %v102 = vld [vmem:[%s1 + $0x220] sm:$0xff]
  %v103 = vld [vmem:[%s1 + $0x228] sm:$0xff]
  %v104 = vld [vmem:[%s1 + $0x230] sm:$0xff]
  %v105 = vld [vmem:[%s1 + $0x238] sm:$0xff]
  %v106 = vld [vmem:[%s1 + $0x240] sm:$0xff]
  %v107 = vld [vmem:[%s1 + $0x248] sm:$0xff]
  %v108 = vld [vmem:[%s1 + $0x250] sm:$0xff]
  %v109 = vld [vmem:[%s1 + $0x258] sm:$0xff]
  %v110 = vld [vmem:[%s1 + $0x260] sm:$0xff]
  %v111 = vld [vmem:[%s1 + $0x268] sm:$0xff]
  %v112 = vld [vmem:[%s1 + $0x270] sm:$0xff]
  %v113 = vld [vmem:[%s1 + $0x278] sm:$0xff]
  %v114 = vld [vmem:[%s1 + $0x280] sm:$0xff]
  %v115 = vld [vmem:[%s1 + $0x288] sm:$0xff]
  %v116 = vld [vmem:[%s1 + $0x290] sm:$0xff]
  %v117 = vld [vmem:[%s1 + $0x298] sm:$0xff]
  %v118 = vld [vmem:[%s1 + $0x2a0] sm:$0xff]
  %v119 = vld [vmem:[%s1 + $0x2a8] sm:$0xff]
  %v120 = vld [vmem:[%s1 + $0x2b0] sm:$0xff]
  %v121 = vld [vmem:[%s1 + $0x2b8] sm:$0xff]
  %v122 = vld [vmem:[%s1 + $0x2c0] sm:$0xff]
  %v123 = vld [vmem:[%s1 + $0x2c8] sm:$0xff]
  %v124 = vld [vmem:[%s1 + $0x2d0] sm:$0xff]
  %v125 = vld [vmem:[%s1 + $0x2d8] sm:$0xff]
  %v126 = vld [vmem:[%s1 + $0x2e0] sm:$0xff]
  %v127 = vld [vmem:[%s1 + $0x2e8] sm:$0xff]
  %v128 = vld [vmem:[%s1 + $0x2f0] sm:$0xff]
  %v129 = vld [vmem:[%s1 + $0x2f8] sm:$0xff]
  %v130 = vld [vmem:[%s1 + $0x300] sm:$0xff]
  %v131 = vld [vmem:[%s1 + $0x308] sm:$0xff]
  %v132 = vld [vmem:[%s1 + $0x310] sm:$0xff]
  %v133 = vld [vmem:[%s1 + $0x318] sm:$0xff]
  %v134 = vld [vmem:[%s1 + $0x320] sm:$0xff]
  %v135 = vld [vmem:[%s1 + $0x328] sm:$0xff]
  %v136 = vld [vmem:[%s1 + $0x330] sm:$0xff]
  %v137 = vld [vmem:[%s1 + $0x338] sm:$0xff]
  %v138 = vld [vmem:[%s1 + $0x340] sm:$0xff]
  %v139 = vld [vmem:[%s1 + $0x348] sm:$0xff]
  %v140 = vld [vmem:[%s1 + $0x350] sm:$0xff]
  %v141 = vld [vmem:[%s1 + $0x358] sm:$0xff]
  %v142 = vld [vmem:[%s1 + $0x360] sm:$0xff]
  %v143 = vld [vmem:[%s1 + $0x368] sm:$0xff]
  %v144 = vld [vmem:[%s1 + $0x370] sm:$0xff]
  %v145 = vld [vmem:[%s1 + $0x378] sm:$0xff]
  %v146 = vld [vmem:[%s1 + $0x380] sm:$0xff]
  %v147 = vld [vmem:[%s1 + $0x388] sm:$0xff]
  %v148 = vld [vmem:[%s1 + $0x390] sm:$0xff]
  %v149 = vld [vmem:[%s1 + $0x398] sm:$0xff]
  %v150 = vld [vmem:[%s1 + $0x3a0] sm:$0xff]
  %v151 = vld [vmem:[%s1 + $0x3a8] sm:$0xff]
  %v152 = vld [vmem:[%s1 + $0x3b0] sm:$0xff]
  %v153 = vld [vmem:[%s1 + $0x3b8] sm:$0xff]
  %v154 = vld [vmem:[%s1 + $0x3c0] sm:$0xff]
  %v155 = vld [vmem:[%s1 + $0x3c8] sm:$0xff]
  %v156 = vld [vmem:[%s1 + $0x3d0] sm:$0xff]
  %v157 = vld [vmem:[%s1 + $0x3d8] sm:$0xff]
  %v158 = vld [vmem:[%s1 + $0x3e0] sm:$0xff]
  %v159 = vld [vmem:[%s1 + $0x3e8] sm:$0xff]
  %v160 = vld [vmem:[%s1 + $0x3f0] sm:$0xff]
  %v161 = vld [vmem:[%s1 + $0x3f8] sm:$0xff]
  %v162 = vld [vmem:[%s1 + $0x400] sm:$0xff]
  %v163 = vld [vmem:[%s1 + $0x408] sm:$0xff]
  %v164 = vld [vmem:[%s1 + $0x410] sm:$0xff]
  %v165 = vld [vmem:[%s1 + $0x418] sm:$0xff]
  %v166 = vld [vmem:[%s1 + $0x420] sm:$0xff]
  %v167 = vld [vmem:[%s1 + $0x428] sm:$0xff]
  %v168 = vld [vmem:[%s1 + $0x430] sm:$0xff]
  %v169 = vld [vmem:[%s1 + $0x438] sm:$0xff]
  %v170 = vld [vmem:[%s1 + $0x440] sm:$0xff]
  %v171 = vld [vmem:[%s1 + $0x448] sm:$0xff]
  %v172 = vld [vmem:[%s1 + $0x450] sm:$0xff]
  %v173 = vld [vmem:[%s1 + $0x458] sm:$0xff]
  %v174 = vld [vmem:[%s1 + $0x460] sm:$0xff]
  %v175 = vld [vmem:[%s1 + $0x468] sm:$0xff]
  %v176 = vld [vmem:[%s1 + $0x470] sm:$0xff]
  %v177 = vld [vmem:[%s1 + $0x478] sm:$0xff]
  %v178 = vld [vmem:[%s1 + $0x480] sm:$0xff]
  %v179 = vld [vmem:[%s1 + $0x488] sm:$0xff]
  %v180 = vld [vmem:[%s1 + $0x490] sm:$0xff]
  %v181 = vld [vmem:[%s1 + $0x498] sm:$0xff]
  %v182 = vld [vmem:[%s1 + $0x4a0] sm:$0xff]
  %v183 = vld [vmem:[%s1 + $0x4a8] sm:$0xff]
  %v184 = vld [vmem:[%s1 + $0x4b0] sm:$0xff]
  %v185 = vld [vmem:[%s1 + $0x4b8] sm:$0xff]
  %v186 = vld [vmem:[%s1 + $0x4c0] sm:$0xff]
  %v187 = vld [vmem:[%s1 + $0x4c8] sm:$0xff]
  %v188 = vld [vmem:[%s1 + $0x4d0] sm:$0xff]
  %v189 = vld [vmem:[%s1 + $0x4d8] sm:$0xff]
  %v190 = vld [vmem:[%s1 + $0x4e0] sm:$0xff]
  %v191 = vld [vmem:[%s1 + $0x4e8] sm:$0xff]
  %v192 = vld [vmem:[%s1 + $0x4f0] sm:$0xff]
  %v193 = vld [vmem:[%s1 + $0x4f8] sm:$0xff]
  %v194 = vld [vmem:[%s1 + $0x500] sm:$0xff]
  %v195 = vld [vmem:[%s1 + $0x508] sm:$0xff]
  %v196 = vld [vmem:[%s1 + $0x510] sm:$0xff]
  %v197 = vld [vmem:[%s1 + $0x518] sm:$0xff]
  %v198 = vld [vmem:[%s1 + $0x520] sm:$0xff]
  %v199 = vld [vmem:[%s1 + $0x528] sm:$0xff]
  %v200 = vld [vmem:[%s1 + $0x530] sm:$0xff]
  %v201 = vld [vmem:[%s1 + $0x538] sm:$0xff]
  %v202 = vld [vmem:[%s1 + $0x540] sm:$0xff]
  %v203 = vld [vmem:[%s1 + $0x548] sm:$0xff]
  %v204 = vld [vmem:[%s1 + $0x550] sm:$0xff]
  %v205 = vld [vmem:[%s1 + $0x558] sm:$0xff]
  %v206 = vld [vmem:[%s1 + $0x560] sm:$0xff]
  %v207 = vld [vmem:[%s1 + $0x568] sm:$0xff]
  %v208 = vld [vmem:[%s1 + $0x570] sm:$0xff]
  %v209 = vld [vmem:[%s1 + $0x578] sm:$0xff]
  %v210 = vld [vmem:[%s1 + $0x580] sm:$0xff]
  %v211 = vld [vmem:[%s1 + $0x588] sm:$0xff]
  %v212 = vld [vmem:[%s1 + $0x590] sm:$0xff]
  %v213 = vld [vmem:[%s1 + $0x598] sm:$0xff]
  %v214 = vld [vmem:[%s1 + $0x5a0] sm:$0xff]
  %v215 = vld [vmem:[%s1 + $0x5a8] sm:$0xff]
  %v216 = vld [vmem:[%s1 + $0x5b0] sm:$0xff]
  %v217 = vld [vmem:[%s1 + $0x5b8] sm:$0xff]
  %v218 = vld [vmem:[%s1 + $0x5c0] sm:$0xff]
  %v219 = vld [vmem:[%s1 + $0x5c8] sm:$0xff]
  %v220 = vld [vmem:[%s1 + $0x5d0] sm:$0xff]
  %v221 = vld [vmem:[%s1 + $0x5d8] sm:$0xff]
  %v222 = vld [vmem:[%s1 + $0x5e0] sm:$0xff]
  %v223 = vld [vmem:[%s1 + $0x5e8] sm:$0xff]
  %v224 = vld [vmem:[%s1 + $0x5f0] sm:$0xff]
  %v225 = vld [vmem:[%s1 + $0x5f8] sm:$0xff]
  %v226 = vld [vmem:[%s1 + $0x600] sm:$0xff]
  %v227 = vld [vmem:[%s1 + $0x608] sm:$0xff]
  %v228 = vld [vmem:[%s1 + $0x610] sm:$0xff]
  %v229 = vld [vmem:[%s1 + $0x618] sm:$0xff]
  %v230 = vld [vmem:[%s1 + $0x620] sm:$0xff]
  %v231 = vld [vmem:[%s1 + $0x628] sm:$0xff]
  %v232 = vld [vmem:[%s1 + $0x630] sm:$0xff]
  %v233 = vld [vmem:[%s1 + $0x638] sm:$0xff]
  %v234 = vld [vmem:[%s1 + $0x640] sm:$0xff]
  %v235 = vld [vmem:[%s1 + $0x648] sm:$0xff]
  %v236 = vld [vmem:[%s1 + $0x650] sm:$0xff]
  %v237 = vld [vmem:[%s1 + $0x658] sm:$0xff]
  %v238 = vld [vmem:[%s1 + $0x660] sm:$0xff]
  %v239 = vld [vmem:[%s1 + $0x668] sm:$0xff]
  %v240 = vld [vmem:[%s1 + $0x670] sm:$0xff]
  %v241 = vld [vmem:[%s1 + $0x678] sm:$0xff]
  %v242 = vld [vmem:[%s1 + $0x680] sm:$0xff]
  %v243 = vld [vmem:[%s1 + $0x688] sm:$0xff]
  %v244 = vld [vmem:[%s1 + $0x690] sm:$0xff]
  %v245 = vld [vmem:[%s1 + $0x698] sm:$0xff]
  %v246 = vld [vmem:[%s1 + $0x6a0] sm:$0xff]
  %v247 = vld [vmem:[%s1 + $0x6a8] sm:$0xff]
  %v248 = vld [vmem:[%s1 + $0x6b0] sm:$0xff]
  %v249 = vld [vmem:[%s1 + $0x6b8] sm:$0xff]
  %v250 = vld [vmem:[%s1 + $0x6c0] sm:$0xff]
  %v251 = vld [vmem:[%s1 + $0x6c8] sm:$0xff]
  %v252 = vld [vmem:[%s1 + $0x6d0] sm:$0xff]
  %v253 = vld [vmem:[%s1 + $0x6d8] sm:$0xff]
  %v254 = vld [vmem:[%s1 + $0x6e0] sm:$0xff]
  %v255 = vld [vmem:[%s1 + $0x6e8] sm:$0xff]
  %v256 = vld [vmem:[%s1 + $0x6f0] sm:$0xff]
  %v257 = vld [vmem:[%s1 + $0x6f8] sm:$0xff]
  %v258 = vld [vmem:[%s1 + $0x700] sm:$0xff]
  %v259 = vld [vmem:[%s1 + $0x708] sm:$0xff]
  %v260 = vld [vmem:[%s1 + $0x710] sm:$0xff]
  %v261 = vld [vmem:[%s1 + $0x718] sm:$0xff]
  %v262 = vld [vmem:[%s1 + $0x720] sm:$0xff]
  %v263 = vld [vmem:[%s1 + $0x728] sm:$0xff]
  %v264 = vld [vmem:[%s1 + $0x730] sm:$0xff]
  %v265 = vld [vmem:[%s1 + $0x738] sm:$0xff]
  %v266 = vld [vmem:[%s1 + $0x740] sm:$0xff]
  %v267 = vld [vmem:[%s1 + $0x748] sm:$0xff]
  %v268 = vld [vmem:[%s1 + $0x750] sm:$0xff]
  %v269 = vld [vmem:[%s1 + $0x758] sm:$0xff]
  %v270 = vld [vmem:[%s1 + $0x760] sm:$0xff]
  %v271 = vld [vmem:[%s1 + $0x768] sm:$0xff]
  %v272 = vld [vmem:[%s1 + $0x770] sm:$0xff]
  %v273 = vld [vmem:[%s1 + $0x778] sm:$0xff]
  %v274 = vld [vmem:[%s1 + $0x780] sm:$0xff]
  %v275 = vld [vmem:[%s1 + $0x788] sm:$0xff]
  %v276 = vld [vmem:[%s1 + $0x790] sm:$0xff]
  %v277 = vld [vmem:[%s1 + $0x798] sm:$0xff]
  %v278 = vld [vmem:[%s1 + $0x7a0] sm:$0xff]
  %v279 = vld [vmem:[%s1 + $0x7a8] sm:$0xff]
  %v280 = vld [vmem:[%s1 + $0x7b0] sm:$0xff]
  %v281 = vld [vmem:[%s1 + $0x7b8] sm:$0xff]
  %v282 = vld [vmem:[%s1 + $0x7c0] sm:$0xff]
  %v283 = vld [vmem:[%s1 + $0x7c8] sm:$0xff]
  %v284 = vld [vmem:[%s1 + $0x7d0] sm:$0xff]
  %v285 = vld [vmem:[%s1 + $0x7d8] sm:$0xff]
  %v286 = vld [vmem:[%s1 + $0x7e0] sm:$0xff]
  %v287 = vld [vmem:[%s1 + $0x7e8] sm:$0xff]
  %v288 = vld [vmem:[%s1 + $0x7f0] sm:$0xff]
  %v289 = vld [vmem:[%s1 + $0x7f8] sm:$0xff]
  %v290 = vld [vmem:[%s1 + $0x800] sm:$0xff]
  %v291 = vld [vmem:[%s1 + $0x808] sm:$0xff]
  %v292 = vld [vmem:[%s1 + $0x810] sm:$0xff]
  %v293 = vld [vmem:[%s1 + $0x818] sm:$0xff]
  %v294 = vld [vmem:[%s1 + $0x820] sm:$0xff]
  %v295 = vld [vmem:[%s1 + $0x828] sm:$0xff]
  %v296 = vld [vmem:[%s1 + $0x830] sm:$0xff]
  %v297 = vld [vmem:[%s1 + $0x838] sm:$0xff]
  %v298 = vld [vmem:[%s1 + $0x840] sm:$0xff]
  %v299 = vld [vmem:[%s1 + $0x848] sm:$0xff]
  %v300 = vld [vmem:[%s1 + $0x850] sm:$0xff]
  %v301 = vld [vmem:[%s1 + $0x858] sm:$0xff]
  %v302 = vld [vmem:[%s1 + $0x860] sm:$0xff]
  %v303 = vld [vmem:[%s1 + $0x868] sm:$0xff]
  %v304 = vld [vmem:[%s1 + $0x870] sm:$0xff]
  %v305 = vld [vmem:[%s1 + $0x878] sm:$0xff]
  %v306 = vld [vmem:[%s1 + $0x880] sm:$0xff]
  %v307 = vld [vmem:[%s1 + $0x888] sm:$0xff]
  %v308 = vld [vmem:[%s1 + $0x890] sm:$0xff]
  %v309 = vld [vmem:[%s1 + $0x898] sm:$0xff]
  %v310 = vld [vmem:[%s1 + $0x8a0] sm:$0xff]
  %v311 = vld [vmem:[%s1 + $0x8a8] sm:$0xff]
  %v312 = vld [vmem:[%s1 + $0x8b0] sm:$0xff]
  %v313 = vld [vmem:[%s1 + $0x8b8] sm:$0xff]
  %v314 = vld [vmem:[%s1 + $0x8c0] sm:$0xff]
  %v315 = vld [vmem:[%s1 + $0x8c8] sm:$0xff]
  %v316 = vld [vmem:[%s1 + $0x8d0] sm:$0xff]
  %v317 = vld [vmem:[%s1 + $0x8d8] sm:$0xff]
  %v318 = vld [vmem:[%s1 + $0x8e0] sm:$0xff]
  %v319 = vld [vmem:[%s1 + $0x8e8] sm:$0xff]
  %v320 = vld [vmem:[%s1 + $0x8f0] sm:$0xff]
  %v321 = vld [vmem:[%s1 + $0x8f8] sm:$0xff]
  %v322 = vld [vmem:[%s1 + $0x900] sm:$0xff]
  %v323 = vld [vmem:[%s1 + $0x908] sm:$0xff]
  %v324 = vld [vmem:[%s1 + $0x910] sm:$0xff]
  %v325 = vld [vmem:[%s1 + $0x918] sm:$0xff]
  %v326 = vld [vmem:[%s1 + $0x920] sm:$0xff]
  %v327 = vld [vmem:[%s1 + $0x928] sm:$0xff]
  %v328 = vld [vmem:[%s1 + $0x930] sm:$0xff]
  %v329 = vld [vmem:[%s1 + $0x938] sm:$0xff]
  %v330 = vld [vmem:[%s1 + $0x940] sm:$0xff]
  %v331 = vld [vmem:[%s1 + $0x948] sm:$0xff]
  %v332 = vld [vmem:[%s1 + $0x950] sm:$0xff]
  %v333 = vld [vmem:[%s1 + $0x958] sm:$0xff]
  %v334 = vld [vmem:[%s1 + $0x960] sm:$0xff]
  %v335 = vld [vmem:[%s1 + $0x968] sm:$0xff]
  %v336 = vld [vmem:[%s1 + $0x970] sm:$0xff]
  %v337 = vld [vmem:[%s1 + $0x978] sm:$0xff]
  %v338 = vld [vmem:[%s1 + $0x980] sm:$0xff]
  %v339 = vld [vmem:[%s1 + $0x988] sm:$0xff]
  %v340 = vld [vmem:[%s1 + $0x990] sm:$0xff]
  %v341 = vld [vmem:[%s1 + $0x998] sm:$0xff]
  %v342 = vld [vmem:[%s1 + $0x9a0] sm:$0xff]
  %v343 = vld [vmem:[%s1 + $0x9a8] sm:$0xff]
  %v344 = vld [vmem:[%s1 + $0x9b0] sm:$0xff]
  %v345 = vld [vmem:[%s1 + $0x9b8] sm:$0xff]
  %v346 = vld [vmem:[%s1 + $0x9c0] sm:$0xff]
  %v347 = vld [vmem:[%s1 + $0x9c8] sm:$0xff]
  %v348 = vld [vmem:[%s1 + $0x9d0] sm:$0xff]
  %v349 = vld [vmem:[%s1 + $0x9d8] sm:$0xff]
  %v350 = vld [vmem:[%s1 + $0x9e0] sm:$0xff]
  %v351 = vld [vmem:[%s1 + $0x9e8] sm:$0xff]
  %v352 = vld [vmem:[%s1 + $0x9f0] sm:$0xff]
  %v353 = vld [vmem:[%s1 + $0x9f8] sm:$0xff]
  %v354 = vld [vmem:[%s1 + $0xa00] sm:$0xff]
  %v355 = vld [vmem:[%s1 + $0xa08] sm:$0xff]
  %v356 = vld [vmem:[%s1 + $0xa10] sm:$0xff]
  %v357 = vld [vmem:[%s1 + $0xa18] sm:$0xff]
  %v358 = vld [vmem:[%s1 + $0xa20] sm:$0xff]
  %v359 = vld [vmem:[%s1 + $0xa28] sm:$0xff]
  %v360 = vld [vmem:[%s1 + $0xa30] sm:$0xff]
  %v361 = vld [vmem:[%s1 + $0xa38] sm:$0xff]
  %v362 = vld [vmem:[%s1 + $0xa40] sm:$0xff]
  %v363 = vld [vmem:[%s1 + $0xa48] sm:$0xff]
  %v364 = vld [vmem:[%s1 + $0xa50] sm:$0xff]
  %v365 = vld [vmem:[%s1 + $0xa58] sm:$0xff]
  %v366 = vld [vmem:[%s1 + $0xa60] sm:$0xff]
  %v367 = vld [vmem:[%s1 + $0xa68] sm:$0xff]
  %v368 = vld [vmem:[%s1 + $0xa70] sm:$0xff]
  %v369 = vld [vmem:[%s1 + $0xa78] sm:$0xff]
  %v370 = vld [vmem:[%s1 + $0xa80] sm:$0xff]
  %v371 = vld [vmem:[%s1 + $0xa88] sm:$0xff]
  %v372 = vld [vmem:[%s1 + $0xa90] sm:$0xff]
  %v373 = vld [vmem:[%s1 + $0xa98] sm:$0xff]
  %v374 = vld [vmem:[%s1 + $0xaa0] sm:$0xff]
  %v375 = vld [vmem:[%s1 + $0xaa8] sm:$0xff]
  %v376 = vld [vmem:[%s1 + $0xab0] sm:$0xff]
  %v377 = vld [vmem:[%s1 + $0xab8] sm:$0xff]
  %v378 = vld [vmem:[%s1 + $0xac0] sm:$0xff]
  %v379 = vld [vmem:[%s1 + $0xac8] sm:$0xff]
  %v380 = vld [vmem:[%s1 + $0xad0] sm:$0xff]
  %v381 = vld [vmem:[%s1 + $0xad8] sm:$0xff]
  %v382 = vld [vmem:[%s1 + $0xae0] sm:$0xff]
  %v383 = vld [vmem:[%s1 + $0xae8] sm:$0xff]
  %v384 = vld [vmem:[%s1 + $0xaf0] sm:$0xff]
  %v385 = vld [vmem:[%s1 + $0xaf8] sm:$0xff]
  %v386 = vld [vmem:[%s1 + $0xb00] sm:$0xff]
  %v387 = vld [vmem:[%s1 + $0xb08] sm:$0xff]
  %v388 = vld [vmem:[%s1 + $0xb10] sm:$0xff]
  %v389 = vld [vmem:[%s1 + $0xb18] sm:$0xff]
  %v390 = vld [vmem:[%s1 + $0xb20] sm:$0xff]
  %v391 = vld [vmem:[%s1 + $0xb28] sm:$0xff]
  %v392 = vld [vmem:[%s1 + $0xb30] sm:$0xff]
  %v393 = vld [vmem:[%s1 + $0xb38] sm:$0xff]
  %v394 = vld [vmem:[%s1 + $0xb40] sm:$0xff]
  %v395 = vld [vmem:[%s1 + $0xb48] sm:$0xff]
  %v396 = vld [vmem:[%s1 + $0xb50] sm:$0xff]
  %v397 = vld [vmem:[%s1 + $0xb58] sm:$0xff]
  %v398 = vld [vmem:[%s1 + $0xb60] sm:$0xff]
  %v399 = vld [vmem:[%s1 + $0xb68] sm:$0xff]
  %v400 = vld [vmem:[%s1 + $0xb70] sm:$0xff]
  %v401 = vld [vmem:[%s1 + $0xb78] sm:$0xff]
  %v402 = vld [vmem:[%s1 + $0xb80] sm:$0xff]
  %v403 = vld [vmem:[%s1 + $0xb88] sm:$0xff]
  %v404 = vld [vmem:[%s1 + $0xb90] sm:$0xff]
  %v405 = vld [vmem:[%s1 + $0xb98] sm:$0xff]
  %v406 = vld [vmem:[%s1 + $0xba0] sm:$0xff]
  %v407 = vld [vmem:[%s1 + $0xba8] sm:$0xff]
  %v408 = vld [vmem:[%s1 + $0xbb0] sm:$0xff]
  %v409 = vld [vmem:[%s1 + $0xbb8] sm:$0xff]
  %v410 = vld [vmem:[%s1 + $0xbc0] sm:$0xff]
  %v411 = vld [vmem:[%s1 + $0xbc8] sm:$0xff]
  %v412 = vld [vmem:[%s1 + $0xbd0] sm:$0xff]
  %v413 = vld [vmem:[%s1 + $0xbd8] sm:$0xff]
  %v414 = vld [vmem:[%s1 + $0xbe0] sm:$0xff]
  %v415 = vld [vmem:[%s1 + $0xbe8] sm:$0xff]
  %v416 = vld [vmem:[%s1 + $0xbf0] sm:$0xff]
  %v417 = vld [vmem:[%s1 + $0xbf8] sm:$0xff]
  %v418 = vld [vmem:[%s1 + $0xc00] sm:$0xff]
  %v419 = vld [vmem:[%s1 + $0xc08] sm:$0xff]
  %v420 = vld [vmem:[%s1 + $0xc10] sm:$0xff]
  %v421 = vld [vmem:[%s1 + $0xc18] sm:$0xff]
  %v422 = vld [vmem:[%s1 + $0xc20] sm:$0xff]
  %v423 = vld [vmem:[%s1 + $0xc28] sm:$0xff]
  %v424 = vld [vmem:[%s1 + $0xc30] sm:$0xff]
  %v425 = vld [vmem:[%s1 + $0xc38] sm:$0xff]
  %v426 = vld [vmem:[%s1 + $0xc40] sm:$0xff]
  %v427 = vld [vmem:[%s1 + $0xc48] sm:$0xff]
  %v428 = vld [vmem:[%s1 + $0xc50] sm:$0xff]
  %v429 = vld [vmem:[%s1 + $0xc58] sm:$0xff]
  %v430 = vld [vmem:[%s1 + $0xc60] sm:$0xff]
  %v431 = vld [vmem:[%s1 + $0xc68] sm:$0xff]
  %v432 = vld [vmem:[%s1 + $0xc70] sm:$0xff]
  %v433 = vld [vmem:[%s1 + $0xc78] sm:$0xff]
  %v434 = vld [vmem:[%s1 + $0xc80] sm:$0xff]
  %v435 = vld [vmem:[%s1 + $0xc88] sm:$0xff]
  %v436 = vld [vmem:[%s1 + $0xc90] sm:$0xff]
  %v437 = vld [vmem:[%s1 + $0xc98] sm:$0xff]
  %v438 = vld [vmem:[%s1 + $0xca0] sm:$0xff]
  %v439 = vld [vmem:[%s1 + $0xca8] sm:$0xff]
  %v440 = vld [vmem:[%s1 + $0xcb0] sm:$0xff]
  %v441 = vld [vmem:[%s1 + $0xcb8] sm:$0xff]
  %v442 = vld [vmem:[%s1 + $0xcc0] sm:$0xff]
  %v443 = vld [vmem:[%s1 + $0xcc8] sm:$0xff]
  %v444 = vld [vmem:[%s1 + $0xcd0] sm:$0xff]
  %v445 = vld [vmem:[%s1 + $0xcd8] sm:$0xff]
  %v446 = vld [vmem:[%s1 + $0xce0] sm:$0xff]
  %v447 = vld [vmem:[%s1 + $0xce8] sm:$0xff]
  %v448 = vld [vmem:[%s1 + $0xcf0] sm:$0xff]
  %v449 = vld [vmem:[%s1 + $0xcf8] sm:$0xff]
  %v450 = vld [vmem:[%s1 + $0xd00] sm:$0xff]
  %v451 = vld [vmem:[%s1 + $0xd08] sm:$0xff]
  %v452 = vld [vmem:[%s1 + $0xd10] sm:$0xff]
  %v453 = vld [vmem:[%s1 + $0xd18] sm:$0xff]
  %v454 = vld [vmem:[%s1 + $0xd20] sm:$0xff]
  %v455 = vld [vmem:[%s1 + $0xd28] sm:$0xff]
  %v456 = vld [vmem:[%s1 + $0xd30] sm:$0xff]
  %v457 = vld [vmem:[%s1 + $0xd38] sm:$0xff]
  %v458 = vld [vmem:[%s1 + $0xd40] sm:$0xff]
  %v459 = vld [vmem:[%s1 + $0xd48] sm:$0xff]
  %v460 = vld [vmem:[%s1 + $0xd50] sm:$0xff]
  %v461 = vld [vmem:[%s1 + $0xd58] sm:$0xff]
  %v462 = vld [vmem:[%s1 + $0xd60] sm:$0xff]
  %v463 = vld [vmem:[%s1 + $0xd68] sm:$0xff]
  %v464 = vld [vmem:[%s1 + $0xd70] sm:$0xff]
  %v465 = vld [vmem:[%s1 + $0xd78] sm:$0xff]
  %v466 = vld [vmem:[%s1 + $0xd80] sm:$0xff]
  %v467 = vld [vmem:[%s1 + $0xd88] sm:$0xff]
  %v468 = vld [vmem:[%s1 + $0xd90] sm:$0xff]
  %v469 = vld [vmem:[%s1 + $0xd98] sm:$0xff]
  %v470 = vld [vmem:[%s1 + $0xda0] sm:$0xff]
  %v471 = vld [vmem:[%s1 + $0xda8] sm:$0xff]
  %v472 = vld [vmem:[%s1 + $0xdb0] sm:$0xff]
  %v473 = vld [vmem:[%s1 + $0xdb8] sm:$0xff]
  %v474 = vld [vmem:[%s1 + $0xdc0] sm:$0xff]
  %v475 = vld [vmem:[%s1 + $0xdc8] sm:$0xff]
  %v476 = vld [vmem:[%s1 + $0xdd0] sm:$0xff]
  %v477 = vld [vmem:[%s1 + $0xdd8] sm:$0xff]
  %v478 = vld [vmem:[%s1 + $0xde0] sm:$0xff]
  %v479 = vld [vmem:[%s1 + $0xde8] sm:$0xff]
  %v480 = vld [vmem:[%s1 + $0xdf0] sm:$0xff]
  %v481 = vld [vmem:[%s1 + $0xdf8] sm:$0xff]
  %v482 = vld [vmem:[%s1 + $0xe00] sm:$0xff]
  %v483 = vld [vmem:[%s1 + $0xe08] sm:$0xff]
  %v484 = vld [vmem:[%s1 + $0xe10] sm:$0xff]
  %v485 = vld [vmem:[%s1 + $0xe18] sm:$0xff]
  %v486 = vld [vmem:[%s1 + $0xe20] sm:$0xff]
  %v487 = vld [vmem:[%s1 + $0xe28] sm:$0xff]
  %v488 = vld [vmem:[%s1 + $0xe30] sm:$0xff]
  %v489 = vld [vmem:[%s1 + $0xe38] sm:$0xff]
  %v490 = vld [vmem:[%s1 + $0xe40] sm:$0xff]
  %v491 = vld [vmem:[%s1 + $0xe48] sm:$0xff]
  %v492 = vld [vmem:[%s1 + $0xe50] sm:$0xff]
  %v493 = vld [vmem:[%s1 + $0xe58] sm:$0xff]
  %v494 = vld [vmem:[%s1 + $0xe60] sm:$0xff]
  %v495 = vld [vmem:[%s1 + $0xe68] sm:$0xff]
  %v496 = vld [vmem:[%s1 + $0xe70] sm:$0xff]
  %v497 = vld [vmem:[%s1 + $0xe78] sm:$0xff]
  %v498 = vld [vmem:[%s1 + $0xe80] sm:$0xff]
  %v499 = vld [vmem:[%s1 + $0xe88] sm:$0xff]
  %v500 = vld [vmem:[%s1 + $0xe90] sm:$0xff]
  %v501 = vld [vmem:[%s1 + $0xe98] sm:$0xff]
  %v502 = vld [vmem:[%s1 + $0xea0] sm:$0xff]
  %v503 = vld [vmem:[%s1 + $0xea8] sm:$0xff]
  %v504 = vld [vmem:[%s1 + $0xeb0] sm:$0xff]
  %v505 = vld [vmem:[%s1 + $0xeb8] sm:$0xff]
  %v506 = vld [vmem:[%s1 + $0xec0] sm:$0xff]
  %v507 = vld [vmem:[%s1 + $0xec8] sm:$0xff]
  %v508 = vld [vmem:[%s1 + $0xed0] sm:$0xff]
  %v509 = vld [vmem:[%s1 + $0xed8] sm:$0xff]
  %v510 = vld [vmem:[%s1 + $0xee0] sm:$0xff]
  %v511 = vld [vmem:[%s1 + $0xee8] sm:$0xff]
  %v512 = vld [vmem:[%s1 + $0xef0] sm:$0xff]
  %v513 = vld [vmem:[%s1 + $0xef8] sm:$0xff]
  %v514 = vld [vmem:[%s1 + $0xf00] sm:$0xff]
  %v515 = vld [vmem:[%s1 + $0xf08] sm:$0xff]
  %v516 = vld [vmem:[%s1 + $0xf10] sm:$0xff]
  %v517 = vld [vmem:[%s1 + $0xf18] sm:$0xff]
  %v518 = vld [vmem:[%s1 + $0xf20] sm:$0xff]
  %v519 = vld [vmem:[%s1 + $0xf28] sm:$0xff]
  %v520 = vld [vmem:[%s1 + $0xf30] sm:$0xff]
  %v521 = vld [vmem:[%s1 + $0xf38] sm:$0xff]
  %v522 = vld [vmem:[%s1 + $0xf40] sm:$0xff]
  %v523 = vld [vmem:[%s1 + $0xf48] sm:$0xff]
  %v524 = vld [vmem:[%s1 + $0xf50] sm:$0xff]
  %v525 = vld [vmem:[%s1 + $0xf58] sm:$0xff]
  %v526 = vld [vmem:[%s1 + $0xf60] sm:$0xff]
  %v527 = vld [vmem:[%s1 + $0xf68] sm:$0xff]
  %v528 = vld [vmem:[%s1 + $0xf70] sm:$0xff]
  %v529 = vld [vmem:[%s1 + $0xf78] sm:$0xff]
  %v530 = vld [vmem:[%s1 + $0xf80] sm:$0xff]
  %v531 = vld [vmem:[%s1 + $0xf88] sm:$0xff]
  %v532 = vld [vmem:[%s1 + $0xf90] sm:$0xff]
  %v533 = vld [vmem:[%s1 + $0xf98] sm:$0xff]
  %v534 = vld [vmem:[%s1 + $0xfa0] sm:$0xff]
  %v535 = vld [vmem:[%s1 + $0xfa8] sm:$0xff]
  %v536 = vld [vmem:[%s1 + $0xfb0] sm:$0xff]
  %v537 = vld [vmem:[%s1 + $0xfb8] sm:$0xff]
  %v538 = vld [vmem:[%s1 + $0xfc0] sm:$0xff]
  %v539 = vld [vmem:[%s1 + $0xfc8] sm:$0xff]
  %v540 = vld [vmem:[%s1 + $0xfd0] sm:$0xff]
  %v541 = vld [vmem:[%s1 + $0xfd8] sm:$0xff]
  %v542 = vld [vmem:[%s1 + $0xfe0] sm:$0xff]
  %v543 = vld [vmem:[%s1 + $0xfe8] sm:$0xff]
  %v544 = vld [vmem:[%s1 + $0xff0] sm:$0xff]
  %v545 = vld [vmem:[%s1 + $0xff8] sm:$0xff]
  %v546 = vld [vmem:[%s2] sm:$0xff]
  %v548 = vperm.slane %v546, 0
  %v549 = vperm.slane %v546, 1
  %v550 = vperm.slane %v546, 2
  %v551 = vperm.slane %v546, 3
  %v552 = vperm.slane %v546, 4
  %v553 = vperm.slane %v546, 5
  %v554 = vperm.slane %v546, 6
  %v555 = vperm.slane %v546, 7
  %v572 = vunpack.c.l.b16 %v26
  %v573 = vunpack.c.h.b16 %v26
  %v574 = vunpack.c.l.b16 %v27
  %v575 = vunpack.c.h.b16 %v27
  %v576 = vunpack.c.l.b16 %v28
  %v577 = vunpack.c.h.b16 %v28
  %v578 = vunpack.c.l.b16 %v29
  %v579 = vunpack.c.h.b16 %v29
  %v580 = vunpack.c.l.b16 %v30
  %v581 = vunpack.c.h.b16 %v30
  %v582 = vunpack.c.l.b16 %v31
  %v583 = vunpack.c.h.b16 %v31
  %v584 = vunpack.c.l.b16 %v32
  %v585 = vunpack.c.h.b16 %v32
  %v586 = vunpack.c.l.b16 %v33
  %v587 = vunpack.c.h.b16 %v33
  %v588 = vpack.c.b16 %v580, %v572
  %v589 = vpack.c.b16 %v581, %v573
  %v590 = vpack.c.b16 %v582, %v574
  %v591 = vpack.c.b16 %v583, %v575
  %v592 = vpack.c.b16 %v584, %v576
  %v593 = vpack.c.b16 %v585, %v577
  %v594 = vpack.c.b16 %v586, %v578
  %v595 = vpack.c.b16 %v587, %v579
  %v1116 = vunpack.c.l.b16 %v34
  %v1117 = vunpack.c.h.b16 %v34
  %v1118 = vunpack.c.l.b16 %v35
  %v1119 = vunpack.c.h.b16 %v35
  %v1120 = vunpack.c.l.b16 %v36
  %v1121 = vunpack.c.h.b16 %v36
  %v1122 = vunpack.c.l.b16 %v37
  %v1123 = vunpack.c.h.b16 %v37
  %v1124 = vunpack.c.l.b16 %v38
  %v1125 = vunpack.c.h.b16 %v38
  %v1126 = vunpack.c.l.b16 %v39
  %v1127 = vunpack.c.h.b16 %v39
  %v1128 = vunpack.c.l.b16 %v40
  %v1129 = vunpack.c.h.b16 %v40
  %v1130 = vunpack.c.l.b16 %v41
  %v1131 = vunpack.c.h.b16 %v41
  %v1132 = vunpack.c.l.b16 %v42
  %v1133 = vunpack.c.h.b16 %v42
  %v1134 = vunpack.c.l.b16 %v43
  %v1135 = vunpack.c.h.b16 %v43
  %v1136 = vunpack.c.l.b16 %v44
  %v1137 = vunpack.c.h.b16 %v44
  %v1138 = vunpack.c.l.b16 %v45
  %v1139 = vunpack.c.h.b16 %v45
  %v1140 = vunpack.c.l.b16 %v46
  %v1141 = vunpack.c.h.b16 %v46
  %v1142 = vunpack.c.l.b16 %v47
  %v1143 = vunpack.c.h.b16 %v47
  %v1144 = vunpack.c.l.b16 %v48
  %v1145 = vunpack.c.h.b16 %v48
  %v1146 = vunpack.c.l.b16 %v49
  %v1147 = vunpack.c.h.b16 %v49
  %v1148 = vunpack.c.l.b16 %v50
  %v1149 = vunpack.c.h.b16 %v50
  %v1150 = vunpack.c.l.b16 %v51
  %v1151 = vunpack.c.h.b16 %v51
  %v1152 = vunpack.c.l.b16 %v52
  %v1153 = vunpack.c.h.b16 %v52
  %v1154 = vunpack.c.l.b16 %v53
  %v1155 = vunpack.c.h.b16 %v53
  %v1156 = vunpack.c.l.b16 %v54
  %v1157 = vunpack.c.h.b16 %v54
  %v1158 = vunpack.c.l.b16 %v55
  %v1159 = vunpack.c.h.b16 %v55
  %v1160 = vunpack.c.l.b16 %v56
  %v1161 = vunpack.c.h.b16 %v56
  %v1162 = vunpack.c.l.b16 %v57
  %v1163 = vunpack.c.h.b16 %v57
  %v1164 = vunpack.c.l.b16 %v58
  %v1165 = vunpack.c.h.b16 %v58
  %v1166 = vunpack.c.l.b16 %v59
  %v1167 = vunpack.c.h.b16 %v59
  %v1168 = vunpack.c.l.b16 %v60
  %v1169 = vunpack.c.h.b16 %v60
  %v1170 = vunpack.c.l.b16 %v61
  %v1171 = vunpack.c.h.b16 %v61
  %v1172 = vunpack.c.l.b16 %v62
  %v1173 = vunpack.c.h.b16 %v62
  %v1174 = vunpack.c.l.b16 %v63
  %v1175 = vunpack.c.h.b16 %v63
  %v1176 = vunpack.c.l.b16 %v64
  %v1177 = vunpack.c.h.b16 %v64
  %v1178 = vunpack.c.l.b16 %v65
  %v1179 = vunpack.c.h.b16 %v65
  %v1180 = vunpack.c.l.b16 %v66
  %v1181 = vunpack.c.h.b16 %v66
  %v1182 = vunpack.c.l.b16 %v67
  %v1183 = vunpack.c.h.b16 %v67
  %v1184 = vunpack.c.l.b16 %v68
  %v1185 = vunpack.c.h.b16 %v68
  %v1186 = vunpack.c.l.b16 %v69
  %v1187 = vunpack.c.h.b16 %v69
  %v1188 = vunpack.c.l.b16 %v70
  %v1189 = vunpack.c.h.b16 %v70
  %v1190 = vunpack.c.l.b16 %v71
  %v1191 = vunpack.c.h.b16 %v71
  %v1192 = vunpack.c.l.b16 %v72
  %v1193 = vunpack.c.h.b16 %v72
  %v1194 = vunpack.c.l.b16 %v73
  %v1195 = vunpack.c.h.b16 %v73
  %v1196 = vunpack.c.l.b16 %v74
  %v1197 = vunpack.c.h.b16 %v74
  %v1198 = vunpack.c.l.b16 %v75
  %v1199 = vunpack.c.h.b16 %v75
  %v1200 = vunpack.c.l.b16 %v76
  %v1201 = vunpack.c.h.b16 %v76
  %v1202 = vunpack.c.l.b16 %v77
  %v1203 = vunpack.c.h.b16 %v77
  %v1204 = vunpack.c.l.b16 %v78
  %v1205 = vunpack.c.h.b16 %v78
  %v1206 = vunpack.c.l.b16 %v79
  %v1207 = vunpack.c.h.b16 %v79
  %v1208 = vunpack.c.l.b16 %v80
  %v1209 = vunpack.c.h.b16 %v80
  %v1210 = vunpack.c.l.b16 %v81
  %v1211 = vunpack.c.h.b16 %v81
  %v1212 = vunpack.c.l.b16 %v82
  %v1213 = vunpack.c.h.b16 %v82
  %v1214 = vunpack.c.l.b16 %v83
  %v1215 = vunpack.c.h.b16 %v83
  %v1216 = vunpack.c.l.b16 %v84
  %v1217 = vunpack.c.h.b16 %v84
  %v1218 = vunpack.c.l.b16 %v85
  %v1219 = vunpack.c.h.b16 %v85
  %v1220 = vunpack.c.l.b16 %v86
  %v1221 = vunpack.c.h.b16 %v86
  %v1222 = vunpack.c.l.b16 %v87
  %v1223 = vunpack.c.h.b16 %v87
  %v1224 = vunpack.c.l.b16 %v88
  %v1225 = vunpack.c.h.b16 %v88
  %v1226 = vunpack.c.l.b16 %v89
  %v1227 = vunpack.c.h.b16 %v89
  %v1228 = vunpack.c.l.b16 %v90
  %v1229 = vunpack.c.h.b16 %v90
  %v1230 = vunpack.c.l.b16 %v91
  %v1231 = vunpack.c.h.b16 %v91
  %v1232 = vunpack.c.l.b16 %v92
  %v1233 = vunpack.c.h.b16 %v92
  %v1234 = vunpack.c.l.b16 %v93
  %v1235 = vunpack.c.h.b16 %v93
  %v1236 = vunpack.c.l.b16 %v94
  %v1237 = vunpack.c.h.b16 %v94
  %v1238 = vunpack.c.l.b16 %v95
  %v1239 = vunpack.c.h.b16 %v95
  %v1240 = vunpack.c.l.b16 %v96
  %v1241 = vunpack.c.h.b16 %v96
  %v1242 = vunpack.c.l.b16 %v97
  %v1243 = vunpack.c.h.b16 %v97
  %v1244 = vunpack.c.l.b16 %v98
  %v1245 = vunpack.c.h.b16 %v98
  %v1246 = vunpack.c.l.b16 %v99
  %v1247 = vunpack.c.h.b16 %v99
  %v1248 = vunpack.c.l.b16 %v100
  %v1249 = vunpack.c.h.b16 %v100
  %v1250 = vunpack.c.l.b16 %v101
  %v1251 = vunpack.c.h.b16 %v101
  %v1252 = vunpack.c.l.b16 %v102
  %v1253 = vunpack.c.h.b16 %v102
  %v1254 = vunpack.c.l.b16 %v103
  %v1255 = vunpack.c.h.b16 %v103
  %v1256 = vunpack.c.l.b16 %v104
  %v1257 = vunpack.c.h.b16 %v104
  %v1258 = vunpack.c.l.b16 %v105
  %v1259 = vunpack.c.h.b16 %v105
  %v1260 = vunpack.c.l.b16 %v106
  %v1261 = vunpack.c.h.b16 %v106
  %v1262 = vunpack.c.l.b16 %v107
  %v1263 = vunpack.c.h.b16 %v107
  %v1264 = vunpack.c.l.b16 %v108
  %v1265 = vunpack.c.h.b16 %v108
  %v1266 = vunpack.c.l.b16 %v109
  %v1267 = vunpack.c.h.b16 %v109
  %v1268 = vunpack.c.l.b16 %v110
  %v1269 = vunpack.c.h.b16 %v110
  %v1270 = vunpack.c.l.b16 %v111
  %v1271 = vunpack.c.h.b16 %v111
  %v1272 = vunpack.c.l.b16 %v112
  %v1273 = vunpack.c.h.b16 %v112
  %v1274 = vunpack.c.l.b16 %v113
  %v1275 = vunpack.c.h.b16 %v113
  %v1276 = vunpack.c.l.b16 %v114
  %v1277 = vunpack.c.h.b16 %v114
  %v1278 = vunpack.c.l.b16 %v115
  %v1279 = vunpack.c.h.b16 %v115
  %v1280 = vunpack.c.l.b16 %v116
  %v1281 = vunpack.c.h.b16 %v116
  %v1282 = vunpack.c.l.b16 %v117
  %v1283 = vunpack.c.h.b16 %v117
  %v1284 = vunpack.c.l.b16 %v118
  %v1285 = vunpack.c.h.b16 %v118
  %v1286 = vunpack.c.l.b16 %v119
  %v1287 = vunpack.c.h.b16 %v119
  %v1288 = vunpack.c.l.b16 %v120
  %v1289 = vunpack.c.h.b16 %v120
  %v1290 = vunpack.c.l.b16 %v121
  %v1291 = vunpack.c.h.b16 %v121
  %v1292 = vunpack.c.l.b16 %v122
  %v1293 = vunpack.c.h.b16 %v122
  %v1294 = vunpack.c.l.b16 %v123
  %v1295 = vunpack.c.h.b16 %v123
  %v1296 = vunpack.c.l.b16 %v124
  %v1297 = vunpack.c.h.b16 %v124
  %v1298 = vunpack.c.l.b16 %v125
  %v1299 = vunpack.c.h.b16 %v125
  %v1300 = vunpack.c.l.b16 %v126
  %v1301 = vunpack.c.h.b16 %v126
  %v1302 = vunpack.c.l.b16 %v127
  %v1303 = vunpack.c.h.b16 %v127
  %v1304 = vunpack.c.l.b16 %v128
  %v1305 = vunpack.c.h.b16 %v128
  %v1306 = vunpack.c.l.b16 %v129
  %v1307 = vunpack.c.h.b16 %v129
  %v1308 = vunpack.c.l.b16 %v130
  %v1309 = vunpack.c.h.b16 %v130
  %v1310 = vunpack.c.l.b16 %v131
  %v1311 = vunpack.c.h.b16 %v131
  %v1312 = vunpack.c.l.b16 %v132
  %v1313 = vunpack.c.h.b16 %v132
  %v1314 = vunpack.c.l.b16 %v133
  %v1315 = vunpack.c.h.b16 %v133
  %v1316 = vunpack.c.l.b16 %v134
  %v1317 = vunpack.c.h.b16 %v134
  %v1318 = vunpack.c.l.b16 %v135
  %v1319 = vunpack.c.h.b16 %v135
  %v1320 = vunpack.c.l.b16 %v136
  %v1321 = vunpack.c.h.b16 %v136
  %v1322 = vunpack.c.l.b16 %v137
  %v1323 = vunpack.c.h.b16 %v137
  %v1324 = vunpack.c.l.b16 %v138
  %v1325 = vunpack.c.h.b16 %v138
  %v1326 = vunpack.c.l.b16 %v139
  %v1327 = vunpack.c.h.b16 %v139
  %v1328 = vunpack.c.l.b16 %v140
  %v1329 = vunpack.c.h.b16 %v140
  %v1330 = vunpack.c.l.b16 %v141
  %v1331 = vunpack.c.h.b16 %v141
  %v1332 = vunpack.c.l.b16 %v142
  %v1333 = vunpack.c.h.b16 %v142
  %v1334 = vunpack.c.l.b16 %v143
  %v1335 = vunpack.c.h.b16 %v143
  %v1336 = vunpack.c.l.b16 %v144
  %v1337 = vunpack.c.h.b16 %v144
  %v1338 = vunpack.c.l.b16 %v145
  %v1339 = vunpack.c.h.b16 %v145
  %v1340 = vunpack.c.l.b16 %v146
  %v1341 = vunpack.c.h.b16 %v146
  %v1342 = vunpack.c.l.b16 %v147
  %v1343 = vunpack.c.h.b16 %v147
  %v1344 = vunpack.c.l.b16 %v148
  %v1345 = vunpack.c.h.b16 %v148
  %v1346 = vunpack.c.l.b16 %v149
  %v1347 = vunpack.c.h.b16 %v149
  %v1348 = vunpack.c.l.b16 %v150
  %v1349 = vunpack.c.h.b16 %v150
  %v1350 = vunpack.c.l.b16 %v151
  %v1351 = vunpack.c.h.b16 %v151
  %v1352 = vunpack.c.l.b16 %v152
  %v1353 = vunpack.c.h.b16 %v152
  %v1354 = vunpack.c.l.b16 %v153
  %v1355 = vunpack.c.h.b16 %v153
  %v1356 = vunpack.c.l.b16 %v154
  %v1357 = vunpack.c.h.b16 %v154
  %v1358 = vunpack.c.l.b16 %v155
  %v1359 = vunpack.c.h.b16 %v155
  %v1360 = vunpack.c.l.b16 %v156
  %v1361 = vunpack.c.h.b16 %v156
  %v1362 = vunpack.c.l.b16 %v157
  %v1363 = vunpack.c.h.b16 %v157
  %v1364 = vunpack.c.l.b16 %v158
  %v1365 = vunpack.c.h.b16 %v158
  %v1366 = vunpack.c.l.b16 %v159
  %v1367 = vunpack.c.h.b16 %v159
  %v1368 = vunpack.c.l.b16 %v160
  %v1369 = vunpack.c.h.b16 %v160
  %v1370 = vunpack.c.l.b16 %v161
  %v1371 = vunpack.c.h.b16 %v161
  %v1372 = vunpack.c.l.b16 %v162
  %v1373 = vunpack.c.h.b16 %v162
  %v1374 = vunpack.c.l.b16 %v163
  %v1375 = vunpack.c.h.b16 %v163
  %v1376 = vunpack.c.l.b16 %v164
  %v1377 = vunpack.c.h.b16 %v164
  %v1378 = vunpack.c.l.b16 %v165
  %v1379 = vunpack.c.h.b16 %v165
  %v1380 = vunpack.c.l.b16 %v166
  %v1381 = vunpack.c.h.b16 %v166
  %v1382 = vunpack.c.l.b16 %v167
  %v1383 = vunpack.c.h.b16 %v167
  %v1384 = vunpack.c.l.b16 %v168
  %v1385 = vunpack.c.h.b16 %v168
  %v1386 = vunpack.c.l.b16 %v169
  %v1387 = vunpack.c.h.b16 %v169
  %v1388 = vunpack.c.l.b16 %v170
  %v1389 = vunpack.c.h.b16 %v170
  %v1390 = vunpack.c.l.b16 %v171
  %v1391 = vunpack.c.h.b16 %v171
  %v1392 = vunpack.c.l.b16 %v172
  %v1393 = vunpack.c.h.b16 %v172
  %v1394 = vunpack.c.l.b16 %v173
  %v1395 = vunpack.c.h.b16 %v173
  %v1396 = vunpack.c.l.b16 %v174
  %v1397 = vunpack.c.h.b16 %v174
  %v1398 = vunpack.c.l.b16 %v175
  %v1399 = vunpack.c.h.b16 %v175
  %v1400 = vunpack.c.l.b16 %v176
  %v1401 = vunpack.c.h.b16 %v176
  %v1402 = vunpack.c.l.b16 %v177
  %v1403 = vunpack.c.h.b16 %v177
  %v1404 = vunpack.c.l.b16 %v178
  %v1405 = vunpack.c.h.b16 %v178
  %v1406 = vunpack.c.l.b16 %v179
  %v1407 = vunpack.c.h.b16 %v179
  %v1408 = vunpack.c.l.b16 %v180
  %v1409 = vunpack.c.h.b16 %v180
  %v1410 = vunpack.c.l.b16 %v181
  %v1411 = vunpack.c.h.b16 %v181
  %v1412 = vunpack.c.l.b16 %v182
  %v1413 = vunpack.c.h.b16 %v182
  %v1414 = vunpack.c.l.b16 %v183
  %v1415 = vunpack.c.h.b16 %v183
  %v1416 = vunpack.c.l.b16 %v184
  %v1417 = vunpack.c.h.b16 %v184
  %v1418 = vunpack.c.l.b16 %v185
  %v1419 = vunpack.c.h.b16 %v185
  %v1420 = vunpack.c.l.b16 %v186
  %v1421 = vunpack.c.h.b16 %v186
  %v1422 = vunpack.c.l.b16 %v187
  %v1423 = vunpack.c.h.b16 %v187
  %v1424 = vunpack.c.l.b16 %v188
  %v1425 = vunpack.c.h.b16 %v188
  %v1426 = vunpack.c.l.b16 %v189
  %v1427 = vunpack.c.h.b16 %v189
  %v1428 = vunpack.c.l.b16 %v190
  %v1429 = vunpack.c.h.b16 %v190
  %v1430 = vunpack.c.l.b16 %v191
  %v1431 = vunpack.c.h.b16 %v191
  %v1432 = vunpack.c.l.b16 %v192
  %v1433 = vunpack.c.h.b16 %v192
  %v1434 = vunpack.c.l.b16 %v193
  %v1435 = vunpack.c.h.b16 %v193
  %v1436 = vunpack.c.l.b16 %v194
  %v1437 = vunpack.c.h.b16 %v194
  %v1438 = vunpack.c.l.b16 %v195
  %v1439 = vunpack.c.h.b16 %v195
  %v1440 = vunpack.c.l.b16 %v196
  %v1441 = vunpack.c.h.b16 %v196
  %v1442 = vunpack.c.l.b16 %v197
  %v1443 = vunpack.c.h.b16 %v197
  %v1444 = vunpack.c.l.b16 %v198
  %v1445 = vunpack.c.h.b16 %v198
  %v1446 = vunpack.c.l.b16 %v199
  %v1447 = vunpack.c.h.b16 %v199
  %v1448 = vunpack.c.l.b16 %v200
  %v1449 = vunpack.c.h.b16 %v200
  %v1450 = vunpack.c.l.b16 %v201
  %v1451 = vunpack.c.h.b16 %v201
  %v1452 = vunpack.c.l.b16 %v202
  %v1453 = vunpack.c.h.b16 %v202
  %v1454 = vunpack.c.l.b16 %v203
  %v1455 = vunpack.c.h.b16 %v203
  %v1456 = vunpack.c.l.b16 %v204
  %v1457 = vunpack.c.h.b16 %v204
  %v1458 = vunpack.c.l.b16 %v205
  %v1459 = vunpack.c.h.b16 %v205
  %v1460 = vunpack.c.l.b16 %v206
  %v1461 = vunpack.c.h.b16 %v206
  %v1462 = vunpack.c.l.b16 %v207
  %v1463 = vunpack.c.h.b16 %v207
  %v1464 = vunpack.c.l.b16 %v208
  %v1465 = vunpack.c.h.b16 %v208
  %v1466 = vunpack.c.l.b16 %v209
  %v1467 = vunpack.c.h.b16 %v209
  %v1468 = vunpack.c.l.b16 %v210
  %v1469 = vunpack.c.h.b16 %v210
  %v1470 = vunpack.c.l.b16 %v211
  %v1471 = vunpack.c.h.b16 %v211
  %v1472 = vunpack.c.l.b16 %v212
  %v1473 = vunpack.c.h.b16 %v212
  %v1474 = vunpack.c.l.b16 %v213
  %v1475 = vunpack.c.h.b16 %v213
  %v1476 = vunpack.c.l.b16 %v214
  %v1477 = vunpack.c.h.b16 %v214
  %v1478 = vunpack.c.l.b16 %v215
  %v1479 = vunpack.c.h.b16 %v215
  %v1480 = vunpack.c.l.b16 %v216
  %v1481 = vunpack.c.h.b16 %v216
  %v1482 = vunpack.c.l.b16 %v217
  %v1483 = vunpack.c.h.b16 %v217
  %v1484 = vunpack.c.l.b16 %v218
  %v1485 = vunpack.c.h.b16 %v218
  %v1486 = vunpack.c.l.b16 %v219
  %v1487 = vunpack.c.h.b16 %v219
  %v1488 = vunpack.c.l.b16 %v220
  %v1489 = vunpack.c.h.b16 %v220
  %v1490 = vunpack.c.l.b16 %v221
  %v1491 = vunpack.c.h.b16 %v221
  %v1492 = vunpack.c.l.b16 %v222
  %v1493 = vunpack.c.h.b16 %v222
  %v1494 = vunpack.c.l.b16 %v223
  %v1495 = vunpack.c.h.b16 %v223
  %v1496 = vunpack.c.l.b16 %v224
  %v1497 = vunpack.c.h.b16 %v224
  %v1498 = vunpack.c.l.b16 %v225
  %v1499 = vunpack.c.h.b16 %v225
  %v1500 = vunpack.c.l.b16 %v226
  %v1501 = vunpack.c.h.b16 %v226
  %v1502 = vunpack.c.l.b16 %v227
  %v1503 = vunpack.c.h.b16 %v227
  %v1504 = vunpack.c.l.b16 %v228
  %v1505 = vunpack.c.h.b16 %v228
  %v1506 = vunpack.c.l.b16 %v229
  %v1507 = vunpack.c.h.b16 %v229
  %v1508 = vunpack.c.l.b16 %v230
  %v1509 = vunpack.c.h.b16 %v230
  %v1510 = vunpack.c.l.b16 %v231
  %v1511 = vunpack.c.h.b16 %v231
  %v1512 = vunpack.c.l.b16 %v232
  %v1513 = vunpack.c.h.b16 %v232
  %v1514 = vunpack.c.l.b16 %v233
  %v1515 = vunpack.c.h.b16 %v233
  %v1516 = vunpack.c.l.b16 %v234
  %v1517 = vunpack.c.h.b16 %v234
  %v1518 = vunpack.c.l.b16 %v235
  %v1519 = vunpack.c.h.b16 %v235
  %v1520 = vunpack.c.l.b16 %v236
  %v1521 = vunpack.c.h.b16 %v236
  %v1522 = vunpack.c.l.b16 %v237
  %v1523 = vunpack.c.h.b16 %v237
  %v1524 = vunpack.c.l.b16 %v238
  %v1525 = vunpack.c.h.b16 %v238
  %v1526 = vunpack.c.l.b16 %v239
  %v1527 = vunpack.c.h.b16 %v239
  %v1528 = vunpack.c.l.b16 %v240
  %v1529 = vunpack.c.h.b16 %v240
  %v1530 = vunpack.c.l.b16 %v241
  %v1531 = vunpack.c.h.b16 %v241
  %v1532 = vunpack.c.l.b16 %v242
  %v1533 = vunpack.c.h.b16 %v242
  %v1534 = vunpack.c.l.b16 %v243
  %v1535 = vunpack.c.h.b16 %v243
  %v1536 = vunpack.c.l.b16 %v244
  %v1537 = vunpack.c.h.b16 %v244
  %v1538 = vunpack.c.l.b16 %v245
  %v1539 = vunpack.c.h.b16 %v245
  %v1540 = vunpack.c.l.b16 %v246
  %v1541 = vunpack.c.h.b16 %v246
  %v1542 = vunpack.c.l.b16 %v247
  %v1543 = vunpack.c.h.b16 %v247
  %v1544 = vunpack.c.l.b16 %v248
  %v1545 = vunpack.c.h.b16 %v248
  %v1546 = vunpack.c.l.b16 %v249
  %v1547 = vunpack.c.h.b16 %v249
  %v1548 = vunpack.c.l.b16 %v250
  %v1549 = vunpack.c.h.b16 %v250
  %v1550 = vunpack.c.l.b16 %v251
  %v1551 = vunpack.c.h.b16 %v251
  %v1552 = vunpack.c.l.b16 %v252
  %v1553 = vunpack.c.h.b16 %v252
  %v1554 = vunpack.c.l.b16 %v253
  %v1555 = vunpack.c.h.b16 %v253
  %v1556 = vunpack.c.l.b16 %v254
  %v1557 = vunpack.c.h.b16 %v254
  %v1558 = vunpack.c.l.b16 %v255
  %v1559 = vunpack.c.h.b16 %v255
  %v1560 = vunpack.c.l.b16 %v256
  %v1561 = vunpack.c.h.b16 %v256
  %v1562 = vunpack.c.l.b16 %v257
  %v1563 = vunpack.c.h.b16 %v257
  %v1564 = vunpack.c.l.b16 %v258
  %v1565 = vunpack.c.h.b16 %v258
  %v1566 = vunpack.c.l.b16 %v259
  %v1567 = vunpack.c.h.b16 %v259
  %v1568 = vunpack.c.l.b16 %v260
  %v1569 = vunpack.c.h.b16 %v260
  %v1570 = vunpack.c.l.b16 %v261
  %v1571 = vunpack.c.h.b16 %v261
  %v1572 = vunpack.c.l.b16 %v262
  %v1573 = vunpack.c.h.b16 %v262
  %v1574 = vunpack.c.l.b16 %v263
  %v1575 = vunpack.c.h.b16 %v263
  %v1576 = vunpack.c.l.b16 %v264
  %v1577 = vunpack.c.h.b16 %v264
  %v1578 = vunpack.c.l.b16 %v265
  %v1579 = vunpack.c.h.b16 %v265
  %v1580 = vunpack.c.l.b16 %v266
  %v1581 = vunpack.c.h.b16 %v266
  %v1582 = vunpack.c.l.b16 %v267
  %v1583 = vunpack.c.h.b16 %v267
  %v1584 = vunpack.c.l.b16 %v268
  %v1585 = vunpack.c.h.b16 %v268
  %v1586 = vunpack.c.l.b16 %v269
  %v1587 = vunpack.c.h.b16 %v269
  %v1588 = vunpack.c.l.b16 %v270
  %v1589 = vunpack.c.h.b16 %v270
  %v1590 = vunpack.c.l.b16 %v271
  %v1591 = vunpack.c.h.b16 %v271
  %v1592 = vunpack.c.l.b16 %v272
  %v1593 = vunpack.c.h.b16 %v272
  %v1594 = vunpack.c.l.b16 %v273
  %v1595 = vunpack.c.h.b16 %v273
  %v1596 = vunpack.c.l.b16 %v274
  %v1597 = vunpack.c.h.b16 %v274
  %v1598 = vunpack.c.l.b16 %v275
  %v1599 = vunpack.c.h.b16 %v275
  %v1600 = vunpack.c.l.b16 %v276
  %v1601 = vunpack.c.h.b16 %v276
  %v1602 = vunpack.c.l.b16 %v277
  %v1603 = vunpack.c.h.b16 %v277
  %v1604 = vunpack.c.l.b16 %v278
  %v1605 = vunpack.c.h.b16 %v278
  %v1606 = vunpack.c.l.b16 %v279
  %v1607 = vunpack.c.h.b16 %v279
  %v1608 = vunpack.c.l.b16 %v280
  %v1609 = vunpack.c.h.b16 %v280
  %v1610 = vunpack.c.l.b16 %v281
  %v1611 = vunpack.c.h.b16 %v281
  %v1612 = vunpack.c.l.b16 %v282
  %v1613 = vunpack.c.h.b16 %v282
  %v1614 = vunpack.c.l.b16 %v283
  %v1615 = vunpack.c.h.b16 %v283
  %v1616 = vunpack.c.l.b16 %v284
  %v1617 = vunpack.c.h.b16 %v284
  %v1618 = vunpack.c.l.b16 %v285
  %v1619 = vunpack.c.h.b16 %v285
  %v1620 = vunpack.c.l.b16 %v286
  %v1621 = vunpack.c.h.b16 %v286
  %v1622 = vunpack.c.l.b16 %v287
  %v1623 = vunpack.c.h.b16 %v287
  %v1624 = vunpack.c.l.b16 %v288
  %v1625 = vunpack.c.h.b16 %v288
  %v1626 = vunpack.c.l.b16 %v289
  %v1627 = vunpack.c.h.b16 %v289
  %v1628 = vunpack.c.l.b16 %v290
  %v1629 = vunpack.c.h.b16 %v290
  %v1630 = vunpack.c.l.b16 %v291
  %v1631 = vunpack.c.h.b16 %v291
  %v1632 = vunpack.c.l.b16 %v292
  %v1633 = vunpack.c.h.b16 %v292
  %v1634 = vunpack.c.l.b16 %v293
  %v1635 = vunpack.c.h.b16 %v293
  %v1636 = vunpack.c.l.b16 %v294
  %v1637 = vunpack.c.h.b16 %v294
  %v1638 = vunpack.c.l.b16 %v295
  %v1639 = vunpack.c.h.b16 %v295
  %v1640 = vunpack.c.l.b16 %v296
  %v1641 = vunpack.c.h.b16 %v296
  %v1642 = vunpack.c.l.b16 %v297
  %v1643 = vunpack.c.h.b16 %v297
  %v1644 = vunpack.c.l.b16 %v298
  %v1645 = vunpack.c.h.b16 %v298
  %v1646 = vunpack.c.l.b16 %v299
  %v1647 = vunpack.c.h.b16 %v299
  %v1648 = vunpack.c.l.b16 %v300
  %v1649 = vunpack.c.h.b16 %v300
  %v1650 = vunpack.c.l.b16 %v301
  %v1651 = vunpack.c.h.b16 %v301
  %v1652 = vunpack.c.l.b16 %v302
  %v1653 = vunpack.c.h.b16 %v302
  %v1654 = vunpack.c.l.b16 %v303
  %v1655 = vunpack.c.h.b16 %v303
  %v1656 = vunpack.c.l.b16 %v304
  %v1657 = vunpack.c.h.b16 %v304
  %v1658 = vunpack.c.l.b16 %v305
  %v1659 = vunpack.c.h.b16 %v305
  %v1660 = vunpack.c.l.b16 %v306
  %v1661 = vunpack.c.h.b16 %v306
  %v1662 = vunpack.c.l.b16 %v307
  %v1663 = vunpack.c.h.b16 %v307
  %v1664 = vunpack.c.l.b16 %v308
  %v1665 = vunpack.c.h.b16 %v308
  %v1666 = vunpack.c.l.b16 %v309
  %v1667 = vunpack.c.h.b16 %v309
  %v1668 = vunpack.c.l.b16 %v310
  %v1669 = vunpack.c.h.b16 %v310
  %v1670 = vunpack.c.l.b16 %v311
  %v1671 = vunpack.c.h.b16 %v311
  %v1672 = vunpack.c.l.b16 %v312
  %v1673 = vunpack.c.h.b16 %v312
  %v1674 = vunpack.c.l.b16 %v313
  %v1675 = vunpack.c.h.b16 %v313
  %v1676 = vunpack.c.l.b16 %v314
  %v1677 = vunpack.c.h.b16 %v314
  %v1678 = vunpack.c.l.b16 %v315
  %v1679 = vunpack.c.h.b16 %v315
  %v1680 = vunpack.c.l.b16 %v316
  %v1681 = vunpack.c.h.b16 %v316
  %v1682 = vunpack.c.l.b16 %v317
  %v1683 = vunpack.c.h.b16 %v317
  %v1684 = vunpack.c.l.b16 %v318
  %v1685 = vunpack.c.h.b16 %v318
  %v1686 = vunpack.c.l.b16 %v319
  %v1687 = vunpack.c.h.b16 %v319
  %v1688 = vunpack.c.l.b16 %v320
  %v1689 = vunpack.c.h.b16 %v320
  %v1690 = vunpack.c.l.b16 %v321
  %v1691 = vunpack.c.h.b16 %v321
  %v1692 = vunpack.c.l.b16 %v322
  %v1693 = vunpack.c.h.b16 %v322
  %v1694 = vunpack.c.l.b16 %v323
  %v1695 = vunpack.c.h.b16 %v323
  %v1696 = vunpack.c.l.b16 %v324
  %v1697 = vunpack.c.h.b16 %v324
  %v1698 = vunpack.c.l.b16 %v325
  %v1699 = vunpack.c.h.b16 %v325
  %v1700 = vunpack.c.l.b16 %v326
  %v1701 = vunpack.c.h.b16 %v326
  %v1702 = vunpack.c.l.b16 %v327
  %v1703 = vunpack.c.h.b16 %v327
  %v1704 = vunpack.c.l.b16 %v328
  %v1705 = vunpack.c.h.b16 %v328
  %v1706 = vunpack.c.l.b16 %v329
  %v1707 = vunpack.c.h.b16 %v329
  %v1708 = vunpack.c.l.b16 %v330
  %v1709 = vunpack.c.h.b16 %v330
  %v1710 = vunpack.c.l.b16 %v331
  %v1711 = vunpack.c.h.b16 %v331
  %v1712 = vunpack.c.l.b16 %v332
  %v1713 = vunpack.c.h.b16 %v332
  %v1714 = vunpack.c.l.b16 %v333
  %v1715 = vunpack.c.h.b16 %v333
  %v1716 = vunpack.c.l.b16 %v334
  %v1717 = vunpack.c.h.b16 %v334
  %v1718 = vunpack.c.l.b16 %v335
  %v1719 = vunpack.c.h.b16 %v335
  %v1720 = vunpack.c.l.b16 %v336
  %v1721 = vunpack.c.h.b16 %v336
  %v1722 = vunpack.c.l.b16 %v337
  %v1723 = vunpack.c.h.b16 %v337
  %v1724 = vunpack.c.l.b16 %v338
  %v1725 = vunpack.c.h.b16 %v338
  %v1726 = vunpack.c.l.b16 %v339
  %v1727 = vunpack.c.h.b16 %v339
  %v1728 = vunpack.c.l.b16 %v340
  %v1729 = vunpack.c.h.b16 %v340
  %v1730 = vunpack.c.l.b16 %v341
  %v1731 = vunpack.c.h.b16 %v341
  %v1732 = vunpack.c.l.b16 %v342
  %v1733 = vunpack.c.h.b16 %v342
  %v1734 = vunpack.c.l.b16 %v343
  %v1735 = vunpack.c.h.b16 %v343
  %v1736 = vunpack.c.l.b16 %v344
  %v1737 = vunpack.c.h.b16 %v344
  %v1738 = vunpack.c.l.b16 %v345
  %v1739 = vunpack.c.h.b16 %v345
  %v1740 = vunpack.c.l.b16 %v346
  %v1741 = vunpack.c.h.b16 %v346
  %v1742 = vunpack.c.l.b16 %v347
  %v1743 = vunpack.c.h.b16 %v347
  %v1744 = vunpack.c.l.b16 %v348
  %v1745 = vunpack.c.h.b16 %v348
  %v1746 = vunpack.c.l.b16 %v349
  %v1747 = vunpack.c.h.b16 %v349
  %v1748 = vunpack.c.l.b16 %v350
  %v1749 = vunpack.c.h.b16 %v350
  %v1750 = vunpack.c.l.b16 %v351
  %v1751 = vunpack.c.h.b16 %v351
  %v1752 = vunpack.c.l.b16 %v352
  %v1753 = vunpack.c.h.b16 %v352
  %v1754 = vunpack.c.l.b16 %v353
  %v1755 = vunpack.c.h.b16 %v353
  %v1756 = vunpack.c.l.b16 %v354
  %v1757 = vunpack.c.h.b16 %v354
  %v1758 = vunpack.c.l.b16 %v355
  %v1759 = vunpack.c.h.b16 %v355
  %v1760 = vunpack.c.l.b16 %v356
  %v1761 = vunpack.c.h.b16 %v356
  %v1762 = vunpack.c.l.b16 %v357
  %v1763 = vunpack.c.h.b16 %v357
  %v1764 = vunpack.c.l.b16 %v358
  %v1765 = vunpack.c.h.b16 %v358
  %v1766 = vunpack.c.l.b16 %v359
  %v1767 = vunpack.c.h.b16 %v359
  %v1768 = vunpack.c.l.b16 %v360
  %v1769 = vunpack.c.h.b16 %v360
  %v1770 = vunpack.c.l.b16 %v361
  %v1771 = vunpack.c.h.b16 %v361
  %v1772 = vunpack.c.l.b16 %v362
  %v1773 = vunpack.c.h.b16 %v362
  %v1774 = vunpack.c.l.b16 %v363
  %v1775 = vunpack.c.h.b16 %v363
  %v1776 = vunpack.c.l.b16 %v364
  %v1777 = vunpack.c.h.b16 %v364
  %v1778 = vunpack.c.l.b16 %v365
  %v1779 = vunpack.c.h.b16 %v365
  %v1780 = vunpack.c.l.b16 %v366
  %v1781 = vunpack.c.h.b16 %v366
  %v1782 = vunpack.c.l.b16 %v367
  %v1783 = vunpack.c.h.b16 %v367
  %v1784 = vunpack.c.l.b16 %v368
  %v1785 = vunpack.c.h.b16 %v368
  %v1786 = vunpack.c.l.b16 %v369
  %v1787 = vunpack.c.h.b16 %v369
  %v1788 = vunpack.c.l.b16 %v370
  %v1789 = vunpack.c.h.b16 %v370
  %v1790 = vunpack.c.l.b16 %v371
  %v1791 = vunpack.c.h.b16 %v371
  %v1792 = vunpack.c.l.b16 %v372
  %v1793 = vunpack.c.h.b16 %v372
  %v1794 = vunpack.c.l.b16 %v373
  %v1795 = vunpack.c.h.b16 %v373
  %v1796 = vunpack.c.l.b16 %v374
  %v1797 = vunpack.c.h.b16 %v374
  %v1798 = vunpack.c.l.b16 %v375
  %v1799 = vunpack.c.h.b16 %v375
  %v1800 = vunpack.c.l.b16 %v376
  %v1801 = vunpack.c.h.b16 %v376
  %v1802 = vunpack.c.l.b16 %v377
  %v1803 = vunpack.c.h.b16 %v377
  %v1804 = vunpack.c.l.b16 %v378
  %v1805 = vunpack.c.h.b16 %v378
  %v1806 = vunpack.c.l.b16 %v379
  %v1807 = vunpack.c.h.b16 %v379
  %v1808 = vunpack.c.l.b16 %v380
  %v1809 = vunpack.c.h.b16 %v380
  %v1810 = vunpack.c.l.b16 %v381
  %v1811 = vunpack.c.h.b16 %v381
  %v1812 = vunpack.c.l.b16 %v382
  %v1813 = vunpack.c.h.b16 %v382
  %v1814 = vunpack.c.l.b16 %v383
  %v1815 = vunpack.c.h.b16 %v383
  %v1816 = vunpack.c.l.b16 %v384
  %v1817 = vunpack.c.h.b16 %v384
  %v1818 = vunpack.c.l.b16 %v385
  %v1819 = vunpack.c.h.b16 %v385
  %v1820 = vunpack.c.l.b16 %v386
  %v1821 = vunpack.c.h.b16 %v386
  %v1822 = vunpack.c.l.b16 %v387
  %v1823 = vunpack.c.h.b16 %v387
  %v1824 = vunpack.c.l.b16 %v388
  %v1825 = vunpack.c.h.b16 %v388
  %v1826 = vunpack.c.l.b16 %v389
  %v1827 = vunpack.c.h.b16 %v389
  %v1828 = vunpack.c.l.b16 %v390
  %v1829 = vunpack.c.h.b16 %v390
  %v1830 = vunpack.c.l.b16 %v391
  %v1831 = vunpack.c.h.b16 %v391
  %v1832 = vunpack.c.l.b16 %v392
  %v1833 = vunpack.c.h.b16 %v392
  %v1834 = vunpack.c.l.b16 %v393
  %v1835 = vunpack.c.h.b16 %v393
  %v1836 = vunpack.c.l.b16 %v394
  %v1837 = vunpack.c.h.b16 %v394
  %v1838 = vunpack.c.l.b16 %v395
  %v1839 = vunpack.c.h.b16 %v395
  %v1840 = vunpack.c.l.b16 %v396
  %v1841 = vunpack.c.h.b16 %v396
  %v1842 = vunpack.c.l.b16 %v397
  %v1843 = vunpack.c.h.b16 %v397
  %v1844 = vunpack.c.l.b16 %v398
  %v1845 = vunpack.c.h.b16 %v398
  %v1846 = vunpack.c.l.b16 %v399
  %v1847 = vunpack.c.h.b16 %v399
  %v1848 = vunpack.c.l.b16 %v400
  %v1849 = vunpack.c.h.b16 %v400
  %v1850 = vunpack.c.l.b16 %v401
  %v1851 = vunpack.c.h.b16 %v401
  %v1852 = vunpack.c.l.b16 %v402
  %v1853 = vunpack.c.h.b16 %v402
  %v1854 = vunpack.c.l.b16 %v403
  %v1855 = vunpack.c.h.b16 %v403
  %v1856 = vunpack.c.l.b16 %v404
  %v1857 = vunpack.c.h.b16 %v404
  %v1858 = vunpack.c.l.b16 %v405
  %v1859 = vunpack.c.h.b16 %v405
  %v1860 = vunpack.c.l.b16 %v406
  %v1861 = vunpack.c.h.b16 %v406
  %v1862 = vunpack.c.l.b16 %v407
  %v1863 = vunpack.c.h.b16 %v407
  %v1864 = vunpack.c.l.b16 %v408
  %v1865 = vunpack.c.h.b16 %v408
  %v1866 = vunpack.c.l.b16 %v409
  %v1867 = vunpack.c.h.b16 %v409
  %v1868 = vunpack.c.l.b16 %v410
  %v1869 = vunpack.c.h.b16 %v410
  %v1870 = vunpack.c.l.b16 %v411
  %v1871 = vunpack.c.h.b16 %v411
  %v1872 = vunpack.c.l.b16 %v412
  %v1873 = vunpack.c.h.b16 %v412
  %v1874 = vunpack.c.l.b16 %v413
  %v1875 = vunpack.c.h.b16 %v413
  %v1876 = vunpack.c.l.b16 %v414
  %v1877 = vunpack.c.h.b16 %v414
  %v1878 = vunpack.c.l.b16 %v415
  %v1879 = vunpack.c.h.b16 %v415
  %v1880 = vunpack.c.l.b16 %v416
  %v1881 = vunpack.c.h.b16 %v416
  %v1882 = vunpack.c.l.b16 %v417
  %v1883 = vunpack.c.h.b16 %v417
  %v1884 = vunpack.c.l.b16 %v418
  %v1885 = vunpack.c.h.b16 %v418
  %v1886 = vunpack.c.l.b16 %v419
  %v1887 = vunpack.c.h.b16 %v419
  %v1888 = vunpack.c.l.b16 %v420
  %v1889 = vunpack.c.h.b16 %v420
  %v1890 = vunpack.c.l.b16 %v421
  %v1891 = vunpack.c.h.b16 %v421
  %v1892 = vunpack.c.l.b16 %v422
  %v1893 = vunpack.c.h.b16 %v422
  %v1894 = vunpack.c.l.b16 %v423
  %v1895 = vunpack.c.h.b16 %v423
  %v1896 = vunpack.c.l.b16 %v424
  %v1897 = vunpack.c.h.b16 %v424
  %v1898 = vunpack.c.l.b16 %v425
  %v1899 = vunpack.c.h.b16 %v425
  %v1900 = vunpack.c.l.b16 %v426
  %v1901 = vunpack.c.h.b16 %v426
  %v1902 = vunpack.c.l.b16 %v427
  %v1903 = vunpack.c.h.b16 %v427
  %v1904 = vunpack.c.l.b16 %v428
  %v1905 = vunpack.c.h.b16 %v428
  %v1906 = vunpack.c.l.b16 %v429
  %v1907 = vunpack.c.h.b16 %v429
  %v1908 = vunpack.c.l.b16 %v430
  %v1909 = vunpack.c.h.b16 %v430
  %v1910 = vunpack.c.l.b16 %v431
  %v1911 = vunpack.c.h.b16 %v431
  %v1912 = vunpack.c.l.b16 %v432
  %v1913 = vunpack.c.h.b16 %v432
  %v1914 = vunpack.c.l.b16 %v433
  %v1915 = vunpack.c.h.b16 %v433
  %v1916 = vunpack.c.l.b16 %v434
  %v1917 = vunpack.c.h.b16 %v434
  %v1918 = vunpack.c.l.b16 %v435
  %v1919 = vunpack.c.h.b16 %v435
  %v1920 = vunpack.c.l.b16 %v436
  %v1921 = vunpack.c.h.b16 %v436
  %v1922 = vunpack.c.l.b16 %v437
  %v1923 = vunpack.c.h.b16 %v437
  %v1924 = vunpack.c.l.b16 %v438
  %v1925 = vunpack.c.h.b16 %v438
  %v1926 = vunpack.c.l.b16 %v439
  %v1927 = vunpack.c.h.b16 %v439
  %v1928 = vunpack.c.l.b16 %v440
  %v1929 = vunpack.c.h.b16 %v440
  %v1930 = vunpack.c.l.b16 %v441
  %v1931 = vunpack.c.h.b16 %v441
  %v1932 = vunpack.c.l.b16 %v442
  %v1933 = vunpack.c.h.b16 %v442
  %v1934 = vunpack.c.l.b16 %v443
  %v1935 = vunpack.c.h.b16 %v443
  %v1936 = vunpack.c.l.b16 %v444
  %v1937 = vunpack.c.h.b16 %v444
  %v1938 = vunpack.c.l.b16 %v445
  %v1939 = vunpack.c.h.b16 %v445
  %v1940 = vunpack.c.l.b16 %v446
  %v1941 = vunpack.c.h.b16 %v446
  %v1942 = vunpack.c.l.b16 %v447
  %v1943 = vunpack.c.h.b16 %v447
  %v1944 = vunpack.c.l.b16 %v448
  %v1945 = vunpack.c.h.b16 %v448
  %v1946 = vunpack.c.l.b16 %v449
  %v1947 = vunpack.c.h.b16 %v449
  %v1948 = vunpack.c.l.b16 %v450
  %v1949 = vunpack.c.h.b16 %v450
  %v1950 = vunpack.c.l.b16 %v451
  %v1951 = vunpack.c.h.b16 %v451
  %v1952 = vunpack.c.l.b16 %v452
  %v1953 = vunpack.c.h.b16 %v452
  %v1954 = vunpack.c.l.b16 %v453
  %v1955 = vunpack.c.h.b16 %v453
  %v1956 = vunpack.c.l.b16 %v454
  %v1957 = vunpack.c.h.b16 %v454
  %v1958 = vunpack.c.l.b16 %v455
  %v1959 = vunpack.c.h.b16 %v455
  %v1960 = vunpack.c.l.b16 %v456
  %v1961 = vunpack.c.h.b16 %v456
  %v1962 = vunpack.c.l.b16 %v457
  %v1963 = vunpack.c.h.b16 %v457
  %v1964 = vunpack.c.l.b16 %v458
  %v1965 = vunpack.c.h.b16 %v458
  %v1966 = vunpack.c.l.b16 %v459
  %v1967 = vunpack.c.h.b16 %v459
  %v1968 = vunpack.c.l.b16 %v460
  %v1969 = vunpack.c.h.b16 %v460
  %v1970 = vunpack.c.l.b16 %v461
  %v1971 = vunpack.c.h.b16 %v461
  %v1972 = vunpack.c.l.b16 %v462
  %v1973 = vunpack.c.h.b16 %v462
  %v1974 = vunpack.c.l.b16 %v463
  %v1975 = vunpack.c.h.b16 %v463
  %v1976 = vunpack.c.l.b16 %v464
  %v1977 = vunpack.c.h.b16 %v464
  %v1978 = vunpack.c.l.b16 %v465
  %v1979 = vunpack.c.h.b16 %v465
  %v1980 = vunpack.c.l.b16 %v466
  %v1981 = vunpack.c.h.b16 %v466
  %v1982 = vunpack.c.l.b16 %v467
  %v1983 = vunpack.c.h.b16 %v467
  %v1984 = vunpack.c.l.b16 %v468
  %v1985 = vunpack.c.h.b16 %v468
  %v1986 = vunpack.c.l.b16 %v469
  %v1987 = vunpack.c.h.b16 %v469
  %v1988 = vunpack.c.l.b16 %v470
  %v1989 = vunpack.c.h.b16 %v470
  %v1990 = vunpack.c.l.b16 %v471
  %v1991 = vunpack.c.h.b16 %v471
  %v1992 = vunpack.c.l.b16 %v472
  %v1993 = vunpack.c.h.b16 %v472
  %v1994 = vunpack.c.l.b16 %v473
  %v1995 = vunpack.c.h.b16 %v473
  %v1996 = vunpack.c.l.b16 %v474
  %v1997 = vunpack.c.h.b16 %v474
  %v1998 = vunpack.c.l.b16 %v475
  %v1999 = vunpack.c.h.b16 %v475
  %v2000 = vunpack.c.l.b16 %v476
  %v2001 = vunpack.c.h.b16 %v476
  %v2002 = vunpack.c.l.b16 %v477
  %v2003 = vunpack.c.h.b16 %v477
  %v2004 = vunpack.c.l.b16 %v478
  %v2005 = vunpack.c.h.b16 %v478
  %v2006 = vunpack.c.l.b16 %v479
  %v2007 = vunpack.c.h.b16 %v479
  %v2008 = vunpack.c.l.b16 %v480
  %v2009 = vunpack.c.h.b16 %v480
  %v2010 = vunpack.c.l.b16 %v481
  %v2011 = vunpack.c.h.b16 %v481
  %v2012 = vunpack.c.l.b16 %v482
  %v2013 = vunpack.c.h.b16 %v482
  %v2014 = vunpack.c.l.b16 %v483
  %v2015 = vunpack.c.h.b16 %v483
  %v2016 = vunpack.c.l.b16 %v484
  %v2017 = vunpack.c.h.b16 %v484
  %v2018 = vunpack.c.l.b16 %v485
  %v2019 = vunpack.c.h.b16 %v485
  %v2020 = vunpack.c.l.b16 %v486
  %v2021 = vunpack.c.h.b16 %v486
  %v2022 = vunpack.c.l.b16 %v487
  %v2023 = vunpack.c.h.b16 %v487
  %v2024 = vunpack.c.l.b16 %v488
  %v2025 = vunpack.c.h.b16 %v488
  %v2026 = vunpack.c.l.b16 %v489
  %v2027 = vunpack.c.h.b16 %v489
  %v2028 = vunpack.c.l.b16 %v490
  %v2029 = vunpack.c.h.b16 %v490
  %v2030 = vunpack.c.l.b16 %v491
  %v2031 = vunpack.c.h.b16 %v491
  %v2032 = vunpack.c.l.b16 %v492
  %v2033 = vunpack.c.h.b16 %v492
  %v2034 = vunpack.c.l.b16 %v493
  %v2035 = vunpack.c.h.b16 %v493
  %v2036 = vunpack.c.l.b16 %v494
  %v2037 = vunpack.c.h.b16 %v494
  %v2038 = vunpack.c.l.b16 %v495
  %v2039 = vunpack.c.h.b16 %v495
  %v2040 = vunpack.c.l.b16 %v496
  %v2041 = vunpack.c.h.b16 %v496
  %v2042 = vunpack.c.l.b16 %v497
  %v2043 = vunpack.c.h.b16 %v497
  %v2044 = vunpack.c.l.b16 %v498
  %v2045 = vunpack.c.h.b16 %v498
  %v2046 = vunpack.c.l.b16 %v499
  %v2047 = vunpack.c.h.b16 %v499
  %v2048 = vunpack.c.l.b16 %v500
  %v2049 = vunpack.c.h.b16 %v500
  %v2050 = vunpack.c.l.b16 %v501
  %v2051 = vunpack.c.h.b16 %v501
  %v2052 = vunpack.c.l.b16 %v502
  %v2053 = vunpack.c.h.b16 %v502
  %v2054 = vunpack.c.l.b16 %v503
  %v2055 = vunpack.c.h.b16 %v503
  %v2056 = vunpack.c.l.b16 %v504
  %v2057 = vunpack.c.h.b16 %v504
  %v2058 = vunpack.c.l.b16 %v505
  %v2059 = vunpack.c.h.b16 %v505
  %v2060 = vunpack.c.l.b16 %v506
  %v2061 = vunpack.c.h.b16 %v506
  %v2062 = vunpack.c.l.b16 %v507
  %v2063 = vunpack.c.h.b16 %v507
  %v2064 = vunpack.c.l.b16 %v508
  %v2065 = vunpack.c.h.b16 %v508
  %v2066 = vunpack.c.l.b16 %v509
  %v2067 = vunpack.c.h.b16 %v509
  %v2068 = vunpack.c.l.b16 %v510
  %v2069 = vunpack.c.h.b16 %v510
  %v2070 = vunpack.c.l.b16 %v511
  %v2071 = vunpack.c.h.b16 %v511
  %v2072 = vunpack.c.l.b16 %v512
  %v2073 = vunpack.c.h.b16 %v512
  %v2074 = vunpack.c.l.b16 %v513
  %v2075 = vunpack.c.h.b16 %v513
  %v2076 = vunpack.c.l.b16 %v514
  %v2077 = vunpack.c.h.b16 %v514
  %v2078 = vunpack.c.l.b16 %v515
  %v2079 = vunpack.c.h.b16 %v515
  %v2080 = vunpack.c.l.b16 %v516
  %v2081 = vunpack.c.h.b16 %v516
  %v2082 = vunpack.c.l.b16 %v517
  %v2083 = vunpack.c.h.b16 %v517
  %v2084 = vunpack.c.l.b16 %v518
  %v2085 = vunpack.c.h.b16 %v518
  %v2086 = vunpack.c.l.b16 %v519
  %v2087 = vunpack.c.h.b16 %v519
  %v2088 = vunpack.c.l.b16 %v520
  %v2089 = vunpack.c.h.b16 %v520
  %v2090 = vunpack.c.l.b16 %v521
  %v2091 = vunpack.c.h.b16 %v521
  %v2092 = vunpack.c.l.b16 %v522
  %v2093 = vunpack.c.h.b16 %v522
  %v2094 = vunpack.c.l.b16 %v523
  %v2095 = vunpack.c.h.b16 %v523
  %v2096 = vunpack.c.l.b16 %v524
  %v2097 = vunpack.c.h.b16 %v524
  %v2098 = vunpack.c.l.b16 %v525
  %v2099 = vunpack.c.h.b16 %v525
  %v2100 = vunpack.c.l.b16 %v526
  %v2101 = vunpack.c.h.b16 %v526
  %v2102 = vunpack.c.l.b16 %v527
  %v2103 = vunpack.c.h.b16 %v527
  %v2104 = vunpack.c.l.b16 %v528
  %v2105 = vunpack.c.h.b16 %v528
  %v2106 = vunpack.c.l.b16 %v529
  %v2107 = vunpack.c.h.b16 %v529
  %v2108 = vunpack.c.l.b16 %v530
  %v2109 = vunpack.c.h.b16 %v530
  %v2110 = vunpack.c.l.b16 %v531
  %v2111 = vunpack.c.h.b16 %v531
  %v2112 = vunpack.c.l.b16 %v532
  %v2113 = vunpack.c.h.b16 %v532
  %v2114 = vunpack.c.l.b16 %v533
  %v2115 = vunpack.c.h.b16 %v533
  %v2116 = vunpack.c.l.b16 %v534
  %v2117 = vunpack.c.h.b16 %v534
  %v2118 = vunpack.c.l.b16 %v535
  %v2119 = vunpack.c.h.b16 %v535
  %v2120 = vunpack.c.l.b16 %v536
  %v2121 = vunpack.c.h.b16 %v536
  %v2122 = vunpack.c.l.b16 %v537
  %v2123 = vunpack.c.h.b16 %v537
  %v2124 = vunpack.c.l.b16 %v538
  %v2125 = vunpack.c.h.b16 %v538
  %v2126 = vunpack.c.l.b16 %v539
  %v2127 = vunpack.c.h.b16 %v539
  %v2128 = vunpack.c.l.b16 %v540
  %v2129 = vunpack.c.h.b16 %v540
  %v2130 = vunpack.c.l.b16 %v541
  %v2131 = vunpack.c.h.b16 %v541
  %v2132 = vunpack.c.l.b16 %v542
  %v2133 = vunpack.c.h.b16 %v542
  %v2134 = vunpack.c.l.b16 %v543
  %v2135 = vunpack.c.h.b16 %v543
  %v2136 = vunpack.c.l.b16 %v544
  %v2137 = vunpack.c.h.b16 %v544
  %v2138 = vunpack.c.l.b16 %v545
  %v2139 = vunpack.c.h.b16 %v545
  %v2140 = vpack.c.b16 %v1124, %v1116
  %v2141 = vpack.c.b16 %v1125, %v1117
  %v2142 = vpack.c.b16 %v1126, %v1118
  %v2143 = vpack.c.b16 %v1127, %v1119
  %v2144 = vpack.c.b16 %v1128, %v1120
  %v2145 = vpack.c.b16 %v1129, %v1121
  %v2146 = vpack.c.b16 %v1130, %v1122
  %v2147 = vpack.c.b16 %v1131, %v1123
  %v2148 = vpack.c.b16 %v1140, %v1132
  %v2149 = vpack.c.b16 %v1141, %v1133
  %v2150 = vpack.c.b16 %v1142, %v1134
  %v2151 = vpack.c.b16 %v1143, %v1135
  %v2152 = vpack.c.b16 %v1144, %v1136
  %v2153 = vpack.c.b16 %v1145, %v1137
  %v2154 = vpack.c.b16 %v1146, %v1138
  %v2155 = vpack.c.b16 %v1147, %v1139
  %v2156 = vpack.c.b16 %v1156, %v1148
  %v2157 = vpack.c.b16 %v1157, %v1149
  %v2158 = vpack.c.b16 %v1158, %v1150
  %v2159 = vpack.c.b16 %v1159, %v1151
  %v2160 = vpack.c.b16 %v1160, %v1152
  %v2161 = vpack.c.b16 %v1161, %v1153
  %v2162 = vpack.c.b16 %v1162, %v1154
  %v2163 = vpack.c.b16 %v1163, %v1155
  %v2164 = vpack.c.b16 %v1172, %v1164
  %v2165 = vpack.c.b16 %v1173, %v1165
  %v2166 = vpack.c.b16 %v1174, %v1166
  %v2167 = vpack.c.b16 %v1175, %v1167
  %v2168 = vpack.c.b16 %v1176, %v1168
  %v2169 = vpack.c.b16 %v1177, %v1169
  %v2170 = vpack.c.b16 %v1178, %v1170
  %v2171 = vpack.c.b16 %v1179, %v1171
  %v2172 = vpack.c.b16 %v1188, %v1180
  %v2173 = vpack.c.b16 %v1189, %v1181
  %v2174 = vpack.c.b16 %v1190, %v1182
  %v2175 = vpack.c.b16 %v1191, %v1183
  %v2176 = vpack.c.b16 %v1192, %v1184
  %v2177 = vpack.c.b16 %v1193, %v1185
  %v2178 = vpack.c.b16 %v1194, %v1186
  %v2179 = vpack.c.b16 %v1195, %v1187
  %v2180 = vpack.c.b16 %v1204, %v1196
  %v2181 = vpack.c.b16 %v1205, %v1197
  %v2182 = vpack.c.b16 %v1206, %v1198
  %v2183 = vpack.c.b16 %v1207, %v1199
  %v2184 = vpack.c.b16 %v1208, %v1200
  %v2185 = vpack.c.b16 %v1209, %v1201
  %v2186 = vpack.c.b16 %v1210, %v1202
  %v2187 = vpack.c.b16 %v1211, %v1203
  %v2188 = vpack.c.b16 %v1220, %v1212
  %v2189 = vpack.c.b16 %v1221, %v1213
  %v2190 = vpack.c.b16 %v1222, %v1214
  %v2191 = vpack.c.b16 %v1223, %v1215
  %v2192 = vpack.c.b16 %v1224, %v1216
  %v2193 = vpack.c.b16 %v1225, %v1217
  %v2194 = vpack.c.b16 %v1226, %v1218
  %v2195 = vpack.c.b16 %v1227, %v1219
  %v2196 = vpack.c.b16 %v1236, %v1228
  %v2197 = vpack.c.b16 %v1237, %v1229
  %v2198 = vpack.c.b16 %v1238, %v1230
  %v2199 = vpack.c.b16 %v1239, %v1231
  %v2200 = vpack.c.b16 %v1240, %v1232
  %v2201 = vpack.c.b16 %v1241, %v1233
  %v2202 = vpack.c.b16 %v1242, %v1234
  %v2203 = vpack.c.b16 %v1243, %v1235
  %v2204 = vpack.c.b16 %v1252, %v1244
  %v2205 = vpack.c.b16 %v1253, %v1245
  %v2206 = vpack.c.b16 %v1254, %v1246
  %v2207 = vpack.c.b16 %v1255, %v1247
  %v2208 = vpack.c.b16 %v1256, %v1248
  %v2209 = vpack.c.b16 %v1257, %v1249
  %v2210 = vpack.c.b16 %v1258, %v1250
  %v2211 = vpack.c.b16 %v1259, %v1251
  %v2212 = vpack.c.b16 %v1268, %v1260
  %v2213 = vpack.c.b16 %v1269, %v1261
  %v2214 = vpack.c.b16 %v1270, %v1262
  %v2215 = vpack.c.b16 %v1271, %v1263
  %v2216 = vpack.c.b16 %v1272, %v1264
  %v2217 = vpack.c.b16 %v1273, %v1265
  %v2218 = vpack.c.b16 %v1274, %v1266
  %v2219 = vpack.c.b16 %v1275, %v1267
  %v2220 = vpack.c.b16 %v1284, %v1276
  %v2221 = vpack.c.b16 %v1285, %v1277
  %v2222 = vpack.c.b16 %v1286, %v1278
  %v2223 = vpack.c.b16 %v1287, %v1279
  %v2224 = vpack.c.b16 %v1288, %v1280
  %v2225 = vpack.c.b16 %v1289, %v1281
  %v2226 = vpack.c.b16 %v1290, %v1282
  %v2227 = vpack.c.b16 %v1291, %v1283
  %v2228 = vpack.c.b16 %v1300, %v1292
  %v2229 = vpack.c.b16 %v1301, %v1293
  %v2230 = vpack.c.b16 %v1302, %v1294
  %v2231 = vpack.c.b16 %v1303, %v1295
  %v2232 = vpack.c.b16 %v1304, %v1296
  %v2233 = vpack.c.b16 %v1305, %v1297
  %v2234 = vpack.c.b16 %v1306, %v1298
  %v2235 = vpack.c.b16 %v1307, %v1299
  %v2236 = vpack.c.b16 %v1316, %v1308
  %v2237 = vpack.c.b16 %v1317, %v1309
  %v2238 = vpack.c.b16 %v1318, %v1310
  %v2239 = vpack.c.b16 %v1319, %v1311
  %v2240 = vpack.c.b16 %v1320, %v1312
  %v2241 = vpack.c.b16 %v1321, %v1313
  %v2242 = vpack.c.b16 %v1322, %v1314
  %v2243 = vpack.c.b16 %v1323, %v1315
  %v2244 = vpack.c.b16 %v1332, %v1324
  %v2245 = vpack.c.b16 %v1333, %v1325
  %v2246 = vpack.c.b16 %v1334, %v1326
  %v2247 = vpack.c.b16 %v1335, %v1327
  %v2248 = vpack.c.b16 %v1336, %v1328
  %v2249 = vpack.c.b16 %v1337, %v1329
  %v2250 = vpack.c.b16 %v1338, %v1330
  %v2251 = vpack.c.b16 %v1339, %v1331
  %v2252 = vpack.c.b16 %v1348, %v1340
  %v2253 = vpack.c.b16 %v1349, %v1341
  %v2254 = vpack.c.b16 %v1350, %v1342
  %v2255 = vpack.c.b16 %v1351, %v1343
  %v2256 = vpack.c.b16 %v1352, %v1344
  %v2257 = vpack.c.b16 %v1353, %v1345
  %v2258 = vpack.c.b16 %v1354, %v1346
  %v2259 = vpack.c.b16 %v1355, %v1347
  %v2260 = vpack.c.b16 %v1364, %v1356
  %v2261 = vpack.c.b16 %v1365, %v1357
  %v2262 = vpack.c.b16 %v1366, %v1358
  %v2263 = vpack.c.b16 %v1367, %v1359
  %v2264 = vpack.c.b16 %v1368, %v1360
  %v2265 = vpack.c.b16 %v1369, %v1361
  %v2266 = vpack.c.b16 %v1370, %v1362
  %v2267 = vpack.c.b16 %v1371, %v1363
  %v2268 = vpack.c.b16 %v1380, %v1372
  %v2269 = vpack.c.b16 %v1381, %v1373
  %v2270 = vpack.c.b16 %v1382, %v1374
  %v2271 = vpack.c.b16 %v1383, %v1375
  %v2272 = vpack.c.b16 %v1384, %v1376
  %v2273 = vpack.c.b16 %v1385, %v1377
  %v2274 = vpack.c.b16 %v1386, %v1378
  %v2275 = vpack.c.b16 %v1387, %v1379
  %v2276 = vpack.c.b16 %v1396, %v1388
  %v2277 = vpack.c.b16 %v1397, %v1389
  %v2278 = vpack.c.b16 %v1398, %v1390
  %v2279 = vpack.c.b16 %v1399, %v1391
  %v2280 = vpack.c.b16 %v1400, %v1392
  %v2281 = vpack.c.b16 %v1401, %v1393
  %v2282 = vpack.c.b16 %v1402, %v1394
  %v2283 = vpack.c.b16 %v1403, %v1395
  %v2284 = vpack.c.b16 %v1412, %v1404
  %v2285 = vpack.c.b16 %v1413, %v1405
  %v2286 = vpack.c.b16 %v1414, %v1406
  %v2287 = vpack.c.b16 %v1415, %v1407
  %v2288 = vpack.c.b16 %v1416, %v1408
  %v2289 = vpack.c.b16 %v1417, %v1409
  %v2290 = vpack.c.b16 %v1418, %v1410
  %v2291 = vpack.c.b16 %v1419, %v1411
  %v2292 = vpack.c.b16 %v1428, %v1420
  %v2293 = vpack.c.b16 %v1429, %v1421
  %v2294 = vpack.c.b16 %v1430, %v1422
  %v2295 = vpack.c.b16 %v1431, %v1423
  %v2296 = vpack.c.b16 %v1432, %v1424
  %v2297 = vpack.c.b16 %v1433, %v1425
  %v2298 = vpack.c.b16 %v1434, %v1426
  %v2299 = vpack.c.b16 %v1435, %v1427
  %v2300 = vpack.c.b16 %v1444, %v1436
  %v2301 = vpack.c.b16 %v1445, %v1437
  %v2302 = vpack.c.b16 %v1446, %v1438
  %v2303 = vpack.c.b16 %v1447, %v1439
  %v2304 = vpack.c.b16 %v1448, %v1440
  %v2305 = vpack.c.b16 %v1449, %v1441
  %v2306 = vpack.c.b16 %v1450, %v1442
  %v2307 = vpack.c.b16 %v1451, %v1443
  %v2308 = vpack.c.b16 %v1460, %v1452
  %v2309 = vpack.c.b16 %v1461, %v1453
  %v2310 = vpack.c.b16 %v1462, %v1454
  %v2311 = vpack.c.b16 %v1463, %v1455
  %v2312 = vpack.c.b16 %v1464, %v1456
  %v2313 = vpack.c.b16 %v1465, %v1457
  %v2314 = vpack.c.b16 %v1466, %v1458
  %v2315 = vpack.c.b16 %v1467, %v1459
  %v2316 = vpack.c.b16 %v1476, %v1468
  %v2317 = vpack.c.b16 %v1477, %v1469
  %v2318 = vpack.c.b16 %v1478, %v1470
  %v2319 = vpack.c.b16 %v1479, %v1471
  %v2320 = vpack.c.b16 %v1480, %v1472
  %v2321 = vpack.c.b16 %v1481, %v1473
  %v2322 = vpack.c.b16 %v1482, %v1474
  %v2323 = vpack.c.b16 %v1483, %v1475
  %v2324 = vpack.c.b16 %v1492, %v1484
  %v2325 = vpack.c.b16 %v1493, %v1485
  %v2326 = vpack.c.b16 %v1494, %v1486
  %v2327 = vpack.c.b16 %v1495, %v1487
  %v2328 = vpack.c.b16 %v1496, %v1488
  %v2329 = vpack.c.b16 %v1497, %v1489
  %v2330 = vpack.c.b16 %v1498, %v1490
  %v2331 = vpack.c.b16 %v1499, %v1491
  %v2332 = vpack.c.b16 %v1508, %v1500
  %v2333 = vpack.c.b16 %v1509, %v1501
  %v2334 = vpack.c.b16 %v1510, %v1502
  %v2335 = vpack.c.b16 %v1511, %v1503
  %v2336 = vpack.c.b16 %v1512, %v1504
  %v2337 = vpack.c.b16 %v1513, %v1505
  %v2338 = vpack.c.b16 %v1514, %v1506
  %v2339 = vpack.c.b16 %v1515, %v1507
  %v2340 = vpack.c.b16 %v1524, %v1516
  %v2341 = vpack.c.b16 %v1525, %v1517
  %v2342 = vpack.c.b16 %v1526, %v1518
  %v2343 = vpack.c.b16 %v1527, %v1519
  %v2344 = vpack.c.b16 %v1528, %v1520
  %v2345 = vpack.c.b16 %v1529, %v1521
  %v2346 = vpack.c.b16 %v1530, %v1522
  %v2347 = vpack.c.b16 %v1531, %v1523
  %v2348 = vpack.c.b16 %v1540, %v1532
  %v2349 = vpack.c.b16 %v1541, %v1533
  %v2350 = vpack.c.b16 %v1542, %v1534
  %v2351 = vpack.c.b16 %v1543, %v1535
  %v2352 = vpack.c.b16 %v1544, %v1536
  %v2353 = vpack.c.b16 %v1545, %v1537
  %v2354 = vpack.c.b16 %v1546, %v1538
  %v2355 = vpack.c.b16 %v1547, %v1539
  %v2356 = vpack.c.b16 %v1556, %v1548
  %v2357 = vpack.c.b16 %v1557, %v1549
  %v2358 = vpack.c.b16 %v1558, %v1550
  %v2359 = vpack.c.b16 %v1559, %v1551
  %v2360 = vpack.c.b16 %v1560, %v1552
  %v2361 = vpack.c.b16 %v1561, %v1553
  %v2362 = vpack.c.b16 %v1562, %v1554
  %v2363 = vpack.c.b16 %v1563, %v1555
  %v2364 = vpack.c.b16 %v1572, %v1564
  %v2365 = vpack.c.b16 %v1573, %v1565
  %v2366 = vpack.c.b16 %v1574, %v1566
  %v2367 = vpack.c.b16 %v1575, %v1567
  %v2368 = vpack.c.b16 %v1576, %v1568
  %v2369 = vpack.c.b16 %v1577, %v1569
  %v2370 = vpack.c.b16 %v1578, %v1570
  %v2371 = vpack.c.b16 %v1579, %v1571
  %v2372 = vpack.c.b16 %v1588, %v1580
  %v2373 = vpack.c.b16 %v1589, %v1581
  %v2374 = vpack.c.b16 %v1590, %v1582
  %v2375 = vpack.c.b16 %v1591, %v1583
  %v2376 = vpack.c.b16 %v1592, %v1584
  %v2377 = vpack.c.b16 %v1593, %v1585
  %v2378 = vpack.c.b16 %v1594, %v1586
  %v2379 = vpack.c.b16 %v1595, %v1587
  %v2380 = vpack.c.b16 %v1604, %v1596
  %v2381 = vpack.c.b16 %v1605, %v1597
  %v2382 = vpack.c.b16 %v1606, %v1598
  %v2383 = vpack.c.b16 %v1607, %v1599
  %v2384 = vpack.c.b16 %v1608, %v1600
  %v2385 = vpack.c.b16 %v1609, %v1601
  %v2386 = vpack.c.b16 %v1610, %v1602
  %v2387 = vpack.c.b16 %v1611, %v1603
  %v2388 = vpack.c.b16 %v1620, %v1612
  %v2389 = vpack.c.b16 %v1621, %v1613
  %v2390 = vpack.c.b16 %v1622, %v1614
  %v2391 = vpack.c.b16 %v1623, %v1615
  %v2392 = vpack.c.b16 %v1624, %v1616
  %v2393 = vpack.c.b16 %v1625, %v1617
  %v2394 = vpack.c.b16 %v1626, %v1618
  %v2395 = vpack.c.b16 %v1627, %v1619
  %v2396 = vpack.c.b16 %v1636, %v1628
  %v2397 = vpack.c.b16 %v1637, %v1629
  %v2398 = vpack.c.b16 %v1638, %v1630
  %v2399 = vpack.c.b16 %v1639, %v1631
  %v2400 = vpack.c.b16 %v1640, %v1632
  %v2401 = vpack.c.b16 %v1641, %v1633
  %v2402 = vpack.c.b16 %v1642, %v1634
  %v2403 = vpack.c.b16 %v1643, %v1635
  %v2404 = vpack.c.b16 %v1652, %v1644
  %v2405 = vpack.c.b16 %v1653, %v1645
  %v2406 = vpack.c.b16 %v1654, %v1646
  %v2407 = vpack.c.b16 %v1655, %v1647
  %v2408 = vpack.c.b16 %v1656, %v1648
  %v2409 = vpack.c.b16 %v1657, %v1649
  %v2410 = vpack.c.b16 %v1658, %v1650
  %v2411 = vpack.c.b16 %v1659, %v1651
  %v2412 = vpack.c.b16 %v1668, %v1660
  %v2413 = vpack.c.b16 %v1669, %v1661
  %v2414 = vpack.c.b16 %v1670, %v1662
  %v2415 = vpack.c.b16 %v1671, %v1663
  %v2416 = vpack.c.b16 %v1672, %v1664
  %v2417 = vpack.c.b16 %v1673, %v1665
  %v2418 = vpack.c.b16 %v1674, %v1666
  %v2419 = vpack.c.b16 %v1675, %v1667
  %v2420 = vpack.c.b16 %v1684, %v1676
  %v2421 = vpack.c.b16 %v1685, %v1677
  %v2422 = vpack.c.b16 %v1686, %v1678
  %v2423 = vpack.c.b16 %v1687, %v1679
  %v2424 = vpack.c.b16 %v1688, %v1680
  %v2425 = vpack.c.b16 %v1689, %v1681
  %v2426 = vpack.c.b16 %v1690, %v1682
  %v2427 = vpack.c.b16 %v1691, %v1683
  %v2428 = vpack.c.b16 %v1700, %v1692
  %v2429 = vpack.c.b16 %v1701, %v1693
  %v2430 = vpack.c.b16 %v1702, %v1694
  %v2431 = vpack.c.b16 %v1703, %v1695
  %v2432 = vpack.c.b16 %v1704, %v1696
  %v2433 = vpack.c.b16 %v1705, %v1697
  %v2434 = vpack.c.b16 %v1706, %v1698
  %v2435 = vpack.c.b16 %v1707, %v1699
  %v2436 = vpack.c.b16 %v1716, %v1708
  %v2437 = vpack.c.b16 %v1717, %v1709
  %v2438 = vpack.c.b16 %v1718, %v1710
  %v2439 = vpack.c.b16 %v1719, %v1711
  %v2440 = vpack.c.b16 %v1720, %v1712
  %v2441 = vpack.c.b16 %v1721, %v1713
  %v2442 = vpack.c.b16 %v1722, %v1714
  %v2443 = vpack.c.b16 %v1723, %v1715
  %v2444 = vpack.c.b16 %v1732, %v1724
  %v2445 = vpack.c.b16 %v1733, %v1725
  %v2446 = vpack.c.b16 %v1734, %v1726
  %v2447 = vpack.c.b16 %v1735, %v1727
  %v2448 = vpack.c.b16 %v1736, %v1728
  %v2449 = vpack.c.b16 %v1737, %v1729
  %v2450 = vpack.c.b16 %v1738, %v1730
  %v2451 = vpack.c.b16 %v1739, %v1731
  %v2452 = vpack.c.b16 %v1748, %v1740
  %v2453 = vpack.c.b16 %v1749, %v1741
  %v2454 = vpack.c.b16 %v1750, %v1742
  %v2455 = vpack.c.b16 %v1751, %v1743
  %v2456 = vpack.c.b16 %v1752, %v1744
  %v2457 = vpack.c.b16 %v1753, %v1745
  %v2458 = vpack.c.b16 %v1754, %v1746
  %v2459 = vpack.c.b16 %v1755, %v1747
  %v2460 = vpack.c.b16 %v1764, %v1756
  %v2461 = vpack.c.b16 %v1765, %v1757
  %v2462 = vpack.c.b16 %v1766, %v1758
  %v2463 = vpack.c.b16 %v1767, %v1759
  %v2464 = vpack.c.b16 %v1768, %v1760
  %v2465 = vpack.c.b16 %v1769, %v1761
  %v2466 = vpack.c.b16 %v1770, %v1762
  %v2467 = vpack.c.b16 %v1771, %v1763
  %v2468 = vpack.c.b16 %v1780, %v1772
  %v2469 = vpack.c.b16 %v1781, %v1773
  %v2470 = vpack.c.b16 %v1782, %v1774
  %v2471 = vpack.c.b16 %v1783, %v1775
  %v2472 = vpack.c.b16 %v1784, %v1776
  %v2473 = vpack.c.b16 %v1785, %v1777
  %v2474 = vpack.c.b16 %v1786, %v1778
  %v2475 = vpack.c.b16 %v1787, %v1779
  %v2476 = vpack.c.b16 %v1796, %v1788
  %v2477 = vpack.c.b16 %v1797, %v1789
  %v2478 = vpack.c.b16 %v1798, %v1790
  %v2479 = vpack.c.b16 %v1799, %v1791
  %v2480 = vpack.c.b16 %v1800, %v1792
  %v2481 = vpack.c.b16 %v1801, %v1793
  %v2482 = vpack.c.b16 %v1802, %v1794
  %v2483 = vpack.c.b16 %v1803, %v1795
  %v2484 = vpack.c.b16 %v1812, %v1804
  %v2485 = vpack.c.b16 %v1813, %v1805
  %v2486 = vpack.c.b16 %v1814, %v1806
  %v2487 = vpack.c.b16 %v1815, %v1807
  %v2488 = vpack.c.b16 %v1816, %v1808
  %v2489 = vpack.c.b16 %v1817, %v1809
  %v2490 = vpack.c.b16 %v1818, %v1810
  %v2491 = vpack.c.b16 %v1819, %v1811
  %v2492 = vpack.c.b16 %v1828, %v1820
  %v2493 = vpack.c.b16 %v1829, %v1821
  %v2494 = vpack.c.b16 %v1830, %v1822
  %v2495 = vpack.c.b16 %v1831, %v1823
  %v2496 = vpack.c.b16 %v1832, %v1824
  %v2497 = vpack.c.b16 %v1833, %v1825
  %v2498 = vpack.c.b16 %v1834, %v1826
  %v2499 = vpack.c.b16 %v1835, %v1827
  %v2500 = vpack.c.b16 %v1844, %v1836
  %v2501 = vpack.c.b16 %v1845, %v1837
  %v2502 = vpack.c.b16 %v1846, %v1838
  %v2503 = vpack.c.b16 %v1847, %v1839
  %v2504 = vpack.c.b16 %v1848, %v1840
  %v2505 = vpack.c.b16 %v1849, %v1841
  %v2506 = vpack.c.b16 %v1850, %v1842
  %v2507 = vpack.c.b16 %v1851, %v1843
  %v2508 = vpack.c.b16 %v1860, %v1852
  %v2509 = vpack.c.b16 %v1861, %v1853
  %v2510 = vpack.c.b16 %v1862, %v1854
  %v2511 = vpack.c.b16 %v1863, %v1855
  %v2512 = vpack.c.b16 %v1864, %v1856
  %v2513 = vpack.c.b16 %v1865, %v1857
  %v2514 = vpack.c.b16 %v1866, %v1858
  %v2515 = vpack.c.b16 %v1867, %v1859
  %v2516 = vpack.c.b16 %v1876, %v1868
  %v2517 = vpack.c.b16 %v1877, %v1869
  %v2518 = vpack.c.b16 %v1878, %v1870
  %v2519 = vpack.c.b16 %v1879, %v1871
  %v2520 = vpack.c.b16 %v1880, %v1872
  %v2521 = vpack.c.b16 %v1881, %v1873
  %v2522 = vpack.c.b16 %v1882, %v1874
  %v2523 = vpack.c.b16 %v1883, %v1875
  %v2524 = vpack.c.b16 %v1892, %v1884
  %v2525 = vpack.c.b16 %v1893, %v1885
  %v2526 = vpack.c.b16 %v1894, %v1886
  %v2527 = vpack.c.b16 %v1895, %v1887
  %v2528 = vpack.c.b16 %v1896, %v1888
  %v2529 = vpack.c.b16 %v1897, %v1889
  %v2530 = vpack.c.b16 %v1898, %v1890
  %v2531 = vpack.c.b16 %v1899, %v1891
  %v2532 = vpack.c.b16 %v1908, %v1900
  %v2533 = vpack.c.b16 %v1909, %v1901
  %v2534 = vpack.c.b16 %v1910, %v1902
  %v2535 = vpack.c.b16 %v1911, %v1903
  %v2536 = vpack.c.b16 %v1912, %v1904
  %v2537 = vpack.c.b16 %v1913, %v1905
  %v2538 = vpack.c.b16 %v1914, %v1906
  %v2539 = vpack.c.b16 %v1915, %v1907
  %v2540 = vpack.c.b16 %v1924, %v1916
  %v2541 = vpack.c.b16 %v1925, %v1917
  %v2542 = vpack.c.b16 %v1926, %v1918
  %v2543 = vpack.c.b16 %v1927, %v1919
  %v2544 = vpack.c.b16 %v1928, %v1920
  %v2545 = vpack.c.b16 %v1929, %v1921
  %v2546 = vpack.c.b16 %v1930, %v1922
  %v2547 = vpack.c.b16 %v1931, %v1923
  %v2548 = vpack.c.b16 %v1940, %v1932
  %v2549 = vpack.c.b16 %v1941, %v1933
  %v2550 = vpack.c.b16 %v1942, %v1934
  %v2551 = vpack.c.b16 %v1943, %v1935
  %v2552 = vpack.c.b16 %v1944, %v1936
  %v2553 = vpack.c.b16 %v1945, %v1937
  %v2554 = vpack.c.b16 %v1946, %v1938
  %v2555 = vpack.c.b16 %v1947, %v1939
  %v2556 = vpack.c.b16 %v1956, %v1948
  %v2557 = vpack.c.b16 %v1957, %v1949
  %v2558 = vpack.c.b16 %v1958, %v1950
  %v2559 = vpack.c.b16 %v1959, %v1951
  %v2560 = vpack.c.b16 %v1960, %v1952
  %v2561 = vpack.c.b16 %v1961, %v1953
  %v2562 = vpack.c.b16 %v1962, %v1954
  %v2563 = vpack.c.b16 %v1963, %v1955
  %v2564 = vpack.c.b16 %v1972, %v1964
  %v2565 = vpack.c.b16 %v1973, %v1965
  %v2566 = vpack.c.b16 %v1974, %v1966
  %v2567 = vpack.c.b16 %v1975, %v1967
  %v2568 = vpack.c.b16 %v1976, %v1968
  %v2569 = vpack.c.b16 %v1977, %v1969
  %v2570 = vpack.c.b16 %v1978, %v1970
  %v2571 = vpack.c.b16 %v1979, %v1971
  %v2572 = vpack.c.b16 %v1988, %v1980
  %v2573 = vpack.c.b16 %v1989, %v1981
  %v2574 = vpack.c.b16 %v1990, %v1982
  %v2575 = vpack.c.b16 %v1991, %v1983
  %v2576 = vpack.c.b16 %v1992, %v1984
  %v2577 = vpack.c.b16 %v1993, %v1985
  %v2578 = vpack.c.b16 %v1994, %v1986
  %v2579 = vpack.c.b16 %v1995, %v1987
  %v2580 = vpack.c.b16 %v2004, %v1996
  %v2581 = vpack.c.b16 %v2005, %v1997
  %v2582 = vpack.c.b16 %v2006, %v1998
  %v2583 = vpack.c.b16 %v2007, %v1999
  %v2584 = vpack.c.b16 %v2008, %v2000
  %v2585 = vpack.c.b16 %v2009, %v2001
  %v2586 = vpack.c.b16 %v2010, %v2002
  %v2587 = vpack.c.b16 %v2011, %v2003
  %v2588 = vpack.c.b16 %v2020, %v2012
  %v2589 = vpack.c.b16 %v2021, %v2013
  %v2590 = vpack.c.b16 %v2022, %v2014
  %v2591 = vpack.c.b16 %v2023, %v2015
  %v2592 = vpack.c.b16 %v2024, %v2016
  %v2593 = vpack.c.b16 %v2025, %v2017
  %v2594 = vpack.c.b16 %v2026, %v2018
  %v2595 = vpack.c.b16 %v2027, %v2019
  %v2596 = vpack.c.b16 %v2036, %v2028
  %v2597 = vpack.c.b16 %v2037, %v2029
  %v2598 = vpack.c.b16 %v2038, %v2030
  %v2599 = vpack.c.b16 %v2039, %v2031
  %v2600 = vpack.c.b16 %v2040, %v2032
  %v2601 = vpack.c.b16 %v2041, %v2033
  %v2602 = vpack.c.b16 %v2042, %v2034
  %v2603 = vpack.c.b16 %v2043, %v2035
  %v2604 = vpack.c.b16 %v2052, %v2044
  %v2605 = vpack.c.b16 %v2053, %v2045
  %v2606 = vpack.c.b16 %v2054, %v2046
  %v2607 = vpack.c.b16 %v2055, %v2047
  %v2608 = vpack.c.b16 %v2056, %v2048
  %v2609 = vpack.c.b16 %v2057, %v2049
  %v2610 = vpack.c.b16 %v2058, %v2050
  %v2611 = vpack.c.b16 %v2059, %v2051
  %v2612 = vpack.c.b16 %v2068, %v2060
  %v2613 = vpack.c.b16 %v2069, %v2061
  %v2614 = vpack.c.b16 %v2070, %v2062
  %v2615 = vpack.c.b16 %v2071, %v2063
  %v2616 = vpack.c.b16 %v2072, %v2064
  %v2617 = vpack.c.b16 %v2073, %v2065
  %v2618 = vpack.c.b16 %v2074, %v2066
  %v2619 = vpack.c.b16 %v2075, %v2067
  %v2620 = vpack.c.b16 %v2084, %v2076
  %v2621 = vpack.c.b16 %v2085, %v2077
  %v2622 = vpack.c.b16 %v2086, %v2078
  %v2623 = vpack.c.b16 %v2087, %v2079
  %v2624 = vpack.c.b16 %v2088, %v2080
  %v2625 = vpack.c.b16 %v2089, %v2081
  %v2626 = vpack.c.b16 %v2090, %v2082
  %v2627 = vpack.c.b16 %v2091, %v2083
  %v2628 = vpack.c.b16 %v2100, %v2092
  %v2629 = vpack.c.b16 %v2101, %v2093
  %v2630 = vpack.c.b16 %v2102, %v2094
  %v2631 = vpack.c.b16 %v2103, %v2095
  %v2632 = vpack.c.b16 %v2104, %v2096
  %v2633 = vpack.c.b16 %v2105, %v2097
  %v2634 = vpack.c.b16 %v2106, %v2098
  %v2635 = vpack.c.b16 %v2107, %v2099
  %v2636 = vpack.c.b16 %v2116, %v2108
  %v2637 = vpack.c.b16 %v2117, %v2109
  %v2638 = vpack.c.b16 %v2118, %v2110
  %v2639 = vpack.c.b16 %v2119, %v2111
  %v2640 = vpack.c.b16 %v2120, %v2112
  %v2641 = vpack.c.b16 %v2121, %v2113
  %v2642 = vpack.c.b16 %v2122, %v2114
  %v2643 = vpack.c.b16 %v2123, %v2115
  %v2644 = vpack.c.b16 %v2132, %v2124
  %v2645 = vpack.c.b16 %v2133, %v2125
  %v2646 = vpack.c.b16 %v2134, %v2126
  %v2647 = vpack.c.b16 %v2135, %v2127
  %v2648 = vpack.c.b16 %v2136, %v2128
  %v2649 = vpack.c.b16 %v2137, %v2129
  %v2650 = vpack.c.b16 %v2138, %v2130
  %v2651 = vpack.c.b16 %v2139, %v2131
  %3164 = vmatpush.bf16.msra.mxu0 %v2196
  %3165 = vmatpush.bf16.msra.mxu0 %v2188
  %3166 = vmatpush.bf16.msra.mxu0 %v2180
  %3167 = vmatpush.bf16.msra.mxu0 %v2172
  %3168 = vmatpush.bf16.msra.mxu0 %v2164
  %3169 = vmatpush.bf16.msra.mxu0 %v2156
  %3170 = vmatpush.bf16.msra.mxu0 %v2148
  %3171 = vmatpush.bf16.msra.mxu0 %v2140
  %3172 = vmatmul.bf16.gmra.mxu0 %v588
  %v3173 = vpop.f32.mrf.mxu0
  %v3174 = vadd.f32 %v548, %v3173
  %v3175 = vpop.f32.mrf.mxu0
  %v3176 = vadd.f32 %v548, %v3175
  %3177 = vdwg.mxu0
  %3178 = vmatpush.bf16.msra.mxu0 %v2260
  %3179 = vmatpush.bf16.msra.mxu0 %v2252
  %3180 = vmatpush.bf16.msra.mxu0 %v2244
  %3181 = vmatpush.bf16.msra.mxu0 %v2236
  %3182 = vmatpush.bf16.msra.mxu0 %v2228
  %3183 = vmatpush.bf16.msra.mxu0 %v2220
  %3184 = vmatpush.bf16.msra.mxu0 %v2212
  %3185 = vmatpush.bf16.msra.mxu0 %v2204
  %3186 = vmatmul.bf16.gmra.mxu0 %v589
  %v3187 = vpop.f32.mrf.mxu0
  %v3188 = vadd.f32 %v3174, %v3187
  %v3189 = vpop.f32.mrf.mxu0
  %v3190 = vadd.f32 %v3176, %v3189
  %3191 = vdwg.mxu0
  %3192 = vmatpush.bf16.msra.mxu0 %v2324
  %3193 = vmatpush.bf16.msra.mxu0 %v2316
  %3194 = vmatpush.bf16.msra.mxu0 %v2308
  %3195 = vmatpush.bf16.msra.mxu0 %v2300
  %3196 = vmatpush.bf16.msra.mxu0 %v2292
  %3197 = vmatpush.bf16.msra.mxu0 %v2284
  %3198 = vmatpush.bf16.msra.mxu0 %v2276
  %3199 = vmatpush.bf16.msra.mxu0 %v2268
  %3200 = vmatmul.bf16.gmra.mxu0 %v590
  %v3201 = vpop.f32.mrf.mxu0
  %v3202 = vadd.f32 %v3188, %v3201
  %v3203 = vpop.f32.mrf.mxu0
  %v3204 = vadd.f32 %v3190, %v3203
  %3205 = vdwg.mxu0
  %3206 = vmatpush.bf16.msra.mxu0 %v2388
  %3207 = vmatpush.bf16.msra.mxu0 %v2380
  %3208 = vmatpush.bf16.msra.mxu0 %v2372
  %3209 = vmatpush.bf16.msra.mxu0 %v2364
  %3210 = vmatpush.bf16.msra.mxu0 %v2356
  %3211 = vmatpush.bf16.msra.mxu0 %v2348
  %3212 = vmatpush.bf16.msra.mxu0 %v2340
  %3213 = vmatpush.bf16.msra.mxu0 %v2332
  %3214 = vmatmul.bf16.gmra.mxu0 %v591
  %v3215 = vpop.f32.mrf.mxu0
  %v3216 = vadd.f32 %v3202, %v3215
  %v3217 = vpop.f32.mrf.mxu0
  %v3218 = vadd.f32 %v3204, %v3217
  %3219 = vdwg.mxu0
  %3220 = vmatpush.bf16.msra.mxu0 %v2452
  %3221 = vmatpush.bf16.msra.mxu0 %v2444
  %3222 = vmatpush.bf16.msra.mxu0 %v2436
  %3223 = vmatpush.bf16.msra.mxu0 %v2428
  %3224 = vmatpush.bf16.msra.mxu0 %v2420
  %3225 = vmatpush.bf16.msra.mxu0 %v2412
  %3226 = vmatpush.bf16.msra.mxu0 %v2404
  %3227 = vmatpush.bf16.msra.mxu0 %v2396
  %3228 = vmatmul.bf16.gmra.mxu0 %v592
  %v3229 = vpop.f32.mrf.mxu0
  %v3230 = vadd.f32 %v3216, %v3229
  %v3231 = vpop.f32.mrf.mxu0
  %v3232 = vadd.f32 %v3218, %v3231
  %3233 = vdwg.mxu0
  %3234 = vmatpush.bf16.msra.mxu0 %v2516
  %3235 = vmatpush.bf16.msra.mxu0 %v2508
  %3236 = vmatpush.bf16.msra.mxu0 %v2500
  %3237 = vmatpush.bf16.msra.mxu0 %v2492
  %3238 = vmatpush.bf16.msra.mxu0 %v2484
  %3239 = vmatpush.bf16.msra.mxu0 %v2476
  %3240 = vmatpush.bf16.msra.mxu0 %v2468
  %3241 = vmatpush.bf16.msra.mxu0 %v2460
  %3242 = vmatmul.bf16.gmra.mxu0 %v593
  %v3243 = vpop.f32.mrf.mxu0
  %v3244 = vadd.f32 %v3230, %v3243
  %v3245 = vpop.f32.mrf.mxu0
  %v3246 = vadd.f32 %v3232, %v3245
  %3247 = vdwg.mxu0
  %3248 = vmatpush.bf16.msra.mxu0 %v2580
  %3249 = vmatpush.bf16.msra.mxu0 %v2572
  %3250 = vmatpush.bf16.msra.mxu0 %v2564
  %3251 = vmatpush.bf16.msra.mxu0 %v2556
  %3252 = vmatpush.bf16.msra.mxu0 %v2548
  %3253 = vmatpush.bf16.msra.mxu0 %v2540
  %3254 = vmatpush.bf16.msra.mxu0 %v2532
  %3255 = vmatpush.bf16.msra.mxu0 %v2524
  %3256 = vmatmul.bf16.gmra.mxu0 %v594
  %v3257 = vpop.f32.mrf.mxu0
  %v3258 = vadd.f32 %v3244, %v3257
  %v3259 = vpop.f32.mrf.mxu0
  %v3260 = vadd.f32 %v3246, %v3259
  %3261 = vdwg.mxu0
  %3262 = vmatpush.bf16.msra.mxu0 %v2644
  %3263 = vmatpush.bf16.msra.mxu0 %v2636
  %3264 = vmatpush.bf16.msra.mxu0 %v2628
  %3265 = vmatpush.bf16.msra.mxu0 %v2620
  %3266 = vmatpush.bf16.msra.mxu0 %v2612
  %3267 = vmatpush.bf16.msra.mxu0 %v2604
  %3268 = vmatpush.bf16.msra.mxu0 %v2596
  %3269 = vmatpush.bf16.msra.mxu0 %v2588
  %3270 = vmatmul.bf16.gmra.mxu0 %v595
  %v3271 = vpop.f32.mrf.mxu0
  %v3272 = vadd.f32 %v3258, %v3271
  %v3273 = vpop.f32.mrf.mxu0
  %v3274 = vadd.f32 %v3260, %v3273
  %3275 = vdwg.mxu0
  %3276 = vmatpush.bf16.msra.mxu0 %v2197
  %3277 = vmatpush.bf16.msra.mxu0 %v2189
  %3278 = vmatpush.bf16.msra.mxu0 %v2181
  %3279 = vmatpush.bf16.msra.mxu0 %v2173
  %3280 = vmatpush.bf16.msra.mxu0 %v2165
  %3281 = vmatpush.bf16.msra.mxu0 %v2157
  %3282 = vmatpush.bf16.msra.mxu0 %v2149
  %3283 = vmatpush.bf16.msra.mxu0 %v2141
  %3284 = vmatmul.bf16.gmra.mxu0 %v588
  %v3285 = vpop.f32.mrf.mxu0
  %v3286 = vadd.f32 %v549, %v3285
  %v3287 = vpop.f32.mrf.mxu0
  %v3288 = vadd.f32 %v549, %v3287
  %3289 = vdwg.mxu0
  %3290 = vmatpush.bf16.msra.mxu0 %v2261
  %3291 = vmatpush.bf16.msra.mxu0 %v2253
  %3292 = vmatpush.bf16.msra.mxu0 %v2245
  %3293 = vmatpush.bf16.msra.mxu0 %v2237
  %3294 = vmatpush.bf16.msra.mxu0 %v2229
  %3295 = vmatpush.bf16.msra.mxu0 %v2221
  %3296 = vmatpush.bf16.msra.mxu0 %v2213
  %3297 = vmatpush.bf16.msra.mxu0 %v2205
  %3298 = vmatmul.bf16.gmra.mxu0 %v589
  %v3299 = vpop.f32.mrf.mxu0
  %v3300 = vadd.f32 %v3286, %v3299
  %v3301 = vpop.f32.mrf.mxu0
  %v3302 = vadd.f32 %v3288, %v3301
  %3303 = vdwg.mxu0
  %3304 = vmatpush.bf16.msra.mxu0 %v2325
  %3305 = vmatpush.bf16.msra.mxu0 %v2317
  %3306 = vmatpush.bf16.msra.mxu0 %v2309
  %3307 = vmatpush.bf16.msra.mxu0 %v2301
  %3308 = vmatpush.bf16.msra.mxu0 %v2293
  %3309 = vmatpush.bf16.msra.mxu0 %v2285
  %3310 = vmatpush.bf16.msra.mxu0 %v2277
  %3311 = vmatpush.bf16.msra.mxu0 %v2269
  %3312 = vmatmul.bf16.gmra.mxu0 %v590
  %v3313 = vpop.f32.mrf.mxu0
  %v3314 = vadd.f32 %v3300, %v3313
  %v3315 = vpop.f32.mrf.mxu0
  %v3316 = vadd.f32 %v3302, %v3315
  %3317 = vdwg.mxu0
  %3318 = vmatpush.bf16.msra.mxu0 %v2389
  %3319 = vmatpush.bf16.msra.mxu0 %v2381
  %3320 = vmatpush.bf16.msra.mxu0 %v2373
  %3321 = vmatpush.bf16.msra.mxu0 %v2365
  %3322 = vmatpush.bf16.msra.mxu0 %v2357
  %3323 = vmatpush.bf16.msra.mxu0 %v2349
  %3324 = vmatpush.bf16.msra.mxu0 %v2341
  %3325 = vmatpush.bf16.msra.mxu0 %v2333
  %3326 = vmatmul.bf16.gmra.mxu0 %v591
  %v3327 = vpop.f32.mrf.mxu0
  %v3328 = vadd.f32 %v3314, %v3327
  %v3329 = vpop.f32.mrf.mxu0
  %v3330 = vadd.f32 %v3316, %v3329
  %3331 = vdwg.mxu0
  %3332 = vmatpush.bf16.msra.mxu0 %v2453
  %3333 = vmatpush.bf16.msra.mxu0 %v2445
  %3334 = vmatpush.bf16.msra.mxu0 %v2437
  %3335 = vmatpush.bf16.msra.mxu0 %v2429
  %3336 = vmatpush.bf16.msra.mxu0 %v2421
  %3337 = vmatpush.bf16.msra.mxu0 %v2413
  %3338 = vmatpush.bf16.msra.mxu0 %v2405
  %3339 = vmatpush.bf16.msra.mxu0 %v2397
  %3340 = vmatmul.bf16.gmra.mxu0 %v592
  %v3341 = vpop.f32.mrf.mxu0
  %v3342 = vadd.f32 %v3328, %v3341
  %v3343 = vpop.f32.mrf.mxu0
  %v3344 = vadd.f32 %v3330, %v3343
  %3345 = vdwg.mxu0
  %3346 = vmatpush.bf16.msra.mxu0 %v2517
  %3347 = vmatpush.bf16.msra.mxu0 %v2509
  %3348 = vmatpush.bf16.msra.mxu0 %v2501
  %3349 = vmatpush.bf16.msra.mxu0 %v2493
  %3350 = vmatpush.bf16.msra.mxu0 %v2485
  %3351 = vmatpush.bf16.msra.mxu0 %v2477
  %3352 = vmatpush.bf16.msra.mxu0 %v2469
  %3353 = vmatpush.bf16.msra.mxu0 %v2461
  %3354 = vmatmul.bf16.gmra.mxu0 %v593
  %v3355 = vpop.f32.mrf.mxu0
  %v3356 = vadd.f32 %v3342, %v3355
  %v3357 = vpop.f32.mrf.mxu0
  %v3358 = vadd.f32 %v3344, %v3357
  %3359 = vdwg.mxu0
  %3360 = vmatpush.bf16.msra.mxu0 %v2581
  %3361 = vmatpush.bf16.msra.mxu0 %v2573
  %3362 = vmatpush.bf16.msra.mxu0 %v2565
  %3363 = vmatpush.bf16.msra.mxu0 %v2557
  %3364 = vmatpush.bf16.msra.mxu0 %v2549
  %3365 = vmatpush.bf16.msra.mxu0 %v2541
  %3366 = vmatpush.bf16.msra.mxu0 %v2533
  %3367 = vmatpush.bf16.msra.mxu0 %v2525
  %3368 = vmatmul.bf16.gmra.mxu0 %v594
  %v3369 = vpop.f32.mrf.mxu0
  %v3370 = vadd.f32 %v3356, %v3369
  %v3371 = vpop.f32.mrf.mxu0
  %v3372 = vadd.f32 %v3358, %v3371
  %3373 = vdwg.mxu0
  %3374 = vmatpush.bf16.msra.mxu0 %v2645
  %3375 = vmatpush.bf16.msra.mxu0 %v2637
  %3376 = vmatpush.bf16.msra.mxu0 %v2629
  %3377 = vmatpush.bf16.msra.mxu0 %v2621
  %3378 = vmatpush.bf16.msra.mxu0 %v2613
  %3379 = vmatpush.bf16.msra.mxu0 %v2605
  %3380 = vmatpush.bf16.msra.mxu0 %v2597
  %3381 = vmatpush.bf16.msra.mxu0 %v2589
  %3382 = vmatmul.bf16.gmra.mxu0 %v595
  %v3383 = vpop.f32.mrf.mxu0
  %v3384 = vadd.f32 %v3370, %v3383
  %v3385 = vpop.f32.mrf.mxu0
  %v3386 = vadd.f32 %v3372, %v3385
  %3387 = vdwg.mxu0
  %3388 = vmatpush.bf16.msra.mxu0 %v2198
  %3389 = vmatpush.bf16.msra.mxu0 %v2190
  %3390 = vmatpush.bf16.msra.mxu0 %v2182
  %3391 = vmatpush.bf16.msra.mxu0 %v2174
  %3392 = vmatpush.bf16.msra.mxu0 %v2166
  %3393 = vmatpush.bf16.msra.mxu0 %v2158
  %3394 = vmatpush.bf16.msra.mxu0 %v2150
  %3395 = vmatpush.bf16.msra.mxu0 %v2142
  %3396 = vmatmul.bf16.gmra.mxu0 %v588
  %v3397 = vpop.f32.mrf.mxu0
  %v3398 = vadd.f32 %v550, %v3397
  %v3399 = vpop.f32.mrf.mxu0
  %v3400 = vadd.f32 %v550, %v3399
  %3401 = vdwg.mxu0
  %3402 = vmatpush.bf16.msra.mxu0 %v2262
  %3403 = vmatpush.bf16.msra.mxu0 %v2254
  %3404 = vmatpush.bf16.msra.mxu0 %v2246
  %3405 = vmatpush.bf16.msra.mxu0 %v2238
  %3406 = vmatpush.bf16.msra.mxu0 %v2230
  %3407 = vmatpush.bf16.msra.mxu0 %v2222
  %3408 = vmatpush.bf16.msra.mxu0 %v2214
  %3409 = vmatpush.bf16.msra.mxu0 %v2206
  %3410 = vmatmul.bf16.gmra.mxu0 %v589
  %v3411 = vpop.f32.mrf.mxu0
  %v3412 = vadd.f32 %v3398, %v3411
  %v3413 = vpop.f32.mrf.mxu0
  %v3414 = vadd.f32 %v3400, %v3413
  %3415 = vdwg.mxu0
  %3416 = vmatpush.bf16.msra.mxu0 %v2326
  %3417 = vmatpush.bf16.msra.mxu0 %v2318
  %3418 = vmatpush.bf16.msra.mxu0 %v2310
  %3419 = vmatpush.bf16.msra.mxu0 %v2302
  %3420 = vmatpush.bf16.msra.mxu0 %v2294
  %3421 = vmatpush.bf16.msra.mxu0 %v2286
  %3422 = vmatpush.bf16.msra.mxu0 %v2278
  %3423 = vmatpush.bf16.msra.mxu0 %v2270
  %3424 = vmatmul.bf16.gmra.mxu0 %v590
  %v3425 = vpop.f32.mrf.mxu0
  %v3426 = vadd.f32 %v3412, %v3425
  %v3427 = vpop.f32.mrf.mxu0
  %v3428 = vadd.f32 %v3414, %v3427
  %3429 = vdwg.mxu0
  %3430 = vmatpush.bf16.msra.mxu0 %v2390
  %3431 = vmatpush.bf16.msra.mxu0 %v2382
  %3432 = vmatpush.bf16.msra.mxu0 %v2374
  %3433 = vmatpush.bf16.msra.mxu0 %v2366
  %3434 = vmatpush.bf16.msra.mxu0 %v2358
  %3435 = vmatpush.bf16.msra.mxu0 %v2350
  %3436 = vmatpush.bf16.msra.mxu0 %v2342
  %3437 = vmatpush.bf16.msra.mxu0 %v2334
  %3438 = vmatmul.bf16.gmra.mxu0 %v591
  %v3439 = vpop.f32.mrf.mxu0
  %v3440 = vadd.f32 %v3426, %v3439
  %v3441 = vpop.f32.mrf.mxu0
  %v3442 = vadd.f32 %v3428, %v3441
  %3443 = vdwg.mxu0
  %3444 = vmatpush.bf16.msra.mxu0 %v2454
  %3445 = vmatpush.bf16.msra.mxu0 %v2446
  %3446 = vmatpush.bf16.msra.mxu0 %v2438
  %3447 = vmatpush.bf16.msra.mxu0 %v2430
  %3448 = vmatpush.bf16.msra.mxu0 %v2422
  %3449 = vmatpush.bf16.msra.mxu0 %v2414
  %3450 = vmatpush.bf16.msra.mxu0 %v2406
  %3451 = vmatpush.bf16.msra.mxu0 %v2398
  %3452 = vmatmul.bf16.gmra.mxu0 %v592
  %v3453 = vpop.f32.mrf.mxu0
  %v3454 = vadd.f32 %v3440, %v3453
  %v3455 = vpop.f32.mrf.mxu0
  %v3456 = vadd.f32 %v3442, %v3455
  %3457 = vdwg.mxu0
  %3458 = vmatpush.bf16.msra.mxu0 %v2518
  %3459 = vmatpush.bf16.msra.mxu0 %v2510
  %3460 = vmatpush.bf16.msra.mxu0 %v2502
  %3461 = vmatpush.bf16.msra.mxu0 %v2494
  %3462 = vmatpush.bf16.msra.mxu0 %v2486
  %3463 = vmatpush.bf16.msra.mxu0 %v2478
  %3464 = vmatpush.bf16.msra.mxu0 %v2470
  %3465 = vmatpush.bf16.msra.mxu0 %v2462
  %3466 = vmatmul.bf16.gmra.mxu0 %v593
  %v3467 = vpop.f32.mrf.mxu0
  %v3468 = vadd.f32 %v3454, %v3467
  %v3469 = vpop.f32.mrf.mxu0
  %v3470 = vadd.f32 %v3456, %v3469
  %3471 = vdwg.mxu0
  %3472 = vmatpush.bf16.msra.mxu0 %v2582
  %3473 = vmatpush.bf16.msra.mxu0 %v2574
  %3474 = vmatpush.bf16.msra.mxu0 %v2566
  %3475 = vmatpush.bf16.msra.mxu0 %v2558
  %3476 = vmatpush.bf16.msra.mxu0 %v2550
  %3477 = vmatpush.bf16.msra.mxu0 %v2542
  %3478 = vmatpush.bf16.msra.mxu0 %v2534
  %3479 = vmatpush.bf16.msra.mxu0 %v2526
  %3480 = vmatmul.bf16.gmra.mxu0 %v594
  %v3481 = vpop.f32.mrf.mxu0
  %v3482 = vadd.f32 %v3468, %v3481
  %v3483 = vpop.f32.mrf.mxu0
  %v3484 = vadd.f32 %v3470, %v3483
  %3485 = vdwg.mxu0
  %3486 = vmatpush.bf16.msra.mxu0 %v2646
  %3487 = vmatpush.bf16.msra.mxu0 %v2638
  %3488 = vmatpush.bf16.msra.mxu0 %v2630
  %3489 = vmatpush.bf16.msra.mxu0 %v2622
  %3490 = vmatpush.bf16.msra.mxu0 %v2614
  %3491 = vmatpush.bf16.msra.mxu0 %v2606
  %3492 = vmatpush.bf16.msra.mxu0 %v2598
  %3493 = vmatpush.bf16.msra.mxu0 %v2590
  %3494 = vmatmul.bf16.gmra.mxu0 %v595
  %v3495 = vpop.f32.mrf.mxu0
  %v3496 = vadd.f32 %v3482, %v3495
  %v3497 = vpop.f32.mrf.mxu0
  %v3498 = vadd.f32 %v3484, %v3497
  %3499 = vdwg.mxu0
  %3500 = vmatpush.bf16.msra.mxu0 %v2199
  %3501 = vmatpush.bf16.msra.mxu0 %v2191
  %3502 = vmatpush.bf16.msra.mxu0 %v2183
  %3503 = vmatpush.bf16.msra.mxu0 %v2175
  %3504 = vmatpush.bf16.msra.mxu0 %v2167
  %3505 = vmatpush.bf16.msra.mxu0 %v2159
  %3506 = vmatpush.bf16.msra.mxu0 %v2151
  %3507 = vmatpush.bf16.msra.mxu0 %v2143
  %3508 = vmatmul.bf16.gmra.mxu0 %v588
  %v3509 = vpop.f32.mrf.mxu0
  %v3510 = vadd.f32 %v551, %v3509
  %v3511 = vpop.f32.mrf.mxu0
  %v3512 = vadd.f32 %v551, %v3511
  %3513 = vdwg.mxu0
  %3514 = vmatpush.bf16.msra.mxu0 %v2263
  %3515 = vmatpush.bf16.msra.mxu0 %v2255
  %3516 = vmatpush.bf16.msra.mxu0 %v2247
  %3517 = vmatpush.bf16.msra.mxu0 %v2239
  %3518 = vmatpush.bf16.msra.mxu0 %v2231
  %3519 = vmatpush.bf16.msra.mxu0 %v2223
  %3520 = vmatpush.bf16.msra.mxu0 %v2215
  %3521 = vmatpush.bf16.msra.mxu0 %v2207
  %3522 = vmatmul.bf16.gmra.mxu0 %v589
  %v3523 = vpop.f32.mrf.mxu0
  %v3524 = vadd.f32 %v3510, %v3523
  %v3525 = vpop.f32.mrf.mxu0
  %v3526 = vadd.f32 %v3512, %v3525
  %3527 = vdwg.mxu0
  %3528 = vmatpush.bf16.msra.mxu0 %v2327
  %3529 = vmatpush.bf16.msra.mxu0 %v2319
  %3530 = vmatpush.bf16.msra.mxu0 %v2311
  %3531 = vmatpush.bf16.msra.mxu0 %v2303
  %3532 = vmatpush.bf16.msra.mxu0 %v2295
  %3533 = vmatpush.bf16.msra.mxu0 %v2287
  %3534 = vmatpush.bf16.msra.mxu0 %v2279
  %3535 = vmatpush.bf16.msra.mxu0 %v2271
  %3536 = vmatmul.bf16.gmra.mxu0 %v590
  %v3537 = vpop.f32.mrf.mxu0
  %v3538 = vadd.f32 %v3524, %v3537
  %v3539 = vpop.f32.mrf.mxu0
  %v3540 = vadd.f32 %v3526, %v3539
  %3541 = vdwg.mxu0
  %3542 = vmatpush.bf16.msra.mxu0 %v2391
  %3543 = vmatpush.bf16.msra.mxu0 %v2383
  %3544 = vmatpush.bf16.msra.mxu0 %v2375
  %3545 = vmatpush.bf16.msra.mxu0 %v2367
  %3546 = vmatpush.bf16.msra.mxu0 %v2359
  %3547 = vmatpush.bf16.msra.mxu0 %v2351
  %3548 = vmatpush.bf16.msra.mxu0 %v2343
  %3549 = vmatpush.bf16.msra.mxu0 %v2335
  %3550 = vmatmul.bf16.gmra.mxu0 %v591
  %v3551 = vpop.f32.mrf.mxu0
  %v3552 = vadd.f32 %v3538, %v3551
  %v3553 = vpop.f32.mrf.mxu0
  %v3554 = vadd.f32 %v3540, %v3553
  %3555 = vdwg.mxu0
  %3556 = vmatpush.bf16.msra.mxu0 %v2455
  %3557 = vmatpush.bf16.msra.mxu0 %v2447
  %3558 = vmatpush.bf16.msra.mxu0 %v2439
  %3559 = vmatpush.bf16.msra.mxu0 %v2431
  %3560 = vmatpush.bf16.msra.mxu0 %v2423
  %3561 = vmatpush.bf16.msra.mxu0 %v2415
  %3562 = vmatpush.bf16.msra.mxu0 %v2407
  %3563 = vmatpush.bf16.msra.mxu0 %v2399
  %3564 = vmatmul.bf16.gmra.mxu0 %v592
  %v3565 = vpop.f32.mrf.mxu0
  %v3566 = vadd.f32 %v3552, %v3565
  %v3567 = vpop.f32.mrf.mxu0
  %v3568 = vadd.f32 %v3554, %v3567
  %3569 = vdwg.mxu0
  %3570 = vmatpush.bf16.msra.mxu0 %v2519
  %3571 = vmatpush.bf16.msra.mxu0 %v2511
  %3572 = vmatpush.bf16.msra.mxu0 %v2503
  %3573 = vmatpush.bf16.msra.mxu0 %v2495
  %3574 = vmatpush.bf16.msra.mxu0 %v2487
  %3575 = vmatpush.bf16.msra.mxu0 %v2479
  %3576 = vmatpush.bf16.msra.mxu0 %v2471
  %3577 = vmatpush.bf16.msra.mxu0 %v2463
  %3578 = vmatmul.bf16.gmra.mxu0 %v593
  %v3579 = vpop.f32.mrf.mxu0
  %v3580 = vadd.f32 %v3566, %v3579
  %v3581 = vpop.f32.mrf.mxu0
  %v3582 = vadd.f32 %v3568, %v3581
  %3583 = vdwg.mxu0
  %3584 = vmatpush.bf16.msra.mxu0 %v2583
  %3585 = vmatpush.bf16.msra.mxu0 %v2575
  %3586 = vmatpush.bf16.msra.mxu0 %v2567
  %3587 = vmatpush.bf16.msra.mxu0 %v2559
  %3588 = vmatpush.bf16.msra.mxu0 %v2551
  %3589 = vmatpush.bf16.msra.mxu0 %v2543
  %3590 = vmatpush.bf16.msra.mxu0 %v2535
  %3591 = vmatpush.bf16.msra.mxu0 %v2527
  %3592 = vmatmul.bf16.gmra.mxu0 %v594
  %v3593 = vpop.f32.mrf.mxu0
  %v3594 = vadd.f32 %v3580, %v3593
  %v3595 = vpop.f32.mrf.mxu0
  %v3596 = vadd.f32 %v3582, %v3595
  %3597 = vdwg.mxu0
  %3598 = vmatpush.bf16.msra.mxu0 %v2647
  %3599 = vmatpush.bf16.msra.mxu0 %v2639
  %3600 = vmatpush.bf16.msra.mxu0 %v2631
  %3601 = vmatpush.bf16.msra.mxu0 %v2623
  %3602 = vmatpush.bf16.msra.mxu0 %v2615
  %3603 = vmatpush.bf16.msra.mxu0 %v2607
  %3604 = vmatpush.bf16.msra.mxu0 %v2599
  %3605 = vmatpush.bf16.msra.mxu0 %v2591
  %3606 = vmatmul.bf16.gmra.mxu0 %v595
  %v3607 = vpop.f32.mrf.mxu0
  %v3608 = vadd.f32 %v3594, %v3607
  %v3609 = vpop.f32.mrf.mxu0
  %v3610 = vadd.f32 %v3596, %v3609
  %3611 = vdwg.mxu0
  %3612 = vmatpush.bf16.msra.mxu0 %v2200
  %3613 = vmatpush.bf16.msra.mxu0 %v2192
  %3614 = vmatpush.bf16.msra.mxu0 %v2184
  %3615 = vmatpush.bf16.msra.mxu0 %v2176
  %3616 = vmatpush.bf16.msra.mxu0 %v2168
  %3617 = vmatpush.bf16.msra.mxu0 %v2160
  %3618 = vmatpush.bf16.msra.mxu0 %v2152
  %3619 = vmatpush.bf16.msra.mxu0 %v2144
  %3620 = vmatmul.bf16.gmra.mxu0 %v588
  %v3621 = vpop.f32.mrf.mxu0
  %v3622 = vadd.f32 %v552, %v3621
  %v3623 = vpop.f32.mrf.mxu0
  %v3624 = vadd.f32 %v552, %v3623
  %3625 = vdwg.mxu0
  %3626 = vmatpush.bf16.msra.mxu0 %v2264
  %3627 = vmatpush.bf16.msra.mxu0 %v2256
  %3628 = vmatpush.bf16.msra.mxu0 %v2248
  %3629 = vmatpush.bf16.msra.mxu0 %v2240
  %3630 = vmatpush.bf16.msra.mxu0 %v2232
  %3631 = vmatpush.bf16.msra.mxu0 %v2224
  %3632 = vmatpush.bf16.msra.mxu0 %v2216
  %3633 = vmatpush.bf16.msra.mxu0 %v2208
  %3634 = vmatmul.bf16.gmra.mxu0 %v589
  %v3635 = vpop.f32.mrf.mxu0
  %v3636 = vadd.f32 %v3622, %v3635
  %v3637 = vpop.f32.mrf.mxu0
  %v3638 = vadd.f32 %v3624, %v3637
  %3639 = vdwg.mxu0
  %3640 = vmatpush.bf16.msra.mxu0 %v2328
  %3641 = vmatpush.bf16.msra.mxu0 %v2320
  %3642 = vmatpush.bf16.msra.mxu0 %v2312
  %3643 = vmatpush.bf16.msra.mxu0 %v2304
  %3644 = vmatpush.bf16.msra.mxu0 %v2296
  %3645 = vmatpush.bf16.msra.mxu0 %v2288
  %3646 = vmatpush.bf16.msra.mxu0 %v2280
  %3647 = vmatpush.bf16.msra.mxu0 %v2272
  %3648 = vmatmul.bf16.gmra.mxu0 %v590
  %v3649 = vpop.f32.mrf.mxu0
  %v3650 = vadd.f32 %v3636, %v3649
  %v3651 = vpop.f32.mrf.mxu0
  %v3652 = vadd.f32 %v3638, %v3651
  %3653 = vdwg.mxu0
  %3654 = vmatpush.bf16.msra.mxu0 %v2392
  %3655 = vmatpush.bf16.msra.mxu0 %v2384
  %3656 = vmatpush.bf16.msra.mxu0 %v2376
  %3657 = vmatpush.bf16.msra.mxu0 %v2368
  %3658 = vmatpush.bf16.msra.mxu0 %v2360
  %3659 = vmatpush.bf16.msra.mxu0 %v2352
  %3660 = vmatpush.bf16.msra.mxu0 %v2344
  %3661 = vmatpush.bf16.msra.mxu0 %v2336
  %3662 = vmatmul.bf16.gmra.mxu0 %v591
  %v3663 = vpop.f32.mrf.mxu0
  %v3664 = vadd.f32 %v3650, %v3663
  %v3665 = vpop.f32.mrf.mxu0
  %v3666 = vadd.f32 %v3652, %v3665
  %3667 = vdwg.mxu0
  %3668 = vmatpush.bf16.msra.mxu0 %v2456
  %3669 = vmatpush.bf16.msra.mxu0 %v2448
  %3670 = vmatpush.bf16.msra.mxu0 %v2440
  %3671 = vmatpush.bf16.msra.mxu0 %v2432
  %3672 = vmatpush.bf16.msra.mxu0 %v2424
  %3673 = vmatpush.bf16.msra.mxu0 %v2416
  %3674 = vmatpush.bf16.msra.mxu0 %v2408
  %3675 = vmatpush.bf16.msra.mxu0 %v2400
  %3676 = vmatmul.bf16.gmra.mxu0 %v592
  %v3677 = vpop.f32.mrf.mxu0
  %v3678 = vadd.f32 %v3664, %v3677
  %v3679 = vpop.f32.mrf.mxu0
  %v3680 = vadd.f32 %v3666, %v3679
  %3681 = vdwg.mxu0
  %3682 = vmatpush.bf16.msra.mxu0 %v2520
  %3683 = vmatpush.bf16.msra.mxu0 %v2512
  %3684 = vmatpush.bf16.msra.mxu0 %v2504
  %3685 = vmatpush.bf16.msra.mxu0 %v2496
  %3686 = vmatpush.bf16.msra.mxu0 %v2488
  %3687 = vmatpush.bf16.msra.mxu0 %v2480
  %3688 = vmatpush.bf16.msra.mxu0 %v2472
  %3689 = vmatpush.bf16.msra.mxu0 %v2464
  %3690 = vmatmul.bf16.gmra.mxu0 %v593
  %v3691 = vpop.f32.mrf.mxu0
  %v3692 = vadd.f32 %v3678, %v3691
  %v3693 = vpop.f32.mrf.mxu0
  %v3694 = vadd.f32 %v3680, %v3693
  %3695 = vdwg.mxu0
  %3696 = vmatpush.bf16.msra.mxu0 %v2584
  %3697 = vmatpush.bf16.msra.mxu0 %v2576
  %3698 = vmatpush.bf16.msra.mxu0 %v2568
  %3699 = vmatpush.bf16.msra.mxu0 %v2560
  %3700 = vmatpush.bf16.msra.mxu0 %v2552
  %3701 = vmatpush.bf16.msra.mxu0 %v2544
  %3702 = vmatpush.bf16.msra.mxu0 %v2536
  %3703 = vmatpush.bf16.msra.mxu0 %v2528
  %3704 = vmatmul.bf16.gmra.mxu0 %v594
  %v3705 = vpop.f32.mrf.mxu0
  %v3706 = vadd.f32 %v3692, %v3705
  %v3707 = vpop.f32.mrf.mxu0
  %v3708 = vadd.f32 %v3694, %v3707
  %3709 = vdwg.mxu0
  %3710 = vmatpush.bf16.msra.mxu0 %v2648
  %3711 = vmatpush.bf16.msra.mxu0 %v2640
  %3712 = vmatpush.bf16.msra.mxu0 %v2632
  %3713 = vmatpush.bf16.msra.mxu0 %v2624
  %3714 = vmatpush.bf16.msra.mxu0 %v2616
  %3715 = vmatpush.bf16.msra.mxu0 %v2608
  %3716 = vmatpush.bf16.msra.mxu0 %v2600
  %3717 = vmatpush.bf16.msra.mxu0 %v2592
  %3718 = vmatmul.bf16.gmra.mxu0 %v595
  %v3719 = vpop.f32.mrf.mxu0
  %v3720 = vadd.f32 %v3706, %v3719
  %v3721 = vpop.f32.mrf.mxu0
  %v3722 = vadd.f32 %v3708, %v3721
  %3723 = vdwg.mxu0
  %3724 = vmatpush.bf16.msra.mxu0 %v2201
  %3725 = vmatpush.bf16.msra.mxu0 %v2193
  %3726 = vmatpush.bf16.msra.mxu0 %v2185
  %3727 = vmatpush.bf16.msra.mxu0 %v2177
  %3728 = vmatpush.bf16.msra.mxu0 %v2169
  %3729 = vmatpush.bf16.msra.mxu0 %v2161
  %3730 = vmatpush.bf16.msra.mxu0 %v2153
  %3731 = vmatpush.bf16.msra.mxu0 %v2145
  %3732 = vmatmul.bf16.gmra.mxu0 %v588
  %v3733 = vpop.f32.mrf.mxu0
  %v3734 = vadd.f32 %v553, %v3733
  %v3735 = vpop.f32.mrf.mxu0
  %v3736 = vadd.f32 %v553, %v3735
  %3737 = vdwg.mxu0
  %3738 = vmatpush.bf16.msra.mxu0 %v2265
  %3739 = vmatpush.bf16.msra.mxu0 %v2257
  %3740 = vmatpush.bf16.msra.mxu0 %v2249
  %3741 = vmatpush.bf16.msra.mxu0 %v2241
  %3742 = vmatpush.bf16.msra.mxu0 %v2233
  %3743 = vmatpush.bf16.msra.mxu0 %v2225
  %3744 = vmatpush.bf16.msra.mxu0 %v2217
  %3745 = vmatpush.bf16.msra.mxu0 %v2209
  %3746 = vmatmul.bf16.gmra.mxu0 %v589
  %v3747 = vpop.f32.mrf.mxu0
  %v3748 = vadd.f32 %v3734, %v3747
  %v3749 = vpop.f32.mrf.mxu0
  %v3750 = vadd.f32 %v3736, %v3749
  %3751 = vdwg.mxu0
  %3752 = vmatpush.bf16.msra.mxu0 %v2329
  %3753 = vmatpush.bf16.msra.mxu0 %v2321
  %3754 = vmatpush.bf16.msra.mxu0 %v2313
  %3755 = vmatpush.bf16.msra.mxu0 %v2305
  %3756 = vmatpush.bf16.msra.mxu0 %v2297
  %3757 = vmatpush.bf16.msra.mxu0 %v2289
  %3758 = vmatpush.bf16.msra.mxu0 %v2281
  %3759 = vmatpush.bf16.msra.mxu0 %v2273
  %3760 = vmatmul.bf16.gmra.mxu0 %v590
  %v3761 = vpop.f32.mrf.mxu0
  %v3762 = vadd.f32 %v3748, %v3761
  %v3763 = vpop.f32.mrf.mxu0
  %v3764 = vadd.f32 %v3750, %v3763
  %3765 = vdwg.mxu0
  %3766 = vmatpush.bf16.msra.mxu0 %v2393
  %3767 = vmatpush.bf16.msra.mxu0 %v2385
  %3768 = vmatpush.bf16.msra.mxu0 %v2377
  %3769 = vmatpush.bf16.msra.mxu0 %v2369
  %3770 = vmatpush.bf16.msra.mxu0 %v2361
  %3771 = vmatpush.bf16.msra.mxu0 %v2353
  %3772 = vmatpush.bf16.msra.mxu0 %v2345
  %3773 = vmatpush.bf16.msra.mxu0 %v2337
  %3774 = vmatmul.bf16.gmra.mxu0 %v591
  %v3775 = vpop.f32.mrf.mxu0
  %v3776 = vadd.f32 %v3762, %v3775
  %v3777 = vpop.f32.mrf.mxu0
  %v3778 = vadd.f32 %v3764, %v3777
  %3779 = vdwg.mxu0
  %3780 = vmatpush.bf16.msra.mxu0 %v2457
  %3781 = vmatpush.bf16.msra.mxu0 %v2449
  %3782 = vmatpush.bf16.msra.mxu0 %v2441
  %3783 = vmatpush.bf16.msra.mxu0 %v2433
  %3784 = vmatpush.bf16.msra.mxu0 %v2425
  %3785 = vmatpush.bf16.msra.mxu0 %v2417
  %3786 = vmatpush.bf16.msra.mxu0 %v2409
  %3787 = vmatpush.bf16.msra.mxu0 %v2401
  %3788 = vmatmul.bf16.gmra.mxu0 %v592
  %v3789 = vpop.f32.mrf.mxu0
  %v3790 = vadd.f32 %v3776, %v3789
  %v3791 = vpop.f32.mrf.mxu0
  %v3792 = vadd.f32 %v3778, %v3791
  %3793 = vdwg.mxu0
  %3794 = vmatpush.bf16.msra.mxu0 %v2521
  %3795 = vmatpush.bf16.msra.mxu0 %v2513
  %3796 = vmatpush.bf16.msra.mxu0 %v2505
  %3797 = vmatpush.bf16.msra.mxu0 %v2497
  %3798 = vmatpush.bf16.msra.mxu0 %v2489
  %3799 = vmatpush.bf16.msra.mxu0 %v2481
  %3800 = vmatpush.bf16.msra.mxu0 %v2473
  %3801 = vmatpush.bf16.msra.mxu0 %v2465
  %3802 = vmatmul.bf16.gmra.mxu0 %v593
  %v3803 = vpop.f32.mrf.mxu0
  %v3804 = vadd.f32 %v3790, %v3803
  %v3805 = vpop.f32.mrf.mxu0
  %v3806 = vadd.f32 %v3792, %v3805
  %3807 = vdwg.mxu0
  %3808 = vmatpush.bf16.msra.mxu0 %v2585
  %3809 = vmatpush.bf16.msra.mxu0 %v2577
  %3810 = vmatpush.bf16.msra.mxu0 %v2569
  %3811 = vmatpush.bf16.msra.mxu0 %v2561
  %3812 = vmatpush.bf16.msra.mxu0 %v2553
  %3813 = vmatpush.bf16.msra.mxu0 %v2545
  %3814 = vmatpush.bf16.msra.mxu0 %v2537
  %3815 = vmatpush.bf16.msra.mxu0 %v2529
  %3816 = vmatmul.bf16.gmra.mxu0 %v594
  %v3817 = vpop.f32.mrf.mxu0
  %v3818 = vadd.f32 %v3804, %v3817
  %v3819 = vpop.f32.mrf.mxu0
  %v3820 = vadd.f32 %v3806, %v3819
  %3821 = vdwg.mxu0
  %3822 = vmatpush.bf16.msra.mxu0 %v2649
  %3823 = vmatpush.bf16.msra.mxu0 %v2641
  %3824 = vmatpush.bf16.msra.mxu0 %v2633
  %3825 = vmatpush.bf16.msra.mxu0 %v2625
  %3826 = vmatpush.bf16.msra.mxu0 %v2617
  %3827 = vmatpush.bf16.msra.mxu0 %v2609
  %3828 = vmatpush.bf16.msra.mxu0 %v2601
  %3829 = vmatpush.bf16.msra.mxu0 %v2593
  %3830 = vmatmul.bf16.gmra.mxu0 %v595
  %v3831 = vpop.f32.mrf.mxu0
  %v3832 = vadd.f32 %v3818, %v3831
  %v3833 = vpop.f32.mrf.mxu0
  %v3834 = vadd.f32 %v3820, %v3833
  %3835 = vdwg.mxu0
  %3836 = vmatpush.bf16.msra.mxu0 %v2202
  %3837 = vmatpush.bf16.msra.mxu0 %v2194
  %3838 = vmatpush.bf16.msra.mxu0 %v2186
  %3839 = vmatpush.bf16.msra.mxu0 %v2178
  %3840 = vmatpush.bf16.msra.mxu0 %v2170
  %3841 = vmatpush.bf16.msra.mxu0 %v2162
  %3842 = vmatpush.bf16.msra.mxu0 %v2154
  %3843 = vmatpush.bf16.msra.mxu0 %v2146
  %3844 = vmatmul.bf16.gmra.mxu0 %v588
  %v3845 = vpop.f32.mrf.mxu0
  %v3846 = vadd.f32 %v554, %v3845
  %v3847 = vpop.f32.mrf.mxu0
  %v3848 = vadd.f32 %v554, %v3847
  %3849 = vdwg.mxu0
  %3850 = vmatpush.bf16.msra.mxu0 %v2266
  %3851 = vmatpush.bf16.msra.mxu0 %v2258
  %3852 = vmatpush.bf16.msra.mxu0 %v2250
  %3853 = vmatpush.bf16.msra.mxu0 %v2242
  %3854 = vmatpush.bf16.msra.mxu0 %v2234
  %3855 = vmatpush.bf16.msra.mxu0 %v2226
  %3856 = vmatpush.bf16.msra.mxu0 %v2218
  %3857 = vmatpush.bf16.msra.mxu0 %v2210
  %3858 = vmatmul.bf16.gmra.mxu0 %v589
  %v3859 = vpop.f32.mrf.mxu0
  %v3860 = vadd.f32 %v3846, %v3859
  %v3861 = vpop.f32.mrf.mxu0
  %v3862 = vadd.f32 %v3848, %v3861
  %3863 = vdwg.mxu0
  %3864 = vmatpush.bf16.msra.mxu0 %v2330
  %3865 = vmatpush.bf16.msra.mxu0 %v2322
  %3866 = vmatpush.bf16.msra.mxu0 %v2314
  %3867 = vmatpush.bf16.msra.mxu0 %v2306
  %3868 = vmatpush.bf16.msra.mxu0 %v2298
  %3869 = vmatpush.bf16.msra.mxu0 %v2290
  %3870 = vmatpush.bf16.msra.mxu0 %v2282
  %3871 = vmatpush.bf16.msra.mxu0 %v2274
  %3872 = vmatmul.bf16.gmra.mxu0 %v590
  %v3873 = vpop.f32.mrf.mxu0
  %v3874 = vadd.f32 %v3860, %v3873
  %v3875 = vpop.f32.mrf.mxu0
  %v3876 = vadd.f32 %v3862, %v3875
  %3877 = vdwg.mxu0
  %3878 = vmatpush.bf16.msra.mxu0 %v2394
  %3879 = vmatpush.bf16.msra.mxu0 %v2386
  %3880 = vmatpush.bf16.msra.mxu0 %v2378
  %3881 = vmatpush.bf16.msra.mxu0 %v2370
  %3882 = vmatpush.bf16.msra.mxu0 %v2362
  %3883 = vmatpush.bf16.msra.mxu0 %v2354
  %3884 = vmatpush.bf16.msra.mxu0 %v2346
  %3885 = vmatpush.bf16.msra.mxu0 %v2338
  %3886 = vmatmul.bf16.gmra.mxu0 %v591
  %v3887 = vpop.f32.mrf.mxu0
  %v3888 = vadd.f32 %v3874, %v3887
  %v3889 = vpop.f32.mrf.mxu0
  %v3890 = vadd.f32 %v3876, %v3889
  %3891 = vdwg.mxu0
  %3892 = vmatpush.bf16.msra.mxu0 %v2458
  %3893 = vmatpush.bf16.msra.mxu0 %v2450
  %3894 = vmatpush.bf16.msra.mxu0 %v2442
  %3895 = vmatpush.bf16.msra.mxu0 %v2434
  %3896 = vmatpush.bf16.msra.mxu0 %v2426
  %3897 = vmatpush.bf16.msra.mxu0 %v2418
  %3898 = vmatpush.bf16.msra.mxu0 %v2410
  %3899 = vmatpush.bf16.msra.mxu0 %v2402
  %3900 = vmatmul.bf16.gmra.mxu0 %v592
  %v3901 = vpop.f32.mrf.mxu0
  %v3902 = vadd.f32 %v3888, %v3901
  %v3903 = vpop.f32.mrf.mxu0
  %v3904 = vadd.f32 %v3890, %v3903
  %3905 = vdwg.mxu0
  %3906 = vmatpush.bf16.msra.mxu0 %v2522
  %3907 = vmatpush.bf16.msra.mxu0 %v2514
  %3908 = vmatpush.bf16.msra.mxu0 %v2506
  %3909 = vmatpush.bf16.msra.mxu0 %v2498
  %3910 = vmatpush.bf16.msra.mxu0 %v2490
  %3911 = vmatpush.bf16.msra.mxu0 %v2482
  %3912 = vmatpush.bf16.msra.mxu0 %v2474
  %3913 = vmatpush.bf16.msra.mxu0 %v2466
  %3914 = vmatmul.bf16.gmra.mxu0 %v593
  %v3915 = vpop.f32.mrf.mxu0
  %v3916 = vadd.f32 %v3902, %v3915
  %v3917 = vpop.f32.mrf.mxu0
  %v3918 = vadd.f32 %v3904, %v3917
  %3919 = vdwg.mxu0
  %3920 = vmatpush.bf16.msra.mxu0 %v2586
  %3921 = vmatpush.bf16.msra.mxu0 %v2578
  %3922 = vmatpush.bf16.msra.mxu0 %v2570
  %3923 = vmatpush.bf16.msra.mxu0 %v2562
  %3924 = vmatpush.bf16.msra.mxu0 %v2554
  %3925 = vmatpush.bf16.msra.mxu0 %v2546
  %3926 = vmatpush.bf16.msra.mxu0 %v2538
  %3927 = vmatpush.bf16.msra.mxu0 %v2530
  %3928 = vmatmul.bf16.gmra.mxu0 %v594
  %v3929 = vpop.f32.mrf.mxu0
  %v3930 = vadd.f32 %v3916, %v3929
  %v3931 = vpop.f32.mrf.mxu0
  %v3932 = vadd.f32 %v3918, %v3931
  %3933 = vdwg.mxu0
  %3934 = vmatpush.bf16.msra.mxu0 %v2650
  %3935 = vmatpush.bf16.msra.mxu0 %v2642
  %3936 = vmatpush.bf16.msra.mxu0 %v2634
  %3937 = vmatpush.bf16.msra.mxu0 %v2626
  %3938 = vmatpush.bf16.msra.mxu0 %v2618
  %3939 = vmatpush.bf16.msra.mxu0 %v2610
  %3940 = vmatpush.bf16.msra.mxu0 %v2602
  %3941 = vmatpush.bf16.msra.mxu0 %v2594
  %3942 = vmatmul.bf16.gmra.mxu0 %v595
  %v3943 = vpop.f32.mrf.mxu0
  %v3944 = vadd.f32 %v3930, %v3943
  %v3945 = vpop.f32.mrf.mxu0
  %v3946 = vadd.f32 %v3932, %v3945
  %3947 = vdwg.mxu0
  %3948 = vmatpush.bf16.msra.mxu0 %v2203
  %3949 = vmatpush.bf16.msra.mxu0 %v2195
  %3950 = vmatpush.bf16.msra.mxu0 %v2187
  %3951 = vmatpush.bf16.msra.mxu0 %v2179
  %3952 = vmatpush.bf16.msra.mxu0 %v2171
  %3953 = vmatpush.bf16.msra.mxu0 %v2163
  %3954 = vmatpush.bf16.msra.mxu0 %v2155
  %3955 = vmatpush.bf16.msra.mxu0 %v2147
  %3956 = vmatmul.bf16.gmra.mxu0 %v588
  %v3957 = vpop.f32.mrf.mxu0
  %v3958 = vadd.f32 %v555, %v3957
  %v3959 = vpop.f32.mrf.mxu0
  %v3960 = vadd.f32 %v555, %v3959
  %3961 = vdwg.mxu0
  %3962 = vmatpush.bf16.msra.mxu0 %v2267
  %3963 = vmatpush.bf16.msra.mxu0 %v2259
  %3964 = vmatpush.bf16.msra.mxu0 %v2251
  %3965 = vmatpush.bf16.msra.mxu0 %v2243
  %3966 = vmatpush.bf16.msra.mxu0 %v2235
  %3967 = vmatpush.bf16.msra.mxu0 %v2227
  %3968 = vmatpush.bf16.msra.mxu0 %v2219
  %3969 = vmatpush.bf16.msra.mxu0 %v2211
  %3970 = vmatmul.bf16.gmra.mxu0 %v589
  %v3971 = vpop.f32.mrf.mxu0
  %v3972 = vadd.f32 %v3958, %v3971
  %v3973 = vpop.f32.mrf.mxu0
  %v3974 = vadd.f32 %v3960, %v3973
  %3975 = vdwg.mxu0
  %3976 = vmatpush.bf16.msra.mxu0 %v2331
  %3977 = vmatpush.bf16.msra.mxu0 %v2323
  %3978 = vmatpush.bf16.msra.mxu0 %v2315
  %3979 = vmatpush.bf16.msra.mxu0 %v2307
  %3980 = vmatpush.bf16.msra.mxu0 %v2299
  %3981 = vmatpush.bf16.msra.mxu0 %v2291
  %3982 = vmatpush.bf16.msra.mxu0 %v2283
  %3983 = vmatpush.bf16.msra.mxu0 %v2275
  %3984 = vmatmul.bf16.gmra.mxu0 %v590
  %v3985 = vpop.f32.mrf.mxu0
  %v3986 = vadd.f32 %v3972, %v3985
  %v3987 = vpop.f32.mrf.mxu0
  %v3988 = vadd.f32 %v3974, %v3987
  %3989 = vdwg.mxu0
  %3990 = vmatpush.bf16.msra.mxu0 %v2395
  %3991 = vmatpush.bf16.msra.mxu0 %v2387
  %3992 = vmatpush.bf16.msra.mxu0 %v2379
  %3993 = vmatpush.bf16.msra.mxu0 %v2371
  %3994 = vmatpush.bf16.msra.mxu0 %v2363
  %3995 = vmatpush.bf16.msra.mxu0 %v2355
  %3996 = vmatpush.bf16.msra.mxu0 %v2347
  %3997 = vmatpush.bf16.msra.mxu0 %v2339
  %3998 = vmatmul.bf16.gmra.mxu0 %v591
  %v3999 = vpop.f32.mrf.mxu0
  %v4000 = vadd.f32 %v3986, %v3999
  %v4001 = vpop.f32.mrf.mxu0
  %v4002 = vadd.f32 %v3988, %v4001
  %4003 = vdwg.mxu0
  %4004 = vmatpush.bf16.msra.mxu0 %v2459
  %4005 = vmatpush.bf16.msra.mxu0 %v2451
  %4006 = vmatpush.bf16.msra.mxu0 %v2443
  %4007 = vmatpush.bf16.msra.mxu0 %v2435
  %4008 = vmatpush.bf16.msra.mxu0 %v2427
  %4009 = vmatpush.bf16.msra.mxu0 %v2419
  %4010 = vmatpush.bf16.msra.mxu0 %v2411
  %4011 = vmatpush.bf16.msra.mxu0 %v2403
  %4012 = vmatmul.bf16.gmra.mxu0 %v592
  %v4013 = vpop.f32.mrf.mxu0
  %v4014 = vadd.f32 %v4000, %v4013
  %v4015 = vpop.f32.mrf.mxu0
  %v4016 = vadd.f32 %v4002, %v4015
  %4017 = vdwg.mxu0
  %4018 = vmatpush.bf16.msra.mxu0 %v2523
  %4019 = vmatpush.bf16.msra.mxu0 %v2515
  %4020 = vmatpush.bf16.msra.mxu0 %v2507
  %4021 = vmatpush.bf16.msra.mxu0 %v2499
  %4022 = vmatpush.bf16.msra.mxu0 %v2491
  %4023 = vmatpush.bf16.msra.mxu0 %v2483
  %4024 = vmatpush.bf16.msra.mxu0 %v2475
  %4025 = vmatpush.bf16.msra.mxu0 %v2467
  %4026 = vmatmul.bf16.gmra.mxu0 %v593
  %v4027 = vpop.f32.mrf.mxu0
  %v4028 = vadd.f32 %v4014, %v4027
  %v4029 = vpop.f32.mrf.mxu0
  %v4030 = vadd.f32 %v4016, %v4029
  %4031 = vdwg.mxu0
  %4032 = vmatpush.bf16.msra.mxu0 %v2587
  %4033 = vmatpush.bf16.msra.mxu0 %v2579
  %4034 = vmatpush.bf16.msra.mxu0 %v2571
  %4035 = vmatpush.bf16.msra.mxu0 %v2563
  %4036 = vmatpush.bf16.msra.mxu0 %v2555
  %4037 = vmatpush.bf16.msra.mxu0 %v2547
  %4038 = vmatpush.bf16.msra.mxu0 %v2539
  %4039 = vmatpush.bf16.msra.mxu0 %v2531
  %4040 = vmatmul.bf16.gmra.mxu0 %v594
  %v4041 = vpop.f32.mrf.mxu0
  %v4042 = vadd.f32 %v4028, %v4041
  %v4043 = vpop.f32.mrf.mxu0
  %v4044 = vadd.f32 %v4030, %v4043
  %4045 = vdwg.mxu0
  %4046 = vmatpush.bf16.msra.mxu0 %v2651
  %4047 = vmatpush.bf16.msra.mxu0 %v2643
  %4048 = vmatpush.bf16.msra.mxu0 %v2635
  %4049 = vmatpush.bf16.msra.mxu0 %v2627
  %4050 = vmatpush.bf16.msra.mxu0 %v2619
  %4051 = vmatpush.bf16.msra.mxu0 %v2611
  %4052 = vmatpush.bf16.msra.mxu0 %v2603
  %4053 = vmatpush.bf16.msra.mxu0 %v2595
  %4054 = vmatmul.bf16.gmra.mxu0 %v595
  %v4055 = vpop.f32.mrf.mxu0
  %v4056 = vadd.f32 %v4042, %v4055
  %v4057 = vpop.f32.mrf.mxu0
  %v4058 = vadd.f32 %v4044, %v4057
  %4059 = vdwg.mxu0
  %v4060 = vmul.f32 %v3272, 0.01
  %v4061 = vmul.f32 %v3384, 0.01
  %v4062 = vmul.f32 %v3496, 0.01
  %v4063 = vmul.f32 %v3608, 0.01
  %v4064 = vmul.f32 %v3720, 0.01
  %v4065 = vmul.f32 %v3832, 0.01
  %v4066 = vmul.f32 %v3944, 0.01
  %v4067 = vmul.f32 %v4056, 0.01
  %v4068 = vmul.f32 %v3274, 0.01
  %v4069 = vmul.f32 %v3386, 0.01
  %v4070 = vmul.f32 %v3498, 0.01
  %v4071 = vmul.f32 %v3610, 0.01
  %v4072 = vmul.f32 %v3722, 0.01
  %v4073 = vmul.f32 %v3834, 0.01
  %v4074 = vmul.f32 %v3946, 0.01
  %v4075 = vmul.f32 %v4058, 0.01
  %v4076 = vmax.f32 %v3272, %v4060
  %v4077 = vmax.f32 %v3384, %v4061
  %v4078 = vmax.f32 %v3496, %v4062
  %v4079 = vmax.f32 %v3608, %v4063
  %v4080 = vmax.f32 %v3720, %v4064
  %v4081 = vmax.f32 %v3832, %v4065
  %v4082 = vmax.f32 %v3944, %v4066
  %v4083 = vmax.f32 %v4056, %v4067
  %v4084 = vmax.f32 %v3274, %v4068
  %v4085 = vmax.f32 %v3386, %v4069
  %v4086 = vmax.f32 %v3498, %v4070
  %v4087 = vmax.f32 %v3610, %v4071
  %v4088 = vmax.f32 %v3722, %v4072
  %v4089 = vmax.f32 %v3834, %v4073
  %v4090 = vmax.f32 %v3946, %v4074
  %v4091 = vmax.f32 %v4058, %v4075
  %v4092 = vpack.c.bf16 %v4084, %v4076
  %v4093 = vpack.c.bf16 %v4085, %v4077
  %v4094 = vpack.c.bf16 %v4086, %v4078
  %v4095 = vpack.c.bf16 %v4087, %v4079
  %v4096 = vpack.c.bf16 %v4088, %v4080
  %v4097 = vpack.c.bf16 %v4089, %v4081
  %v4098 = vpack.c.bf16 %v4090, %v4082
  %v4099 = vpack.c.bf16 %v4091, %v4083
  %v4100 = vld [vmem:[%s3] sm:$0xff]
  %v4101 = vld [vmem:[%s3 + $0x8] sm:$0xff]
  %v4102 = vld [vmem:[%s3 + $0x10] sm:$0xff]
  %v4103 = vld [vmem:[%s3 + $0x18] sm:$0xff]
  %v4104 = vld [vmem:[%s3 + $0x20] sm:$0xff]
  %v4105 = vld [vmem:[%s3 + $0x28] sm:$0xff]
  %v4106 = vld [vmem:[%s3 + $0x30] sm:$0xff]
  %v4107 = vld [vmem:[%s3 + $0x38] sm:$0xff]
  %v4108 = vld [vmem:[%s3 + $0x40] sm:$0xff]
  %v4109 = vld [vmem:[%s3 + $0x48] sm:$0xff]
  %v4110 = vld [vmem:[%s3 + $0x50] sm:$0xff]
  %v4111 = vld [vmem:[%s3 + $0x58] sm:$0xff]
  %v4112 = vld [vmem:[%s3 + $0x60] sm:$0xff]
  %v4113 = vld [vmem:[%s3 + $0x68] sm:$0xff]
  %v4114 = vld [vmem:[%s3 + $0x70] sm:$0xff]
  %v4115 = vld [vmem:[%s3 + $0x78] sm:$0xff]
  %v4116 = vld [vmem:[%s3 + $0x80] sm:$0xff]
  %v4117 = vld [vmem:[%s3 + $0x88] sm:$0xff]
  %v4118 = vld [vmem:[%s3 + $0x90] sm:$0xff]
  %v4119 = vld [vmem:[%s3 + $0x98] sm:$0xff]
  %v4120 = vld [vmem:[%s3 + $0xa0] sm:$0xff]
  %v4121 = vld [vmem:[%s3 + $0xa8] sm:$0xff]
  %v4122 = vld [vmem:[%s3 + $0xb0] sm:$0xff]
  %v4123 = vld [vmem:[%s3 + $0xb8] sm:$0xff]
  %v4124 = vld [vmem:[%s3 + $0xc0] sm:$0xff]
  %v4125 = vld [vmem:[%s3 + $0xc8] sm:$0xff]
  %v4126 = vld [vmem:[%s3 + $0xd0] sm:$0xff]
  %v4127 = vld [vmem:[%s3 + $0xd8] sm:$0xff]
  %v4128 = vld [vmem:[%s3 + $0xe0] sm:$0xff]
  %v4129 = vld [vmem:[%s3 + $0xe8] sm:$0xff]
  %v4130 = vld [vmem:[%s3 + $0xf0] sm:$0xff]
  %v4131 = vld [vmem:[%s3 + $0xf8] sm:$0xff]
  %v4132 = vld [vmem:[%s3 + $0x100] sm:$0xff]
  %v4133 = vld [vmem:[%s3 + $0x108] sm:$0xff]
  %v4134 = vld [vmem:[%s3 + $0x110] sm:$0xff]
  %v4135 = vld [vmem:[%s3 + $0x118] sm:$0xff]
  %v4136 = vld [vmem:[%s3 + $0x120] sm:$0xff]
  %v4137 = vld [vmem:[%s3 + $0x128] sm:$0xff]
  %v4138 = vld [vmem:[%s3 + $0x130] sm:$0xff]
  %v4139 = vld [vmem:[%s3 + $0x138] sm:$0xff]
  %v4140 = vld [vmem:[%s3 + $0x140] sm:$0xff]
  %v4141 = vld [vmem:[%s3 + $0x148] sm:$0xff]
  %v4142 = vld [vmem:[%s3 + $0x150] sm:$0xff]
  %v4143 = vld [vmem:[%s3 + $0x158] sm:$0xff]
  %v4144 = vld [vmem:[%s3 + $0x160] sm:$0xff]
  %v4145 = vld [vmem:[%s3 + $0x168] sm:$0xff]
  %v4146 = vld [vmem:[%s3 + $0x170] sm:$0xff]
  %v4147 = vld [vmem:[%s3 + $0x178] sm:$0xff]
  %v4148 = vld [vmem:[%s3 + $0x180] sm:$0xff]
  %v4149 = vld [vmem:[%s3 + $0x188] sm:$0xff]
  %v4150 = vld [vmem:[%s3 + $0x190] sm:$0xff]
  %v4151 = vld [vmem:[%s3 + $0x198] sm:$0xff]
  %v4152 = vld [vmem:[%s3 + $0x1a0] sm:$0xff]
  %v4153 = vld [vmem:[%s3 + $0x1a8] sm:$0xff]
  %v4154 = vld [vmem:[%s3 + $0x1b0] sm:$0xff]
  %v4155 = vld [vmem:[%s3 + $0x1b8] sm:$0xff]
  %v4156 = vld [vmem:[%s3 + $0x1c0] sm:$0xff]
  %v4157 = vld [vmem:[%s3 + $0x1c8] sm:$0xff]
  %v4158 = vld [vmem:[%s3 + $0x1d0] sm:$0xff]
  %v4159 = vld [vmem:[%s3 + $0x1d8] sm:$0xff]
  %v4160 = vld [vmem:[%s3 + $0x1e0] sm:$0xff]
  %v4161 = vld [vmem:[%s3 + $0x1e8] sm:$0xff]
  %v4162 = vld [vmem:[%s3 + $0x1f0] sm:$0xff]
  %v4163 = vld [vmem:[%s3 + $0x1f8] sm:$0xff]
  %v4164 = vld [vmem:[%s3 + $0x200] sm:$0xff]
  %v4165 = vld [vmem:[%s3 + $0x208] sm:$0xff]
  %v4166 = vld [vmem:[%s3 + $0x210] sm:$0xff]
  %v4167 = vld [vmem:[%s3 + $0x218] sm:$0xff]
  %v4168 = vld [vmem:[%s3 + $0x220] sm:$0xff]
  %v4169 = vld [vmem:[%s3 + $0x228] sm:$0xff]
  %v4170 = vld [vmem:[%s3 + $0x230] sm:$0xff]
  %v4171 = vld [vmem:[%s3 + $0x238] sm:$0xff]
  %v4172 = vld [vmem:[%s3 + $0x240] sm:$0xff]
  %v4173 = vld [vmem:[%s3 + $0x248] sm:$0xff]
  %v4174 = vld [vmem:[%s3 + $0x250] sm:$0xff]
  %v4175 = vld [vmem:[%s3 + $0x258] sm:$0xff]
  %v4176 = vld [vmem:[%s3 + $0x260] sm:$0xff]
  %v4177 = vld [vmem:[%s3 + $0x268] sm:$0xff]
  %v4178 = vld [vmem:[%s3 + $0x270] sm:$0xff]
  %v4179 = vld [vmem:[%s3 + $0x278] sm:$0xff]
  %v4180 = vld [vmem:[%s3 + $0x280] sm:$0xff]
  %v4181 = vld [vmem:[%s3 + $0x288] sm:$0xff]
  %v4182 = vld [vmem:[%s3 + $0x290] sm:$0xff]
  %v4183 = vld [vmem:[%s3 + $0x298] sm:$0xff]
  %v4184 = vld [vmem:[%s3 + $0x2a0] sm:$0xff]
  %v4185 = vld [vmem:[%s3 + $0x2a8] sm:$0xff]
  %v4186 = vld [vmem:[%s3 + $0x2b0] sm:$0xff]
  %v4187 = vld [vmem:[%s3 + $0x2b8] sm:$0xff]
  %v4188 = vld [vmem:[%s3 + $0x2c0] sm:$0xff]
  %v4189 = vld [vmem:[%s3 + $0x2c8] sm:$0xff]
  %v4190 = vld [vmem:[%s3 + $0x2d0] sm:$0xff]
  %v4191 = vld [vmem:[%s3 + $0x2d8] sm:$0xff]
  %v4192 = vld [vmem:[%s3 + $0x2e0] sm:$0xff]
  %v4193 = vld [vmem:[%s3 + $0x2e8] sm:$0xff]
  %v4194 = vld [vmem:[%s3 + $0x2f0] sm:$0xff]
  %v4195 = vld [vmem:[%s3 + $0x2f8] sm:$0xff]
  %v4196 = vld [vmem:[%s3 + $0x300] sm:$0xff]
  %v4197 = vld [vmem:[%s3 + $0x308] sm:$0xff]
  %v4198 = vld [vmem:[%s3 + $0x310] sm:$0xff]
  %v4199 = vld [vmem:[%s3 + $0x318] sm:$0xff]
  %v4200 = vld [vmem:[%s3 + $0x320] sm:$0xff]
  %v4201 = vld [vmem:[%s3 + $0x328] sm:$0xff]
  %v4202 = vld [vmem:[%s3 + $0x330] sm:$0xff]
  %v4203 = vld [vmem:[%s3 + $0x338] sm:$0xff]
  %v4204 = vld [vmem:[%s3 + $0x340] sm:$0xff]
  %v4205 = vld [vmem:[%s3 + $0x348] sm:$0xff]
  %v4206 = vld [vmem:[%s3 + $0x350] sm:$0xff]
  %v4207 = vld [vmem:[%s3 + $0x358] sm:$0xff]
  %v4208 = vld [vmem:[%s3 + $0x360] sm:$0xff]
  %v4209 = vld [vmem:[%s3 + $0x368] sm:$0xff]
  %v4210 = vld [vmem:[%s3 + $0x370] sm:$0xff]
  %v4211 = vld [vmem:[%s3 + $0x378] sm:$0xff]
  %v4212 = vld [vmem:[%s3 + $0x380] sm:$0xff]
  %v4213 = vld [vmem:[%s3 + $0x388] sm:$0xff]
  %v4214 = vld [vmem:[%s3 + $0x390] sm:$0xff]
  %v4215 = vld [vmem:[%s3 + $0x398] sm:$0xff]
  %v4216 = vld [vmem:[%s3 + $0x3a0] sm:$0xff]
  %v4217 = vld [vmem:[%s3 + $0x3a8] sm:$0xff]
  %v4218 = vld [vmem:[%s3 + $0x3b0] sm:$0xff]
  %v4219 = vld [vmem:[%s3 + $0x3b8] sm:$0xff]
  %v4220 = vld [vmem:[%s3 + $0x3c0] sm:$0xff]
  %v4221 = vld [vmem:[%s3 + $0x3c8] sm:$0xff]
  %v4222 = vld [vmem:[%s3 + $0x3d0] sm:$0xff]
  %v4223 = vld [vmem:[%s3 + $0x3d8] sm:$0xff]
  %v4224 = vld [vmem:[%s3 + $0x3e0] sm:$0xff]
  %v4225 = vld [vmem:[%s3 + $0x3e8] sm:$0xff]
  %v4226 = vld [vmem:[%s3 + $0x3f0] sm:$0xff]
  %v4227 = vld [vmem:[%s3 + $0x3f8] sm:$0xff]
  %v4228 = vld [vmem:[%s3 + $0x400] sm:$0xff]
  %v4229 = vld [vmem:[%s3 + $0x408] sm:$0xff]
  %v4230 = vld [vmem:[%s3 + $0x410] sm:$0xff]
  %v4231 = vld [vmem:[%s3 + $0x418] sm:$0xff]
  %v4232 = vld [vmem:[%s3 + $0x420] sm:$0xff]
  %v4233 = vld [vmem:[%s3 + $0x428] sm:$0xff]
  %v4234 = vld [vmem:[%s3 + $0x430] sm:$0xff]
  %v4235 = vld [vmem:[%s3 + $0x438] sm:$0xff]
  %v4236 = vld [vmem:[%s3 + $0x440] sm:$0xff]
  %v4237 = vld [vmem:[%s3 + $0x448] sm:$0xff]
  %v4238 = vld [vmem:[%s3 + $0x450] sm:$0xff]
  %v4239 = vld [vmem:[%s3 + $0x458] sm:$0xff]
  %v4240 = vld [vmem:[%s3 + $0x460] sm:$0xff]
  %v4241 = vld [vmem:[%s3 + $0x468] sm:$0xff]
  %v4242 = vld [vmem:[%s3 + $0x470] sm:$0xff]
  %v4243 = vld [vmem:[%s3 + $0x478] sm:$0xff]
  %v4244 = vld [vmem:[%s3 + $0x480] sm:$0xff]
  %v4245 = vld [vmem:[%s3 + $0x488] sm:$0xff]
  %v4246 = vld [vmem:[%s3 + $0x490] sm:$0xff]
  %v4247 = vld [vmem:[%s3 + $0x498] sm:$0xff]
  %v4248 = vld [vmem:[%s3 + $0x4a0] sm:$0xff]
  %v4249 = vld [vmem:[%s3 + $0x4a8] sm:$0xff]
  %v4250 = vld [vmem:[%s3 + $0x4b0] sm:$0xff]
  %v4251 = vld [vmem:[%s3 + $0x4b8] sm:$0xff]
  %v4252 = vld [vmem:[%s3 + $0x4c0] sm:$0xff]
  %v4253 = vld [vmem:[%s3 + $0x4c8] sm:$0xff]
  %v4254 = vld [vmem:[%s3 + $0x4d0] sm:$0xff]
  %v4255 = vld [vmem:[%s3 + $0x4d8] sm:$0xff]
  %v4256 = vld [vmem:[%s3 + $0x4e0] sm:$0xff]
  %v4257 = vld [vmem:[%s3 + $0x4e8] sm:$0xff]
  %v4258 = vld [vmem:[%s3 + $0x4f0] sm:$0xff]
  %v4259 = vld [vmem:[%s3 + $0x4f8] sm:$0xff]
  %v4260 = vld [vmem:[%s3 + $0x500] sm:$0xff]
  %v4261 = vld [vmem:[%s3 + $0x508] sm:$0xff]
  %v4262 = vld [vmem:[%s3 + $0x510] sm:$0xff]
  %v4263 = vld [vmem:[%s3 + $0x518] sm:$0xff]
  %v4264 = vld [vmem:[%s3 + $0x520] sm:$0xff]
  %v4265 = vld [vmem:[%s3 + $0x528] sm:$0xff]
  %v4266 = vld [vmem:[%s3 + $0x530] sm:$0xff]
  %v4267 = vld [vmem:[%s3 + $0x538] sm:$0xff]
  %v4268 = vld [vmem:[%s3 + $0x540] sm:$0xff]
  %v4269 = vld [vmem:[%s3 + $0x548] sm:$0xff]
  %v4270 = vld [vmem:[%s3 + $0x550] sm:$0xff]
  %v4271 = vld [vmem:[%s3 + $0x558] sm:$0xff]
  %v4272 = vld [vmem:[%s3 + $0x560] sm:$0xff]
  %v4273 = vld [vmem:[%s3 + $0x568] sm:$0xff]
  %v4274 = vld [vmem:[%s3 + $0x570] sm:$0xff]
  %v4275 = vld [vmem:[%s3 + $0x578] sm:$0xff]
  %v4276 = vld [vmem:[%s3 + $0x580] sm:$0xff]
  %v4277 = vld [vmem:[%s3 + $0x588] sm:$0xff]
  %v4278 = vld [vmem:[%s3 + $0x590] sm:$0xff]
  %v4279 = vld [vmem:[%s3 + $0x598] sm:$0xff]
  %v4280 = vld [vmem:[%s3 + $0x5a0] sm:$0xff]
  %v4281 = vld [vmem:[%s3 + $0x5a8] sm:$0xff]
  %v4282 = vld [vmem:[%s3 + $0x5b0] sm:$0xff]
  %v4283 = vld [vmem:[%s3 + $0x5b8] sm:$0xff]
  %v4284 = vld [vmem:[%s3 + $0x5c0] sm:$0xff]
  %v4285 = vld [vmem:[%s3 + $0x5c8] sm:$0xff]
  %v4286 = vld [vmem:[%s3 + $0x5d0] sm:$0xff]
  %v4287 = vld [vmem:[%s3 + $0x5d8] sm:$0xff]
  %v4288 = vld [vmem:[%s3 + $0x5e0] sm:$0xff]
  %v4289 = vld [vmem:[%s3 + $0x5e8] sm:$0xff]
  %v4290 = vld [vmem:[%s3 + $0x5f0] sm:$0xff]
  %v4291 = vld [vmem:[%s3 + $0x5f8] sm:$0xff]
  %v4292 = vld [vmem:[%s3 + $0x600] sm:$0xff]
  %v4293 = vld [vmem:[%s3 + $0x608] sm:$0xff]
  %v4294 = vld [vmem:[%s3 + $0x610] sm:$0xff]
  %v4295 = vld [vmem:[%s3 + $0x618] sm:$0xff]
  %v4296 = vld [vmem:[%s3 + $0x620] sm:$0xff]
  %v4297 = vld [vmem:[%s3 + $0x628] sm:$0xff]
  %v4298 = vld [vmem:[%s3 + $0x630] sm:$0xff]
  %v4299 = vld [vmem:[%s3 + $0x638] sm:$0xff]
  %v4300 = vld [vmem:[%s3 + $0x640] sm:$0xff]
  %v4301 = vld [vmem:[%s3 + $0x648] sm:$0xff]
  %v4302 = vld [vmem:[%s3 + $0x650] sm:$0xff]
  %v4303 = vld [vmem:[%s3 + $0x658] sm:$0xff]
  %v4304 = vld [vmem:[%s3 + $0x660] sm:$0xff]
  %v4305 = vld [vmem:[%s3 + $0x668] sm:$0xff]
  %v4306 = vld [vmem:[%s3 + $0x670] sm:$0xff]
  %v4307 = vld [vmem:[%s3 + $0x678] sm:$0xff]
  %v4308 = vld [vmem:[%s3 + $0x680] sm:$0xff]
  %v4309 = vld [vmem:[%s3 + $0x688] sm:$0xff]
  %v4310 = vld [vmem:[%s3 + $0x690] sm:$0xff]
  %v4311 = vld [vmem:[%s3 + $0x698] sm:$0xff]
  %v4312 = vld [vmem:[%s3 + $0x6a0] sm:$0xff]
  %v4313 = vld [vmem:[%s3 + $0x6a8] sm:$0xff]
  %v4314 = vld [vmem:[%s3 + $0x6b0] sm:$0xff]
  %v4315 = vld [vmem:[%s3 + $0x6b8] sm:$0xff]
  %v4316 = vld [vmem:[%s3 + $0x6c0] sm:$0xff]
  %v4317 = vld [vmem:[%s3 + $0x6c8] sm:$0xff]
  %v4318 = vld [vmem:[%s3 + $0x6d0] sm:$0xff]
  %v4319 = vld [vmem:[%s3 + $0x6d8] sm:$0xff]
  %v4320 = vld [vmem:[%s3 + $0x6e0] sm:$0xff]
  %v4321 = vld [vmem:[%s3 + $0x6e8] sm:$0xff]
  %v4322 = vld [vmem:[%s3 + $0x6f0] sm:$0xff]
  %v4323 = vld [vmem:[%s3 + $0x6f8] sm:$0xff]
  %v4324 = vld [vmem:[%s3 + $0x700] sm:$0xff]
  %v4325 = vld [vmem:[%s3 + $0x708] sm:$0xff]
  %v4326 = vld [vmem:[%s3 + $0x710] sm:$0xff]
  %v4327 = vld [vmem:[%s3 + $0x718] sm:$0xff]
  %v4328 = vld [vmem:[%s3 + $0x720] sm:$0xff]
  %v4329 = vld [vmem:[%s3 + $0x728] sm:$0xff]
  %v4330 = vld [vmem:[%s3 + $0x730] sm:$0xff]
  %v4331 = vld [vmem:[%s3 + $0x738] sm:$0xff]
  %v4332 = vld [vmem:[%s3 + $0x740] sm:$0xff]
  %v4333 = vld [vmem:[%s3 + $0x748] sm:$0xff]
  %v4334 = vld [vmem:[%s3 + $0x750] sm:$0xff]
  %v4335 = vld [vmem:[%s3 + $0x758] sm:$0xff]
  %v4336 = vld [vmem:[%s3 + $0x760] sm:$0xff]
  %v4337 = vld [vmem:[%s3 + $0x768] sm:$0xff]
  %v4338 = vld [vmem:[%s3 + $0x770] sm:$0xff]
  %v4339 = vld [vmem:[%s3 + $0x778] sm:$0xff]
  %v4340 = vld [vmem:[%s3 + $0x780] sm:$0xff]
  %v4341 = vld [vmem:[%s3 + $0x788] sm:$0xff]
  %v4342 = vld [vmem:[%s3 + $0x790] sm:$0xff]
  %v4343 = vld [vmem:[%s3 + $0x798] sm:$0xff]
  %v4344 = vld [vmem:[%s3 + $0x7a0] sm:$0xff]
  %v4345 = vld [vmem:[%s3 + $0x7a8] sm:$0xff]
  %v4346 = vld [vmem:[%s3 + $0x7b0] sm:$0xff]
  %v4347 = vld [vmem:[%s3 + $0x7b8] sm:$0xff]
  %v4348 = vld [vmem:[%s3 + $0x7c0] sm:$0xff]
  %v4349 = vld [vmem:[%s3 + $0x7c8] sm:$0xff]
  %v4350 = vld [vmem:[%s3 + $0x7d0] sm:$0xff]
  %v4351 = vld [vmem:[%s3 + $0x7d8] sm:$0xff]
  %v4352 = vld [vmem:[%s3 + $0x7e0] sm:$0xff]
  %v4353 = vld [vmem:[%s3 + $0x7e8] sm:$0xff]
  %v4354 = vld [vmem:[%s3 + $0x7f0] sm:$0xff]
  %v4355 = vld [vmem:[%s3 + $0x7f8] sm:$0xff]
  %v4356 = vld [vmem:[%s3 + $0x800] sm:$0xff]
  %v4357 = vld [vmem:[%s3 + $0x808] sm:$0xff]
  %v4358 = vld [vmem:[%s3 + $0x810] sm:$0xff]
  %v4359 = vld [vmem:[%s3 + $0x818] sm:$0xff]
  %v4360 = vld [vmem:[%s3 + $0x820] sm:$0xff]
  %v4361 = vld [vmem:[%s3 + $0x828] sm:$0xff]
  %v4362 = vld [vmem:[%s3 + $0x830] sm:$0xff]
  %v4363 = vld [vmem:[%s3 + $0x838] sm:$0xff]
  %v4364 = vld [vmem:[%s3 + $0x840] sm:$0xff]
  %v4365 = vld [vmem:[%s3 + $0x848] sm:$0xff]
  %v4366 = vld [vmem:[%s3 + $0x850] sm:$0xff]
  %v4367 = vld [vmem:[%s3 + $0x858] sm:$0xff]
  %v4368 = vld [vmem:[%s3 + $0x860] sm:$0xff]
  %v4369 = vld [vmem:[%s3 + $0x868] sm:$0xff]
  %v4370 = vld [vmem:[%s3 + $0x870] sm:$0xff]
  %v4371 = vld [vmem:[%s3 + $0x878] sm:$0xff]
  %v4372 = vld [vmem:[%s3 + $0x880] sm:$0xff]
  %v4373 = vld [vmem:[%s3 + $0x888] sm:$0xff]
  %v4374 = vld [vmem:[%s3 + $0x890] sm:$0xff]
  %v4375 = vld [vmem:[%s3 + $0x898] sm:$0xff]
  %v4376 = vld [vmem:[%s3 + $0x8a0] sm:$0xff]
  %v4377 = vld [vmem:[%s3 + $0x8a8] sm:$0xff]
  %v4378 = vld [vmem:[%s3 + $0x8b0] sm:$0xff]
  %v4379 = vld [vmem:[%s3 + $0x8b8] sm:$0xff]
  %v4380 = vld [vmem:[%s3 + $0x8c0] sm:$0xff]
  %v4381 = vld [vmem:[%s3 + $0x8c8] sm:$0xff]
  %v4382 = vld [vmem:[%s3 + $0x8d0] sm:$0xff]
  %v4383 = vld [vmem:[%s3 + $0x8d8] sm:$0xff]
  %v4384 = vld [vmem:[%s3 + $0x8e0] sm:$0xff]
  %v4385 = vld [vmem:[%s3 + $0x8e8] sm:$0xff]
  %v4386 = vld [vmem:[%s3 + $0x8f0] sm:$0xff]
  %v4387 = vld [vmem:[%s3 + $0x8f8] sm:$0xff]
  %v4388 = vld [vmem:[%s3 + $0x900] sm:$0xff]
  %v4389 = vld [vmem:[%s3 + $0x908] sm:$0xff]
  %v4390 = vld [vmem:[%s3 + $0x910] sm:$0xff]
  %v4391 = vld [vmem:[%s3 + $0x918] sm:$0xff]
  %v4392 = vld [vmem:[%s3 + $0x920] sm:$0xff]
  %v4393 = vld [vmem:[%s3 + $0x928] sm:$0xff]
  %v4394 = vld [vmem:[%s3 + $0x930] sm:$0xff]
  %v4395 = vld [vmem:[%s3 + $0x938] sm:$0xff]
  %v4396 = vld [vmem:[%s3 + $0x940] sm:$0xff]
  %v4397 = vld [vmem:[%s3 + $0x948] sm:$0xff]
  %v4398 = vld [vmem:[%s3 + $0x950] sm:$0xff]
  %v4399 = vld [vmem:[%s3 + $0x958] sm:$0xff]
  %v4400 = vld [vmem:[%s3 + $0x960] sm:$0xff]
  %v4401 = vld [vmem:[%s3 + $0x968] sm:$0xff]
  %v4402 = vld [vmem:[%s3 + $0x970] sm:$0xff]
  %v4403 = vld [vmem:[%s3 + $0x978] sm:$0xff]
  %v4404 = vld [vmem:[%s3 + $0x980] sm:$0xff]
  %v4405 = vld [vmem:[%s3 + $0x988] sm:$0xff]
  %v4406 = vld [vmem:[%s3 + $0x990] sm:$0xff]
  %v4407 = vld [vmem:[%s3 + $0x998] sm:$0xff]
  %v4408 = vld [vmem:[%s3 + $0x9a0] sm:$0xff]
  %v4409 = vld [vmem:[%s3 + $0x9a8] sm:$0xff]
  %v4410 = vld [vmem:[%s3 + $0x9b0] sm:$0xff]
  %v4411 = vld [vmem:[%s3 + $0x9b8] sm:$0xff]
  %v4412 = vld [vmem:[%s3 + $0x9c0] sm:$0xff]
  %v4413 = vld [vmem:[%s3 + $0x9c8] sm:$0xff]
  %v4414 = vld [vmem:[%s3 + $0x9d0] sm:$0xff]
  %v4415 = vld [vmem:[%s3 + $0x9d8] sm:$0xff]
  %v4416 = vld [vmem:[%s3 + $0x9e0] sm:$0xff]
  %v4417 = vld [vmem:[%s3 + $0x9e8] sm:$0xff]
  %v4418 = vld [vmem:[%s3 + $0x9f0] sm:$0xff]
  %v4419 = vld [vmem:[%s3 + $0x9f8] sm:$0xff]
  %v4420 = vld [vmem:[%s3 + $0xa00] sm:$0xff]
  %v4421 = vld [vmem:[%s3 + $0xa08] sm:$0xff]
  %v4422 = vld [vmem:[%s3 + $0xa10] sm:$0xff]
  %v4423 = vld [vmem:[%s3 + $0xa18] sm:$0xff]
  %v4424 = vld [vmem:[%s3 + $0xa20] sm:$0xff]
  %v4425 = vld [vmem:[%s3 + $0xa28] sm:$0xff]
  %v4426 = vld [vmem:[%s3 + $0xa30] sm:$0xff]
  %v4427 = vld [vmem:[%s3 + $0xa38] sm:$0xff]
  %v4428 = vld [vmem:[%s3 + $0xa40] sm:$0xff]
  %v4429 = vld [vmem:[%s3 + $0xa48] sm:$0xff]
  %v4430 = vld [vmem:[%s3 + $0xa50] sm:$0xff]
  %v4431 = vld [vmem:[%s3 + $0xa58] sm:$0xff]
  %v4432 = vld [vmem:[%s3 + $0xa60] sm:$0xff]
  %v4433 = vld [vmem:[%s3 + $0xa68] sm:$0xff]
  %v4434 = vld [vmem:[%s3 + $0xa70] sm:$0xff]
  %v4435 = vld [vmem:[%s3 + $0xa78] sm:$0xff]
  %v4436 = vld [vmem:[%s3 + $0xa80] sm:$0xff]
  %v4437 = vld [vmem:[%s3 + $0xa88] sm:$0xff]
  %v4438 = vld [vmem:[%s3 + $0xa90] sm:$0xff]
  %v4439 = vld [vmem:[%s3 + $0xa98] sm:$0xff]
  %v4440 = vld [vmem:[%s3 + $0xaa0] sm:$0xff]
  %v4441 = vld [vmem:[%s3 + $0xaa8] sm:$0xff]
  %v4442 = vld [vmem:[%s3 + $0xab0] sm:$0xff]
  %v4443 = vld [vmem:[%s3 + $0xab8] sm:$0xff]
  %v4444 = vld [vmem:[%s3 + $0xac0] sm:$0xff]
  %v4445 = vld [vmem:[%s3 + $0xac8] sm:$0xff]
  %v4446 = vld [vmem:[%s3 + $0xad0] sm:$0xff]
  %v4447 = vld [vmem:[%s3 + $0xad8] sm:$0xff]
  %v4448 = vld [vmem:[%s3 + $0xae0] sm:$0xff]
  %v4449 = vld [vmem:[%s3 + $0xae8] sm:$0xff]
  %v4450 = vld [vmem:[%s3 + $0xaf0] sm:$0xff]
  %v4451 = vld [vmem:[%s3 + $0xaf8] sm:$0xff]
  %v4452 = vld [vmem:[%s3 + $0xb00] sm:$0xff]
  %v4453 = vld [vmem:[%s3 + $0xb08] sm:$0xff]
  %v4454 = vld [vmem:[%s3 + $0xb10] sm:$0xff]
  %v4455 = vld [vmem:[%s3 + $0xb18] sm:$0xff]
  %v4456 = vld [vmem:[%s3 + $0xb20] sm:$0xff]
  %v4457 = vld [vmem:[%s3 + $0xb28] sm:$0xff]
  %v4458 = vld [vmem:[%s3 + $0xb30] sm:$0xff]
  %v4459 = vld [vmem:[%s3 + $0xb38] sm:$0xff]
  %v4460 = vld [vmem:[%s3 + $0xb40] sm:$0xff]
  %v4461 = vld [vmem:[%s3 + $0xb48] sm:$0xff]
  %v4462 = vld [vmem:[%s3 + $0xb50] sm:$0xff]
  %v4463 = vld [vmem:[%s3 + $0xb58] sm:$0xff]
  %v4464 = vld [vmem:[%s3 + $0xb60] sm:$0xff]
  %v4465 = vld [vmem:[%s3 + $0xb68] sm:$0xff]
  %v4466 = vld [vmem:[%s3 + $0xb70] sm:$0xff]
  %v4467 = vld [vmem:[%s3 + $0xb78] sm:$0xff]
  %v4468 = vld [vmem:[%s3 + $0xb80] sm:$0xff]
  %v4469 = vld [vmem:[%s3 + $0xb88] sm:$0xff]
  %v4470 = vld [vmem:[%s3 + $0xb90] sm:$0xff]
  %v4471 = vld [vmem:[%s3 + $0xb98] sm:$0xff]
  %v4472 = vld [vmem:[%s3 + $0xba0] sm:$0xff]
  %v4473 = vld [vmem:[%s3 + $0xba8] sm:$0xff]
  %v4474 = vld [vmem:[%s3 + $0xbb0] sm:$0xff]
  %v4475 = vld [vmem:[%s3 + $0xbb8] sm:$0xff]
  %v4476 = vld [vmem:[%s3 + $0xbc0] sm:$0xff]
  %v4477 = vld [vmem:[%s3 + $0xbc8] sm:$0xff]
  %v4478 = vld [vmem:[%s3 + $0xbd0] sm:$0xff]
  %v4479 = vld [vmem:[%s3 + $0xbd8] sm:$0xff]
  %v4480 = vld [vmem:[%s3 + $0xbe0] sm:$0xff]
  %v4481 = vld [vmem:[%s3 + $0xbe8] sm:$0xff]
  %v4482 = vld [vmem:[%s3 + $0xbf0] sm:$0xff]
  %v4483 = vld [vmem:[%s3 + $0xbf8] sm:$0xff]
  %v4484 = vld [vmem:[%s3 + $0xc00] sm:$0xff]
  %v4485 = vld [vmem:[%s3 + $0xc08] sm:$0xff]
  %v4486 = vld [vmem:[%s3 + $0xc10] sm:$0xff]
  %v4487 = vld [vmem:[%s3 + $0xc18] sm:$0xff]
  %v4488 = vld [vmem:[%s3 + $0xc20] sm:$0xff]
  %v4489 = vld [vmem:[%s3 + $0xc28] sm:$0xff]
  %v4490 = vld [vmem:[%s3 + $0xc30] sm:$0xff]
  %v4491 = vld [vmem:[%s3 + $0xc38] sm:$0xff]
  %v4492 = vld [vmem:[%s3 + $0xc40] sm:$0xff]
  %v4493 = vld [vmem:[%s3 + $0xc48] sm:$0xff]
  %v4494 = vld [vmem:[%s3 + $0xc50] sm:$0xff]
  %v4495 = vld [vmem:[%s3 + $0xc58] sm:$0xff]
  %v4496 = vld [vmem:[%s3 + $0xc60] sm:$0xff]
  %v4497 = vld [vmem:[%s3 + $0xc68] sm:$0xff]
  %v4498 = vld [vmem:[%s3 + $0xc70] sm:$0xff]
  %v4499 = vld [vmem:[%s3 + $0xc78] sm:$0xff]
  %v4500 = vld [vmem:[%s3 + $0xc80] sm:$0xff]
  %v4501 = vld [vmem:[%s3 + $0xc88] sm:$0xff]
  %v4502 = vld [vmem:[%s3 + $0xc90] sm:$0xff]
  %v4503 = vld [vmem:[%s3 + $0xc98] sm:$0xff]
  %v4504 = vld [vmem:[%s3 + $0xca0] sm:$0xff]
  %v4505 = vld [vmem:[%s3 + $0xca8] sm:$0xff]
  %v4506 = vld [vmem:[%s3 + $0xcb0] sm:$0xff]
  %v4507 = vld [vmem:[%s3 + $0xcb8] sm:$0xff]
  %v4508 = vld [vmem:[%s3 + $0xcc0] sm:$0xff]
  %v4509 = vld [vmem:[%s3 + $0xcc8] sm:$0xff]
  %v4510 = vld [vmem:[%s3 + $0xcd0] sm:$0xff]
  %v4511 = vld [vmem:[%s3 + $0xcd8] sm:$0xff]
  %v4512 = vld [vmem:[%s3 + $0xce0] sm:$0xff]
  %v4513 = vld [vmem:[%s3 + $0xce8] sm:$0xff]
  %v4514 = vld [vmem:[%s3 + $0xcf0] sm:$0xff]
  %v4515 = vld [vmem:[%s3 + $0xcf8] sm:$0xff]
  %v4516 = vld [vmem:[%s3 + $0xd00] sm:$0xff]
  %v4517 = vld [vmem:[%s3 + $0xd08] sm:$0xff]
  %v4518 = vld [vmem:[%s3 + $0xd10] sm:$0xff]
  %v4519 = vld [vmem:[%s3 + $0xd18] sm:$0xff]
  %v4520 = vld [vmem:[%s3 + $0xd20] sm:$0xff]
  %v4521 = vld [vmem:[%s3 + $0xd28] sm:$0xff]
  %v4522 = vld [vmem:[%s3 + $0xd30] sm:$0xff]
  %v4523 = vld [vmem:[%s3 + $0xd38] sm:$0xff]
  %v4524 = vld [vmem:[%s3 + $0xd40] sm:$0xff]
  %v4525 = vld [vmem:[%s3 + $0xd48] sm:$0xff]
  %v4526 = vld [vmem:[%s3 + $0xd50] sm:$0xff]
  %v4527 = vld [vmem:[%s3 + $0xd58] sm:$0xff]
  %v4528 = vld [vmem:[%s3 + $0xd60] sm:$0xff]
  %v4529 = vld [vmem:[%s3 + $0xd68] sm:$0xff]
  %v4530 = vld [vmem:[%s3 + $0xd70] sm:$0xff]
  %v4531 = vld [vmem:[%s3 + $0xd78] sm:$0xff]
  %v4532 = vld [vmem:[%s3 + $0xd80] sm:$0xff]
  %v4533 = vld [vmem:[%s3 + $0xd88] sm:$0xff]
  %v4534 = vld [vmem:[%s3 + $0xd90] sm:$0xff]
  %v4535 = vld [vmem:[%s3 + $0xd98] sm:$0xff]
  %v4536 = vld [vmem:[%s3 + $0xda0] sm:$0xff]
  %v4537 = vld [vmem:[%s3 + $0xda8] sm:$0xff]
  %v4538 = vld [vmem:[%s3 + $0xdb0] sm:$0xff]
  %v4539 = vld [vmem:[%s3 + $0xdb8] sm:$0xff]
  %v4540 = vld [vmem:[%s3 + $0xdc0] sm:$0xff]
  %v4541 = vld [vmem:[%s3 + $0xdc8] sm:$0xff]
  %v4542 = vld [vmem:[%s3 + $0xdd0] sm:$0xff]
  %v4543 = vld [vmem:[%s3 + $0xdd8] sm:$0xff]
  %v4544 = vld [vmem:[%s3 + $0xde0] sm:$0xff]
  %v4545 = vld [vmem:[%s3 + $0xde8] sm:$0xff]
  %v4546 = vld [vmem:[%s3 + $0xdf0] sm:$0xff]
  %v4547 = vld [vmem:[%s3 + $0xdf8] sm:$0xff]
  %v4548 = vld [vmem:[%s3 + $0xe00] sm:$0xff]
  %v4549 = vld [vmem:[%s3 + $0xe08] sm:$0xff]
  %v4550 = vld [vmem:[%s3 + $0xe10] sm:$0xff]
  %v4551 = vld [vmem:[%s3 + $0xe18] sm:$0xff]
  %v4552 = vld [vmem:[%s3 + $0xe20] sm:$0xff]
  %v4553 = vld [vmem:[%s3 + $0xe28] sm:$0xff]
  %v4554 = vld [vmem:[%s3 + $0xe30] sm:$0xff]
  %v4555 = vld [vmem:[%s3 + $0xe38] sm:$0xff]
  %v4556 = vld [vmem:[%s3 + $0xe40] sm:$0xff]
  %v4557 = vld [vmem:[%s3 + $0xe48] sm:$0xff]
  %v4558 = vld [vmem:[%s3 + $0xe50] sm:$0xff]
  %v4559 = vld [vmem:[%s3 + $0xe58] sm:$0xff]
  %v4560 = vld [vmem:[%s3 + $0xe60] sm:$0xff]
  %v4561 = vld [vmem:[%s3 + $0xe68] sm:$0xff]
  %v4562 = vld [vmem:[%s3 + $0xe70] sm:$0xff]
  %v4563 = vld [vmem:[%s3 + $0xe78] sm:$0xff]
  %v4564 = vld [vmem:[%s3 + $0xe80] sm:$0xff]
  %v4565 = vld [vmem:[%s3 + $0xe88] sm:$0xff]
  %v4566 = vld [vmem:[%s3 + $0xe90] sm:$0xff]
  %v4567 = vld [vmem:[%s3 + $0xe98] sm:$0xff]
  %v4568 = vld [vmem:[%s3 + $0xea0] sm:$0xff]
  %v4569 = vld [vmem:[%s3 + $0xea8] sm:$0xff]
  %v4570 = vld [vmem:[%s3 + $0xeb0] sm:$0xff]
  %v4571 = vld [vmem:[%s3 + $0xeb8] sm:$0xff]
  %v4572 = vld [vmem:[%s3 + $0xec0] sm:$0xff]
  %v4573 = vld [vmem:[%s3 + $0xec8] sm:$0xff]
  %v4574 = vld [vmem:[%s3 + $0xed0] sm:$0xff]
  %v4575 = vld [vmem:[%s3 + $0xed8] sm:$0xff]
  %v4576 = vld [vmem:[%s3 + $0xee0] sm:$0xff]
  %v4577 = vld [vmem:[%s3 + $0xee8] sm:$0xff]
  %v4578 = vld [vmem:[%s3 + $0xef0] sm:$0xff]
  %v4579 = vld [vmem:[%s3 + $0xef8] sm:$0xff]
  %v4580 = vld [vmem:[%s3 + $0xf00] sm:$0xff]
  %v4581 = vld [vmem:[%s3 + $0xf08] sm:$0xff]
  %v4582 = vld [vmem:[%s3 + $0xf10] sm:$0xff]
  %v4583 = vld [vmem:[%s3 + $0xf18] sm:$0xff]
  %v4584 = vld [vmem:[%s3 + $0xf20] sm:$0xff]
  %v4585 = vld [vmem:[%s3 + $0xf28] sm:$0xff]
  %v4586 = vld [vmem:[%s3 + $0xf30] sm:$0xff]
  %v4587 = vld [vmem:[%s3 + $0xf38] sm:$0xff]
  %v4588 = vld [vmem:[%s3 + $0xf40] sm:$0xff]
  %v4589 = vld [vmem:[%s3 + $0xf48] sm:$0xff]
  %v4590 = vld [vmem:[%s3 + $0xf50] sm:$0xff]
  %v4591 = vld [vmem:[%s3 + $0xf58] sm:$0xff]
  %v4592 = vld [vmem:[%s3 + $0xf60] sm:$0xff]
  %v4593 = vld [vmem:[%s3 + $0xf68] sm:$0xff]
  %v4594 = vld [vmem:[%s3 + $0xf70] sm:$0xff]
  %v4595 = vld [vmem:[%s3 + $0xf78] sm:$0xff]
  %v4596 = vld [vmem:[%s3 + $0xf80] sm:$0xff]
  %v4597 = vld [vmem:[%s3 + $0xf88] sm:$0xff]
  %v4598 = vld [vmem:[%s3 + $0xf90] sm:$0xff]
  %v4599 = vld [vmem:[%s3 + $0xf98] sm:$0xff]
  %v4600 = vld [vmem:[%s3 + $0xfa0] sm:$0xff]
  %v4601 = vld [vmem:[%s3 + $0xfa8] sm:$0xff]
  %v4602 = vld [vmem:[%s3 + $0xfb0] sm:$0xff]
  %v4603 = vld [vmem:[%s3 + $0xfb8] sm:$0xff]
  %v4604 = vld [vmem:[%s3 + $0xfc0] sm:$0xff]
  %v4605 = vld [vmem:[%s3 + $0xfc8] sm:$0xff]
  %v4606 = vld [vmem:[%s3 + $0xfd0] sm:$0xff]
  %v4607 = vld [vmem:[%s3 + $0xfd8] sm:$0xff]
  %v4608 = vld [vmem:[%s3 + $0xfe0] sm:$0xff]
  %v4609 = vld [vmem:[%s3 + $0xfe8] sm:$0xff]
  %v4610 = vld [vmem:[%s3 + $0xff0] sm:$0xff]
  %v4611 = vld [vmem:[%s3 + $0xff8] sm:$0xff]
  %v4612 = vld [vmem:[%s4] sm:$0xff]
  %v4614 = vperm.slane %v4612, 0
  %v4615 = vperm.slane %v4612, 1
  %v4616 = vperm.slane %v4612, 2
  %v4617 = vperm.slane %v4612, 3
  %v4618 = vperm.slane %v4612, 4
  %v4619 = vperm.slane %v4612, 5
  %v4620 = vperm.slane %v4612, 6
  %v4621 = vperm.slane %v4612, 7
  %v5142 = vunpack.c.l.b16 %v4100
  %v5143 = vunpack.c.h.b16 %v4100
  %v5144 = vunpack.c.l.b16 %v4101
  %v5145 = vunpack.c.h.b16 %v4101
  %v5146 = vunpack.c.l.b16 %v4102
  %v5147 = vunpack.c.h.b16 %v4102
  %v5148 = vunpack.c.l.b16 %v4103
  %v5149 = vunpack.c.h.b16 %v4103
  %v5150 = vunpack.c.l.b16 %v4104
  %v5151 = vunpack.c.h.b16 %v4104
  %v5152 = vunpack.c.l.b16 %v4105
  %v5153 = vunpack.c.h.b16 %v4105
  %v5154 = vunpack.c.l.b16 %v4106
  %v5155 = vunpack.c.h.b16 %v4106
  %v5156 = vunpack.c.l.b16 %v4107
  %v5157 = vunpack.c.h.b16 %v4107
  %v5158 = vunpack.c.l.b16 %v4108
  %v5159 = vunpack.c.h.b16 %v4108
  %v5160 = vunpack.c.l.b16 %v4109
  %v5161 = vunpack.c.h.b16 %v4109
  %v5162 = vunpack.c.l.b16 %v4110
  %v5163 = vunpack.c.h.b16 %v4110
  %v5164 = vunpack.c.l.b16 %v4111
  %v5165 = vunpack.c.h.b16 %v4111
  %v5166 = vunpack.c.l.b16 %v4112
  %v5167 = vunpack.c.h.b16 %v4112
  %v5168 = vunpack.c.l.b16 %v4113
  %v5169 = vunpack.c.h.b16 %v4113
  %v5170 = vunpack.c.l.b16 %v4114
  %v5171 = vunpack.c.h.b16 %v4114
  %v5172 = vunpack.c.l.b16 %v4115
  %v5173 = vunpack.c.h.b16 %v4115
  %v5174 = vunpack.c.l.b16 %v4116
  %v5175 = vunpack.c.h.b16 %v4116
  %v5176 = vunpack.c.l.b16 %v4117
  %v5177 = vunpack.c.h.b16 %v4117
  %v5178 = vunpack.c.l.b16 %v4118
  %v5179 = vunpack.c.h.b16 %v4118
  %v5180 = vunpack.c.l.b16 %v4119
  %v5181 = vunpack.c.h.b16 %v4119
  %v5182 = vunpack.c.l.b16 %v4120
  %v5183 = vunpack.c.h.b16 %v4120
  %v5184 = vunpack.c.l.b16 %v4121
  %v5185 = vunpack.c.h.b16 %v4121
  %v5186 = vunpack.c.l.b16 %v4122
  %v5187 = vunpack.c.h.b16 %v4122
  %v5188 = vunpack.c.l.b16 %v4123
  %v5189 = vunpack.c.h.b16 %v4123
  %v5190 = vunpack.c.l.b16 %v4124
  %v5191 = vunpack.c.h.b16 %v4124
  %v5192 = vunpack.c.l.b16 %v4125
  %v5193 = vunpack.c.h.b16 %v4125
  %v5194 = vunpack.c.l.b16 %v4126
  %v5195 = vunpack.c.h.b16 %v4126
  %v5196 = vunpack.c.l.b16 %v4127
  %v5197 = vunpack.c.h.b16 %v4127
  %v5198 = vunpack.c.l.b16 %v4128
  %v5199 = vunpack.c.h.b16 %v4128
  %v5200 = vunpack.c.l.b16 %v4129
  %v5201 = vunpack.c.h.b16 %v4129
  %v5202 = vunpack.c.l.b16 %v4130
  %v5203 = vunpack.c.h.b16 %v4130
  %v5204 = vunpack.c.l.b16 %v4131
  %v5205 = vunpack.c.h.b16 %v4131
  %v5206 = vunpack.c.l.b16 %v4132
  %v5207 = vunpack.c.h.b16 %v4132
  %v5208 = vunpack.c.l.b16 %v4133
  %v5209 = vunpack.c.h.b16 %v4133
  %v5210 = vunpack.c.l.b16 %v4134
  %v5211 = vunpack.c.h.b16 %v4134
  %v5212 = vunpack.c.l.b16 %v4135
  %v5213 = vunpack.c.h.b16 %v4135
  %v5214 = vunpack.c.l.b16 %v4136
  %v5215 = vunpack.c.h.b16 %v4136
  %v5216 = vunpack.c.l.b16 %v4137
  %v5217 = vunpack.c.h.b16 %v4137
  %v5218 = vunpack.c.l.b16 %v4138
  %v5219 = vunpack.c.h.b16 %v4138
  %v5220 = vunpack.c.l.b16 %v4139
  %v5221 = vunpack.c.h.b16 %v4139
  %v5222 = vunpack.c.l.b16 %v4140
  %v5223 = vunpack.c.h.b16 %v4140
  %v5224 = vunpack.c.l.b16 %v4141
  %v5225 = vunpack.c.h.b16 %v4141
  %v5226 = vunpack.c.l.b16 %v4142
  %v5227 = vunpack.c.h.b16 %v4142
  %v5228 = vunpack.c.l.b16 %v4143
  %v5229 = vunpack.c.h.b16 %v4143
  %v5230 = vunpack.c.l.b16 %v4144
  %v5231 = vunpack.c.h.b16 %v4144
  %v5232 = vunpack.c.l.b16 %v4145
  %v5233 = vunpack.c.h.b16 %v4145
  %v5234 = vunpack.c.l.b16 %v4146
  %v5235 = vunpack.c.h.b16 %v4146
  %v5236 = vunpack.c.l.b16 %v4147
  %v5237 = vunpack.c.h.b16 %v4147
  %v5238 = vunpack.c.l.b16 %v4148
  %v5239 = vunpack.c.h.b16 %v4148
  %v5240 = vunpack.c.l.b16 %v4149
  %v5241 = vunpack.c.h.b16 %v4149
  %v5242 = vunpack.c.l.b16 %v4150
  %v5243 = vunpack.c.h.b16 %v4150
  %v5244 = vunpack.c.l.b16 %v4151
  %v5245 = vunpack.c.h.b16 %v4151
  %v5246 = vunpack.c.l.b16 %v4152
  %v5247 = vunpack.c.h.b16 %v4152
  %v5248 = vunpack.c.l.b16 %v4153
  %v5249 = vunpack.c.h.b16 %v4153
  %v5250 = vunpack.c.l.b16 %v4154
  %v5251 = vunpack.c.h.b16 %v4154
  %v5252 = vunpack.c.l.b16 %v4155
  %v5253 = vunpack.c.h.b16 %v4155
  %v5254 = vunpack.c.l.b16 %v4156
  %v5255 = vunpack.c.h.b16 %v4156
  %v5256 = vunpack.c.l.b16 %v4157
  %v5257 = vunpack.c.h.b16 %v4157
  %v5258 = vunpack.c.l.b16 %v4158
  %v5259 = vunpack.c.h.b16 %v4158
  %v5260 = vunpack.c.l.b16 %v4159
  %v5261 = vunpack.c.h.b16 %v4159
  %v5262 = vunpack.c.l.b16 %v4160
  %v5263 = vunpack.c.h.b16 %v4160
  %v5264 = vunpack.c.l.b16 %v4161
  %v5265 = vunpack.c.h.b16 %v4161
  %v5266 = vunpack.c.l.b16 %v4162
  %v5267 = vunpack.c.h.b16 %v4162
  %v5268 = vunpack.c.l.b16 %v4163
  %v5269 = vunpack.c.h.b16 %v4163
  %v5270 = vunpack.c.l.b16 %v4164
  %v5271 = vunpack.c.h.b16 %v4164
  %v5272 = vunpack.c.l.b16 %v4165
  %v5273 = vunpack.c.h.b16 %v4165
  %v5274 = vunpack.c.l.b16 %v4166
  %v5275 = vunpack.c.h.b16 %v4166
  %v5276 = vunpack.c.l.b16 %v4167
  %v5277 = vunpack.c.h.b16 %v4167
  %v5278 = vunpack.c.l.b16 %v4168
  %v5279 = vunpack.c.h.b16 %v4168
  %v5280 = vunpack.c.l.b16 %v4169
  %v5281 = vunpack.c.h.b16 %v4169
  %v5282 = vunpack.c.l.b16 %v4170
  %v5283 = vunpack.c.h.b16 %v4170
  %v5284 = vunpack.c.l.b16 %v4171
  %v5285 = vunpack.c.h.b16 %v4171
  %v5286 = vunpack.c.l.b16 %v4172
  %v5287 = vunpack.c.h.b16 %v4172
  %v5288 = vunpack.c.l.b16 %v4173
  %v5289 = vunpack.c.h.b16 %v4173
  %v5290 = vunpack.c.l.b16 %v4174
  %v5291 = vunpack.c.h.b16 %v4174
  %v5292 = vunpack.c.l.b16 %v4175
  %v5293 = vunpack.c.h.b16 %v4175
  %v5294 = vunpack.c.l.b16 %v4176
  %v5295 = vunpack.c.h.b16 %v4176
  %v5296 = vunpack.c.l.b16 %v4177
  %v5297 = vunpack.c.h.b16 %v4177
  %v5298 = vunpack.c.l.b16 %v4178
  %v5299 = vunpack.c.h.b16 %v4178
  %v5300 = vunpack.c.l.b16 %v4179
  %v5301 = vunpack.c.h.b16 %v4179
  %v5302 = vunpack.c.l.b16 %v4180
  %v5303 = vunpack.c.h.b16 %v4180
  %v5304 = vunpack.c.l.b16 %v4181
  %v5305 = vunpack.c.h.b16 %v4181
  %v5306 = vunpack.c.l.b16 %v4182
  %v5307 = vunpack.c.h.b16 %v4182
  %v5308 = vunpack.c.l.b16 %v4183
  %v5309 = vunpack.c.h.b16 %v4183
  %v5310 = vunpack.c.l.b16 %v4184
  %v5311 = vunpack.c.h.b16 %v4184
  %v5312 = vunpack.c.l.b16 %v4185
  %v5313 = vunpack.c.h.b16 %v4185
  %v5314 = vunpack.c.l.b16 %v4186
  %v5315 = vunpack.c.h.b16 %v4186
  %v5316 = vunpack.c.l.b16 %v4187
  %v5317 = vunpack.c.h.b16 %v4187
  %v5318 = vunpack.c.l.b16 %v4188
  %v5319 = vunpack.c.h.b16 %v4188
  %v5320 = vunpack.c.l.b16 %v4189
  %v5321 = vunpack.c.h.b16 %v4189
  %v5322 = vunpack.c.l.b16 %v4190
  %v5323 = vunpack.c.h.b16 %v4190
  %v5324 = vunpack.c.l.b16 %v4191
  %v5325 = vunpack.c.h.b16 %v4191
  %v5326 = vunpack.c.l.b16 %v4192
  %v5327 = vunpack.c.h.b16 %v4192
  %v5328 = vunpack.c.l.b16 %v4193
  %v5329 = vunpack.c.h.b16 %v4193
  %v5330 = vunpack.c.l.b16 %v4194
  %v5331 = vunpack.c.h.b16 %v4194
  %v5332 = vunpack.c.l.b16 %v4195
  %v5333 = vunpack.c.h.b16 %v4195
  %v5334 = vunpack.c.l.b16 %v4196
  %v5335 = vunpack.c.h.b16 %v4196
  %v5336 = vunpack.c.l.b16 %v4197
  %v5337 = vunpack.c.h.b16 %v4197
  %v5338 = vunpack.c.l.b16 %v4198
  %v5339 = vunpack.c.h.b16 %v4198
  %v5340 = vunpack.c.l.b16 %v4199
  %v5341 = vunpack.c.h.b16 %v4199
  %v5342 = vunpack.c.l.b16 %v4200
  %v5343 = vunpack.c.h.b16 %v4200
  %v5344 = vunpack.c.l.b16 %v4201
  %v5345 = vunpack.c.h.b16 %v4201
  %v5346 = vunpack.c.l.b16 %v4202
  %v5347 = vunpack.c.h.b16 %v4202
  %v5348 = vunpack.c.l.b16 %v4203
  %v5349 = vunpack.c.h.b16 %v4203
  %v5350 = vunpack.c.l.b16 %v4204
  %v5351 = vunpack.c.h.b16 %v4204
  %v5352 = vunpack.c.l.b16 %v4205
  %v5353 = vunpack.c.h.b16 %v4205
  %v5354 = vunpack.c.l.b16 %v4206
  %v5355 = vunpack.c.h.b16 %v4206
  %v5356 = vunpack.c.l.b16 %v4207
  %v5357 = vunpack.c.h.b16 %v4207
  %v5358 = vunpack.c.l.b16 %v4208
  %v5359 = vunpack.c.h.b16 %v4208
  %v5360 = vunpack.c.l.b16 %v4209
  %v5361 = vunpack.c.h.b16 %v4209
  %v5362 = vunpack.c.l.b16 %v4210
  %v5363 = vunpack.c.h.b16 %v4210
  %v5364 = vunpack.c.l.b16 %v4211
  %v5365 = vunpack.c.h.b16 %v4211
  %v5366 = vunpack.c.l.b16 %v4212
  %v5367 = vunpack.c.h.b16 %v4212
  %v5368 = vunpack.c.l.b16 %v4213
  %v5369 = vunpack.c.h.b16 %v4213
  %v5370 = vunpack.c.l.b16 %v4214
  %v5371 = vunpack.c.h.b16 %v4214
  %v5372 = vunpack.c.l.b16 %v4215
  %v5373 = vunpack.c.h.b16 %v4215
  %v5374 = vunpack.c.l.b16 %v4216
  %v5375 = vunpack.c.h.b16 %v4216
  %v5376 = vunpack.c.l.b16 %v4217
  %v5377 = vunpack.c.h.b16 %v4217
  %v5378 = vunpack.c.l.b16 %v4218
  %v5379 = vunpack.c.h.b16 %v4218
  %v5380 = vunpack.c.l.b16 %v4219
  %v5381 = vunpack.c.h.b16 %v4219
  %v5382 = vunpack.c.l.b16 %v4220
  %v5383 = vunpack.c.h.b16 %v4220
  %v5384 = vunpack.c.l.b16 %v4221
  %v5385 = vunpack.c.h.b16 %v4221
  %v5386 = vunpack.c.l.b16 %v4222
  %v5387 = vunpack.c.h.b16 %v4222
  %v5388 = vunpack.c.l.b16 %v4223
  %v5389 = vunpack.c.h.b16 %v4223
  %v5390 = vunpack.c.l.b16 %v4224
  %v5391 = vunpack.c.h.b16 %v4224
  %v5392 = vunpack.c.l.b16 %v4225
  %v5393 = vunpack.c.h.b16 %v4225
  %v5394 = vunpack.c.l.b16 %v4226
  %v5395 = vunpack.c.h.b16 %v4226
  %v5396 = vunpack.c.l.b16 %v4227
  %v5397 = vunpack.c.h.b16 %v4227
  %v5398 = vunpack.c.l.b16 %v4228
  %v5399 = vunpack.c.h.b16 %v4228
  %v5400 = vunpack.c.l.b16 %v4229
  %v5401 = vunpack.c.h.b16 %v4229
  %v5402 = vunpack.c.l.b16 %v4230
  %v5403 = vunpack.c.h.b16 %v4230
  %v5404 = vunpack.c.l.b16 %v4231
  %v5405 = vunpack.c.h.b16 %v4231
  %v5406 = vunpack.c.l.b16 %v4232
  %v5407 = vunpack.c.h.b16 %v4232
  %v5408 = vunpack.c.l.b16 %v4233
  %v5409 = vunpack.c.h.b16 %v4233
  %v5410 = vunpack.c.l.b16 %v4234
  %v5411 = vunpack.c.h.b16 %v4234
  %v5412 = vunpack.c.l.b16 %v4235
  %v5413 = vunpack.c.h.b16 %v4235
  %v5414 = vunpack.c.l.b16 %v4236
  %v5415 = vunpack.c.h.b16 %v4236
  %v5416 = vunpack.c.l.b16 %v4237
  %v5417 = vunpack.c.h.b16 %v4237
  %v5418 = vunpack.c.l.b16 %v4238
  %v5419 = vunpack.c.h.b16 %v4238
  %v5420 = vunpack.c.l.b16 %v4239
  %v5421 = vunpack.c.h.b16 %v4239
  %v5422 = vunpack.c.l.b16 %v4240
  %v5423 = vunpack.c.h.b16 %v4240
  %v5424 = vunpack.c.l.b16 %v4241
  %v5425 = vunpack.c.h.b16 %v4241
  %v5426 = vunpack.c.l.b16 %v4242
  %v5427 = vunpack.c.h.b16 %v4242
  %v5428 = vunpack.c.l.b16 %v4243
  %v5429 = vunpack.c.h.b16 %v4243
  %v5430 = vunpack.c.l.b16 %v4244
  %v5431 = vunpack.c.h.b16 %v4244
  %v5432 = vunpack.c.l.b16 %v4245
  %v5433 = vunpack.c.h.b16 %v4245
  %v5434 = vunpack.c.l.b16 %v4246
  %v5435 = vunpack.c.h.b16 %v4246
  %v5436 = vunpack.c.l.b16 %v4247
  %v5437 = vunpack.c.h.b16 %v4247
  %v5438 = vunpack.c.l.b16 %v4248
  %v5439 = vunpack.c.h.b16 %v4248
  %v5440 = vunpack.c.l.b16 %v4249
  %v5441 = vunpack.c.h.b16 %v4249
  %v5442 = vunpack.c.l.b16 %v4250
  %v5443 = vunpack.c.h.b16 %v4250
  %v5444 = vunpack.c.l.b16 %v4251
  %v5445 = vunpack.c.h.b16 %v4251
  %v5446 = vunpack.c.l.b16 %v4252
  %v5447 = vunpack.c.h.b16 %v4252
  %v5448 = vunpack.c.l.b16 %v4253
  %v5449 = vunpack.c.h.b16 %v4253
  %v5450 = vunpack.c.l.b16 %v4254
  %v5451 = vunpack.c.h.b16 %v4254
  %v5452 = vunpack.c.l.b16 %v4255
  %v5453 = vunpack.c.h.b16 %v4255
  %v5454 = vunpack.c.l.b16 %v4256
  %v5455 = vunpack.c.h.b16 %v4256
  %v5456 = vunpack.c.l.b16 %v4257
  %v5457 = vunpack.c.h.b16 %v4257
  %v5458 = vunpack.c.l.b16 %v4258
  %v5459 = vunpack.c.h.b16 %v4258
  %v5460 = vunpack.c.l.b16 %v4259
  %v5461 = vunpack.c.h.b16 %v4259
  %v5462 = vunpack.c.l.b16 %v4260
  %v5463 = vunpack.c.h.b16 %v4260
  %v5464 = vunpack.c.l.b16 %v4261
  %v5465 = vunpack.c.h.b16 %v4261
  %v5466 = vunpack.c.l.b16 %v4262
  %v5467 = vunpack.c.h.b16 %v4262
  %v5468 = vunpack.c.l.b16 %v4263
  %v5469 = vunpack.c.h.b16 %v4263
  %v5470 = vunpack.c.l.b16 %v4264
  %v5471 = vunpack.c.h.b16 %v4264
  %v5472 = vunpack.c.l.b16 %v4265
  %v5473 = vunpack.c.h.b16 %v4265
  %v5474 = vunpack.c.l.b16 %v4266
  %v5475 = vunpack.c.h.b16 %v4266
  %v5476 = vunpack.c.l.b16 %v4267
  %v5477 = vunpack.c.h.b16 %v4267
  %v5478 = vunpack.c.l.b16 %v4268
  %v5479 = vunpack.c.h.b16 %v4268
  %v5480 = vunpack.c.l.b16 %v4269
  %v5481 = vunpack.c.h.b16 %v4269
  %v5482 = vunpack.c.l.b16 %v4270
  %v5483 = vunpack.c.h.b16 %v4270
  %v5484 = vunpack.c.l.b16 %v4271
  %v5485 = vunpack.c.h.b16 %v4271
  %v5486 = vunpack.c.l.b16 %v4272
  %v5487 = vunpack.c.h.b16 %v4272
  %v5488 = vunpack.c.l.b16 %v4273
  %v5489 = vunpack.c.h.b16 %v4273
  %v5490 = vunpack.c.l.b16 %v4274
  %v5491 = vunpack.c.h.b16 %v4274
  %v5492 = vunpack.c.l.b16 %v4275
  %v5493 = vunpack.c.h.b16 %v4275
  %v5494 = vunpack.c.l.b16 %v4276
  %v5495 = vunpack.c.h.b16 %v4276
  %v5496 = vunpack.c.l.b16 %v4277
  %v5497 = vunpack.c.h.b16 %v4277
  %v5498 = vunpack.c.l.b16 %v4278
  %v5499 = vunpack.c.h.b16 %v4278
  %v5500 = vunpack.c.l.b16 %v4279
  %v5501 = vunpack.c.h.b16 %v4279
  %v5502 = vunpack.c.l.b16 %v4280
  %v5503 = vunpack.c.h.b16 %v4280
  %v5504 = vunpack.c.l.b16 %v4281
  %v5505 = vunpack.c.h.b16 %v4281
  %v5506 = vunpack.c.l.b16 %v4282
  %v5507 = vunpack.c.h.b16 %v4282
  %v5508 = vunpack.c.l.b16 %v4283
  %v5509 = vunpack.c.h.b16 %v4283
  %v5510 = vunpack.c.l.b16 %v4284
  %v5511 = vunpack.c.h.b16 %v4284
  %v5512 = vunpack.c.l.b16 %v4285
  %v5513 = vunpack.c.h.b16 %v4285
  %v5514 = vunpack.c.l.b16 %v4286
  %v5515 = vunpack.c.h.b16 %v4286
  %v5516 = vunpack.c.l.b16 %v4287
  %v5517 = vunpack.c.h.b16 %v4287
  %v5518 = vunpack.c.l.b16 %v4288
  %v5519 = vunpack.c.h.b16 %v4288
  %v5520 = vunpack.c.l.b16 %v4289
  %v5521 = vunpack.c.h.b16 %v4289
  %v5522 = vunpack.c.l.b16 %v4290
  %v5523 = vunpack.c.h.b16 %v4290
  %v5524 = vunpack.c.l.b16 %v4291
  %v5525 = vunpack.c.h.b16 %v4291
  %v5526 = vunpack.c.l.b16 %v4292
  %v5527 = vunpack.c.h.b16 %v4292
  %v5528 = vunpack.c.l.b16 %v4293
  %v5529 = vunpack.c.h.b16 %v4293
  %v5530 = vunpack.c.l.b16 %v4294
  %v5531 = vunpack.c.h.b16 %v4294
  %v5532 = vunpack.c.l.b16 %v4295
  %v5533 = vunpack.c.h.b16 %v4295
  %v5534 = vunpack.c.l.b16 %v4296
  %v5535 = vunpack.c.h.b16 %v4296
  %v5536 = vunpack.c.l.b16 %v4297
  %v5537 = vunpack.c.h.b16 %v4297
  %v5538 = vunpack.c.l.b16 %v4298
  %v5539 = vunpack.c.h.b16 %v4298
  %v5540 = vunpack.c.l.b16 %v4299
  %v5541 = vunpack.c.h.b16 %v4299
  %v5542 = vunpack.c.l.b16 %v4300
  %v5543 = vunpack.c.h.b16 %v4300
  %v5544 = vunpack.c.l.b16 %v4301
  %v5545 = vunpack.c.h.b16 %v4301
  %v5546 = vunpack.c.l.b16 %v4302
  %v5547 = vunpack.c.h.b16 %v4302
  %v5548 = vunpack.c.l.b16 %v4303
  %v5549 = vunpack.c.h.b16 %v4303
  %v5550 = vunpack.c.l.b16 %v4304
  %v5551 = vunpack.c.h.b16 %v4304
  %v5552 = vunpack.c.l.b16 %v4305
  %v5553 = vunpack.c.h.b16 %v4305
  %v5554 = vunpack.c.l.b16 %v4306
  %v5555 = vunpack.c.h.b16 %v4306
  %v5556 = vunpack.c.l.b16 %v4307
  %v5557 = vunpack.c.h.b16 %v4307
  %v5558 = vunpack.c.l.b16 %v4308
  %v5559 = vunpack.c.h.b16 %v4308
  %v5560 = vunpack.c.l.b16 %v4309
  %v5561 = vunpack.c.h.b16 %v4309
  %v5562 = vunpack.c.l.b16 %v4310
  %v5563 = vunpack.c.h.b16 %v4310
  %v5564 = vunpack.c.l.b16 %v4311
  %v5565 = vunpack.c.h.b16 %v4311
  %v5566 = vunpack.c.l.b16 %v4312
  %v5567 = vunpack.c.h.b16 %v4312
  %v5568 = vunpack.c.l.b16 %v4313
  %v5569 = vunpack.c.h.b16 %v4313
  %v5570 = vunpack.c.l.b16 %v4314
  %v5571 = vunpack.c.h.b16 %v4314
  %v5572 = vunpack.c.l.b16 %v4315
  %v5573 = vunpack.c.h.b16 %v4315
  %v5574 = vunpack.c.l.b16 %v4316
  %v5575 = vunpack.c.h.b16 %v4316
  %v5576 = vunpack.c.l.b16 %v4317
  %v5577 = vunpack.c.h.b16 %v4317
  %v5578 = vunpack.c.l.b16 %v4318
  %v5579 = vunpack.c.h.b16 %v4318
  %v5580 = vunpack.c.l.b16 %v4319
  %v5581 = vunpack.c.h.b16 %v4319
  %v5582 = vunpack.c.l.b16 %v4320
  %v5583 = vunpack.c.h.b16 %v4320
  %v5584 = vunpack.c.l.b16 %v4321
  %v5585 = vunpack.c.h.b16 %v4321
  %v5586 = vunpack.c.l.b16 %v4322
  %v5587 = vunpack.c.h.b16 %v4322
  %v5588 = vunpack.c.l.b16 %v4323
  %v5589 = vunpack.c.h.b16 %v4323
  %v5590 = vunpack.c.l.b16 %v4324
  %v5591 = vunpack.c.h.b16 %v4324
  %v5592 = vunpack.c.l.b16 %v4325
  %v5593 = vunpack.c.h.b16 %v4325
  %v5594 = vunpack.c.l.b16 %v4326
  %v5595 = vunpack.c.h.b16 %v4326
  %v5596 = vunpack.c.l.b16 %v4327
  %v5597 = vunpack.c.h.b16 %v4327
  %v5598 = vunpack.c.l.b16 %v4328
  %v5599 = vunpack.c.h.b16 %v4328
  %v5600 = vunpack.c.l.b16 %v4329
  %v5601 = vunpack.c.h.b16 %v4329
  %v5602 = vunpack.c.l.b16 %v4330
  %v5603 = vunpack.c.h.b16 %v4330
  %v5604 = vunpack.c.l.b16 %v4331
  %v5605 = vunpack.c.h.b16 %v4331
  %v5606 = vunpack.c.l.b16 %v4332
  %v5607 = vunpack.c.h.b16 %v4332
  %v5608 = vunpack.c.l.b16 %v4333
  %v5609 = vunpack.c.h.b16 %v4333
  %v5610 = vunpack.c.l.b16 %v4334
  %v5611 = vunpack.c.h.b16 %v4334
  %v5612 = vunpack.c.l.b16 %v4335
  %v5613 = vunpack.c.h.b16 %v4335
  %v5614 = vunpack.c.l.b16 %v4336
  %v5615 = vunpack.c.h.b16 %v4336
  %v5616 = vunpack.c.l.b16 %v4337
  %v5617 = vunpack.c.h.b16 %v4337
  %v5618 = vunpack.c.l.b16 %v4338
  %v5619 = vunpack.c.h.b16 %v4338
  %v5620 = vunpack.c.l.b16 %v4339
  %v5621 = vunpack.c.h.b16 %v4339
  %v5622 = vunpack.c.l.b16 %v4340
  %v5623 = vunpack.c.h.b16 %v4340
  %v5624 = vunpack.c.l.b16 %v4341
  %v5625 = vunpack.c.h.b16 %v4341
  %v5626 = vunpack.c.l.b16 %v4342
  %v5627 = vunpack.c.h.b16 %v4342
  %v5628 = vunpack.c.l.b16 %v4343
  %v5629 = vunpack.c.h.b16 %v4343
  %v5630 = vunpack.c.l.b16 %v4344
  %v5631 = vunpack.c.h.b16 %v4344
  %v5632 = vunpack.c.l.b16 %v4345
  %v5633 = vunpack.c.h.b16 %v4345
  %v5634 = vunpack.c.l.b16 %v4346
  %v5635 = vunpack.c.h.b16 %v4346
  %v5636 = vunpack.c.l.b16 %v4347
  %v5637 = vunpack.c.h.b16 %v4347
  %v5638 = vunpack.c.l.b16 %v4348
  %v5639 = vunpack.c.h.b16 %v4348
  %v5640 = vunpack.c.l.b16 %v4349
  %v5641 = vunpack.c.h.b16 %v4349
  %v5642 = vunpack.c.l.b16 %v4350
  %v5643 = vunpack.c.h.b16 %v4350
  %v5644 = vunpack.c.l.b16 %v4351
  %v5645 = vunpack.c.h.b16 %v4351
  %v5646 = vunpack.c.l.b16 %v4352
  %v5647 = vunpack.c.h.b16 %v4352
  %v5648 = vunpack.c.l.b16 %v4353
  %v5649 = vunpack.c.h.b16 %v4353
  %v5650 = vunpack.c.l.b16 %v4354
  %v5651 = vunpack.c.h.b16 %v4354
  %v5652 = vunpack.c.l.b16 %v4355
  %v5653 = vunpack.c.h.b16 %v4355
  %v5654 = vunpack.c.l.b16 %v4356
  %v5655 = vunpack.c.h.b16 %v4356
  %v5656 = vunpack.c.l.b16 %v4357
  %v5657 = vunpack.c.h.b16 %v4357
  %v5658 = vunpack.c.l.b16 %v4358
  %v5659 = vunpack.c.h.b16 %v4358
  %v5660 = vunpack.c.l.b16 %v4359
  %v5661 = vunpack.c.h.b16 %v4359
  %v5662 = vunpack.c.l.b16 %v4360
  %v5663 = vunpack.c.h.b16 %v4360
  %v5664 = vunpack.c.l.b16 %v4361
  %v5665 = vunpack.c.h.b16 %v4361
  %v5666 = vunpack.c.l.b16 %v4362
  %v5667 = vunpack.c.h.b16 %v4362
  %v5668 = vunpack.c.l.b16 %v4363
  %v5669 = vunpack.c.h.b16 %v4363
  %v5670 = vunpack.c.l.b16 %v4364
  %v5671 = vunpack.c.h.b16 %v4364
  %v5672 = vunpack.c.l.b16 %v4365
  %v5673 = vunpack.c.h.b16 %v4365
  %v5674 = vunpack.c.l.b16 %v4366
  %v5675 = vunpack.c.h.b16 %v4366
  %v5676 = vunpack.c.l.b16 %v4367
  %v5677 = vunpack.c.h.b16 %v4367
  %v5678 = vunpack.c.l.b16 %v4368
  %v5679 = vunpack.c.h.b16 %v4368
  %v5680 = vunpack.c.l.b16 %v4369
  %v5681 = vunpack.c.h.b16 %v4369
  %v5682 = vunpack.c.l.b16 %v4370
  %v5683 = vunpack.c.h.b16 %v4370
  %v5684 = vunpack.c.l.b16 %v4371
  %v5685 = vunpack.c.h.b16 %v4371
  %v5686 = vunpack.c.l.b16 %v4372
  %v5687 = vunpack.c.h.b16 %v4372
  %v5688 = vunpack.c.l.b16 %v4373
  %v5689 = vunpack.c.h.b16 %v4373
  %v5690 = vunpack.c.l.b16 %v4374
  %v5691 = vunpack.c.h.b16 %v4374
  %v5692 = vunpack.c.l.b16 %v4375
  %v5693 = vunpack.c.h.b16 %v4375
  %v5694 = vunpack.c.l.b16 %v4376
  %v5695 = vunpack.c.h.b16 %v4376
  %v5696 = vunpack.c.l.b16 %v4377
  %v5697 = vunpack.c.h.b16 %v4377
  %v5698 = vunpack.c.l.b16 %v4378
  %v5699 = vunpack.c.h.b16 %v4378
  %v5700 = vunpack.c.l.b16 %v4379
  %v5701 = vunpack.c.h.b16 %v4379
  %v5702 = vunpack.c.l.b16 %v4380
  %v5703 = vunpack.c.h.b16 %v4380
  %v5704 = vunpack.c.l.b16 %v4381
  %v5705 = vunpack.c.h.b16 %v4381
  %v5706 = vunpack.c.l.b16 %v4382
  %v5707 = vunpack.c.h.b16 %v4382
  %v5708 = vunpack.c.l.b16 %v4383
  %v5709 = vunpack.c.h.b16 %v4383
  %v5710 = vunpack.c.l.b16 %v4384
  %v5711 = vunpack.c.h.b16 %v4384
  %v5712 = vunpack.c.l.b16 %v4385
  %v5713 = vunpack.c.h.b16 %v4385
  %v5714 = vunpack.c.l.b16 %v4386
  %v5715 = vunpack.c.h.b16 %v4386
  %v5716 = vunpack.c.l.b16 %v4387
  %v5717 = vunpack.c.h.b16 %v4387
  %v5718 = vunpack.c.l.b16 %v4388
  %v5719 = vunpack.c.h.b16 %v4388
  %v5720 = vunpack.c.l.b16 %v4389
  %v5721 = vunpack.c.h.b16 %v4389
  %v5722 = vunpack.c.l.b16 %v4390
  %v5723 = vunpack.c.h.b16 %v4390
  %v5724 = vunpack.c.l.b16 %v4391
  %v5725 = vunpack.c.h.b16 %v4391
  %v5726 = vunpack.c.l.b16 %v4392
  %v5727 = vunpack.c.h.b16 %v4392
  %v5728 = vunpack.c.l.b16 %v4393
  %v5729 = vunpack.c.h.b16 %v4393
  %v5730 = vunpack.c.l.b16 %v4394
  %v5731 = vunpack.c.h.b16 %v4394
  %v5732 = vunpack.c.l.b16 %v4395
  %v5733 = vunpack.c.h.b16 %v4395
  %v5734 = vunpack.c.l.b16 %v4396
  %v5735 = vunpack.c.h.b16 %v4396
  %v5736 = vunpack.c.l.b16 %v4397
  %v5737 = vunpack.c.h.b16 %v4397
  %v5738 = vunpack.c.l.b16 %v4398
  %v5739 = vunpack.c.h.b16 %v4398
  %v5740 = vunpack.c.l.b16 %v4399
  %v5741 = vunpack.c.h.b16 %v4399
  %v5742 = vunpack.c.l.b16 %v4400
  %v5743 = vunpack.c.h.b16 %v4400
  %v5744 = vunpack.c.l.b16 %v4401
  %v5745 = vunpack.c.h.b16 %v4401
  %v5746 = vunpack.c.l.b16 %v4402
  %v5747 = vunpack.c.h.b16 %v4402
  %v5748 = vunpack.c.l.b16 %v4403
  %v5749 = vunpack.c.h.b16 %v4403
  %v5750 = vunpack.c.l.b16 %v4404
  %v5751 = vunpack.c.h.b16 %v4404
  %v5752 = vunpack.c.l.b16 %v4405
  %v5753 = vunpack.c.h.b16 %v4405
  %v5754 = vunpack.c.l.b16 %v4406
  %v5755 = vunpack.c.h.b16 %v4406
  %v5756 = vunpack.c.l.b16 %v4407
  %v5757 = vunpack.c.h.b16 %v4407
  %v5758 = vunpack.c.l.b16 %v4408
  %v5759 = vunpack.c.h.b16 %v4408
  %v5760 = vunpack.c.l.b16 %v4409
  %v5761 = vunpack.c.h.b16 %v4409
  %v5762 = vunpack.c.l.b16 %v4410
  %v5763 = vunpack.c.h.b16 %v4410
  %v5764 = vunpack.c.l.b16 %v4411
  %v5765 = vunpack.c.h.b16 %v4411
  %v5766 = vunpack.c.l.b16 %v4412
  %v5767 = vunpack.c.h.b16 %v4412
  %v5768 = vunpack.c.l.b16 %v4413
  %v5769 = vunpack.c.h.b16 %v4413
  %v5770 = vunpack.c.l.b16 %v4414
  %v5771 = vunpack.c.h.b16 %v4414
  %v5772 = vunpack.c.l.b16 %v4415
  %v5773 = vunpack.c.h.b16 %v4415
  %v5774 = vunpack.c.l.b16 %v4416
  %v5775 = vunpack.c.h.b16 %v4416
  %v5776 = vunpack.c.l.b16 %v4417
  %v5777 = vunpack.c.h.b16 %v4417
  %v5778 = vunpack.c.l.b16 %v4418
  %v5779 = vunpack.c.h.b16 %v4418
  %v5780 = vunpack.c.l.b16 %v4419
  %v5781 = vunpack.c.h.b16 %v4419
  %v5782 = vunpack.c.l.b16 %v4420
  %v5783 = vunpack.c.h.b16 %v4420
  %v5784 = vunpack.c.l.b16 %v4421
  %v5785 = vunpack.c.h.b16 %v4421
  %v5786 = vunpack.c.l.b16 %v4422
  %v5787 = vunpack.c.h.b16 %v4422
  %v5788 = vunpack.c.l.b16 %v4423
  %v5789 = vunpack.c.h.b16 %v4423
  %v5790 = vunpack.c.l.b16 %v4424
  %v5791 = vunpack.c.h.b16 %v4424
  %v5792 = vunpack.c.l.b16 %v4425
  %v5793 = vunpack.c.h.b16 %v4425
  %v5794 = vunpack.c.l.b16 %v4426
  %v5795 = vunpack.c.h.b16 %v4426
  %v5796 = vunpack.c.l.b16 %v4427
  %v5797 = vunpack.c.h.b16 %v4427
  %v5798 = vunpack.c.l.b16 %v4428
  %v5799 = vunpack.c.h.b16 %v4428
  %v5800 = vunpack.c.l.b16 %v4429
  %v5801 = vunpack.c.h.b16 %v4429
  %v5802 = vunpack.c.l.b16 %v4430
  %v5803 = vunpack.c.h.b16 %v4430
  %v5804 = vunpack.c.l.b16 %v4431
  %v5805 = vunpack.c.h.b16 %v4431
  %v5806 = vunpack.c.l.b16 %v4432
  %v5807 = vunpack.c.h.b16 %v4432
  %v5808 = vunpack.c.l.b16 %v4433
  %v5809 = vunpack.c.h.b16 %v4433
  %v5810 = vunpack.c.l.b16 %v4434
  %v5811 = vunpack.c.h.b16 %v4434
  %v5812 = vunpack.c.l.b16 %v4435
  %v5813 = vunpack.c.h.b16 %v4435
  %v5814 = vunpack.c.l.b16 %v4436
  %v5815 = vunpack.c.h.b16 %v4436
  %v5816 = vunpack.c.l.b16 %v4437
  %v5817 = vunpack.c.h.b16 %v4437
  %v5818 = vunpack.c.l.b16 %v4438
  %v5819 = vunpack.c.h.b16 %v4438
  %v5820 = vunpack.c.l.b16 %v4439
  %v5821 = vunpack.c.h.b16 %v4439
  %v5822 = vunpack.c.l.b16 %v4440
  %v5823 = vunpack.c.h.b16 %v4440
  %v5824 = vunpack.c.l.b16 %v4441
  %v5825 = vunpack.c.h.b16 %v4441
  %v5826 = vunpack.c.l.b16 %v4442
  %v5827 = vunpack.c.h.b16 %v4442
  %v5828 = vunpack.c.l.b16 %v4443
  %v5829 = vunpack.c.h.b16 %v4443
  %v5830 = vunpack.c.l.b16 %v4444
  %v5831 = vunpack.c.h.b16 %v4444
  %v5832 = vunpack.c.l.b16 %v4445
  %v5833 = vunpack.c.h.b16 %v4445
  %v5834 = vunpack.c.l.b16 %v4446
  %v5835 = vunpack.c.h.b16 %v4446
  %v5836 = vunpack.c.l.b16 %v4447
  %v5837 = vunpack.c.h.b16 %v4447
  %v5838 = vunpack.c.l.b16 %v4448
  %v5839 = vunpack.c.h.b16 %v4448
  %v5840 = vunpack.c.l.b16 %v4449
  %v5841 = vunpack.c.h.b16 %v4449
  %v5842 = vunpack.c.l.b16 %v4450
  %v5843 = vunpack.c.h.b16 %v4450
  %v5844 = vunpack.c.l.b16 %v4451
  %v5845 = vunpack.c.h.b16 %v4451
  %v5846 = vunpack.c.l.b16 %v4452
  %v5847 = vunpack.c.h.b16 %v4452
  %v5848 = vunpack.c.l.b16 %v4453
  %v5849 = vunpack.c.h.b16 %v4453
  %v5850 = vunpack.c.l.b16 %v4454
  %v5851 = vunpack.c.h.b16 %v4454
  %v5852 = vunpack.c.l.b16 %v4455
  %v5853 = vunpack.c.h.b16 %v4455
  %v5854 = vunpack.c.l.b16 %v4456
  %v5855 = vunpack.c.h.b16 %v4456
  %v5856 = vunpack.c.l.b16 %v4457
  %v5857 = vunpack.c.h.b16 %v4457
  %v5858 = vunpack.c.l.b16 %v4458
  %v5859 = vunpack.c.h.b16 %v4458
  %v5860 = vunpack.c.l.b16 %v4459
  %v5861 = vunpack.c.h.b16 %v4459
  %v5862 = vunpack.c.l.b16 %v4460
  %v5863 = vunpack.c.h.b16 %v4460
  %v5864 = vunpack.c.l.b16 %v4461
  %v5865 = vunpack.c.h.b16 %v4461
  %v5866 = vunpack.c.l.b16 %v4462
  %v5867 = vunpack.c.h.b16 %v4462
  %v5868 = vunpack.c.l.b16 %v4463
  %v5869 = vunpack.c.h.b16 %v4463
  %v5870 = vunpack.c.l.b16 %v4464
  %v5871 = vunpack.c.h.b16 %v4464
  %v5872 = vunpack.c.l.b16 %v4465
  %v5873 = vunpack.c.h.b16 %v4465
  %v5874 = vunpack.c.l.b16 %v4466
  %v5875 = vunpack.c.h.b16 %v4466
  %v5876 = vunpack.c.l.b16 %v4467
  %v5877 = vunpack.c.h.b16 %v4467
  %v5878 = vunpack.c.l.b16 %v4468
  %v5879 = vunpack.c.h.b16 %v4468
  %v5880 = vunpack.c.l.b16 %v4469
  %v5881 = vunpack.c.h.b16 %v4469
  %v5882 = vunpack.c.l.b16 %v4470
  %v5883 = vunpack.c.h.b16 %v4470
  %v5884 = vunpack.c.l.b16 %v4471
  %v5885 = vunpack.c.h.b16 %v4471
  %v5886 = vunpack.c.l.b16 %v4472
  %v5887 = vunpack.c.h.b16 %v4472
  %v5888 = vunpack.c.l.b16 %v4473
  %v5889 = vunpack.c.h.b16 %v4473
  %v5890 = vunpack.c.l.b16 %v4474
  %v5891 = vunpack.c.h.b16 %v4474
  %v5892 = vunpack.c.l.b16 %v4475
  %v5893 = vunpack.c.h.b16 %v4475
  %v5894 = vunpack.c.l.b16 %v4476
  %v5895 = vunpack.c.h.b16 %v4476
  %v5896 = vunpack.c.l.b16 %v4477
  %v5897 = vunpack.c.h.b16 %v4477
  %v5898 = vunpack.c.l.b16 %v4478
  %v5899 = vunpack.c.h.b16 %v4478
  %v5900 = vunpack.c.l.b16 %v4479
  %v5901 = vunpack.c.h.b16 %v4479
  %v5902 = vunpack.c.l.b16 %v4480
  %v5903 = vunpack.c.h.b16 %v4480
  %v5904 = vunpack.c.l.b16 %v4481
  %v5905 = vunpack.c.h.b16 %v4481
  %v5906 = vunpack.c.l.b16 %v4482
  %v5907 = vunpack.c.h.b16 %v4482
  %v5908 = vunpack.c.l.b16 %v4483
  %v5909 = vunpack.c.h.b16 %v4483
  %v5910 = vunpack.c.l.b16 %v4484
  %v5911 = vunpack.c.h.b16 %v4484
  %v5912 = vunpack.c.l.b16 %v4485
  %v5913 = vunpack.c.h.b16 %v4485
  %v5914 = vunpack.c.l.b16 %v4486
  %v5915 = vunpack.c.h.b16 %v4486
  %v5916 = vunpack.c.l.b16 %v4487
  %v5917 = vunpack.c.h.b16 %v4487
  %v5918 = vunpack.c.l.b16 %v4488
  %v5919 = vunpack.c.h.b16 %v4488
  %v5920 = vunpack.c.l.b16 %v4489
  %v5921 = vunpack.c.h.b16 %v4489
  %v5922 = vunpack.c.l.b16 %v4490
  %v5923 = vunpack.c.h.b16 %v4490
  %v5924 = vunpack.c.l.b16 %v4491
  %v5925 = vunpack.c.h.b16 %v4491
  %v5926 = vunpack.c.l.b16 %v4492
  %v5927 = vunpack.c.h.b16 %v4492
  %v5928 = vunpack.c.l.b16 %v4493
  %v5929 = vunpack.c.h.b16 %v4493
  %v5930 = vunpack.c.l.b16 %v4494
  %v5931 = vunpack.c.h.b16 %v4494
  %v5932 = vunpack.c.l.b16 %v4495
  %v5933 = vunpack.c.h.b16 %v4495
  %v5934 = vunpack.c.l.b16 %v4496
  %v5935 = vunpack.c.h.b16 %v4496
  %v5936 = vunpack.c.l.b16 %v4497
  %v5937 = vunpack.c.h.b16 %v4497
  %v5938 = vunpack.c.l.b16 %v4498
  %v5939 = vunpack.c.h.b16 %v4498
  %v5940 = vunpack.c.l.b16 %v4499
  %v5941 = vunpack.c.h.b16 %v4499
  %v5942 = vunpack.c.l.b16 %v4500
  %v5943 = vunpack.c.h.b16 %v4500
  %v5944 = vunpack.c.l.b16 %v4501
  %v5945 = vunpack.c.h.b16 %v4501
  %v5946 = vunpack.c.l.b16 %v4502
  %v5947 = vunpack.c.h.b16 %v4502
  %v5948 = vunpack.c.l.b16 %v4503
  %v5949 = vunpack.c.h.b16 %v4503
  %v5950 = vunpack.c.l.b16 %v4504
  %v5951 = vunpack.c.h.b16 %v4504
  %v5952 = vunpack.c.l.b16 %v4505
  %v5953 = vunpack.c.h.b16 %v4505
  %v5954 = vunpack.c.l.b16 %v4506
  %v5955 = vunpack.c.h.b16 %v4506
  %v5956 = vunpack.c.l.b16 %v4507
  %v5957 = vunpack.c.h.b16 %v4507
  %v5958 = vunpack.c.l.b16 %v4508
  %v5959 = vunpack.c.h.b16 %v4508
  %v5960 = vunpack.c.l.b16 %v4509
  %v5961 = vunpack.c.h.b16 %v4509
  %v5962 = vunpack.c.l.b16 %v4510
  %v5963 = vunpack.c.h.b16 %v4510
  %v5964 = vunpack.c.l.b16 %v4511
  %v5965 = vunpack.c.h.b16 %v4511
  %v5966 = vunpack.c.l.b16 %v4512
  %v5967 = vunpack.c.h.b16 %v4512
  %v5968 = vunpack.c.l.b16 %v4513
  %v5969 = vunpack.c.h.b16 %v4513
  %v5970 = vunpack.c.l.b16 %v4514
  %v5971 = vunpack.c.h.b16 %v4514
  %v5972 = vunpack.c.l.b16 %v4515
  %v5973 = vunpack.c.h.b16 %v4515
  %v5974 = vunpack.c.l.b16 %v4516
  %v5975 = vunpack.c.h.b16 %v4516
  %v5976 = vunpack.c.l.b16 %v4517
  %v5977 = vunpack.c.h.b16 %v4517
  %v5978 = vunpack.c.l.b16 %v4518
  %v5979 = vunpack.c.h.b16 %v4518
  %v5980 = vunpack.c.l.b16 %v4519
  %v5981 = vunpack.c.h.b16 %v4519
  %v5982 = vunpack.c.l.b16 %v4520
  %v5983 = vunpack.c.h.b16 %v4520
  %v5984 = vunpack.c.l.b16 %v4521
  %v5985 = vunpack.c.h.b16 %v4521
  %v5986 = vunpack.c.l.b16 %v4522
  %v5987 = vunpack.c.h.b16 %v4522
  %v5988 = vunpack.c.l.b16 %v4523
  %v5989 = vunpack.c.h.b16 %v4523
  %v5990 = vunpack.c.l.b16 %v4524
  %v5991 = vunpack.c.h.b16 %v4524
  %v5992 = vunpack.c.l.b16 %v4525
  %v5993 = vunpack.c.h.b16 %v4525
  %v5994 = vunpack.c.l.b16 %v4526
  %v5995 = vunpack.c.h.b16 %v4526
  %v5996 = vunpack.c.l.b16 %v4527
  %v5997 = vunpack.c.h.b16 %v4527
  %v5998 = vunpack.c.l.b16 %v4528
  %v5999 = vunpack.c.h.b16 %v4528
  %v6000 = vunpack.c.l.b16 %v4529
  %v6001 = vunpack.c.h.b16 %v4529
  %v6002 = vunpack.c.l.b16 %v4530
  %v6003 = vunpack.c.h.b16 %v4530
  %v6004 = vunpack.c.l.b16 %v4531
  %v6005 = vunpack.c.h.b16 %v4531
  %v6006 = vunpack.c.l.b16 %v4532
  %v6007 = vunpack.c.h.b16 %v4532
  %v6008 = vunpack.c.l.b16 %v4533
  %v6009 = vunpack.c.h.b16 %v4533
  %v6010 = vunpack.c.l.b16 %v4534
  %v6011 = vunpack.c.h.b16 %v4534
  %v6012 = vunpack.c.l.b16 %v4535
  %v6013 = vunpack.c.h.b16 %v4535
  %v6014 = vunpack.c.l.b16 %v4536
  %v6015 = vunpack.c.h.b16 %v4536
  %v6016 = vunpack.c.l.b16 %v4537
  %v6017 = vunpack.c.h.b16 %v4537
  %v6018 = vunpack.c.l.b16 %v4538
  %v6019 = vunpack.c.h.b16 %v4538
  %v6020 = vunpack.c.l.b16 %v4539
  %v6021 = vunpack.c.h.b16 %v4539
  %v6022 = vunpack.c.l.b16 %v4540
  %v6023 = vunpack.c.h.b16 %v4540
  %v6024 = vunpack.c.l.b16 %v4541
  %v6025 = vunpack.c.h.b16 %v4541
  %v6026 = vunpack.c.l.b16 %v4542
  %v6027 = vunpack.c.h.b16 %v4542
  %v6028 = vunpack.c.l.b16 %v4543
  %v6029 = vunpack.c.h.b16 %v4543
  %v6030 = vunpack.c.l.b16 %v4544
  %v6031 = vunpack.c.h.b16 %v4544
  %v6032 = vunpack.c.l.b16 %v4545
  %v6033 = vunpack.c.h.b16 %v4545
  %v6034 = vunpack.c.l.b16 %v4546
  %v6035 = vunpack.c.h.b16 %v4546
  %v6036 = vunpack.c.l.b16 %v4547
  %v6037 = vunpack.c.h.b16 %v4547
  %v6038 = vunpack.c.l.b16 %v4548
  %v6039 = vunpack.c.h.b16 %v4548
  %v6040 = vunpack.c.l.b16 %v4549
  %v6041 = vunpack.c.h.b16 %v4549
  %v6042 = vunpack.c.l.b16 %v4550
  %v6043 = vunpack.c.h.b16 %v4550
  %v6044 = vunpack.c.l.b16 %v4551
  %v6045 = vunpack.c.h.b16 %v4551
  %v6046 = vunpack.c.l.b16 %v4552
  %v6047 = vunpack.c.h.b16 %v4552
  %v6048 = vunpack.c.l.b16 %v4553
  %v6049 = vunpack.c.h.b16 %v4553
  %v6050 = vunpack.c.l.b16 %v4554
  %v6051 = vunpack.c.h.b16 %v4554
  %v6052 = vunpack.c.l.b16 %v4555
  %v6053 = vunpack.c.h.b16 %v4555
  %v6054 = vunpack.c.l.b16 %v4556
  %v6055 = vunpack.c.h.b16 %v4556
  %v6056 = vunpack.c.l.b16 %v4557
  %v6057 = vunpack.c.h.b16 %v4557
  %v6058 = vunpack.c.l.b16 %v4558
  %v6059 = vunpack.c.h.b16 %v4558
  %v6060 = vunpack.c.l.b16 %v4559
  %v6061 = vunpack.c.h.b16 %v4559
  %v6062 = vunpack.c.l.b16 %v4560
  %v6063 = vunpack.c.h.b16 %v4560
  %v6064 = vunpack.c.l.b16 %v4561
  %v6065 = vunpack.c.h.b16 %v4561
  %v6066 = vunpack.c.l.b16 %v4562
  %v6067 = vunpack.c.h.b16 %v4562
  %v6068 = vunpack.c.l.b16 %v4563
  %v6069 = vunpack.c.h.b16 %v4563
  %v6070 = vunpack.c.l.b16 %v4564
  %v6071 = vunpack.c.h.b16 %v4564
  %v6072 = vunpack.c.l.b16 %v4565
  %v6073 = vunpack.c.h.b16 %v4565
  %v6074 = vunpack.c.l.b16 %v4566
  %v6075 = vunpack.c.h.b16 %v4566
  %v6076 = vunpack.c.l.b16 %v4567
  %v6077 = vunpack.c.h.b16 %v4567
  %v6078 = vunpack.c.l.b16 %v4568
  %v6079 = vunpack.c.h.b16 %v4568
  %v6080 = vunpack.c.l.b16 %v4569
  %v6081 = vunpack.c.h.b16 %v4569
  %v6082 = vunpack.c.l.b16 %v4570
  %v6083 = vunpack.c.h.b16 %v4570
  %v6084 = vunpack.c.l.b16 %v4571
  %v6085 = vunpack.c.h.b16 %v4571
  %v6086 = vunpack.c.l.b16 %v4572
  %v6087 = vunpack.c.h.b16 %v4572
  %v6088 = vunpack.c.l.b16 %v4573
  %v6089 = vunpack.c.h.b16 %v4573
  %v6090 = vunpack.c.l.b16 %v4574
  %v6091 = vunpack.c.h.b16 %v4574
  %v6092 = vunpack.c.l.b16 %v4575
  %v6093 = vunpack.c.h.b16 %v4575
  %v6094 = vunpack.c.l.b16 %v4576
  %v6095 = vunpack.c.h.b16 %v4576
  %v6096 = vunpack.c.l.b16 %v4577
  %v6097 = vunpack.c.h.b16 %v4577
  %v6098 = vunpack.c.l.b16 %v4578
  %v6099 = vunpack.c.h.b16 %v4578
  %v6100 = vunpack.c.l.b16 %v4579
  %v6101 = vunpack.c.h.b16 %v4579
  %v6102 = vunpack.c.l.b16 %v4580
  %v6103 = vunpack.c.h.b16 %v4580
  %v6104 = vunpack.c.l.b16 %v4581
  %v6105 = vunpack.c.h.b16 %v4581
  %v6106 = vunpack.c.l.b16 %v4582
  %v6107 = vunpack.c.h.b16 %v4582
  %v6108 = vunpack.c.l.b16 %v4583
  %v6109 = vunpack.c.h.b16 %v4583
  %v6110 = vunpack.c.l.b16 %v4584
  %v6111 = vunpack.c.h.b16 %v4584
  %v6112 = vunpack.c.l.b16 %v4585
  %v6113 = vunpack.c.h.b16 %v4585
  %v6114 = vunpack.c.l.b16 %v4586
  %v6115 = vunpack.c.h.b16 %v4586
  %v6116 = vunpack.c.l.b16 %v4587
  %v6117 = vunpack.c.h.b16 %v4587
  %v6118 = vunpack.c.l.b16 %v4588
  %v6119 = vunpack.c.h.b16 %v4588
  %v6120 = vunpack.c.l.b16 %v4589
  %v6121 = vunpack.c.h.b16 %v4589
  %v6122 = vunpack.c.l.b16 %v4590
  %v6123 = vunpack.c.h.b16 %v4590
  %v6124 = vunpack.c.l.b16 %v4591
  %v6125 = vunpack.c.h.b16 %v4591
  %v6126 = vunpack.c.l.b16 %v4592
  %v6127 = vunpack.c.h.b16 %v4592
  %v6128 = vunpack.c.l.b16 %v4593
  %v6129 = vunpack.c.h.b16 %v4593
  %v6130 = vunpack.c.l.b16 %v4594
  %v6131 = vunpack.c.h.b16 %v4594
  %v6132 = vunpack.c.l.b16 %v4595
  %v6133 = vunpack.c.h.b16 %v4595
  %v6134 = vunpack.c.l.b16 %v4596
  %v6135 = vunpack.c.h.b16 %v4596
  %v6136 = vunpack.c.l.b16 %v4597
  %v6137 = vunpack.c.h.b16 %v4597
  %v6138 = vunpack.c.l.b16 %v4598
  %v6139 = vunpack.c.h.b16 %v4598
  %v6140 = vunpack.c.l.b16 %v4599
  %v6141 = vunpack.c.h.b16 %v4599
  %v6142 = vunpack.c.l.b16 %v4600
  %v6143 = vunpack.c.h.b16 %v4600
  %v6144 = vunpack.c.l.b16 %v4601
  %v6145 = vunpack.c.h.b16 %v4601
  %v6146 = vunpack.c.l.b16 %v4602
  %v6147 = vunpack.c.h.b16 %v4602
  %v6148 = vunpack.c.l.b16 %v4603
  %v6149 = vunpack.c.h.b16 %v4603
  %v6150 = vunpack.c.l.b16 %v4604
  %v6151 = vunpack.c.h.b16 %v4604
  %v6152 = vunpack.c.l.b16 %v4605
  %v6153 = vunpack.c.h.b16 %v4605
  %v6154 = vunpack.c.l.b16 %v4606
  %v6155 = vunpack.c.h.b16 %v4606
  %v6156 = vunpack.c.l.b16 %v4607
  %v6157 = vunpack.c.h.b16 %v4607
  %v6158 = vunpack.c.l.b16 %v4608
  %v6159 = vunpack.c.h.b16 %v4608
  %v6160 = vunpack.c.l.b16 %v4609
  %v6161 = vunpack.c.h.b16 %v4609
  %v6162 = vunpack.c.l.b16 %v4610
  %v6163 = vunpack.c.h.b16 %v4610
  %v6164 = vunpack.c.l.b16 %v4611
  %v6165 = vunpack.c.h.b16 %v4611
  %v6166 = vpack.c.b16 %v5150, %v5142
  %v6167 = vpack.c.b16 %v5151, %v5143
  %v6168 = vpack.c.b16 %v5152, %v5144
  %v6169 = vpack.c.b16 %v5153, %v5145
  %v6170 = vpack.c.b16 %v5154, %v5146
  %v6171 = vpack.c.b16 %v5155, %v5147
  %v6172 = vpack.c.b16 %v5156, %v5148
  %v6173 = vpack.c.b16 %v5157, %v5149
  %v6174 = vpack.c.b16 %v5166, %v5158
  %v6175 = vpack.c.b16 %v5167, %v5159
  %v6176 = vpack.c.b16 %v5168, %v5160
  %v6177 = vpack.c.b16 %v5169, %v5161
  %v6178 = vpack.c.b16 %v5170, %v5162
  %v6179 = vpack.c.b16 %v5171, %v5163
  %v6180 = vpack.c.b16 %v5172, %v5164
  %v6181 = vpack.c.b16 %v5173, %v5165
  %v6182 = vpack.c.b16 %v5182, %v5174
  %v6183 = vpack.c.b16 %v5183, %v5175
  %v6184 = vpack.c.b16 %v5184, %v5176
  %v6185 = vpack.c.b16 %v5185, %v5177
  %v6186 = vpack.c.b16 %v5186, %v5178
  %v6187 = vpack.c.b16 %v5187, %v5179
  %v6188 = vpack.c.b16 %v5188, %v5180
  %v6189 = vpack.c.b16 %v5189, %v5181
  %v6190 = vpack.c.b16 %v5198, %v5190
  %v6191 = vpack.c.b16 %v5199, %v5191
  %v6192 = vpack.c.b16 %v5200, %v5192
  %v6193 = vpack.c.b16 %v5201, %v5193
  %v6194 = vpack.c.b16 %v5202, %v5194
  %v6195 = vpack.c.b16 %v5203, %v5195
  %v6196 = vpack.c.b16 %v5204, %v5196
  %v6197 = vpack.c.b16 %v5205, %v5197
  %v6198 = vpack.c.b16 %v5214, %v5206
  %v6199 = vpack.c.b16 %v5215, %v5207
  %v6200 = vpack.c.b16 %v5216, %v5208
  %v6201 = vpack.c.b16 %v5217, %v5209
  %v6202 = vpack.c.b16 %v5218, %v5210
  %v6203 = vpack.c.b16 %v5219, %v5211
  %v6204 = vpack.c.b16 %v5220, %v5212
  %v6205 = vpack.c.b16 %v5221, %v5213
  %v6206 = vpack.c.b16 %v5230, %v5222
  %v6207 = vpack.c.b16 %v5231, %v5223
  %v6208 = vpack.c.b16 %v5232, %v5224
  %v6209 = vpack.c.b16 %v5233, %v5225
  %v6210 = vpack.c.b16 %v5234, %v5226
  %v6211 = vpack.c.b16 %v5235, %v5227
  %v6212 = vpack.c.b16 %v5236, %v5228
  %v6213 = vpack.c.b16 %v5237, %v5229
  %v6214 = vpack.c.b16 %v5246, %v5238
  %v6215 = vpack.c.b16 %v5247, %v5239
  %v6216 = vpack.c.b16 %v5248, %v5240
  %v6217 = vpack.c.b16 %v5249, %v5241
  %v6218 = vpack.c.b16 %v5250, %v5242
  %v6219 = vpack.c.b16 %v5251, %v5243
  %v6220 = vpack.c.b16 %v5252, %v5244
  %v6221 = vpack.c.b16 %v5253, %v5245
  %v6222 = vpack.c.b16 %v5262, %v5254
  %v6223 = vpack.c.b16 %v5263, %v5255
  %v6224 = vpack.c.b16 %v5264, %v5256
  %v6225 = vpack.c.b16 %v5265, %v5257
  %v6226 = vpack.c.b16 %v5266, %v5258
  %v6227 = vpack.c.b16 %v5267, %v5259
  %v6228 = vpack.c.b16 %v5268, %v5260
  %v6229 = vpack.c.b16 %v5269, %v5261
  %v6230 = vpack.c.b16 %v5278, %v5270
  %v6231 = vpack.c.b16 %v5279, %v5271
  %v6232 = vpack.c.b16 %v5280, %v5272
  %v6233 = vpack.c.b16 %v5281, %v5273
  %v6234 = vpack.c.b16 %v5282, %v5274
  %v6235 = vpack.c.b16 %v5283, %v5275
  %v6236 = vpack.c.b16 %v5284, %v5276
  %v6237 = vpack.c.b16 %v5285, %v5277
  %v6238 = vpack.c.b16 %v5294, %v5286
  %v6239 = vpack.c.b16 %v5295, %v5287
  %v6240 = vpack.c.b16 %v5296, %v5288
  %v6241 = vpack.c.b16 %v5297, %v5289
  %v6242 = vpack.c.b16 %v5298, %v5290
  %v6243 = vpack.c.b16 %v5299, %v5291
  %v6244 = vpack.c.b16 %v5300, %v5292
  %v6245 = vpack.c.b16 %v5301, %v5293
  %v6246 = vpack.c.b16 %v5310, %v5302
  %v6247 = vpack.c.b16 %v5311, %v5303
  %v6248 = vpack.c.b16 %v5312, %v5304
  %v6249 = vpack.c.b16 %v5313, %v5305
  %v6250 = vpack.c.b16 %v5314, %v5306
  %v6251 = vpack.c.b16 %v5315, %v5307
  %v6252 = vpack.c.b16 %v5316, %v5308
  %v6253 = vpack.c.b16 %v5317, %v5309
  %v6254 = vpack.c.b16 %v5326, %v5318
  %v6255 = vpack.c.b16 %v5327, %v5319
  %v6256 = vpack.c.b16 %v5328, %v5320
  %v6257 = vpack.c.b16 %v5329, %v5321
  %v6258 = vpack.c.b16 %v5330, %v5322
  %v6259 = vpack.c.b16 %v5331, %v5323
  %v6260 = vpack.c.b16 %v5332, %v5324
  %v6261 = vpack.c.b16 %v5333, %v5325
  %v6262 = vpack.c.b16 %v5342, %v5334
  %v6263 = vpack.c.b16 %v5343, %v5335
  %v6264 = vpack.c.b16 %v5344, %v5336
  %v6265 = vpack.c.b16 %v5345, %v5337
  %v6266 = vpack.c.b16 %v5346, %v5338
  %v6267 = vpack.c.b16 %v5347, %v5339
  %v6268 = vpack.c.b16 %v5348, %v5340
  %v6269 = vpack.c.b16 %v5349, %v5341
  %v6270 = vpack.c.b16 %v5358, %v5350
  %v6271 = vpack.c.b16 %v5359, %v5351
  %v6272 = vpack.c.b16 %v5360, %v5352
  %v6273 = vpack.c.b16 %v5361, %v5353
  %v6274 = vpack.c.b16 %v5362, %v5354
  %v6275 = vpack.c.b16 %v5363, %v5355
  %v6276 = vpack.c.b16 %v5364, %v5356
  %v6277 = vpack.c.b16 %v5365, %v5357
  %v6278 = vpack.c.b16 %v5374, %v5366
  %v6279 = vpack.c.b16 %v5375, %v5367
  %v6280 = vpack.c.b16 %v5376, %v5368
  %v6281 = vpack.c.b16 %v5377, %v5369
  %v6282 = vpack.c.b16 %v5378, %v5370
  %v6283 = vpack.c.b16 %v5379, %v5371
  %v6284 = vpack.c.b16 %v5380, %v5372
  %v6285 = vpack.c.b16 %v5381, %v5373
  %v6286 = vpack.c.b16 %v5390, %v5382
  %v6287 = vpack.c.b16 %v5391, %v5383
  %v6288 = vpack.c.b16 %v5392, %v5384
  %v6289 = vpack.c.b16 %v5393, %v5385
  %v6290 = vpack.c.b16 %v5394, %v5386
  %v6291 = vpack.c.b16 %v5395, %v5387
  %v6292 = vpack.c.b16 %v5396, %v5388
  %v6293 = vpack.c.b16 %v5397, %v5389
  %v6294 = vpack.c.b16 %v5406, %v5398
  %v6295 = vpack.c.b16 %v5407, %v5399
  %v6296 = vpack.c.b16 %v5408, %v5400
  %v6297 = vpack.c.b16 %v5409, %v5401
  %v6298 = vpack.c.b16 %v5410, %v5402
  %v6299 = vpack.c.b16 %v5411, %v5403
  %v6300 = vpack.c.b16 %v5412, %v5404
  %v6301 = vpack.c.b16 %v5413, %v5405
  %v6302 = vpack.c.b16 %v5422, %v5414
  %v6303 = vpack.c.b16 %v5423, %v5415
  %v6304 = vpack.c.b16 %v5424, %v5416
  %v6305 = vpack.c.b16 %v5425, %v5417
  %v6306 = vpack.c.b16 %v5426, %v5418
  %v6307 = vpack.c.b16 %v5427, %v5419
  %v6308 = vpack.c.b16 %v5428, %v5420
  %v6309 = vpack.c.b16 %v5429, %v5421
  %v6310 = vpack.c.b16 %v5438, %v5430
  %v6311 = vpack.c.b16 %v5439, %v5431
  %v6312 = vpack.c.b16 %v5440, %v5432
  %v6313 = vpack.c.b16 %v5441, %v5433
  %v6314 = vpack.c.b16 %v5442, %v5434
  %v6315 = vpack.c.b16 %v5443, %v5435
  %v6316 = vpack.c.b16 %v5444, %v5436
  %v6317 = vpack.c.b16 %v5445, %v5437
  %v6318 = vpack.c.b16 %v5454, %v5446
  %v6319 = vpack.c.b16 %v5455, %v5447
  %v6320 = vpack.c.b16 %v5456, %v5448
  %v6321 = vpack.c.b16 %v5457, %v5449
  %v6322 = vpack.c.b16 %v5458, %v5450
  %v6323 = vpack.c.b16 %v5459, %v5451
  %v6324 = vpack.c.b16 %v5460, %v5452
  %v6325 = vpack.c.b16 %v5461, %v5453
  %v6326 = vpack.c.b16 %v5470, %v5462
  %v6327 = vpack.c.b16 %v5471, %v5463
  %v6328 = vpack.c.b16 %v5472, %v5464
  %v6329 = vpack.c.b16 %v5473, %v5465
  %v6330 = vpack.c.b16 %v5474, %v5466
  %v6331 = vpack.c.b16 %v5475, %v5467
  %v6332 = vpack.c.b16 %v5476, %v5468
  %v6333 = vpack.c.b16 %v5477, %v5469
  %v6334 = vpack.c.b16 %v5486, %v5478
  %v6335 = vpack.c.b16 %v5487, %v5479
  %v6336 = vpack.c.b16 %v5488, %v5480
  %v6337 = vpack.c.b16 %v5489, %v5481
  %v6338 = vpack.c.b16 %v5490, %v5482
  %v6339 = vpack.c.b16 %v5491, %v5483
  %v6340 = vpack.c.b16 %v5492, %v5484
  %v6341 = vpack.c.b16 %v5493, %v5485
  %v6342 = vpack.c.b16 %v5502, %v5494
  %v6343 = vpack.c.b16 %v5503, %v5495
  %v6344 = vpack.c.b16 %v5504, %v5496
  %v6345 = vpack.c.b16 %v5505, %v5497
  %v6346 = vpack.c.b16 %v5506, %v5498
  %v6347 = vpack.c.b16 %v5507, %v5499
  %v6348 = vpack.c.b16 %v5508, %v5500
  %v6349 = vpack.c.b16 %v5509, %v5501
  %v6350 = vpack.c.b16 %v5518, %v5510
  %v6351 = vpack.c.b16 %v5519, %v5511
  %v6352 = vpack.c.b16 %v5520, %v5512
  %v6353 = vpack.c.b16 %v5521, %v5513
  %v6354 = vpack.c.b16 %v5522, %v5514
  %v6355 = vpack.c.b16 %v5523, %v5515
  %v6356 = vpack.c.b16 %v5524, %v5516
  %v6357 = vpack.c.b16 %v5525, %v5517
  %v6358 = vpack.c.b16 %v5534, %v5526
  %v6359 = vpack.c.b16 %v5535, %v5527
  %v6360 = vpack.c.b16 %v5536, %v5528
  %v6361 = vpack.c.b16 %v5537, %v5529
  %v6362 = vpack.c.b16 %v5538, %v5530
  %v6363 = vpack.c.b16 %v5539, %v5531
  %v6364 = vpack.c.b16 %v5540, %v5532
  %v6365 = vpack.c.b16 %v5541, %v5533
  %v6366 = vpack.c.b16 %v5550, %v5542
  %v6367 = vpack.c.b16 %v5551, %v5543
  %v6368 = vpack.c.b16 %v5552, %v5544
  %v6369 = vpack.c.b16 %v5553, %v5545
  %v6370 = vpack.c.b16 %v5554, %v5546
  %v6371 = vpack.c.b16 %v5555, %v5547
  %v6372 = vpack.c.b16 %v5556, %v5548
  %v6373 = vpack.c.b16 %v5557, %v5549
  %v6374 = vpack.c.b16 %v5566, %v5558
  %v6375 = vpack.c.b16 %v5567, %v5559
  %v6376 = vpack.c.b16 %v5568, %v5560
  %v6377 = vpack.c.b16 %v5569, %v5561
  %v6378 = vpack.c.b16 %v5570, %v5562
  %v6379 = vpack.c.b16 %v5571, %v5563
  %v6380 = vpack.c.b16 %v5572, %v5564
  %v6381 = vpack.c.b16 %v5573, %v5565
  %v6382 = vpack.c.b16 %v5582, %v5574
  %v6383 = vpack.c.b16 %v5583, %v5575
  %v6384 = vpack.c.b16 %v5584, %v5576
  %v6385 = vpack.c.b16 %v5585, %v5577
  %v6386 = vpack.c.b16 %v5586, %v5578
  %v6387 = vpack.c.b16 %v5587, %v5579
  %v6388 = vpack.c.b16 %v5588, %v5580
  %v6389 = vpack.c.b16 %v5589, %v5581
  %v6390 = vpack.c.b16 %v5598, %v5590
  %v6391 = vpack.c.b16 %v5599, %v5591
  %v6392 = vpack.c.b16 %v5600, %v5592
  %v6393 = vpack.c.b16 %v5601, %v5593
  %v6394 = vpack.c.b16 %v5602, %v5594
  %v6395 = vpack.c.b16 %v5603, %v5595
  %v6396 = vpack.c.b16 %v5604, %v5596
  %v6397 = vpack.c.b16 %v5605, %v5597
  %v6398 = vpack.c.b16 %v5614, %v5606
  %v6399 = vpack.c.b16 %v5615, %v5607
  %v6400 = vpack.c.b16 %v5616, %v5608
  %v6401 = vpack.c.b16 %v5617, %v5609
  %v6402 = vpack.c.b16 %v5618, %v5610
  %v6403 = vpack.c.b16 %v5619, %v5611
  %v6404 = vpack.c.b16 %v5620, %v5612
  %v6405 = vpack.c.b16 %v5621, %v5613
  %v6406 = vpack.c.b16 %v5630, %v5622
  %v6407 = vpack.c.b16 %v5631, %v5623
  %v6408 = vpack.c.b16 %v5632, %v5624
  %v6409 = vpack.c.b16 %v5633, %v5625
  %v6410 = vpack.c.b16 %v5634, %v5626
  %v6411 = vpack.c.b16 %v5635, %v5627
  %v6412 = vpack.c.b16 %v5636, %v5628
  %v6413 = vpack.c.b16 %v5637, %v5629
  %v6414 = vpack.c.b16 %v5646, %v5638
  %v6415 = vpack.c.b16 %v5647, %v5639
  %v6416 = vpack.c.b16 %v5648, %v5640
  %v6417 = vpack.c.b16 %v5649, %v5641
  %v6418 = vpack.c.b16 %v5650, %v5642
  %v6419 = vpack.c.b16 %v5651, %v5643
  %v6420 = vpack.c.b16 %v5652, %v5644
  %v6421 = vpack.c.b16 %v5653, %v5645
  %v6422 = vpack.c.b16 %v5662, %v5654
  %v6423 = vpack.c.b16 %v5663, %v5655
  %v6424 = vpack.c.b16 %v5664, %v5656
  %v6425 = vpack.c.b16 %v5665, %v5657
  %v6426 = vpack.c.b16 %v5666, %v5658
  %v6427 = vpack.c.b16 %v5667, %v5659
  %v6428 = vpack.c.b16 %v5668, %v5660
  %v6429 = vpack.c.b16 %v5669, %v5661
  %v6430 = vpack.c.b16 %v5678, %v5670
  %v6431 = vpack.c.b16 %v5679, %v5671
  %v6432 = vpack.c.b16 %v5680, %v5672
  %v6433 = vpack.c.b16 %v5681, %v5673
  %v6434 = vpack.c.b16 %v5682, %v5674
  %v6435 = vpack.c.b16 %v5683, %v5675
  %v6436 = vpack.c.b16 %v5684, %v5676
  %v6437 = vpack.c.b16 %v5685, %v5677
  %v6438 = vpack.c.b16 %v5694, %v5686
  %v6439 = vpack.c.b16 %v5695, %v5687
  %v6440 = vpack.c.b16 %v5696, %v5688
  %v6441 = vpack.c.b16 %v5697, %v5689
  %v6442 = vpack.c.b16 %v5698, %v5690
  %v6443 = vpack.c.b16 %v5699, %v5691
  %v6444 = vpack.c.b16 %v5700, %v5692
  %v6445 = vpack.c.b16 %v5701, %v5693
  %v6446 = vpack.c.b16 %v5710, %v5702
  %v6447 = vpack.c.b16 %v5711, %v5703
  %v6448 = vpack.c.b16 %v5712, %v5704
  %v6449 = vpack.c.b16 %v5713, %v5705
  %v6450 = vpack.c.b16 %v5714, %v5706
  %v6451 = vpack.c.b16 %v5715, %v5707
  %v6452 = vpack.c.b16 %v5716, %v5708
  %v6453 = vpack.c.b16 %v5717, %v5709
  %v6454 = vpack.c.b16 %v5726, %v5718
  %v6455 = vpack.c.b16 %v5727, %v5719
  %v6456 = vpack.c.b16 %v5728, %v5720
  %v6457 = vpack.c.b16 %v5729, %v5721
  %v6458 = vpack.c.b16 %v5730, %v5722
  %v6459 = vpack.c.b16 %v5731, %v5723
  %v6460 = vpack.c.b16 %v5732, %v5724
  %v6461 = vpack.c.b16 %v5733, %v5725
  %v6462 = vpack.c.b16 %v5742, %v5734
  %v6463 = vpack.c.b16 %v5743, %v5735
  %v6464 = vpack.c.b16 %v5744, %v5736
  %v6465 = vpack.c.b16 %v5745, %v5737
  %v6466 = vpack.c.b16 %v5746, %v5738
  %v6467 = vpack.c.b16 %v5747, %v5739
  %v6468 = vpack.c.b16 %v5748, %v5740
  %v6469 = vpack.c.b16 %v5749, %v5741
  %v6470 = vpack.c.b16 %v5758, %v5750
  %v6471 = vpack.c.b16 %v5759, %v5751
  %v6472 = vpack.c.b16 %v5760, %v5752
  %v6473 = vpack.c.b16 %v5761, %v5753
  %v6474 = vpack.c.b16 %v5762, %v5754
  %v6475 = vpack.c.b16 %v5763, %v5755
  %v6476 = vpack.c.b16 %v5764, %v5756
  %v6477 = vpack.c.b16 %v5765, %v5757
  %v6478 = vpack.c.b16 %v5774, %v5766
  %v6479 = vpack.c.b16 %v5775, %v5767
  %v6480 = vpack.c.b16 %v5776, %v5768
  %v6481 = vpack.c.b16 %v5777, %v5769
  %v6482 = vpack.c.b16 %v5778, %v5770
  %v6483 = vpack.c.b16 %v5779, %v5771
  %v6484 = vpack.c.b16 %v5780, %v5772
  %v6485 = vpack.c.b16 %v5781, %v5773
  %v6486 = vpack.c.b16 %v5790, %v5782
  %v6487 = vpack.c.b16 %v5791, %v5783
  %v6488 = vpack.c.b16 %v5792, %v5784
  %v6489 = vpack.c.b16 %v5793, %v5785
  %v6490 = vpack.c.b16 %v5794, %v5786
  %v6491 = vpack.c.b16 %v5795, %v5787
  %v6492 = vpack.c.b16 %v5796, %v5788
  %v6493 = vpack.c.b16 %v5797, %v5789
  %v6494 = vpack.c.b16 %v5806, %v5798
  %v6495 = vpack.c.b16 %v5807, %v5799
  %v6496 = vpack.c.b16 %v5808, %v5800
  %v6497 = vpack.c.b16 %v5809, %v5801
  %v6498 = vpack.c.b16 %v5810, %v5802
  %v6499 = vpack.c.b16 %v5811, %v5803
  %v6500 = vpack.c.b16 %v5812, %v5804
  %v6501 = vpack.c.b16 %v5813, %v5805
  %v6502 = vpack.c.b16 %v5822, %v5814
  %v6503 = vpack.c.b16 %v5823, %v5815
  %v6504 = vpack.c.b16 %v5824, %v5816
  %v6505 = vpack.c.b16 %v5825, %v5817
  %v6506 = vpack.c.b16 %v5826, %v5818
  %v6507 = vpack.c.b16 %v5827, %v5819
  %v6508 = vpack.c.b16 %v5828, %v5820
  %v6509 = vpack.c.b16 %v5829, %v5821
  %v6510 = vpack.c.b16 %v5838, %v5830
  %v6511 = vpack.c.b16 %v5839, %v5831
  %v6512 = vpack.c.b16 %v5840, %v5832
  %v6513 = vpack.c.b16 %v5841, %v5833
  %v6514 = vpack.c.b16 %v5842, %v5834
  %v6515 = vpack.c.b16 %v5843, %v5835
  %v6516 = vpack.c.b16 %v5844, %v5836
  %v6517 = vpack.c.b16 %v5845, %v5837
  %v6518 = vpack.c.b16 %v5854, %v5846
  %v6519 = vpack.c.b16 %v5855, %v5847
  %v6520 = vpack.c.b16 %v5856, %v5848
  %v6521 = vpack.c.b16 %v5857, %v5849
  %v6522 = vpack.c.b16 %v5858, %v5850
  %v6523 = vpack.c.b16 %v5859, %v5851
  %v6524 = vpack.c.b16 %v5860, %v5852
  %v6525 = vpack.c.b16 %v5861, %v5853
  %v6526 = vpack.c.b16 %v5870, %v5862
  %v6527 = vpack.c.b16 %v5871, %v5863
  %v6528 = vpack.c.b16 %v5872, %v5864
  %v6529 = vpack.c.b16 %v5873, %v5865
  %v6530 = vpack.c.b16 %v5874, %v5866
  %v6531 = vpack.c.b16 %v5875, %v5867
  %v6532 = vpack.c.b16 %v5876, %v5868
  %v6533 = vpack.c.b16 %v5877, %v5869
  %v6534 = vpack.c.b16 %v5886, %v5878
  %v6535 = vpack.c.b16 %v5887, %v5879
  %v6536 = vpack.c.b16 %v5888, %v5880
  %v6537 = vpack.c.b16 %v5889, %v5881
  %v6538 = vpack.c.b16 %v5890, %v5882
  %v6539 = vpack.c.b16 %v5891, %v5883
  %v6540 = vpack.c.b16 %v5892, %v5884
  %v6541 = vpack.c.b16 %v5893, %v5885
  %v6542 = vpack.c.b16 %v5902, %v5894
  %v6543 = vpack.c.b16 %v5903, %v5895
  %v6544 = vpack.c.b16 %v5904, %v5896
  %v6545 = vpack.c.b16 %v5905, %v5897
  %v6546 = vpack.c.b16 %v5906, %v5898
  %v6547 = vpack.c.b16 %v5907, %v5899
  %v6548 = vpack.c.b16 %v5908, %v5900
  %v6549 = vpack.c.b16 %v5909, %v5901
  %v6550 = vpack.c.b16 %v5918, %v5910
  %v6551 = vpack.c.b16 %v5919, %v5911
  %v6552 = vpack.c.b16 %v5920, %v5912
  %v6553 = vpack.c.b16 %v5921, %v5913
  %v6554 = vpack.c.b16 %v5922, %v5914
  %v6555 = vpack.c.b16 %v5923, %v5915
  %v6556 = vpack.c.b16 %v5924, %v5916
  %v6557 = vpack.c.b16 %v5925, %v5917
  %v6558 = vpack.c.b16 %v5934, %v5926
  %v6559 = vpack.c.b16 %v5935, %v5927
  %v6560 = vpack.c.b16 %v5936, %v5928
  %v6561 = vpack.c.b16 %v5937, %v5929
  %v6562 = vpack.c.b16 %v5938, %v5930
  %v6563 = vpack.c.b16 %v5939, %v5931
  %v6564 = vpack.c.b16 %v5940, %v5932
  %v6565 = vpack.c.b16 %v5941, %v5933
  %v6566 = vpack.c.b16 %v5950, %v5942
  %v6567 = vpack.c.b16 %v5951, %v5943
  %v6568 = vpack.c.b16 %v5952, %v5944
  %v6569 = vpack.c.b16 %v5953, %v5945
  %v6570 = vpack.c.b16 %v5954, %v5946
  %v6571 = vpack.c.b16 %v5955, %v5947
  %v6572 = vpack.c.b16 %v5956, %v5948
  %v6573 = vpack.c.b16 %v5957, %v5949
  %v6574 = vpack.c.b16 %v5966, %v5958
  %v6575 = vpack.c.b16 %v5967, %v5959
  %v6576 = vpack.c.b16 %v5968, %v5960
  %v6577 = vpack.c.b16 %v5969, %v5961
  %v6578 = vpack.c.b16 %v5970, %v5962
  %v6579 = vpack.c.b16 %v5971, %v5963
  %v6580 = vpack.c.b16 %v5972, %v5964
  %v6581 = vpack.c.b16 %v5973, %v5965
  %v6582 = vpack.c.b16 %v5982, %v5974
  %v6583 = vpack.c.b16 %v5983, %v5975
  %v6584 = vpack.c.b16 %v5984, %v5976
  %v6585 = vpack.c.b16 %v5985, %v5977
  %v6586 = vpack.c.b16 %v5986, %v5978
  %v6587 = vpack.c.b16 %v5987, %v5979
  %v6588 = vpack.c.b16 %v5988, %v5980
  %v6589 = vpack.c.b16 %v5989, %v5981
  %v6590 = vpack.c.b16 %v5998, %v5990
  %v6591 = vpack.c.b16 %v5999, %v5991
  %v6592 = vpack.c.b16 %v6000, %v5992
  %v6593 = vpack.c.b16 %v6001, %v5993
  %v6594 = vpack.c.b16 %v6002, %v5994
  %v6595 = vpack.c.b16 %v6003, %v5995
  %v6596 = vpack.c.b16 %v6004, %v5996
  %v6597 = vpack.c.b16 %v6005, %v5997
  %v6598 = vpack.c.b16 %v6014, %v6006
  %v6599 = vpack.c.b16 %v6015, %v6007
  %v6600 = vpack.c.b16 %v6016, %v6008
  %v6601 = vpack.c.b16 %v6017, %v6009
  %v6602 = vpack.c.b16 %v6018, %v6010
  %v6603 = vpack.c.b16 %v6019, %v6011
  %v6604 = vpack.c.b16 %v6020, %v6012
  %v6605 = vpack.c.b16 %v6021, %v6013
  %v6606 = vpack.c.b16 %v6030, %v6022
  %v6607 = vpack.c.b16 %v6031, %v6023
  %v6608 = vpack.c.b16 %v6032, %v6024
  %v6609 = vpack.c.b16 %v6033, %v6025
  %v6610 = vpack.c.b16 %v6034, %v6026
  %v6611 = vpack.c.b16 %v6035, %v6027
  %v6612 = vpack.c.b16 %v6036, %v6028
  %v6613 = vpack.c.b16 %v6037, %v6029
  %v6614 = vpack.c.b16 %v6046, %v6038
  %v6615 = vpack.c.b16 %v6047, %v6039
  %v6616 = vpack.c.b16 %v6048, %v6040
  %v6617 = vpack.c.b16 %v6049, %v6041
  %v6618 = vpack.c.b16 %v6050, %v6042
  %v6619 = vpack.c.b16 %v6051, %v6043
  %v6620 = vpack.c.b16 %v6052, %v6044
  %v6621 = vpack.c.b16 %v6053, %v6045
  %v6622 = vpack.c.b16 %v6062, %v6054
  %v6623 = vpack.c.b16 %v6063, %v6055
  %v6624 = vpack.c.b16 %v6064, %v6056
  %v6625 = vpack.c.b16 %v6065, %v6057
  %v6626 = vpack.c.b16 %v6066, %v6058
  %v6627 = vpack.c.b16 %v6067, %v6059
  %v6628 = vpack.c.b16 %v6068, %v6060
  %v6629 = vpack.c.b16 %v6069, %v6061
  %v6630 = vpack.c.b16 %v6078, %v6070
  %v6631 = vpack.c.b16 %v6079, %v6071
  %v6632 = vpack.c.b16 %v6080, %v6072
  %v6633 = vpack.c.b16 %v6081, %v6073
  %v6634 = vpack.c.b16 %v6082, %v6074
  %v6635 = vpack.c.b16 %v6083, %v6075
  %v6636 = vpack.c.b16 %v6084, %v6076
  %v6637 = vpack.c.b16 %v6085, %v6077
  %v6638 = vpack.c.b16 %v6094, %v6086
  %v6639 = vpack.c.b16 %v6095, %v6087
  %v6640 = vpack.c.b16 %v6096, %v6088
  %v6641 = vpack.c.b16 %v6097, %v6089
  %v6642 = vpack.c.b16 %v6098, %v6090
  %v6643 = vpack.c.b16 %v6099, %v6091
  %v6644 = vpack.c.b16 %v6100, %v6092
  %v6645 = vpack.c.b16 %v6101, %v6093
  %v6646 = vpack.c.b16 %v6110, %v6102
  %v6647 = vpack.c.b16 %v6111, %v6103
  %v6648 = vpack.c.b16 %v6112, %v6104
  %v6649 = vpack.c.b16 %v6113, %v6105
  %v6650 = vpack.c.b16 %v6114, %v6106
  %v6651 = vpack.c.b16 %v6115, %v6107
  %v6652 = vpack.c.b16 %v6116, %v6108
  %v6653 = vpack.c.b16 %v6117, %v6109
  %v6654 = vpack.c.b16 %v6126, %v6118
  %v6655 = vpack.c.b16 %v6127, %v6119
  %v6656 = vpack.c.b16 %v6128, %v6120
  %v6657 = vpack.c.b16 %v6129, %v6121
  %v6658 = vpack.c.b16 %v6130, %v6122
  %v6659 = vpack.c.b16 %v6131, %v6123
  %v6660 = vpack.c.b16 %v6132, %v6124
  %v6661 = vpack.c.b16 %v6133, %v6125
  %v6662 = vpack.c.b16 %v6142, %v6134
  %v6663 = vpack.c.b16 %v6143, %v6135
  %v6664 = vpack.c.b16 %v6144, %v6136
  %v6665 = vpack.c.b16 %v6145, %v6137
  %v6666 = vpack.c.b16 %v6146, %v6138
  %v6667 = vpack.c.b16 %v6147, %v6139
  %v6668 = vpack.c.b16 %v6148, %v6140
  %v6669 = vpack.c.b16 %v6149, %v6141
  %v6670 = vpack.c.b16 %v6158, %v6150
  %v6671 = vpack.c.b16 %v6159, %v6151
  %v6672 = vpack.c.b16 %v6160, %v6152
  %v6673 = vpack.c.b16 %v6161, %v6153
  %v6674 = vpack.c.b16 %v6162, %v6154
  %v6675 = vpack.c.b16 %v6163, %v6155
  %v6676 = vpack.c.b16 %v6164, %v6156
  %v6677 = vpack.c.b16 %v6165, %v6157
  %7190 = vmatpush.bf16.msra.mxu0 %v6222
  %7191 = vmatpush.bf16.msra.mxu0 %v6214
  %7192 = vmatpush.bf16.msra.mxu0 %v6206
  %7193 = vmatpush.bf16.msra.mxu0 %v6198
  %7194 = vmatpush.bf16.msra.mxu0 %v6190
  %7195 = vmatpush.bf16.msra.mxu0 %v6182
  %7196 = vmatpush.bf16.msra.mxu0 %v6174
  %7197 = vmatpush.bf16.msra.mxu0 %v6166
  %7198 = vmatmul.bf16.gmra.mxu0 %v4092
  %v7199 = vpop.f32.mrf.mxu0
  %v7200 = vadd.f32 %v4614, %v7199
  %v7201 = vpop.f32.mrf.mxu0
  %v7202 = vadd.f32 %v4614, %v7201
  %7203 = vdwg.mxu0
  %7204 = vmatpush.bf16.msra.mxu0 %v6286
  %7205 = vmatpush.bf16.msra.mxu0 %v6278
  %7206 = vmatpush.bf16.msra.mxu0 %v6270
  %7207 = vmatpush.bf16.msra.mxu0 %v6262
  %7208 = vmatpush.bf16.msra.mxu0 %v6254
  %7209 = vmatpush.bf16.msra.mxu0 %v6246
  %7210 = vmatpush.bf16.msra.mxu0 %v6238
  %7211 = vmatpush.bf16.msra.mxu0 %v6230
  %7212 = vmatmul.bf16.gmra.mxu0 %v4093
  %v7213 = vpop.f32.mrf.mxu0
  %v7214 = vadd.f32 %v7200, %v7213
  %v7215 = vpop.f32.mrf.mxu0
  %v7216 = vadd.f32 %v7202, %v7215
  %7217 = vdwg.mxu0
  %7218 = vmatpush.bf16.msra.mxu0 %v6350
  %7219 = vmatpush.bf16.msra.mxu0 %v6342
  %7220 = vmatpush.bf16.msra.mxu0 %v6334
  %7221 = vmatpush.bf16.msra.mxu0 %v6326
  %7222 = vmatpush.bf16.msra.mxu0 %v6318
  %7223 = vmatpush.bf16.msra.mxu0 %v6310
  %7224 = vmatpush.bf16.msra.mxu0 %v6302
  %7225 = vmatpush.bf16.msra.mxu0 %v6294
  %7226 = vmatmul.bf16.gmra.mxu0 %v4094
  %v7227 = vpop.f32.mrf.mxu0
  %v7228 = vadd.f32 %v7214, %v7227
  %v7229 = vpop.f32.mrf.mxu0
  %v7230 = vadd.f32 %v7216, %v7229
  %7231 = vdwg.mxu0
  %7232 = vmatpush.bf16.msra.mxu0 %v6414
  %7233 = vmatpush.bf16.msra.mxu0 %v6406
  %7234 = vmatpush.bf16.msra.mxu0 %v6398
  %7235 = vmatpush.bf16.msra.mxu0 %v6390
  %7236 = vmatpush.bf16.msra.mxu0 %v6382
  %7237 = vmatpush.bf16.msra.mxu0 %v6374
  %7238 = vmatpush.bf16.msra.mxu0 %v6366
  %7239 = vmatpush.bf16.msra.mxu0 %v6358
  %7240 = vmatmul.bf16.gmra.mxu0 %v4095
  %v7241 = vpop.f32.mrf.mxu0
  %v7242 = vadd.f32 %v7228, %v7241
  %v7243 = vpop.f32.mrf.mxu0
  %v7244 = vadd.f32 %v7230, %v7243
  %7245 = vdwg.mxu0
  %7246 = vmatpush.bf16.msra.mxu0 %v6478
  %7247 = vmatpush.bf16.msra.mxu0 %v6470
  %7248 = vmatpush.bf16.msra.mxu0 %v6462
  %7249 = vmatpush.bf16.msra.mxu0 %v6454
  %7250 = vmatpush.bf16.msra.mxu0 %v6446
  %7251 = vmatpush.bf16.msra.mxu0 %v6438
  %7252 = vmatpush.bf16.msra.mxu0 %v6430
  %7253 = vmatpush.bf16.msra.mxu0 %v6422
  %7254 = vmatmul.bf16.gmra.mxu0 %v4096
  %v7255 = vpop.f32.mrf.mxu0
  %v7256 = vadd.f32 %v7242, %v7255
  %v7257 = vpop.f32.mrf.mxu0
  %v7258 = vadd.f32 %v7244, %v7257
  %7259 = vdwg.mxu0
  %7260 = vmatpush.bf16.msra.mxu0 %v6542
  %7261 = vmatpush.bf16.msra.mxu0 %v6534
  %7262 = vmatpush.bf16.msra.mxu0 %v6526
  %7263 = vmatpush.bf16.msra.mxu0 %v6518
  %7264 = vmatpush.bf16.msra.mxu0 %v6510
  %7265 = vmatpush.bf16.msra.mxu0 %v6502
  %7266 = vmatpush.bf16.msra.mxu0 %v6494
  %7267 = vmatpush.bf16.msra.mxu0 %v6486
  %7268 = vmatmul.bf16.gmra.mxu0 %v4097
  %v7269 = vpop.f32.mrf.mxu0
  %v7270 = vadd.f32 %v7256, %v7269
  %v7271 = vpop.f32.mrf.mxu0
  %v7272 = vadd.f32 %v7258, %v7271
  %7273 = vdwg.mxu0
  %7274 = vmatpush.bf16.msra.mxu0 %v6606
  %7275 = vmatpush.bf16.msra.mxu0 %v6598
  %7276 = vmatpush.bf16.msra.mxu0 %v6590
  %7277 = vmatpush.bf16.msra.mxu0 %v6582
  %7278 = vmatpush.bf16.msra.mxu0 %v6574
  %7279 = vmatpush.bf16.msra.mxu0 %v6566
  %7280 = vmatpush.bf16.msra.mxu0 %v6558
  %7281 = vmatpush.bf16.msra.mxu0 %v6550
  %7282 = vmatmul.bf16.gmra.mxu0 %v4098
  %v7283 = vpop.f32.mrf.mxu0
  %v7284 = vadd.f32 %v7270, %v7283
  %v7285 = vpop.f32.mrf.mxu0
  %v7286 = vadd.f32 %v7272, %v7285
  %7287 = vdwg.mxu0
  %7288 = vmatpush.bf16.msra.mxu0 %v6670
  %7289 = vmatpush.bf16.msra.mxu0 %v6662
  %7290 = vmatpush.bf16.msra.mxu0 %v6654
  %7291 = vmatpush.bf16.msra.mxu0 %v6646
  %7292 = vmatpush.bf16.msra.mxu0 %v6638
  %7293 = vmatpush.bf16.msra.mxu0 %v6630
  %7294 = vmatpush.bf16.msra.mxu0 %v6622
  %7295 = vmatpush.bf16.msra.mxu0 %v6614
  %7296 = vmatmul.bf16.gmra.mxu0 %v4099
  %v7297 = vpop.f32.mrf.mxu0
  %v7298 = vadd.f32 %v7284, %v7297
  %v7299 = vpop.f32.mrf.mxu0
  %v7300 = vadd.f32 %v7286, %v7299
  %7301 = vdwg.mxu0
  %7302 = vmatpush.bf16.msra.mxu0 %v6223
  %7303 = vmatpush.bf16.msra.mxu0 %v6215
  %7304 = vmatpush.bf16.msra.mxu0 %v6207
  %7305 = vmatpush.bf16.msra.mxu0 %v6199
  %7306 = vmatpush.bf16.msra.mxu0 %v6191
  %7307 = vmatpush.bf16.msra.mxu0 %v6183
  %7308 = vmatpush.bf16.msra.mxu0 %v6175
  %7309 = vmatpush.bf16.msra.mxu0 %v6167
  %7310 = vmatmul.bf16.gmra.mxu0 %v4092
  %v7311 = vpop.f32.mrf.mxu0
  %v7312 = vadd.f32 %v4615, %v7311
  %v7313 = vpop.f32.mrf.mxu0
  %v7314 = vadd.f32 %v4615, %v7313
  %7315 = vdwg.mxu0
  %7316 = vmatpush.bf16.msra.mxu0 %v6287
  %7317 = vmatpush.bf16.msra.mxu0 %v6279
  %7318 = vmatpush.bf16.msra.mxu0 %v6271
  %7319 = vmatpush.bf16.msra.mxu0 %v6263
  %7320 = vmatpush.bf16.msra.mxu0 %v6255
  %7321 = vmatpush.bf16.msra.mxu0 %v6247
  %7322 = vmatpush.bf16.msra.mxu0 %v6239
  %7323 = vmatpush.bf16.msra.mxu0 %v6231
  %7324 = vmatmul.bf16.gmra.mxu0 %v4093
  %v7325 = vpop.f32.mrf.mxu0
  %v7326 = vadd.f32 %v7312, %v7325
  %v7327 = vpop.f32.mrf.mxu0
  %v7328 = vadd.f32 %v7314, %v7327
  %7329 = vdwg.mxu0
  %7330 = vmatpush.bf16.msra.mxu0 %v6351
  %7331 = vmatpush.bf16.msra.mxu0 %v6343
  %7332 = vmatpush.bf16.msra.mxu0 %v6335
  %7333 = vmatpush.bf16.msra.mxu0 %v6327
  %7334 = vmatpush.bf16.msra.mxu0 %v6319
  %7335 = vmatpush.bf16.msra.mxu0 %v6311
  %7336 = vmatpush.bf16.msra.mxu0 %v6303
  %7337 = vmatpush.bf16.msra.mxu0 %v6295
  %7338 = vmatmul.bf16.gmra.mxu0 %v4094
  %v7339 = vpop.f32.mrf.mxu0
  %v7340 = vadd.f32 %v7326, %v7339
  %v7341 = vpop.f32.mrf.mxu0
  %v7342 = vadd.f32 %v7328, %v7341
  %7343 = vdwg.mxu0
  %7344 = vmatpush.bf16.msra.mxu0 %v6415
  %7345 = vmatpush.bf16.msra.mxu0 %v6407
  %7346 = vmatpush.bf16.msra.mxu0 %v6399
  %7347 = vmatpush.bf16.msra.mxu0 %v6391
  %7348 = vmatpush.bf16.msra.mxu0 %v6383
  %7349 = vmatpush.bf16.msra.mxu0 %v6375
  %7350 = vmatpush.bf16.msra.mxu0 %v6367
  %7351 = vmatpush.bf16.msra.mxu0 %v6359
  %7352 = vmatmul.bf16.gmra.mxu0 %v4095
  %v7353 = vpop.f32.mrf.mxu0
  %v7354 = vadd.f32 %v7340, %v7353
  %v7355 = vpop.f32.mrf.mxu0
  %v7356 = vadd.f32 %v7342, %v7355
  %7357 = vdwg.mxu0
  %7358 = vmatpush.bf16.msra.mxu0 %v6479
  %7359 = vmatpush.bf16.msra.mxu0 %v6471
  %7360 = vmatpush.bf16.msra.mxu0 %v6463
  %7361 = vmatpush.bf16.msra.mxu0 %v6455
  %7362 = vmatpush.bf16.msra.mxu0 %v6447
  %7363 = vmatpush.bf16.msra.mxu0 %v6439
  %7364 = vmatpush.bf16.msra.mxu0 %v6431
  %7365 = vmatpush.bf16.msra.mxu0 %v6423
  %7366 = vmatmul.bf16.gmra.mxu0 %v4096
  %v7367 = vpop.f32.mrf.mxu0
  %v7368 = vadd.f32 %v7354, %v7367
  %v7369 = vpop.f32.mrf.mxu0
  %v7370 = vadd.f32 %v7356, %v7369
  %7371 = vdwg.mxu0
  %7372 = vmatpush.bf16.msra.mxu0 %v6543
  %7373 = vmatpush.bf16.msra.mxu0 %v6535
  %7374 = vmatpush.bf16.msra.mxu0 %v6527
  %7375 = vmatpush.bf16.msra.mxu0 %v6519
  %7376 = vmatpush.bf16.msra.mxu0 %v6511
  %7377 = vmatpush.bf16.msra.mxu0 %v6503
  %7378 = vmatpush.bf16.msra.mxu0 %v6495
  %7379 = vmatpush.bf16.msra.mxu0 %v6487
  %7380 = vmatmul.bf16.gmra.mxu0 %v4097
  %v7381 = vpop.f32.mrf.mxu0
  %v7382 = vadd.f32 %v7368, %v7381
  %v7383 = vpop.f32.mrf.mxu0
  %v7384 = vadd.f32 %v7370, %v7383
  %7385 = vdwg.mxu0
  %7386 = vmatpush.bf16.msra.mxu0 %v6607
  %7387 = vmatpush.bf16.msra.mxu0 %v6599
  %7388 = vmatpush.bf16.msra.mxu0 %v6591
  %7389 = vmatpush.bf16.msra.mxu0 %v6583
  %7390 = vmatpush.bf16.msra.mxu0 %v6575
  %7391 = vmatpush.bf16.msra.mxu0 %v6567
  %7392 = vmatpush.bf16.msra.mxu0 %v6559
  %7393 = vmatpush.bf16.msra.mxu0 %v6551
  %7394 = vmatmul.bf16.gmra.mxu0 %v4098
  %v7395 = vpop.f32.mrf.mxu0
  %v7396 = vadd.f32 %v7382, %v7395
  %v7397 = vpop.f32.mrf.mxu0
  %v7398 = vadd.f32 %v7384, %v7397
  %7399 = vdwg.mxu0
  %7400 = vmatpush.bf16.msra.mxu0 %v6671
  %7401 = vmatpush.bf16.msra.mxu0 %v6663
  %7402 = vmatpush.bf16.msra.mxu0 %v6655
  %7403 = vmatpush.bf16.msra.mxu0 %v6647
  %7404 = vmatpush.bf16.msra.mxu0 %v6639
  %7405 = vmatpush.bf16.msra.mxu0 %v6631
  %7406 = vmatpush.bf16.msra.mxu0 %v6623
  %7407 = vmatpush.bf16.msra.mxu0 %v6615
  %7408 = vmatmul.bf16.gmra.mxu0 %v4099
  %v7409 = vpop.f32.mrf.mxu0
  %v7410 = vadd.f32 %v7396, %v7409
  %v7411 = vpop.f32.mrf.mxu0
  %v7412 = vadd.f32 %v7398, %v7411
  %7413 = vdwg.mxu0
  %7414 = vmatpush.bf16.msra.mxu0 %v6224
  %7415 = vmatpush.bf16.msra.mxu0 %v6216
  %7416 = vmatpush.bf16.msra.mxu0 %v6208
  %7417 = vmatpush.bf16.msra.mxu0 %v6200
  %7418 = vmatpush.bf16.msra.mxu0 %v6192
  %7419 = vmatpush.bf16.msra.mxu0 %v6184
  %7420 = vmatpush.bf16.msra.mxu0 %v6176
  %7421 = vmatpush.bf16.msra.mxu0 %v6168
  %7422 = vmatmul.bf16.gmra.mxu0 %v4092
  %v7423 = vpop.f32.mrf.mxu0
  %v7424 = vadd.f32 %v4616, %v7423
  %v7425 = vpop.f32.mrf.mxu0
  %v7426 = vadd.f32 %v4616, %v7425
  %7427 = vdwg.mxu0
  %7428 = vmatpush.bf16.msra.mxu0 %v6288
  %7429 = vmatpush.bf16.msra.mxu0 %v6280
  %7430 = vmatpush.bf16.msra.mxu0 %v6272
  %7431 = vmatpush.bf16.msra.mxu0 %v6264
  %7432 = vmatpush.bf16.msra.mxu0 %v6256
  %7433 = vmatpush.bf16.msra.mxu0 %v6248
  %7434 = vmatpush.bf16.msra.mxu0 %v6240
  %7435 = vmatpush.bf16.msra.mxu0 %v6232
  %7436 = vmatmul.bf16.gmra.mxu0 %v4093
  %v7437 = vpop.f32.mrf.mxu0
  %v7438 = vadd.f32 %v7424, %v7437
  %v7439 = vpop.f32.mrf.mxu0
  %v7440 = vadd.f32 %v7426, %v7439
  %7441 = vdwg.mxu0
  %7442 = vmatpush.bf16.msra.mxu0 %v6352
  %7443 = vmatpush.bf16.msra.mxu0 %v6344
  %7444 = vmatpush.bf16.msra.mxu0 %v6336
  %7445 = vmatpush.bf16.msra.mxu0 %v6328
  %7446 = vmatpush.bf16.msra.mxu0 %v6320
  %7447 = vmatpush.bf16.msra.mxu0 %v6312
  %7448 = vmatpush.bf16.msra.mxu0 %v6304
  %7449 = vmatpush.bf16.msra.mxu0 %v6296
  %7450 = vmatmul.bf16.gmra.mxu0 %v4094
  %v7451 = vpop.f32.mrf.mxu0
  %v7452 = vadd.f32 %v7438, %v7451
  %v7453 = vpop.f32.mrf.mxu0
  %v7454 = vadd.f32 %v7440, %v7453
  %7455 = vdwg.mxu0
  %7456 = vmatpush.bf16.msra.mxu0 %v6416
  %7457 = vmatpush.bf16.msra.mxu0 %v6408
  %7458 = vmatpush.bf16.msra.mxu0 %v6400
  %7459 = vmatpush.bf16.msra.mxu0 %v6392
  %7460 = vmatpush.bf16.msra.mxu0 %v6384
  %7461 = vmatpush.bf16.msra.mxu0 %v6376
  %7462 = vmatpush.bf16.msra.mxu0 %v6368
  %7463 = vmatpush.bf16.msra.mxu0 %v6360
  %7464 = vmatmul.bf16.gmra.mxu0 %v4095
  %v7465 = vpop.f32.mrf.mxu0
  %v7466 = vadd.f32 %v7452, %v7465
  %v7467 = vpop.f32.mrf.mxu0
  %v7468 = vadd.f32 %v7454, %v7467
  %7469 = vdwg.mxu0
  %7470 = vmatpush.bf16.msra.mxu0 %v6480
  %7471 = vmatpush.bf16.msra.mxu0 %v6472
  %7472 = vmatpush.bf16.msra.mxu0 %v6464
  %7473 = vmatpush.bf16.msra.mxu0 %v6456
  %7474 = vmatpush.bf16.msra.mxu0 %v6448
  %7475 = vmatpush.bf16.msra.mxu0 %v6440
  %7476 = vmatpush.bf16.msra.mxu0 %v6432
  %7477 = vmatpush.bf16.msra.mxu0 %v6424
  %7478 = vmatmul.bf16.gmra.mxu0 %v4096
  %v7479 = vpop.f32.mrf.mxu0
  %v7480 = vadd.f32 %v7466, %v7479
  %v7481 = vpop.f32.mrf.mxu0
  %v7482 = vadd.f32 %v7468, %v7481
  %7483 = vdwg.mxu0
  %7484 = vmatpush.bf16.msra.mxu0 %v6544
  %7485 = vmatpush.bf16.msra.mxu0 %v6536
  %7486 = vmatpush.bf16.msra.mxu0 %v6528
  %7487 = vmatpush.bf16.msra.mxu0 %v6520
  %7488 = vmatpush.bf16.msra.mxu0 %v6512
  %7489 = vmatpush.bf16.msra.mxu0 %v6504
  %7490 = vmatpush.bf16.msra.mxu0 %v6496
  %7491 = vmatpush.bf16.msra.mxu0 %v6488
  %7492 = vmatmul.bf16.gmra.mxu0 %v4097
  %v7493 = vpop.f32.mrf.mxu0
  %v7494 = vadd.f32 %v7480, %v7493
  %v7495 = vpop.f32.mrf.mxu0
  %v7496 = vadd.f32 %v7482, %v7495
  %7497 = vdwg.mxu0
  %7498 = vmatpush.bf16.msra.mxu0 %v6608
  %7499 = vmatpush.bf16.msra.mxu0 %v6600
  %7500 = vmatpush.bf16.msra.mxu0 %v6592
  %7501 = vmatpush.bf16.msra.mxu0 %v6584
  %7502 = vmatpush.bf16.msra.mxu0 %v6576
  %7503 = vmatpush.bf16.msra.mxu0 %v6568
  %7504 = vmatpush.bf16.msra.mxu0 %v6560
  %7505 = vmatpush.bf16.msra.mxu0 %v6552
  %7506 = vmatmul.bf16.gmra.mxu0 %v4098
  %v7507 = vpop.f32.mrf.mxu0
  %v7508 = vadd.f32 %v7494, %v7507
  %v7509 = vpop.f32.mrf.mxu0
  %v7510 = vadd.f32 %v7496, %v7509
  %7511 = vdwg.mxu0
  %7512 = vmatpush.bf16.msra.mxu0 %v6672
  %7513 = vmatpush.bf16.msra.mxu0 %v6664
  %7514 = vmatpush.bf16.msra.mxu0 %v6656
  %7515 = vmatpush.bf16.msra.mxu0 %v6648
  %7516 = vmatpush.bf16.msra.mxu0 %v6640
  %7517 = vmatpush.bf16.msra.mxu0 %v6632
  %7518 = vmatpush.bf16.msra.mxu0 %v6624
  %7519 = vmatpush.bf16.msra.mxu0 %v6616
  %7520 = vmatmul.bf16.gmra.mxu0 %v4099
  %v7521 = vpop.f32.mrf.mxu0
  %v7522 = vadd.f32 %v7508, %v7521
  %v7523 = vpop.f32.mrf.mxu0
  %v7524 = vadd.f32 %v7510, %v7523
  %7525 = vdwg.mxu0
  %7526 = vmatpush.bf16.msra.mxu0 %v6225
  %7527 = vmatpush.bf16.msra.mxu0 %v6217
  %7528 = vmatpush.bf16.msra.mxu0 %v6209
  %7529 = vmatpush.bf16.msra.mxu0 %v6201
  %7530 = vmatpush.bf16.msra.mxu0 %v6193
  %7531 = vmatpush.bf16.msra.mxu0 %v6185
  %7532 = vmatpush.bf16.msra.mxu0 %v6177
  %7533 = vmatpush.bf16.msra.mxu0 %v6169
  %7534 = vmatmul.bf16.gmra.mxu0 %v4092
  %v7535 = vpop.f32.mrf.mxu0
  %v7536 = vadd.f32 %v4617, %v7535
  %v7537 = vpop.f32.mrf.mxu0
  %v7538 = vadd.f32 %v4617, %v7537
  %7539 = vdwg.mxu0
  %7540 = vmatpush.bf16.msra.mxu0 %v6289
  %7541 = vmatpush.bf16.msra.mxu0 %v6281
  %7542 = vmatpush.bf16.msra.mxu0 %v6273
  %7543 = vmatpush.bf16.msra.mxu0 %v6265
  %7544 = vmatpush.bf16.msra.mxu0 %v6257
  %7545 = vmatpush.bf16.msra.mxu0 %v6249
  %7546 = vmatpush.bf16.msra.mxu0 %v6241
  %7547 = vmatpush.bf16.msra.mxu0 %v6233
  %7548 = vmatmul.bf16.gmra.mxu0 %v4093
  %v7549 = vpop.f32.mrf.mxu0
  %v7550 = vadd.f32 %v7536, %v7549
  %v7551 = vpop.f32.mrf.mxu0
  %v7552 = vadd.f32 %v7538, %v7551
  %7553 = vdwg.mxu0
  %7554 = vmatpush.bf16.msra.mxu0 %v6353
  %7555 = vmatpush.bf16.msra.mxu0 %v6345
  %7556 = vmatpush.bf16.msra.mxu0 %v6337
  %7557 = vmatpush.bf16.msra.mxu0 %v6329
  %7558 = vmatpush.bf16.msra.mxu0 %v6321
  %7559 = vmatpush.bf16.msra.mxu0 %v6313
  %7560 = vmatpush.bf16.msra.mxu0 %v6305
  %7561 = vmatpush.bf16.msra.mxu0 %v6297
  %7562 = vmatmul.bf16.gmra.mxu0 %v4094
  %v7563 = vpop.f32.mrf.mxu0
  %v7564 = vadd.f32 %v7550, %v7563
  %v7565 = vpop.f32.mrf.mxu0
  %v7566 = vadd.f32 %v7552, %v7565
  %7567 = vdwg.mxu0
  %7568 = vmatpush.bf16.msra.mxu0 %v6417
  %7569 = vmatpush.bf16.msra.mxu0 %v6409
  %7570 = vmatpush.bf16.msra.mxu0 %v6401
  %7571 = vmatpush.bf16.msra.mxu0 %v6393
  %7572 = vmatpush.bf16.msra.mxu0 %v6385
  %7573 = vmatpush.bf16.msra.mxu0 %v6377
  %7574 = vmatpush.bf16.msra.mxu0 %v6369
  %7575 = vmatpush.bf16.msra.mxu0 %v6361
  %7576 = vmatmul.bf16.gmra.mxu0 %v4095
  %v7577 = vpop.f32.mrf.mxu0
  %v7578 = vadd.f32 %v7564, %v7577
  %v7579 = vpop.f32.mrf.mxu0
  %v7580 = vadd.f32 %v7566, %v7579
  %7581 = vdwg.mxu0
  %7582 = vmatpush.bf16.msra.mxu0 %v6481
  %7583 = vmatpush.bf16.msra.mxu0 %v6473
  %7584 = vmatpush.bf16.msra.mxu0 %v6465
  %7585 = vmatpush.bf16.msra.mxu0 %v6457
  %7586 = vmatpush.bf16.msra.mxu0 %v6449
  %7587 = vmatpush.bf16.msra.mxu0 %v6441
  %7588 = vmatpush.bf16.msra.mxu0 %v6433
  %7589 = vmatpush.bf16.msra.mxu0 %v6425
  %7590 = vmatmul.bf16.gmra.mxu0 %v4096
  %v7591 = vpop.f32.mrf.mxu0
  %v7592 = vadd.f32 %v7578, %v7591
  %v7593 = vpop.f32.mrf.mxu0
  %v7594 = vadd.f32 %v7580, %v7593
  %7595 = vdwg.mxu0
  %7596 = vmatpush.bf16.msra.mxu0 %v6545
  %7597 = vmatpush.bf16.msra.mxu0 %v6537
  %7598 = vmatpush.bf16.msra.mxu0 %v6529
  %7599 = vmatpush.bf16.msra.mxu0 %v6521
  %7600 = vmatpush.bf16.msra.mxu0 %v6513
  %7601 = vmatpush.bf16.msra.mxu0 %v6505
  %7602 = vmatpush.bf16.msra.mxu0 %v6497
  %7603 = vmatpush.bf16.msra.mxu0 %v6489
  %7604 = vmatmul.bf16.gmra.mxu0 %v4097
  %v7605 = vpop.f32.mrf.mxu0
  %v7606 = vadd.f32 %v7592, %v7605
  %v7607 = vpop.f32.mrf.mxu0
  %v7608 = vadd.f32 %v7594, %v7607
  %7609 = vdwg.mxu0
  %7610 = vmatpush.bf16.msra.mxu0 %v6609
  %7611 = vmatpush.bf16.msra.mxu0 %v6601
  %7612 = vmatpush.bf16.msra.mxu0 %v6593
  %7613 = vmatpush.bf16.msra.mxu0 %v6585
  %7614 = vmatpush.bf16.msra.mxu0 %v6577
  %7615 = vmatpush.bf16.msra.mxu0 %v6569
  %7616 = vmatpush.bf16.msra.mxu0 %v6561
  %7617 = vmatpush.bf16.msra.mxu0 %v6553
  %7618 = vmatmul.bf16.gmra.mxu0 %v4098
  %v7619 = vpop.f32.mrf.mxu0
  %v7620 = vadd.f32 %v7606, %v7619
  %v7621 = vpop.f32.mrf.mxu0
  %v7622 = vadd.f32 %v7608, %v7621
  %7623 = vdwg.mxu0
  %7624 = vmatpush.bf16.msra.mxu0 %v6673
  %7625 = vmatpush.bf16.msra.mxu0 %v6665
  %7626 = vmatpush.bf16.msra.mxu0 %v6657
  %7627 = vmatpush.bf16.msra.mxu0 %v6649
  %7628 = vmatpush.bf16.msra.mxu0 %v6641
  %7629 = vmatpush.bf16.msra.mxu0 %v6633
  %7630 = vmatpush.bf16.msra.mxu0 %v6625
  %7631 = vmatpush.bf16.msra.mxu0 %v6617
  %7632 = vmatmul.bf16.gmra.mxu0 %v4099
  %v7633 = vpop.f32.mrf.mxu0
  %v7634 = vadd.f32 %v7620, %v7633
  %v7635 = vpop.f32.mrf.mxu0
  %v7636 = vadd.f32 %v7622, %v7635
  %7637 = vdwg.mxu0
  %7638 = vmatpush.bf16.msra.mxu0 %v6226
  %7639 = vmatpush.bf16.msra.mxu0 %v6218
  %7640 = vmatpush.bf16.msra.mxu0 %v6210
  %7641 = vmatpush.bf16.msra.mxu0 %v6202
  %7642 = vmatpush.bf16.msra.mxu0 %v6194
  %7643 = vmatpush.bf16.msra.mxu0 %v6186
  %7644 = vmatpush.bf16.msra.mxu0 %v6178
  %7645 = vmatpush.bf16.msra.mxu0 %v6170
  %7646 = vmatmul.bf16.gmra.mxu0 %v4092
  %v7647 = vpop.f32.mrf.mxu0
  %v7648 = vadd.f32 %v4618, %v7647
  %v7649 = vpop.f32.mrf.mxu0
  %v7650 = vadd.f32 %v4618, %v7649
  %7651 = vdwg.mxu0
  %7652 = vmatpush.bf16.msra.mxu0 %v6290
  %7653 = vmatpush.bf16.msra.mxu0 %v6282
  %7654 = vmatpush.bf16.msra.mxu0 %v6274
  %7655 = vmatpush.bf16.msra.mxu0 %v6266
  %7656 = vmatpush.bf16.msra.mxu0 %v6258
  %7657 = vmatpush.bf16.msra.mxu0 %v6250
  %7658 = vmatpush.bf16.msra.mxu0 %v6242
  %7659 = vmatpush.bf16.msra.mxu0 %v6234
  %7660 = vmatmul.bf16.gmra.mxu0 %v4093
  %v7661 = vpop.f32.mrf.mxu0
  %v7662 = vadd.f32 %v7648, %v7661
  %v7663 = vpop.f32.mrf.mxu0
  %v7664 = vadd.f32 %v7650, %v7663
  %7665 = vdwg.mxu0
  %7666 = vmatpush.bf16.msra.mxu0 %v6354
  %7667 = vmatpush.bf16.msra.mxu0 %v6346
  %7668 = vmatpush.bf16.msra.mxu0 %v6338
  %7669 = vmatpush.bf16.msra.mxu0 %v6330
  %7670 = vmatpush.bf16.msra.mxu0 %v6322
  %7671 = vmatpush.bf16.msra.mxu0 %v6314
  %7672 = vmatpush.bf16.msra.mxu0 %v6306
  %7673 = vmatpush.bf16.msra.mxu0 %v6298
  %7674 = vmatmul.bf16.gmra.mxu0 %v4094
  %v7675 = vpop.f32.mrf.mxu0
  %v7676 = vadd.f32 %v7662, %v7675
  %v7677 = vpop.f32.mrf.mxu0
  %v7678 = vadd.f32 %v7664, %v7677
  %7679 = vdwg.mxu0
  %7680 = vmatpush.bf16.msra.mxu0 %v6418
  %7681 = vmatpush.bf16.msra.mxu0 %v6410
  %7682 = vmatpush.bf16.msra.mxu0 %v6402
  %7683 = vmatpush.bf16.msra.mxu0 %v6394
  %7684 = vmatpush.bf16.msra.mxu0 %v6386
  %7685 = vmatpush.bf16.msra.mxu0 %v6378
  %7686 = vmatpush.bf16.msra.mxu0 %v6370
  %7687 = vmatpush.bf16.msra.mxu0 %v6362
  %7688 = vmatmul.bf16.gmra.mxu0 %v4095
  %v7689 = vpop.f32.mrf.mxu0
  %v7690 = vadd.f32 %v7676, %v7689
  %v7691 = vpop.f32.mrf.mxu0
  %v7692 = vadd.f32 %v7678, %v7691
  %7693 = vdwg.mxu0
  %7694 = vmatpush.bf16.msra.mxu0 %v6482
  %7695 = vmatpush.bf16.msra.mxu0 %v6474
  %7696 = vmatpush.bf16.msra.mxu0 %v6466
  %7697 = vmatpush.bf16.msra.mxu0 %v6458
  %7698 = vmatpush.bf16.msra.mxu0 %v6450
  %7699 = vmatpush.bf16.msra.mxu0 %v6442
  %7700 = vmatpush.bf16.msra.mxu0 %v6434
  %7701 = vmatpush.bf16.msra.mxu0 %v6426
  %7702 = vmatmul.bf16.gmra.mxu0 %v4096
  %v7703 = vpop.f32.mrf.mxu0
  %v7704 = vadd.f32 %v7690, %v7703
  %v7705 = vpop.f32.mrf.mxu0
  %v7706 = vadd.f32 %v7692, %v7705
  %7707 = vdwg.mxu0
  %7708 = vmatpush.bf16.msra.mxu0 %v6546
  %7709 = vmatpush.bf16.msra.mxu0 %v6538
  %7710 = vmatpush.bf16.msra.mxu0 %v6530
  %7711 = vmatpush.bf16.msra.mxu0 %v6522
  %7712 = vmatpush.bf16.msra.mxu0 %v6514
  %7713 = vmatpush.bf16.msra.mxu0 %v6506
  %7714 = vmatpush.bf16.msra.mxu0 %v6498
  %7715 = vmatpush.bf16.msra.mxu0 %v6490
  %7716 = vmatmul.bf16.gmra.mxu0 %v4097
  %v7717 = vpop.f32.mrf.mxu0
  %v7718 = vadd.f32 %v7704, %v7717
  %v7719 = vpop.f32.mrf.mxu0
  %v7720 = vadd.f32 %v7706, %v7719
  %7721 = vdwg.mxu0
  %7722 = vmatpush.bf16.msra.mxu0 %v6610
  %7723 = vmatpush.bf16.msra.mxu0 %v6602
  %7724 = vmatpush.bf16.msra.mxu0 %v6594
  %7725 = vmatpush.bf16.msra.mxu0 %v6586
  %7726 = vmatpush.bf16.msra.mxu0 %v6578
  %7727 = vmatpush.bf16.msra.mxu0 %v6570
  %7728 = vmatpush.bf16.msra.mxu0 %v6562
  %7729 = vmatpush.bf16.msra.mxu0 %v6554
  %7730 = vmatmul.bf16.gmra.mxu0 %v4098
  %v7731 = vpop.f32.mrf.mxu0
  %v7732 = vadd.f32 %v7718, %v7731
  %v7733 = vpop.f32.mrf.mxu0
  %v7734 = vadd.f32 %v7720, %v7733
  %7735 = vdwg.mxu0
  %7736 = vmatpush.bf16.msra.mxu0 %v6674
  %7737 = vmatpush.bf16.msra.mxu0 %v6666
  %7738 = vmatpush.bf16.msra.mxu0 %v6658
  %7739 = vmatpush.bf16.msra.mxu0 %v6650
  %7740 = vmatpush.bf16.msra.mxu0 %v6642
  %7741 = vmatpush.bf16.msra.mxu0 %v6634
  %7742 = vmatpush.bf16.msra.mxu0 %v6626
  %7743 = vmatpush.bf16.msra.mxu0 %v6618
  %7744 = vmatmul.bf16.gmra.mxu0 %v4099
  %v7745 = vpop.f32.mrf.mxu0
  %v7746 = vadd.f32 %v7732, %v7745
  %v7747 = vpop.f32.mrf.mxu0
  %v7748 = vadd.f32 %v7734, %v7747
  %7749 = vdwg.mxu0
  %7750 = vmatpush.bf16.msra.mxu0 %v6227
  %7751 = vmatpush.bf16.msra.mxu0 %v6219
  %7752 = vmatpush.bf16.msra.mxu0 %v6211
  %7753 = vmatpush.bf16.msra.mxu0 %v6203
  %7754 = vmatpush.bf16.msra.mxu0 %v6195
  %7755 = vmatpush.bf16.msra.mxu0 %v6187
  %7756 = vmatpush.bf16.msra.mxu0 %v6179
  %7757 = vmatpush.bf16.msra.mxu0 %v6171
  %7758 = vmatmul.bf16.gmra.mxu0 %v4092
  %v7759 = vpop.f32.mrf.mxu0
  %v7760 = vadd.f32 %v4619, %v7759
  %v7761 = vpop.f32.mrf.mxu0
  %v7762 = vadd.f32 %v4619, %v7761
  %7763 = vdwg.mxu0
  %7764 = vmatpush.bf16.msra.mxu0 %v6291
  %7765 = vmatpush.bf16.msra.mxu0 %v6283
  %7766 = vmatpush.bf16.msra.mxu0 %v6275
  %7767 = vmatpush.bf16.msra.mxu0 %v6267
  %7768 = vmatpush.bf16.msra.mxu0 %v6259
  %7769 = vmatpush.bf16.msra.mxu0 %v6251
  %7770 = vmatpush.bf16.msra.mxu0 %v6243
  %7771 = vmatpush.bf16.msra.mxu0 %v6235
  %7772 = vmatmul.bf16.gmra.mxu0 %v4093
  %v7773 = vpop.f32.mrf.mxu0
  %v7774 = vadd.f32 %v7760, %v7773
  %v7775 = vpop.f32.mrf.mxu0
  %v7776 = vadd.f32 %v7762, %v7775
  %7777 = vdwg.mxu0
  %7778 = vmatpush.bf16.msra.mxu0 %v6355
  %7779 = vmatpush.bf16.msra.mxu0 %v6347
  %7780 = vmatpush.bf16.msra.mxu0 %v6339
  %7781 = vmatpush.bf16.msra.mxu0 %v6331
  %7782 = vmatpush.bf16.msra.mxu0 %v6323
  %7783 = vmatpush.bf16.msra.mxu0 %v6315
  %7784 = vmatpush.bf16.msra.mxu0 %v6307
  %7785 = vmatpush.bf16.msra.mxu0 %v6299
  %7786 = vmatmul.bf16.gmra.mxu0 %v4094
  %v7787 = vpop.f32.mrf.mxu0
  %v7788 = vadd.f32 %v7774, %v7787
  %v7789 = vpop.f32.mrf.mxu0
  %v7790 = vadd.f32 %v7776, %v7789
  %7791 = vdwg.mxu0
  %7792 = vmatpush.bf16.msra.mxu0 %v6419
  %7793 = vmatpush.bf16.msra.mxu0 %v6411
  %7794 = vmatpush.bf16.msra.mxu0 %v6403
  %7795 = vmatpush.bf16.msra.mxu0 %v6395
  %7796 = vmatpush.bf16.msra.mxu0 %v6387
  %7797 = vmatpush.bf16.msra.mxu0 %v6379
  %7798 = vmatpush.bf16.msra.mxu0 %v6371
  %7799 = vmatpush.bf16.msra.mxu0 %v6363
  %7800 = vmatmul.bf16.gmra.mxu0 %v4095
  %v7801 = vpop.f32.mrf.mxu0
  %v7802 = vadd.f32 %v7788, %v7801
  %v7803 = vpop.f32.mrf.mxu0
  %v7804 = vadd.f32 %v7790, %v7803
  %7805 = vdwg.mxu0
  %7806 = vmatpush.bf16.msra.mxu0 %v6483
  %7807 = vmatpush.bf16.msra.mxu0 %v6475
  %7808 = vmatpush.bf16.msra.mxu0 %v6467
  %7809 = vmatpush.bf16.msra.mxu0 %v6459
  %7810 = vmatpush.bf16.msra.mxu0 %v6451
  %7811 = vmatpush.bf16.msra.mxu0 %v6443
  %7812 = vmatpush.bf16.msra.mxu0 %v6435
  %7813 = vmatpush.bf16.msra.mxu0 %v6427
  %7814 = vmatmul.bf16.gmra.mxu0 %v4096
  %v7815 = vpop.f32.mrf.mxu0
  %v7816 = vadd.f32 %v7802, %v7815
  %v7817 = vpop.f32.mrf.mxu0
  %v7818 = vadd.f32 %v7804, %v7817
  %7819 = vdwg.mxu0
  %7820 = vmatpush.bf16.msra.mxu0 %v6547
  %7821 = vmatpush.bf16.msra.mxu0 %v6539
  %7822 = vmatpush.bf16.msra.mxu0 %v6531
  %7823 = vmatpush.bf16.msra.mxu0 %v6523
  %7824 = vmatpush.bf16.msra.mxu0 %v6515
  %7825 = vmatpush.bf16.msra.mxu0 %v6507
  %7826 = vmatpush.bf16.msra.mxu0 %v6499
  %7827 = vmatpush.bf16.msra.mxu0 %v6491
  %7828 = vmatmul.bf16.gmra.mxu0 %v4097
  %v7829 = vpop.f32.mrf.mxu0
  %v7830 = vadd.f32 %v7816, %v7829
  %v7831 = vpop.f32.mrf.mxu0
  %v7832 = vadd.f32 %v7818, %v7831
  %7833 = vdwg.mxu0
  %7834 = vmatpush.bf16.msra.mxu0 %v6611
  %7835 = vmatpush.bf16.msra.mxu0 %v6603
  %7836 = vmatpush.bf16.msra.mxu0 %v6595
  %7837 = vmatpush.bf16.msra.mxu0 %v6587
  %7838 = vmatpush.bf16.msra.mxu0 %v6579
  %7839 = vmatpush.bf16.msra.mxu0 %v6571
  %7840 = vmatpush.bf16.msra.mxu0 %v6563
  %7841 = vmatpush.bf16.msra.mxu0 %v6555
  %7842 = vmatmul.bf16.gmra.mxu0 %v4098
  %v7843 = vpop.f32.mrf.mxu0
  %v7844 = vadd.f32 %v7830, %v7843
  %v7845 = vpop.f32.mrf.mxu0
  %v7846 = vadd.f32 %v7832, %v7845
  %7847 = vdwg.mxu0
  %7848 = vmatpush.bf16.msra.mxu0 %v6675
  %7849 = vmatpush.bf16.msra.mxu0 %v6667
  %7850 = vmatpush.bf16.msra.mxu0 %v6659
  %7851 = vmatpush.bf16.msra.mxu0 %v6651
  %7852 = vmatpush.bf16.msra.mxu0 %v6643
  %7853 = vmatpush.bf16.msra.mxu0 %v6635
  %7854 = vmatpush.bf16.msra.mxu0 %v6627
  %7855 = vmatpush.bf16.msra.mxu0 %v6619
  %7856 = vmatmul.bf16.gmra.mxu0 %v4099
  %v7857 = vpop.f32.mrf.mxu0
  %v7858 = vadd.f32 %v7844, %v7857
  %v7859 = vpop.f32.mrf.mxu0
  %v7860 = vadd.f32 %v7846, %v7859
  %7861 = vdwg.mxu0
  %7862 = vmatpush.bf16.msra.mxu0 %v6228
  %7863 = vmatpush.bf16.msra.mxu0 %v6220
  %7864 = vmatpush.bf16.msra.mxu0 %v6212
  %7865 = vmatpush.bf16.msra.mxu0 %v6204
  %7866 = vmatpush.bf16.msra.mxu0 %v6196
  %7867 = vmatpush.bf16.msra.mxu0 %v6188
  %7868 = vmatpush.bf16.msra.mxu0 %v6180
  %7869 = vmatpush.bf16.msra.mxu0 %v6172
  %7870 = vmatmul.bf16.gmra.mxu0 %v4092
  %v7871 = vpop.f32.mrf.mxu0
  %v7872 = vadd.f32 %v4620, %v7871
  %v7873 = vpop.f32.mrf.mxu0
  %v7874 = vadd.f32 %v4620, %v7873
  %7875 = vdwg.mxu0
  %7876 = vmatpush.bf16.msra.mxu0 %v6292
  %7877 = vmatpush.bf16.msra.mxu0 %v6284
  %7878 = vmatpush.bf16.msra.mxu0 %v6276
  %7879 = vmatpush.bf16.msra.mxu0 %v6268
  %7880 = vmatpush.bf16.msra.mxu0 %v6260
  %7881 = vmatpush.bf16.msra.mxu0 %v6252
  %7882 = vmatpush.bf16.msra.mxu0 %v6244
  %7883 = vmatpush.bf16.msra.mxu0 %v6236
  %7884 = vmatmul.bf16.gmra.mxu0 %v4093
  %v7885 = vpop.f32.mrf.mxu0
  %v7886 = vadd.f32 %v7872, %v7885
  %v7887 = vpop.f32.mrf.mxu0
  %v7888 = vadd.f32 %v7874, %v7887
  %7889 = vdwg.mxu0
  %7890 = vmatpush.bf16.msra.mxu0 %v6356
  %7891 = vmatpush.bf16.msra.mxu0 %v6348
  %7892 = vmatpush.bf16.msra.mxu0 %v6340
  %7893 = vmatpush.bf16.msra.mxu0 %v6332
  %7894 = vmatpush.bf16.msra.mxu0 %v6324
  %7895 = vmatpush.bf16.msra.mxu0 %v6316
  %7896 = vmatpush.bf16.msra.mxu0 %v6308
  %7897 = vmatpush.bf16.msra.mxu0 %v6300
  %7898 = vmatmul.bf16.gmra.mxu0 %v4094
  %v7899 = vpop.f32.mrf.mxu0
  %v7900 = vadd.f32 %v7886, %v7899
  %v7901 = vpop.f32.mrf.mxu0
  %v7902 = vadd.f32 %v7888, %v7901
  %7903 = vdwg.mxu0
  %7904 = vmatpush.bf16.msra.mxu0 %v6420
  %7905 = vmatpush.bf16.msra.mxu0 %v6412
  %7906 = vmatpush.bf16.msra.mxu0 %v6404
  %7907 = vmatpush.bf16.msra.mxu0 %v6396
  %7908 = vmatpush.bf16.msra.mxu0 %v6388
  %7909 = vmatpush.bf16.msra.mxu0 %v6380
  %7910 = vmatpush.bf16.msra.mxu0 %v6372
  %7911 = vmatpush.bf16.msra.mxu0 %v6364
  %7912 = vmatmul.bf16.gmra.mxu0 %v4095
  %v7913 = vpop.f32.mrf.mxu0
  %v7914 = vadd.f32 %v7900, %v7913
  %v7915 = vpop.f32.mrf.mxu0
  %v7916 = vadd.f32 %v7902, %v7915
  %7917 = vdwg.mxu0
  %7918 = vmatpush.bf16.msra.mxu0 %v6484
  %7919 = vmatpush.bf16.msra.mxu0 %v6476
  %7920 = vmatpush.bf16.msra.mxu0 %v6468
  %7921 = vmatpush.bf16.msra.mxu0 %v6460
  %7922 = vmatpush.bf16.msra.mxu0 %v6452
  %7923 = vmatpush.bf16.msra.mxu0 %v6444
  %7924 = vmatpush.bf16.msra.mxu0 %v6436
  %7925 = vmatpush.bf16.msra.mxu0 %v6428
  %7926 = vmatmul.bf16.gmra.mxu0 %v4096
  %v7927 = vpop.f32.mrf.mxu0
  %v7928 = vadd.f32 %v7914, %v7927
  %v7929 = vpop.f32.mrf.mxu0
  %v7930 = vadd.f32 %v7916, %v7929
  %7931 = vdwg.mxu0
  %7932 = vmatpush.bf16.msra.mxu0 %v6548
  %7933 = vmatpush.bf16.msra.mxu0 %v6540
  %7934 = vmatpush.bf16.msra.mxu0 %v6532
  %7935 = vmatpush.bf16.msra.mxu0 %v6524
  %7936 = vmatpush.bf16.msra.mxu0 %v6516
  %7937 = vmatpush.bf16.msra.mxu0 %v6508
  %7938 = vmatpush.bf16.msra.mxu0 %v6500
  %7939 = vmatpush.bf16.msra.mxu0 %v6492
  %7940 = vmatmul.bf16.gmra.mxu0 %v4097
  %v7941 = vpop.f32.mrf.mxu0
  %v7942 = vadd.f32 %v7928, %v7941
  %v7943 = vpop.f32.mrf.mxu0
  %v7944 = vadd.f32 %v7930, %v7943
  %7945 = vdwg.mxu0
  %7946 = vmatpush.bf16.msra.mxu0 %v6612
  %7947 = vmatpush.bf16.msra.mxu0 %v6604
  %7948 = vmatpush.bf16.msra.mxu0 %v6596
  %7949 = vmatpush.bf16.msra.mxu0 %v6588
  %7950 = vmatpush.bf16.msra.mxu0 %v6580
  %7951 = vmatpush.bf16.msra.mxu0 %v6572
  %7952 = vmatpush.bf16.msra.mxu0 %v6564
  %7953 = vmatpush.bf16.msra.mxu0 %v6556
  %7954 = vmatmul.bf16.gmra.mxu0 %v4098
  %v7955 = vpop.f32.mrf.mxu0
  %v7956 = vadd.f32 %v7942, %v7955
  %v7957 = vpop.f32.mrf.mxu0
  %v7958 = vadd.f32 %v7944, %v7957
  %7959 = vdwg.mxu0
  %7960 = vmatpush.bf16.msra.mxu0 %v6676
  %7961 = vmatpush.bf16.msra.mxu0 %v6668
  %7962 = vmatpush.bf16.msra.mxu0 %v6660
  %7963 = vmatpush.bf16.msra.mxu0 %v6652
  %7964 = vmatpush.bf16.msra.mxu0 %v6644
  %7965 = vmatpush.bf16.msra.mxu0 %v6636
  %7966 = vmatpush.bf16.msra.mxu0 %v6628
  %7967 = vmatpush.bf16.msra.mxu0 %v6620
  %7968 = vmatmul.bf16.gmra.mxu0 %v4099
  %v7969 = vpop.f32.mrf.mxu0
  %v7970 = vadd.f32 %v7956, %v7969
  %v7971 = vpop.f32.mrf.mxu0
  %v7972 = vadd.f32 %v7958, %v7971
  %7973 = vdwg.mxu0
  %7974 = vmatpush.bf16.msra.mxu0 %v6229
  %7975 = vmatpush.bf16.msra.mxu0 %v6221
  %7976 = vmatpush.bf16.msra.mxu0 %v6213
  %7977 = vmatpush.bf16.msra.mxu0 %v6205
  %7978 = vmatpush.bf16.msra.mxu0 %v6197
  %7979 = vmatpush.bf16.msra.mxu0 %v6189
  %7980 = vmatpush.bf16.msra.mxu0 %v6181
  %7981 = vmatpush.bf16.msra.mxu0 %v6173
  %7982 = vmatmul.bf16.gmra.mxu0 %v4092
  %v7983 = vpop.f32.mrf.mxu0
  %v7984 = vadd.f32 %v4621, %v7983
  %v7985 = vpop.f32.mrf.mxu0
  %v7986 = vadd.f32 %v4621, %v7985
  %7987 = vdwg.mxu0
  %7988 = vmatpush.bf16.msra.mxu0 %v6293
  %7989 = vmatpush.bf16.msra.mxu0 %v6285
  %7990 = vmatpush.bf16.msra.mxu0 %v6277
  %7991 = vmatpush.bf16.msra.mxu0 %v6269
  %7992 = vmatpush.bf16.msra.mxu0 %v6261
  %7993 = vmatpush.bf16.msra.mxu0 %v6253
  %7994 = vmatpush.bf16.msra.mxu0 %v6245
  %7995 = vmatpush.bf16.msra.mxu0 %v6237
  %7996 = vmatmul.bf16.gmra.mxu0 %v4093
  %v7997 = vpop.f32.mrf.mxu0
  %v7998 = vadd.f32 %v7984, %v7997
  %v7999 = vpop.f32.mrf.mxu0
  %v8000 = vadd.f32 %v7986, %v7999
  %8001 = vdwg.mxu0
  %8002 = vmatpush.bf16.msra.mxu0 %v6357
  %8003 = vmatpush.bf16.msra.mxu0 %v6349
  %8004 = vmatpush.bf16.msra.mxu0 %v6341
  %8005 = vmatpush.bf16.msra.mxu0 %v6333
  %8006 = vmatpush.bf16.msra.mxu0 %v6325
  %8007 = vmatpush.bf16.msra.mxu0 %v6317
  %8008 = vmatpush.bf16.msra.mxu0 %v6309
  %8009 = vmatpush.bf16.msra.mxu0 %v6301
  %8010 = vmatmul.bf16.gmra.mxu0 %v4094
  %v8011 = vpop.f32.mrf.mxu0
  %v8012 = vadd.f32 %v7998, %v8011
  %v8013 = vpop.f32.mrf.mxu0
  %v8014 = vadd.f32 %v8000, %v8013
  %8015 = vdwg.mxu0
  %8016 = vmatpush.bf16.msra.mxu0 %v6421
  %8017 = vmatpush.bf16.msra.mxu0 %v6413
  %8018 = vmatpush.bf16.msra.mxu0 %v6405
  %8019 = vmatpush.bf16.msra.mxu0 %v6397
  %8020 = vmatpush.bf16.msra.mxu0 %v6389
  %8021 = vmatpush.bf16.msra.mxu0 %v6381
  %8022 = vmatpush.bf16.msra.mxu0 %v6373
  %8023 = vmatpush.bf16.msra.mxu0 %v6365
  %8024 = vmatmul.bf16.gmra.mxu0 %v4095
  %v8025 = vpop.f32.mrf.mxu0
  %v8026 = vadd.f32 %v8012, %v8025
  %v8027 = vpop.f32.mrf.mxu0
  %v8028 = vadd.f32 %v8014, %v8027
  %8029 = vdwg.mxu0
  %8030 = vmatpush.bf16.msra.mxu0 %v6485
  %8031 = vmatpush.bf16.msra.mxu0 %v6477
  %8032 = vmatpush.bf16.msra.mxu0 %v6469
  %8033 = vmatpush.bf16.msra.mxu0 %v6461
  %8034 = vmatpush.bf16.msra.mxu0 %v6453
  %8035 = vmatpush.bf16.msra.mxu0 %v6445
  %8036 = vmatpush.bf16.msra.mxu0 %v6437
  %8037 = vmatpush.bf16.msra.mxu0 %v6429
  %8038 = vmatmul.bf16.gmra.mxu0 %v4096
  %v8039 = vpop.f32.mrf.mxu0
  %v8040 = vadd.f32 %v8026, %v8039
  %v8041 = vpop.f32.mrf.mxu0
  %v8042 = vadd.f32 %v8028, %v8041
  %8043 = vdwg.mxu0
  %8044 = vmatpush.bf16.msra.mxu0 %v6549
  %8045 = vmatpush.bf16.msra.mxu0 %v6541
  %8046 = vmatpush.bf16.msra.mxu0 %v6533
  %8047 = vmatpush.bf16.msra.mxu0 %v6525
  %8048 = vmatpush.bf16.msra.mxu0 %v6517
  %8049 = vmatpush.bf16.msra.mxu0 %v6509
  %8050 = vmatpush.bf16.msra.mxu0 %v6501
  %8051 = vmatpush.bf16.msra.mxu0 %v6493
  %8052 = vmatmul.bf16.gmra.mxu0 %v4097
  %v8053 = vpop.f32.mrf.mxu0
  %v8054 = vadd.f32 %v8040, %v8053
  %v8055 = vpop.f32.mrf.mxu0
  %v8056 = vadd.f32 %v8042, %v8055
  %8057 = vdwg.mxu0
  %8058 = vmatpush.bf16.msra.mxu0 %v6613
  %8059 = vmatpush.bf16.msra.mxu0 %v6605
  %8060 = vmatpush.bf16.msra.mxu0 %v6597
  %8061 = vmatpush.bf16.msra.mxu0 %v6589
  %8062 = vmatpush.bf16.msra.mxu0 %v6581
  %8063 = vmatpush.bf16.msra.mxu0 %v6573
  %8064 = vmatpush.bf16.msra.mxu0 %v6565
  %8065 = vmatpush.bf16.msra.mxu0 %v6557
  %8066 = vmatmul.bf16.gmra.mxu0 %v4098
  %v8067 = vpop.f32.mrf.mxu0
  %v8068 = vadd.f32 %v8054, %v8067
  %v8069 = vpop.f32.mrf.mxu0
  %v8070 = vadd.f32 %v8056, %v8069
  %8071 = vdwg.mxu0
  %8072 = vmatpush.bf16.msra.mxu0 %v6677
  %8073 = vmatpush.bf16.msra.mxu0 %v6669
  %8074 = vmatpush.bf16.msra.mxu0 %v6661
  %8075 = vmatpush.bf16.msra.mxu0 %v6653
  %8076 = vmatpush.bf16.msra.mxu0 %v6645
  %8077 = vmatpush.bf16.msra.mxu0 %v6637
  %8078 = vmatpush.bf16.msra.mxu0 %v6629
  %8079 = vmatpush.bf16.msra.mxu0 %v6621
  %8080 = vmatmul.bf16.gmra.mxu0 %v4099
  %v8081 = vpop.f32.mrf.mxu0
  %v8082 = vadd.f32 %v8068, %v8081
  %v8083 = vpop.f32.mrf.mxu0
  %v8084 = vadd.f32 %v8070, %v8083
  %8085 = vdwg.mxu0
  %v8086 = vmul.f32 %v7298, 0.01
  %v8087 = vmul.f32 %v7410, 0.01
  %v8088 = vmul.f32 %v7522, 0.01
  %v8089 = vmul.f32 %v7634, 0.01
  %v8090 = vmul.f32 %v7746, 0.01
  %v8091 = vmul.f32 %v7858, 0.01
  %v8092 = vmul.f32 %v7970, 0.01
  %v8093 = vmul.f32 %v8082, 0.01
  %v8094 = vmul.f32 %v7300, 0.01
  %v8095 = vmul.f32 %v7412, 0.01
  %v8096 = vmul.f32 %v7524, 0.01
  %v8097 = vmul.f32 %v7636, 0.01
  %v8098 = vmul.f32 %v7748, 0.01
  %v8099 = vmul.f32 %v7860, 0.01
  %v8100 = vmul.f32 %v7972, 0.01
  %v8101 = vmul.f32 %v8084, 0.01
  %v8102 = vmax.f32 %v7298, %v8086
  %v8103 = vmax.f32 %v7410, %v8087
  %v8104 = vmax.f32 %v7522, %v8088
  %v8105 = vmax.f32 %v7634, %v8089
  %v8106 = vmax.f32 %v7746, %v8090
  %v8107 = vmax.f32 %v7858, %v8091
  %v8108 = vmax.f32 %v7970, %v8092
  %v8109 = vmax.f32 %v8082, %v8093
  %v8110 = vmax.f32 %v7300, %v8094
  %v8111 = vmax.f32 %v7412, %v8095
  %v8112 = vmax.f32 %v7524, %v8096
  %v8113 = vmax.f32 %v7636, %v8097
  %v8114 = vmax.f32 %v7748, %v8098
  %v8115 = vmax.f32 %v7860, %v8099
  %v8116 = vmax.f32 %v7972, %v8100
  %v8117 = vmax.f32 %v8084, %v8101
  %v8118 = vpack.c.bf16 %v8110, %v8102
  %v8119 = vpack.c.bf16 %v8111, %v8103
  %v8120 = vpack.c.bf16 %v8112, %v8104
  %v8121 = vpack.c.bf16 %v8113, %v8105
  %v8122 = vpack.c.bf16 %v8114, %v8106
  %v8123 = vpack.c.bf16 %v8115, %v8107
  %v8124 = vpack.c.bf16 %v8116, %v8108
  %v8125 = vpack.c.bf16 %v8117, %v8109
  %v8126 = vld [vmem:[%s5] sm:$0xf]
  %v8127 = vld [vmem:[%s5 + $0x4] sm:$0xf]
  %v8128 = vld [vmem:[%s5 + $0x8] sm:$0xf]
  %v8129 = vld [vmem:[%s5 + $0xc] sm:$0xf]
  %v8130 = vld [vmem:[%s5 + $0x10] sm:$0xf]
  %v8131 = vld [vmem:[%s5 + $0x14] sm:$0xf]
  %v8132 = vld [vmem:[%s5 + $0x18] sm:$0xf]
  %v8133 = vld [vmem:[%s5 + $0x1c] sm:$0xf]
  %v8134 = vld [vmem:[%s5 + $0x20] sm:$0xf]
  %v8135 = vld [vmem:[%s5 + $0x24] sm:$0xf]
  %v8136 = vld [vmem:[%s5 + $0x28] sm:$0xf]
  %v8137 = vld [vmem:[%s5 + $0x2c] sm:$0xf]
  %v8138 = vld [vmem:[%s5 + $0x30] sm:$0xf]
  %v8139 = vld [vmem:[%s5 + $0x34] sm:$0xf]
  %v8140 = vld [vmem:[%s5 + $0x38] sm:$0xf]
  %v8141 = vld [vmem:[%s5 + $0x3c] sm:$0xf]
  %v8142 = vld [vmem:[%s5 + $0x40] sm:$0xf]
  %v8143 = vld [vmem:[%s5 + $0x44] sm:$0xf]
  %v8144 = vld [vmem:[%s5 + $0x48] sm:$0xf]
  %v8145 = vld [vmem:[%s5 + $0x4c] sm:$0xf]
  %v8146 = vld [vmem:[%s5 + $0x50] sm:$0xf]
  %v8147 = vld [vmem:[%s5 + $0x54] sm:$0xf]
  %v8148 = vld [vmem:[%s5 + $0x58] sm:$0xf]
  %v8149 = vld [vmem:[%s5 + $0x5c] sm:$0xf]
  %v8150 = vld [vmem:[%s5 + $0x60] sm:$0xf]
  %v8151 = vld [vmem:[%s5 + $0x64] sm:$0xf]
  %v8152 = vld [vmem:[%s5 + $0x68] sm:$0xf]
  %v8153 = vld [vmem:[%s5 + $0x6c] sm:$0xf]
  %v8154 = vld [vmem:[%s5 + $0x70] sm:$0xf]
  %v8155 = vld [vmem:[%s5 + $0x74] sm:$0xf]
  %v8156 = vld [vmem:[%s5 + $0x78] sm:$0xf]
  %v8157 = vld [vmem:[%s5 + $0x7c] sm:$0xf]
  %v8158 = vld [vmem:[%s5 + $0x80] sm:$0xf]
  %v8159 = vld [vmem:[%s5 + $0x84] sm:$0xf]
  %v8160 = vld [vmem:[%s5 + $0x88] sm:$0xf]
  %v8161 = vld [vmem:[%s5 + $0x8c] sm:$0xf]
  %v8162 = vld [vmem:[%s5 + $0x90] sm:$0xf]
  %v8163 = vld [vmem:[%s5 + $0x94] sm:$0xf]
  %v8164 = vld [vmem:[%s5 + $0x98] sm:$0xf]
  %v8165 = vld [vmem:[%s5 + $0x9c] sm:$0xf]
  %v8166 = vld [vmem:[%s5 + $0xa0] sm:$0xf]
  %v8167 = vld [vmem:[%s5 + $0xa4] sm:$0xf]
  %v8168 = vld [vmem:[%s5 + $0xa8] sm:$0xf]
  %v8169 = vld [vmem:[%s5 + $0xac] sm:$0xf]
  %v8170 = vld [vmem:[%s5 + $0xb0] sm:$0xf]
  %v8171 = vld [vmem:[%s5 + $0xb4] sm:$0xf]
  %v8172 = vld [vmem:[%s5 + $0xb8] sm:$0xf]
  %v8173 = vld [vmem:[%s5 + $0xbc] sm:$0xf]
  %v8174 = vld [vmem:[%s5 + $0xc0] sm:$0xf]
  %v8175 = vld [vmem:[%s5 + $0xc4] sm:$0xf]
  %v8176 = vld [vmem:[%s5 + $0xc8] sm:$0xf]
  %v8177 = vld [vmem:[%s5 + $0xcc] sm:$0xf]
  %v8178 = vld [vmem:[%s5 + $0xd0] sm:$0xf]
  %v8179 = vld [vmem:[%s5 + $0xd4] sm:$0xf]
  %v8180 = vld [vmem:[%s5 + $0xd8] sm:$0xf]
  %v8181 = vld [vmem:[%s5 + $0xdc] sm:$0xf]
  %v8182 = vld [vmem:[%s5 + $0xe0] sm:$0xf]
  %v8183 = vld [vmem:[%s5 + $0xe4] sm:$0xf]
  %v8184 = vld [vmem:[%s5 + $0xe8] sm:$0xf]
  %v8185 = vld [vmem:[%s5 + $0xec] sm:$0xf]
  %v8186 = vld [vmem:[%s5 + $0xf0] sm:$0xf]
  %v8187 = vld [vmem:[%s5 + $0xf4] sm:$0xf]
  %v8188 = vld [vmem:[%s5 + $0xf8] sm:$0xf]
  %v8189 = vld [vmem:[%s5 + $0xfc] sm:$0xf]
  %v8190 = vld [vmem:[%s5 + $0x100] sm:$0xf]
  %v8191 = vld [vmem:[%s5 + $0x104] sm:$0xf]
  %v8192 = vld [vmem:[%s5 + $0x108] sm:$0xf]
  %v8193 = vld [vmem:[%s5 + $0x10c] sm:$0xf]
  %v8194 = vld [vmem:[%s5 + $0x110] sm:$0xf]
  %v8195 = vld [vmem:[%s5 + $0x114] sm:$0xf]
  %v8196 = vld [vmem:[%s5 + $0x118] sm:$0xf]
  %v8197 = vld [vmem:[%s5 + $0x11c] sm:$0xf]
  %v8198 = vld [vmem:[%s5 + $0x120] sm:$0xf]
  %v8199 = vld [vmem:[%s5 + $0x124] sm:$0xf]
  %v8200 = vld [vmem:[%s5 + $0x128] sm:$0xf]
  %v8201 = vld [vmem:[%s5 + $0x12c] sm:$0xf]
  %v8202 = vld [vmem:[%s5 + $0x130] sm:$0xf]
  %v8203 = vld [vmem:[%s5 + $0x134] sm:$0xf]
  %v8204 = vld [vmem:[%s5 + $0x138] sm:$0xf]
  %v8205 = vld [vmem:[%s5 + $0x13c] sm:$0xf]
  %v8206 = vld [vmem:[%s5 + $0x140] sm:$0xf]
  %v8207 = vld [vmem:[%s5 + $0x144] sm:$0xf]
  %v8208 = vld [vmem:[%s5 + $0x148] sm:$0xf]
  %v8209 = vld [vmem:[%s5 + $0x14c] sm:$0xf]
  %v8210 = vld [vmem:[%s5 + $0x150] sm:$0xf]
  %v8211 = vld [vmem:[%s5 + $0x154] sm:$0xf]
  %v8212 = vld [vmem:[%s5 + $0x158] sm:$0xf]
  %v8213 = vld [vmem:[%s5 + $0x15c] sm:$0xf]
  %v8214 = vld [vmem:[%s5 + $0x160] sm:$0xf]
  %v8215 = vld [vmem:[%s5 + $0x164] sm:$0xf]
  %v8216 = vld [vmem:[%s5 + $0x168] sm:$0xf]
  %v8217 = vld [vmem:[%s5 + $0x16c] sm:$0xf]
  %v8218 = vld [vmem:[%s5 + $0x170] sm:$0xf]
  %v8219 = vld [vmem:[%s5 + $0x174] sm:$0xf]
  %v8220 = vld [vmem:[%s5 + $0x178] sm:$0xf]
  %v8221 = vld [vmem:[%s5 + $0x17c] sm:$0xf]
  %v8222 = vld [vmem:[%s5 + $0x180] sm:$0xf]
  %v8223 = vld [vmem:[%s5 + $0x184] sm:$0xf]
  %v8224 = vld [vmem:[%s5 + $0x188] sm:$0xf]
  %v8225 = vld [vmem:[%s5 + $0x18c] sm:$0xf]
  %v8226 = vld [vmem:[%s5 + $0x190] sm:$0xf]
  %v8227 = vld [vmem:[%s5 + $0x194] sm:$0xf]
  %v8228 = vld [vmem:[%s5 + $0x198] sm:$0xf]
  %v8229 = vld [vmem:[%s5 + $0x19c] sm:$0xf]
  %v8230 = vld [vmem:[%s5 + $0x1a0] sm:$0xf]
  %v8231 = vld [vmem:[%s5 + $0x1a4] sm:$0xf]
  %v8232 = vld [vmem:[%s5 + $0x1a8] sm:$0xf]
  %v8233 = vld [vmem:[%s5 + $0x1ac] sm:$0xf]
  %v8234 = vld [vmem:[%s5 + $0x1b0] sm:$0xf]
  %v8235 = vld [vmem:[%s5 + $0x1b4] sm:$0xf]
  %v8236 = vld [vmem:[%s5 + $0x1b8] sm:$0xf]
  %v8237 = vld [vmem:[%s5 + $0x1bc] sm:$0xf]
  %v8238 = vld [vmem:[%s5 + $0x1c0] sm:$0xf]
  %v8239 = vld [vmem:[%s5 + $0x1c4] sm:$0xf]
  %v8240 = vld [vmem:[%s5 + $0x1c8] sm:$0xf]
  %v8241 = vld [vmem:[%s5 + $0x1cc] sm:$0xf]
  %v8242 = vld [vmem:[%s5 + $0x1d0] sm:$0xf]
  %v8243 = vld [vmem:[%s5 + $0x1d4] sm:$0xf]
  %v8244 = vld [vmem:[%s5 + $0x1d8] sm:$0xf]
  %v8245 = vld [vmem:[%s5 + $0x1dc] sm:$0xf]
  %v8246 = vld [vmem:[%s5 + $0x1e0] sm:$0xf]
  %v8247 = vld [vmem:[%s5 + $0x1e4] sm:$0xf]
  %v8248 = vld [vmem:[%s5 + $0x1e8] sm:$0xf]
  %v8249 = vld [vmem:[%s5 + $0x1ec] sm:$0xf]
  %v8250 = vld [vmem:[%s5 + $0x1f0] sm:$0xf]
  %v8251 = vld [vmem:[%s5 + $0x1f4] sm:$0xf]
  %v8252 = vld [vmem:[%s5 + $0x1f8] sm:$0xf]
  %v8253 = vld [vmem:[%s5 + $0x1fc] sm:$0xf]
  %v8254 = vld [vmem:[%s6] sm:$0x1]
  %v8256 = vperm.slane %v8254, 0
  %v8386 = vunpack.c.l.b16 %v8126
  %v8387 = vunpack.c.l.b16 %v8127
  %v8388 = vunpack.c.l.b16 %v8128
  %v8389 = vunpack.c.l.b16 %v8129
  %v8390 = vunpack.c.l.b16 %v8130
  %v8391 = vunpack.c.l.b16 %v8131
  %v8392 = vunpack.c.l.b16 %v8132
  %v8393 = vunpack.c.l.b16 %v8133
  %v8394 = vunpack.c.l.b16 %v8134
  %v8395 = vunpack.c.l.b16 %v8135
  %v8396 = vunpack.c.l.b16 %v8136
  %v8397 = vunpack.c.l.b16 %v8137
  %v8398 = vunpack.c.l.b16 %v8138
  %v8399 = vunpack.c.l.b16 %v8139
  %v8400 = vunpack.c.l.b16 %v8140
  %v8401 = vunpack.c.l.b16 %v8141
  %v8402 = vunpack.c.l.b16 %v8142
  %v8403 = vunpack.c.l.b16 %v8143
  %v8404 = vunpack.c.l.b16 %v8144
  %v8405 = vunpack.c.l.b16 %v8145
  %v8406 = vunpack.c.l.b16 %v8146
  %v8407 = vunpack.c.l.b16 %v8147
  %v8408 = vunpack.c.l.b16 %v8148
  %v8409 = vunpack.c.l.b16 %v8149
  %v8410 = vunpack.c.l.b16 %v8150
  %v8411 = vunpack.c.l.b16 %v8151
  %v8412 = vunpack.c.l.b16 %v8152
  %v8413 = vunpack.c.l.b16 %v8153
  %v8414 = vunpack.c.l.b16 %v8154
  %v8415 = vunpack.c.l.b16 %v8155
  %v8416 = vunpack.c.l.b16 %v8156
  %v8417 = vunpack.c.l.b16 %v8157
  %v8418 = vunpack.c.l.b16 %v8158
  %v8419 = vunpack.c.l.b16 %v8159
  %v8420 = vunpack.c.l.b16 %v8160
  %v8421 = vunpack.c.l.b16 %v8161
  %v8422 = vunpack.c.l.b16 %v8162
  %v8423 = vunpack.c.l.b16 %v8163
  %v8424 = vunpack.c.l.b16 %v8164
  %v8425 = vunpack.c.l.b16 %v8165
  %v8426 = vunpack.c.l.b16 %v8166
  %v8427 = vunpack.c.l.b16 %v8167
  %v8428 = vunpack.c.l.b16 %v8168
  %v8429 = vunpack.c.l.b16 %v8169
  %v8430 = vunpack.c.l.b16 %v8170
  %v8431 = vunpack.c.l.b16 %v8171
  %v8432 = vunpack.c.l.b16 %v8172
  %v8433 = vunpack.c.l.b16 %v8173
  %v8434 = vunpack.c.l.b16 %v8174
  %v8435 = vunpack.c.l.b16 %v8175
  %v8436 = vunpack.c.l.b16 %v8176
  %v8437 = vunpack.c.l.b16 %v8177
  %v8438 = vunpack.c.l.b16 %v8178
  %v8439 = vunpack.c.l.b16 %v8179
  %v8440 = vunpack.c.l.b16 %v8180
  %v8441 = vunpack.c.l.b16 %v8181
  %v8442 = vunpack.c.l.b16 %v8182
  %v8443 = vunpack.c.l.b16 %v8183
  %v8444 = vunpack.c.l.b16 %v8184
  %v8445 = vunpack.c.l.b16 %v8185
  %v8446 = vunpack.c.l.b16 %v8186
  %v8447 = vunpack.c.l.b16 %v8187
  %v8448 = vunpack.c.l.b16 %v8188
  %v8449 = vunpack.c.l.b16 %v8189
  %v8450 = vunpack.c.l.b16 %v8190
  %v8451 = vunpack.c.l.b16 %v8191
  %v8452 = vunpack.c.l.b16 %v8192
  %v8453 = vunpack.c.l.b16 %v8193
  %v8454 = vunpack.c.l.b16 %v8194
  %v8455 = vunpack.c.l.b16 %v8195
  %v8456 = vunpack.c.l.b16 %v8196
  %v8457 = vunpack.c.l.b16 %v8197
  %v8458 = vunpack.c.l.b16 %v8198
  %v8459 = vunpack.c.l.b16 %v8199
  %v8460 = vunpack.c.l.b16 %v8200
  %v8461 = vunpack.c.l.b16 %v8201
  %v8462 = vunpack.c.l.b16 %v8202
  %v8463 = vunpack.c.l.b16 %v8203
  %v8464 = vunpack.c.l.b16 %v8204
  %v8465 = vunpack.c.l.b16 %v8205
  %v8466 = vunpack.c.l.b16 %v8206
  %v8467 = vunpack.c.l.b16 %v8207
  %v8468 = vunpack.c.l.b16 %v8208
  %v8469 = vunpack.c.l.b16 %v8209
  %v8470 = vunpack.c.l.b16 %v8210
  %v8471 = vunpack.c.l.b16 %v8211
  %v8472 = vunpack.c.l.b16 %v8212
  %v8473 = vunpack.c.l.b16 %v8213
  %v8474 = vunpack.c.l.b16 %v8214
  %v8475 = vunpack.c.l.b16 %v8215
  %v8476 = vunpack.c.l.b16 %v8216
  %v8477 = vunpack.c.l.b16 %v8217
  %v8478 = vunpack.c.l.b16 %v8218
  %v8479 = vunpack.c.l.b16 %v8219
  %v8480 = vunpack.c.l.b16 %v8220
  %v8481 = vunpack.c.l.b16 %v8221
  %v8482 = vunpack.c.l.b16 %v8222
  %v8483 = vunpack.c.l.b16 %v8223
  %v8484 = vunpack.c.l.b16 %v8224
  %v8485 = vunpack.c.l.b16 %v8225
  %v8486 = vunpack.c.l.b16 %v8226
  %v8487 = vunpack.c.l.b16 %v8227
  %v8488 = vunpack.c.l.b16 %v8228
  %v8489 = vunpack.c.l.b16 %v8229
  %v8490 = vunpack.c.l.b16 %v8230
  %v8491 = vunpack.c.l.b16 %v8231
  %v8492 = vunpack.c.l.b16 %v8232
  %v8493 = vunpack.c.l.b16 %v8233
  %v8494 = vunpack.c.l.b16 %v8234
  %v8495 = vunpack.c.l.b16 %v8235
  %v8496 = vunpack.c.l.b16 %v8236
  %v8497 = vunpack.c.l.b16 %v8237
  %v8498 = vunpack.c.l.b16 %v8238
  %v8499 = vunpack.c.l.b16 %v8239
  %v8500 = vunpack.c.l.b16 %v8240
  %v8501 = vunpack.c.l.b16 %v8241
  %v8502 = vunpack.c.l.b16 %v8242
  %v8503 = vunpack.c.l.b16 %v8243
  %v8504 = vunpack.c.l.b16 %v8244
  %v8505 = vunpack.c.l.b16 %v8245
  %v8506 = vunpack.c.l.b16 %v8246
  %v8507 = vunpack.c.l.b16 %v8247
  %v8508 = vunpack.c.l.b16 %v8248
  %v8509 = vunpack.c.l.b16 %v8249
  %v8510 = vunpack.c.l.b16 %v8250
  %v8511 = vunpack.c.l.b16 %v8251
  %v8512 = vunpack.c.l.b16 %v8252
  %v8513 = vunpack.c.l.b16 %v8253
  %v8514 = vpack.c.b16 %v8387, %v8386
  %v8515 = vpack.c.b16 %v8389, %v8388
  %v8516 = vpack.c.b16 %v8391, %v8390
  %v8517 = vpack.c.b16 %v8393, %v8392
  %v8518 = vpack.c.b16 %v8395, %v8394
  %v8519 = vpack.c.b16 %v8397, %v8396
  %v8520 = vpack.c.b16 %v8399, %v8398
  %v8521 = vpack.c.b16 %v8401, %v8400
  %v8522 = vpack.c.b16 %v8403, %v8402
  %v8523 = vpack.c.b16 %v8405, %v8404
  %v8524 = vpack.c.b16 %v8407, %v8406
  %v8525 = vpack.c.b16 %v8409, %v8408
  %v8526 = vpack.c.b16 %v8411, %v8410
  %v8527 = vpack.c.b16 %v8413, %v8412
  %v8528 = vpack.c.b16 %v8415, %v8414
  %v8529 = vpack.c.b16 %v8417, %v8416
  %v8530 = vpack.c.b16 %v8419, %v8418
  %v8531 = vpack.c.b16 %v8421, %v8420
  %v8532 = vpack.c.b16 %v8423, %v8422
  %v8533 = vpack.c.b16 %v8425, %v8424
  %v8534 = vpack.c.b16 %v8427, %v8426
  %v8535 = vpack.c.b16 %v8429, %v8428
  %v8536 = vpack.c.b16 %v8431, %v8430
  %v8537 = vpack.c.b16 %v8433, %v8432
  %v8538 = vpack.c.b16 %v8435, %v8434
  %v8539 = vpack.c.b16 %v8437, %v8436
  %v8540 = vpack.c.b16 %v8439, %v8438
  %v8541 = vpack.c.b16 %v8441, %v8440
  %v8542 = vpack.c.b16 %v8443, %v8442
  %v8543 = vpack.c.b16 %v8445, %v8444
  %v8544 = vpack.c.b16 %v8447, %v8446
  %v8545 = vpack.c.b16 %v8449, %v8448
  %v8546 = vpack.c.b16 %v8451, %v8450
  %v8547 = vpack.c.b16 %v8453, %v8452
  %v8548 = vpack.c.b16 %v8455, %v8454
  %v8549 = vpack.c.b16 %v8457, %v8456
  %v8550 = vpack.c.b16 %v8459, %v8458
  %v8551 = vpack.c.b16 %v8461, %v8460
  %v8552 = vpack.c.b16 %v8463, %v8462
  %v8553 = vpack.c.b16 %v8465, %v8464
  %v8554 = vpack.c.b16 %v8467, %v8466
  %v8555 = vpack.c.b16 %v8469, %v8468
  %v8556 = vpack.c.b16 %v8471, %v8470
  %v8557 = vpack.c.b16 %v8473, %v8472
  %v8558 = vpack.c.b16 %v8475, %v8474
  %v8559 = vpack.c.b16 %v8477, %v8476
  %v8560 = vpack.c.b16 %v8479, %v8478
  %v8561 = vpack.c.b16 %v8481, %v8480
  %v8562 = vpack.c.b16 %v8483, %v8482
  %v8563 = vpack.c.b16 %v8485, %v8484
  %v8564 = vpack.c.b16 %v8487, %v8486
  %v8565 = vpack.c.b16 %v8489, %v8488
  %v8566 = vpack.c.b16 %v8491, %v8490
  %v8567 = vpack.c.b16 %v8493, %v8492
  %v8568 = vpack.c.b16 %v8495, %v8494
  %v8569 = vpack.c.b16 %v8497, %v8496
  %v8570 = vpack.c.b16 %v8499, %v8498
  %v8571 = vpack.c.b16 %v8501, %v8500
  %v8572 = vpack.c.b16 %v8503, %v8502
  %v8573 = vpack.c.b16 %v8505, %v8504
  %v8574 = vpack.c.b16 %v8507, %v8506
  %v8575 = vpack.c.b16 %v8509, %v8508
  %v8576 = vpack.c.b16 %v8511, %v8510
  %v8577 = vpack.c.b16 %v8513, %v8512
  %8642 = vmatpush.bf16.msra.mxu0 %v8521
  %8643 = vmatpush.bf16.msra.mxu0 %v8520
  %8644 = vmatpush.bf16.msra.mxu0 %v8519
  %8645 = vmatpush.bf16.msra.mxu0 %v8518
  %8646 = vmatpush.bf16.msra.mxu0 %v8517
  %8647 = vmatpush.bf16.msra.mxu0 %v8516
  %8648 = vmatpush.bf16.msra.mxu0 %v8515
  %8649 = vmatpush.bf16.msra.mxu0 %v8514
  %8650 = vmatmul.bf16.gmra.mxu0 %v8118
  %v8651 = vpop.f32.mrf.mxu0
  %v8652 = vadd.f32 %v8256, %v8651
  %v8653 = vpop.f32.mrf.mxu0
  %v8654 = vadd.f32 %v8256, %v8653
  %8655 = vdwg.mxu0
  %8656 = vmatpush.bf16.msra.mxu0 %v8529
  %8657 = vmatpush.bf16.msra.mxu0 %v8528
  %8658 = vmatpush.bf16.msra.mxu0 %v8527
  %8659 = vmatpush.bf16.msra.mxu0 %v8526
  %8660 = vmatpush.bf16.msra.mxu0 %v8525
  %8661 = vmatpush.bf16.msra.mxu0 %v8524
  %8662 = vmatpush.bf16.msra.mxu0 %v8523
  %8663 = vmatpush.bf16.msra.mxu0 %v8522
  %8664 = vmatmul.bf16.gmra.mxu0 %v8119
  %v8665 = vpop.f32.mrf.mxu0
  %v8666 = vadd.f32 %v8652, %v8665
  %v8667 = vpop.f32.mrf.mxu0
  %v8668 = vadd.f32 %v8654, %v8667
  %8669 = vdwg.mxu0
  %8670 = vmatpush.bf16.msra.mxu0 %v8537
  %8671 = vmatpush.bf16.msra.mxu0 %v8536
  %8672 = vmatpush.bf16.msra.mxu0 %v8535
  %8673 = vmatpush.bf16.msra.mxu0 %v8534
  %8674 = vmatpush.bf16.msra.mxu0 %v8533
  %8675 = vmatpush.bf16.msra.mxu0 %v8532
  %8676 = vmatpush.bf16.msra.mxu0 %v8531
  %8677 = vmatpush.bf16.msra.mxu0 %v8530
  %8678 = vmatmul.bf16.gmra.mxu0 %v8120
  %v8679 = vpop.f32.mrf.mxu0
  %v8680 = vadd.f32 %v8666, %v8679
  %v8681 = vpop.f32.mrf.mxu0
  %v8682 = vadd.f32 %v8668, %v8681
  %8683 = vdwg.mxu0
  %8684 = vmatpush.bf16.msra.mxu0 %v8545
  %8685 = vmatpush.bf16.msra.mxu0 %v8544
  %8686 = vmatpush.bf16.msra.mxu0 %v8543
  %8687 = vmatpush.bf16.msra.mxu0 %v8542
  %8688 = vmatpush.bf16.msra.mxu0 %v8541
  %8689 = vmatpush.bf16.msra.mxu0 %v8540
  %8690 = vmatpush.bf16.msra.mxu0 %v8539
  %8691 = vmatpush.bf16.msra.mxu0 %v8538
  %8692 = vmatmul.bf16.gmra.mxu0 %v8121
  %v8693 = vpop.f32.mrf.mxu0
  %v8694 = vadd.f32 %v8680, %v8693
  %v8695 = vpop.f32.mrf.mxu0
  %v8696 = vadd.f32 %v8682, %v8695
  %8697 = vdwg.mxu0
  %8698 = vmatpush.bf16.msra.mxu0 %v8553
  %8699 = vmatpush.bf16.msra.mxu0 %v8552
  %8700 = vmatpush.bf16.msra.mxu0 %v8551
  %8701 = vmatpush.bf16.msra.mxu0 %v8550
  %8702 = vmatpush.bf16.msra.mxu0 %v8549
  %8703 = vmatpush.bf16.msra.mxu0 %v8548
  %8704 = vmatpush.bf16.msra.mxu0 %v8547
  %8705 = vmatpush.bf16.msra.mxu0 %v8546
  %8706 = vmatmul.bf16.gmra.mxu0 %v8122
  %v8707 = vpop.f32.mrf.mxu0
  %v8708 = vadd.f32 %v8694, %v8707
  %v8709 = vpop.f32.mrf.mxu0
  %v8710 = vadd.f32 %v8696, %v8709
  %8711 = vdwg.mxu0
  %8712 = vmatpush.bf16.msra.mxu0 %v8561
  %8713 = vmatpush.bf16.msra.mxu0 %v8560
  %8714 = vmatpush.bf16.msra.mxu0 %v8559
  %8715 = vmatpush.bf16.msra.mxu0 %v8558
  %8716 = vmatpush.bf16.msra.mxu0 %v8557
  %8717 = vmatpush.bf16.msra.mxu0 %v8556
  %8718 = vmatpush.bf16.msra.mxu0 %v8555
  %8719 = vmatpush.bf16.msra.mxu0 %v8554
  %8720 = vmatmul.bf16.gmra.mxu0 %v8123
  %v8721 = vpop.f32.mrf.mxu0
  %v8722 = vadd.f32 %v8708, %v8721
  %v8723 = vpop.f32.mrf.mxu0
  %v8724 = vadd.f32 %v8710, %v8723
  %8725 = vdwg.mxu0
  %8726 = vmatpush.bf16.msra.mxu0 %v8569
  %8727 = vmatpush.bf16.msra.mxu0 %v8568
  %8728 = vmatpush.bf16.msra.mxu0 %v8567
  %8729 = vmatpush.bf16.msra.mxu0 %v8566
  %8730 = vmatpush.bf16.msra.mxu0 %v8565
  %8731 = vmatpush.bf16.msra.mxu0 %v8564
  %8732 = vmatpush.bf16.msra.mxu0 %v8563
  %8733 = vmatpush.bf16.msra.mxu0 %v8562
  %8734 = vmatmul.bf16.gmra.mxu0 %v8124
  %v8735 = vpop.f32.mrf.mxu0
  %v8736 = vadd.f32 %v8722, %v8735
  %v8737 = vpop.f32.mrf.mxu0
  %v8738 = vadd.f32 %v8724, %v8737
  %8739 = vdwg.mxu0
  %8740 = vmatpush.bf16.msra.mxu0 %v8577
  %8741 = vmatpush.bf16.msra.mxu0 %v8576
  %8742 = vmatpush.bf16.msra.mxu0 %v8575
  %8743 = vmatpush.bf16.msra.mxu0 %v8574
  %8744 = vmatpush.bf16.msra.mxu0 %v8573
  %8745 = vmatpush.bf16.msra.mxu0 %v8572
  %8746 = vmatpush.bf16.msra.mxu0 %v8571
  %8747 = vmatpush.bf16.msra.mxu0 %v8570
  %8748 = vmatmul.bf16.gmra.mxu0 %v8125
  %v8749 = vpop.f32.mrf.mxu0
  %v8750 = vadd.f32 %v8736, %v8749
  %v8751 = vpop.f32.mrf.mxu0
  %v8752 = vadd.f32 %v8738, %v8751
  %8753 = vdwg.mxu0
  %v8754 = vsub.f32 0.0, %v8750
  %v8755 = vsub.f32 0.0, %v8752
  %v8756 = vmul.f32 %v8754, 1.442695
  %v8757 = vpow.pop %v8756
  %v8758 = vmul.f32 %v8755, 1.442695
  %v8759 = vpow.pop %v8758
  %v8760 = vadd.f32 %v8757, 1.0
  %v8761 = vadd.f32 %v8759, 1.0
  %v8762 = vrcp.pop %v8760
  %v8763 = vrcp.pop %v8761
  %v8764 = vpack.c.bf16 %v8762, %v8762
  %v8765 = vpack.c.bf16 %v8763, %v8763
  %8766 = vst [vmem:[%s7] sm:$0xf] %v8764
  %8767 = vst [vmem:[%s7 + $0x4] sm:$0xf] %v8765
  // Predicated region
  $region30: #{discriminator_xz_forward.1} parent=0 // pred_check
    _
  $region31: #{discriminator_xz_forward.1} parent=0 // pred_check_branch
    %8769 = sbr.rel (0) target = $region33
  $region32: #{discriminator_xz_forward.1} parent=0 // pred_region
    _
  $region33: #{discriminator_xz_forward.1} parent=0 // pred_fallthru
    _
  // Predicated region
  $region34: #{discriminator_xz_forward.1} parent=0 // pred_check
    _
  $region35: #{discriminator_xz_forward.1} parent=0 // pred_check_branch
    %8771 = sbr.rel (0) target = $region37
  $region36: #{discriminator_xz_forward.1} parent=0 // pred_region
    _
  $region37: #{discriminator_xz_forward.1} parent=0 // pred_fallthru
    _

</llo_original>
